<compile_context>
chip_gen: v7x
topology: tpu7x:2x2x1
jax: 0.10.0
libtpu: 0.0.40
codegen_flags: <defaults>
</compile_context>

<pallas_src>
import functools

import jax
import jax.numpy as jnp
from jax.experimental import pallas as pl
from jax.experimental.pallas import tpu as pltpu

LANE = 128
VMEM_LIMIT = 48 * 1024 * 1024  # leaves headroom even on v7x (64 MiB physical)


def _round_up(x, m):
    return (x + m - 1) // m * m


# ----------------------------------------------------------------------------
# Tiled matmul + bias (+ReLU) kernel: bf16 operands, f32 accumulate.
# ----------------------------------------------------------------------------
def _mm_bias_kernel(x_ref, w_ref, b_ref, o_ref, acc_ref, *, relu):
    @pl.when(pl.program_id(2) == 0)
    def _():
        acc_ref[...] = jnp.zeros_like(acc_ref)

    acc_ref[...] += jnp.dot(x_ref[...], w_ref[...],
                            preferred_element_type=jnp.float32)

    @pl.when(pl.program_id(2) == pl.num_programs(2) - 1)
    def _():
        out = acc_ref[...] + b_ref[...]          # epilogue stays in f32
        if relu:
            out = jnp.maximum(out, 0.0)
        o_ref[...] = out.astype(o_ref.dtype)


def matmul_bias(x, w, b, *, relu=False, out_dtype=jnp.float32,
                tm=None, tn=128, tk=512):
    """x: (M, K), w: (K, N), b: (N,) -> (M, N). Tiled MXU matmul."""
    M, K = x.shape
    K2, N = w.shape
    assert K == K2 and b.shape == (N,)

    x = x.astype(jnp.bfloat16)
    w = w.astype(jnp.bfloat16)
    b2 = b.reshape(1, N).astype(jnp.float32)

    if tm is None:
        tm = min(256, _round_up(M, 8))
    tn = min(tn, _round_up(N, LANE))
    tk = min(tk, _round_up(K, LANE))
    Mp, Kp, Np = _round_up(M, tm), _round_up(K, tk), _round_up(N, tn)

    x = jnp.pad(x, ((0, Mp - M), (0, Kp - K)))
    w = jnp.pad(w, ((0, Kp - K), (0, Np - N)))
    b2 = jnp.pad(b2, ((0, 0), (0, Np - N)))

    grid = (Mp // tm, Np // tn, Kp // tk)
    cost = pl.CostEstimate(
        flops=2 * Mp * Kp * Np,
        transcendentals=0,
        bytes_accessed=2 * Mp * Kp + 2 * Kp * Np + 4 * Mp * Np)

    out = pl.pallas_call(
        functools.partial(_mm_bias_kernel, relu=relu),
        out_shape=jax.ShapeDtypeStruct((Mp, Np), out_dtype),
        grid=grid,
        in_specs=[
            pl.BlockSpec((tm, tk), lambda i, j, k: (i, k)),
            pl.BlockSpec((tk, tn), lambda i, j, k: (k, j)),
            pl.BlockSpec((1, tn), lambda i, j, k: (0, j)),
        ],
        out_specs=pl.BlockSpec((tm, tn), lambda i, j, k: (i, j)),
        scratch_shapes=[pltpu.VMEM((tm, tn), jnp.float32)],
        compiler_params=pltpu.CompilerParams(
            dimension_semantics=("parallel", "parallel", "arbitrary"),
            vmem_limit_bytes=VMEM_LIMIT),
        cost_estimate=cost,
    )(x, w, b2)
    return out[:M, :N]


# ----------------------------------------------------------------------------
# 3x3 conv kernels: nine taps folded into the kernel (no im2col in HBM).
# Input tile is a spatially padded, row-flattened slab ((th+2)*(W+2), C);
# tap (kh, kw) is simply the slab shifted by kh*(W+2)+kw rows.
# ----------------------------------------------------------------------------
def _conv3x3_kernel(x_ref, w_ref, b_ref, o_ref, *, offs, L, relu):
    acc = jnp.zeros((L, b_ref.shape[-1]), jnp.float32)
    for t, off in enumerate(offs):
        acc += jnp.dot(x_ref[0, pl.ds(off, L), :], w_ref[t],
                       preferred_element_type=jnp.float32)
    out = acc + b_ref[...]
    if relu:
        out = jnp.maximum(out, 0.0)
    o_ref[0, :, :] = out.astype(o_ref.dtype)


def _conv3x3_fused_head_kernel(x_ref, w_ref, b_ref, wh_ref, bh_ref, o_ref,
                               *, offs, L):
    # conv3x3 + ReLU, then the fused 1x1 heads — `mid` never leaves VMEM.
    acc = jnp.zeros((L, b_ref.shape[-1]), jnp.float32)
    for t, off in enumerate(offs):
        acc += jnp.dot(x_ref[0, pl.ds(off, L), :], w_ref[t],
                       preferred_element_type=jnp.float32)
    mid = jnp.maximum(acc + b_ref[...], 0.0).astype(wh_ref.dtype)
    out = jnp.dot(mid, wh_ref[...], preferred_element_type=jnp.float32)
    out = out + bh_ref[...]
    o_ref[0, :, :] = out.astype(o_ref.dtype)


def conv3x3(x_nhwc, w_taps, b, *, relu=True, out_dtype=jnp.bfloat16, th=8,
            head_w=None, head_b=None, tn=128):
    """3x3 'same' conv (+optional fused 1x1 heads).

    x_nhwc : (N, H, W, C)
    w_taps : (9, C, Cmid_or_Cout)  taps ordered (kh, kw) row-major
    """
    N, H, W, C = x_nhwc.shape
    th = min(th, H)
    n_ht = -(-H // th)
    Hp = n_ht * th

    # spatial zero-pad + overlapping row tiles (2-row halo per tile)
    xp = jnp.pad(x_nhwc.astype(jnp.bfloat16),
                 ((0, 0), (1, 1 + Hp - H), (1, 1), (0, 0)))
    tiles = [xp[n, i * th: i * th + th + 2]
             for n in range(N) for i in range(n_ht)]
    T = N * n_ht
    xt = jnp.stack(tiles, 0).reshape(T, (th + 2) * (W + 2), C)
    L = th * (W + 2)
    FR = (th + 2) * (W + 2) + 8          # slack rows keep every tap slice in-bounds
    xt = jnp.pad(xt, ((0, 0), (0, FR - xt.shape[1]), (0, 0)))
    offs = tuple(kh * (W + 2) + kw for kh in range(3) for kw in range(3))

    w_taps = w_taps.astype(jnp.bfloat16)
    b2 = b.reshape(1, -1).astype(jnp.float32)

    if head_w is None:
        Np = w_taps.shape[-1]
        assert Np % tn == 0
        kern = functools.partial(_conv3x3_kernel, offs=offs, L=L, relu=relu)
        in_specs = [
            pl.BlockSpec((1, FR, C), lambda i, j: (i, 0, 0)),
            pl.BlockSpec((9, C, tn), lambda i, j: (0, 0, j)),
            pl.BlockSpec((1, tn), lambda i, j: (0, j)),
        ]
        args = (xt, w_taps, b2)
        flops = 2 * T * L * C * Np * 9
    else:
        c_mid = w_taps.shape[-1]
        Np = head_w.shape[-1]
        assert Np % tn == 0
        kern = functools.partial(_conv3x3_fused_head_kernel, offs=offs, L=L)
        in_specs = [
            pl.BlockSpec((1, FR, C), lambda i, j: (i, 0, 0)),
            pl.BlockSpec((9, C, c_mid), lambda i, j: (0, 0, 0)),
            pl.BlockSpec((1, c_mid), lambda i, j: (0, 0)),
            pl.BlockSpec((c_mid, tn), lambda i, j: (0, j)),
            pl.BlockSpec((1, tn), lambda i, j: (0, j)),
        ]
        args = (xt, w_taps, b2, head_w.astype(jnp.bfloat16),
                head_b.reshape(1, -1).astype(jnp.float32))
        flops = 2 * T * L * C * c_mid * 9 + 2 * T * L * c_mid * Np

    cost = pl.CostEstimate(flops=flops, transcendentals=0,
                           bytes_accessed=xt.size * 2 + T * L * Np * 4)

    out = pl.pallas_call(
        kern,
        out_shape=jax.ShapeDtypeStruct((T, L, Np), out_dtype),
        grid=(T, Np // tn),
        in_specs=in_specs,
        out_specs=pl.BlockSpec((1, L, tn), lambda i, j: (i, 0, j)),
        compiler_params=pltpu.CompilerParams(
            dimension_semantics=("parallel", "parallel"),
            vmem_limit_bytes=VMEM_LIMIT),
        cost_estimate=cost,
    )(*args)

    # (T, th*(W+2), Np) -> (N, H, W, Np); padded width columns are discarded.
    o = out.reshape(N, n_ht, th, W + 2, Np)[:, :, :, :W, :]
    return o.reshape(N, Hp, W, Np)[:, :H]


# ----------------------------------------------------------------------------
# Box decode + clip: (8, A) packed tile (anchors rows 0..3, deltas rows 4..7).
# ----------------------------------------------------------------------------
def _decode_clip_kernel(x_ref, o_ref, *, img_h, img_w):
    tl_a = x_ref[0:2, :]                 # [y1; x1]
    br_a = x_ref[2:4, :]                 # [y2; x2]
    d_ctr = x_ref[4:6, :]                # [dy; dx]
    d_sz = x_ref[6:8, :]                 # [dh; dw]

    size = br_a - tl_a                   # [h; w]
    ctr = tl_a + 0.5 * size              # [cy; cx]
    nctr = d_ctr * size + ctr
    nsize = jnp.exp(d_sz) * size         # single EUP pass for both exps
    half = 0.5 * nsize

    row = jax.lax.broadcasted_iota(jnp.int32, nctr.shape, 0)
    bound = jnp.where(row == 0, jnp.float32(img_h), jnp.float32(img_w))
    o_ref[0:2, :] = jnp.clip(nctr - half, 0.0, bound)   # [y1; x1]
    o_ref[2:4, :] = jnp.clip(nctr + half, 0.0, bound)   # [y2; x2]


def decode_and_clip(anchors, locs, img_h, img_w):
    """anchors, locs: (A, 4) -> decoded & clipped boxes (A, 4)."""
    A = anchors.shape[0]
    packed = jnp.concatenate([anchors.T, locs.T], axis=0).astype(jnp.float32)
    ta = min(512, _round_up(A, LANE))
    Ap = _round_up(A, ta)
    packed = jnp.pad(packed, ((0, 0), (0, Ap - A)))

    out = pl.pallas_call(
        functools.partial(_decode_clip_kernel,
                          img_h=float(img_h), img_w=float(img_w)),
        out_shape=jax.ShapeDtypeStruct((4, Ap), jnp.float32),
        grid=(Ap // ta,),
        in_specs=[pl.BlockSpec((8, ta), lambda i: (0, i))],
        out_specs=pl.BlockSpec((4, ta), lambda i: (0, i)),
        compiler_params=pltpu.CompilerParams(
            dimension_semantics=("parallel",),
            vmem_limit_bytes=32 * 1024 * 1024),
        cost_estimate=pl.CostEstimate(flops=24 * Ap, transcendentals=2 * Ap,
                                      bytes_accessed=12 * Ap * 4),
    )(packed)
    return out[:, :A].T


# ----------------------------------------------------------------------------
# JAX glue (anchors, RoI sampling, parameter init)
# ----------------------------------------------------------------------------
def generate_anchors(H, W, base_size=4.0, ratios=(0.5, 1.0, 2.0),
                     scales=(1.0, 2.0, 4.0)):
    base = []
    for r in ratios:
        for s in scales:
            ah = base_size * s * (r ** 0.5)
            aw = base_size * s / (r ** 0.5)
            base.append([-ah / 2.0, -aw / 2.0, ah / 2.0, aw / 2.0])
    base = jnp.asarray(base, dtype=jnp.float32)                       # (n_anchor, 4)
    sy = jnp.arange(H, dtype=jnp.float32)
    sx = jnp.arange(W, dtype=jnp.float32)
    yy, xx = jnp.meshgrid(sy, sx, indexing="ij")
    shifts = jnp.stack([yy.ravel(), xx.ravel(), yy.ravel(), xx.ravel()], axis=1)
    anchors = (shifts[:, None, :] + base[None, :, :]).reshape(-1, 4)
    return anchors, base.shape[0]


def roi_pool_nearest(feat_hwc, rois, out_size=7):
    """Simplified RoI pooling (nearest sample per bin), spatial_scale = 1."""
    # TODO(synk): true RoIPooling max-pools every bin (data-dependent gather);
    # the gather/pool stays in plain JAX (could move in-kernel via scalar prefetch).
    H, W, _ = feat_hwc.shape
    y1, x1, y2, x2 = rois[:, 0], rois[:, 1], rois[:, 2], rois[:, 3]
    grid = (jnp.arange(out_size, dtype=jnp.float32) + 0.5) / out_size
    ys = y1[:, None] + (y2 - y1)[:, None] * grid[None, :]
    xs = x1[:, None] + (x2 - x1)[:, None] * grid[None, :]
    yi = jnp.clip(jnp.round(ys).astype(jnp.int32), 0, H - 1)
    xi = jnp.clip(jnp.round(xs).astype(jnp.int32), 0, W - 1)
    return feat_hwc[yi[:, :, None], xi[:, None, :], :]      # (R, S, S, C)


def init_params(key, c_in, c_feat, c_mid, n_anchor, n_class, pool, hidden):
    """Logical params, zero-padded to 128-lane output widths."""
    ks = jax.random.split(key, 6)
    sd = 0.05

    def w(k, shape):
        return sd * jax.random.normal(k, shape, dtype=jnp.float32)

    cf_pad = _round_up(c_feat, LANE)
    rpn_out = n_anchor * 4 + n_anchor * 2          # fused [loc | score]
    rpn_out_pad = _round_up(rpn_out, LANE)
    hid_pad = _round_up(hidden, LANE)
    head_out = n_class * 4 + n_class               # fused [loc | score]
    head_out_pad = _round_up(head_out, LANE)

    w_ext = jnp.zeros((9, c_in, cf_pad), jnp.float32).at[:, :, :c_feat].set(
        w(ks[0], (9, c_in, c_feat)))
    b_ext = jnp.zeros((cf_pad,), jnp.float32)

    w_rpn = jnp.zeros((9, cf_pad, c_mid), jnp.float32).at[:, :c_feat, :].set(
        w(ks[1], (9, c_feat, c_mid)))
    b_rpn = jnp.zeros((c_mid,), jnp.float32)

    w_rpn_head = jnp.zeros((c_mid, rpn_out_pad), jnp.float32).at[:, :rpn_out].set(
        w(ks[2], (c_mid, rpn_out)))
    b_rpn_head = jnp.zeros((rpn_out_pad,), jnp.float32)

    w_fc1 = jnp.zeros((pool, pool, cf_pad, hid_pad), jnp.float32).at[
        :, :, :c_feat, :hidden].set(w(ks[3], (pool, pool, c_feat, hidden)))
    w_fc1 = w_fc1.reshape(pool * pool * cf_pad, hid_pad)
    b_fc1 = jnp.zeros((hid_pad,), jnp.float32)

    w_head = jnp.zeros((hid_pad, head_out_pad), jnp.float32).at[
        :hidden, :head_out].set(w(ks[4], (hidden, head_out)))
    b_head = jnp.zeros((head_out_pad,), jnp.float32)

    return dict(w_ext=w_ext, b_ext=b_ext, w_rpn=w_rpn, b_rpn=b_rpn,
                w_rpn_head=w_rpn_head, b_rpn_head=b_rpn_head,
                w_fc1=w_fc1, b_fc1=b_fc1, w_head=w_head, b_head=b_head)


# ----------------------------------------------------------------------------
# FasterRCNN.forward: feature_map -> rpn -> head -> (roi_locs, roi_scores, rois)
# ----------------------------------------------------------------------------
def faster_rcnn_forward(img_nchw, params, scale=1.0, n_rois=32, pool=7,
                        n_anchor=9, n_class=21):
    del scale  # TODO(synk): ProposalCreator's min_size/scale filtering not modeled.
    N, C, H, W = img_nchw.shape
    x = jnp.transpose(img_nchw, (0, 2, 3, 1)).astype(jnp.float32)   # NHWC

    # extractor: 3x3 conv + ReLU (taps folded in-kernel, bf16 MXU, 128-lane out)
    feat = conv3x3(x, params["w_ext"], params["b_ext"],
                   relu=True, out_dtype=jnp.bfloat16)          # (N, H, W, 128)

    # RPN: 3x3 conv + ReLU with the two 1x1 heads fused into the kernel tail
    rpn_map = conv3x3(feat, params["w_rpn"], params["b_rpn"],
                      head_w=params["w_rpn_head"], head_b=params["b_rpn_head"],
                      out_dtype=jnp.float32)                   # (N, H, W, 128)
    n_loc = n_anchor * 4
    rpn_locs = rpn_map[..., :n_loc].reshape(N, H * W * n_anchor, 4)
    rpn_scores = rpn_map[..., n_loc:n_loc + n_anchor * 2].reshape(
        N, H * W * n_anchor, 2)

    anchors, _ = generate_anchors(H, W)

    # proposal generation for image 0 (like torch ProposalCreator)
    boxes = decode_and_clip(anchors, rpn_locs[0], H, W)
    fg_prob = jax.nn.softmax(rpn_scores[0], axis=1)[:, 1]
    # TODO(synk): NMS in ProposalCreator has no clean Pallas equivalent; top-k only.
    _, top_idx = jax.lax.top_k(fg_prob, n_rois)
    rois = boxes[top_idx]                                      # (R, 4)

    # head: RoI pooling + fc1 + fused cls/reg heads (tiled Pallas matmuls)
    pooled = roi_pool_nearest(feat[0], rois, out_size=pool)    # (R, 7, 7, 128)
    flat = pooled.reshape(n_rois, -1)
    h1 = matmul_bias(flat, params["w_fc1"], params["b_fc1"],
                     relu=True, out_dtype=jnp.bfloat16)
    head = matmul_bias(h1, params["w_head"], params["b_head"],
                       out_dtype=jnp.float32)
    roi_locs = head[:, :n_class * 4]
    roi_scores = head[:, n_class * 4:n_class * 4 + n_class]
    return roi_locs, roi_scores, rois


if __name__ == "__main__":
    key = jax.random.PRNGKey(0)
    k_img, k_par = jax.random.split(key)

    # small shapes: batch=1 (FasterRCNN proposals assume a single image), C=4, 16x16 image
    B, C_IN, H, W = 1, 4, 16, 16
    C_FEAT, C_MID = 32, 32
    N_ANCHOR, N_CLASS, POOL, HIDDEN, N_ROIS = 9, 21, 7, 64, 32

    img = jax.random.normal(k_img, (B, C_IN, H, W), dtype=jnp.float32)
    params = init_params(k_par, C_IN, C_FEAT, C_MID, N_ANCHOR, N_CLASS,
                         POOL, HIDDEN)

    fwd = jax.jit(functools.partial(faster_rcnn_forward, n_rois=N_ROIS,
                                    pool=POOL, n_anchor=N_ANCHOR,
                                    n_class=N_CLASS))
    roi_locs, roi_scores, rois = fwd(img, params)
    jax.block_until_ready((roi_locs, roi_scores, rois))

    assert roi_locs.shape == (N_ROIS, N_CLASS * 4)
    assert roi_scores.shape == (N_ROIS, N_CLASS)
    assert rois.shape == (N_ROIS, 4)
    assert bool(jnp.all(jnp.isfinite(roi_locs)))
    assert bool(jnp.all(jnp.isfinite(rois)))
    print("KERNEL_OK")
</pallas_src>

<mosaic_0001>
module attributes {stable_mosaic.version = 11 : i64} {
  func.func @_conv3x3_kernel(%arg0: i32, %arg1: i32, %arg2: memref<1x188x4xbf16, #tpu.memory_space<vmem>>, %arg3: memref<9x4x128xbf16, #tpu.memory_space<vmem>>, %arg4: memref<1x128xf32, #tpu.memory_space<vmem>>, %arg5: memref<1x144x128xbf16, #tpu.memory_space<vmem>>) attributes {dimension_semantics = [#tpu.dimension_semantics<parallel>, #tpu.dimension_semantics<parallel>], iteration_bounds = array<i64: 2, 1>, scalar_prefetch = 0 : i64, scratch_operands = 0 : i64, tpu.core_type = #tpu.core_type<tc>, window_params = [{transform_indices = @transform_0, window_bounds = array<i64: 1, 188, 4>}, {transform_indices = @transform_1, window_bounds = array<i64: 9, 4, 128>}, {transform_indices = @transform_2, window_bounds = array<i64: 1, 128>}, {transform_indices = @transform_3, window_bounds = array<i64: 1, 144, 128>}]} {
    %cst = arith.constant 0.000000e+00 : f32
    %0 = vector.broadcast %cst : f32 to vector<144x128xf32>
    %c0 = arith.constant 0 : index
    %c0_0 = arith.constant 0 : index
    %c0_1 = arith.constant 0 : index
    %1 = vector.load %arg2[%c0, %c0_0, %c0_1] : memref<1x188x4xbf16, #tpu.memory_space<vmem>>, vector<1x144x4xbf16>
    %2 = vector.shape_cast %1 : vector<1x144x4xbf16> to vector<144x4xbf16>
    %c0_2 = arith.constant 0 : index
    %c0_3 = arith.constant 0 : index
    %c0_4 = arith.constant 0 : index
    %3 = vector.load %arg3[%c0_2, %c0_3, %c0_4] : memref<9x4x128xbf16, #tpu.memory_space<vmem>>, vector<1x4x128xbf16>
    %4 = vector.shape_cast %3 : vector<1x4x128xbf16> to vector<4x128xbf16>
    %cst_5 = arith.constant dense<0.000000e+00> : vector<144x128xf32>
    %5 = tpu.matmul %2, %4, %cst_5 {dimension_numbers = #tpu.dot_dimension_numbers<[1], [0], [0], [1], [0, 0, 1, 1], [], []>} : vector<144x4xbf16>, vector<4x128xbf16>, vector<144x128xf32> -> vector<144x128xf32>
    %6 = arith.addf %0, %5 : vector<144x128xf32>
    %c0_6 = arith.constant 0 : index
    %c1 = arith.constant 1 : index
    %c0_7 = arith.constant 0 : index
    %7 = vector.load %arg2[%c0_6, %c1, %c0_7] : memref<1x188x4xbf16, #tpu.memory_space<vmem>>, vector<1x144x4xbf16>
    %8 = vector.shape_cast %7 : vector<1x144x4xbf16> to vector<144x4xbf16>
    %c1_8 = arith.constant 1 : index
    %c0_9 = arith.constant 0 : index
    %c0_10 = arith.constant 0 : index
    %9 = vector.load %arg3[%c1_8, %c0_9, %c0_10] : memref<9x4x128xbf16, #tpu.memory_space<vmem>>, vector<1x4x128xbf16>
    %10 = vector.shape_cast %9 : vector<1x4x128xbf16> to vector<4x128xbf16>
    %cst_11 = arith.constant dense<0.000000e+00> : vector<144x128xf32>
    %11 = tpu.matmul %8, %10, %cst_11 {dimension_numbers = #tpu.dot_dimension_numbers<[1], [0], [0], [1], [0, 0, 1, 1], [], []>} : vector<144x4xbf16>, vector<4x128xbf16>, vector<144x128xf32> -> vector<144x128xf32>
    %12 = arith.addf %6, %11 : vector<144x128xf32>
    %c0_12 = arith.constant 0 : index
    %c2 = arith.constant 2 : index
    %c0_13 = arith.constant 0 : index
    %13 = vector.load %arg2[%c0_12, %c2, %c0_13] : memref<1x188x4xbf16, #tpu.memory_space<vmem>>, vector<1x144x4xbf16>
    %14 = vector.shape_cast %13 : vector<1x144x4xbf16> to vector<144x4xbf16>
    %c2_14 = arith.constant 2 : index
    %c0_15 = arith.constant 0 : index
    %c0_16 = arith.constant 0 : index
    %15 = vector.load %arg3[%c2_14, %c0_15, %c0_16] : memref<9x4x128xbf16, #tpu.memory_space<vmem>>, vector<1x4x128xbf16>
    %16 = vector.shape_cast %15 : vector<1x4x128xbf16> to vector<4x128xbf16>
    %cst_17 = arith.constant dense<0.000000e+00> : vector<144x128xf32>
    %17 = tpu.matmul %14, %16, %cst_17 {dimension_numbers = #tpu.dot_dimension_numbers<[1], [0], [0], [1], [0, 0, 1, 1], [], []>} : vector<144x4xbf16>, vector<4x128xbf16>, vector<144x128xf32> -> vector<144x128xf32>
    %18 = arith.addf %12, %17 : vector<144x128xf32>
    %c0_18 = arith.constant 0 : index
    %c18 = arith.constant 18 : index
    %c0_19 = arith.constant 0 : index
    %19 = vector.load %arg2[%c0_18, %c18, %c0_19] : memref<1x188x4xbf16, #tpu.memory_space<vmem>>, vector<1x144x4xbf16>
    %20 = vector.shape_cast %19 : vector<1x144x4xbf16> to vector<144x4xbf16>
    %c3 = arith.constant 3 : index
    %c0_20 = arith.constant 0 : index
    %c0_21 = arith.constant 0 : index
    %21 = vector.load %arg3[%c3, %c0_20, %c0_21] : memref<9x4x128xbf16, #tpu.memory_space<vmem>>, vector<1x4x128xbf16>
    %22 = vector.shape_cast %21 : vector<1x4x128xbf16> to vector<4x128xbf16>
    %cst_22 = arith.constant dense<0.000000e+00> : vector<144x128xf32>
    %23 = tpu.matmul %20, %22, %cst_22 {dimension_numbers = #tpu.dot_dimension_numbers<[1], [0], [0], [1], [0, 0, 1, 1], [], []>} : vector<144x4xbf16>, vector<4x128xbf16>, vector<144x128xf32> -> vector<144x128xf32>
    %24 = arith.addf %18, %23 : vector<144x128xf32>
    %c0_23 = arith.constant 0 : index
    %c19 = arith.constant 19 : index
    %c0_24 = arith.constant 0 : index
    %25 = vector.load %arg2[%c0_23, %c19, %c0_24] : memref<1x188x4xbf16, #tpu.memory_space<vmem>>, vector<1x144x4xbf16>
    %26 = vector.shape_cast %25 : vector<1x144x4xbf16> to vector<144x4xbf16>
    %c4 = arith.constant 4 : index
    %c0_25 = arith.constant 0 : index
    %c0_26 = arith.constant 0 : index
    %27 = vector.load %arg3[%c4, %c0_25, %c0_26] : memref<9x4x128xbf16, #tpu.memory_space<vmem>>, vector<1x4x128xbf16>
    %28 = vector.shape_cast %27 : vector<1x4x128xbf16> to vector<4x128xbf16>
    %cst_27 = arith.constant dense<0.000000e+00> : vector<144x128xf32>
    %29 = tpu.matmul %26, %28, %cst_27 {dimension_numbers = #tpu.dot_dimension_numbers<[1], [0], [0], [1], [0, 0, 1, 1], [], []>} : vector<144x4xbf16>, vector<4x128xbf16>, vector<144x128xf32> -> vector<144x128xf32>
    %30 = arith.addf %24, %29 : vector<144x128xf32>
    %c0_28 = arith.constant 0 : index
    %c20 = arith.constant 20 : index
    %c0_29 = arith.constant 0 : index
    %31 = vector.load %arg2[%c0_28, %c20, %c0_29] : memref<1x188x4xbf16, #tpu.memory_space<vmem>>, vector<1x144x4xbf16>
    %32 = vector.shape_cast %31 : vector<1x144x4xbf16> to vector<144x4xbf16>
    %c5 = arith.constant 5 : index
    %c0_30 = arith.constant 0 : index
    %c0_31 = arith.constant 0 : index
    %33 = vector.load %arg3[%c5, %c0_30, %c0_31] : memref<9x4x128xbf16, #tpu.memory_space<vmem>>, vector<1x4x128xbf16>
    %34 = vector.shape_cast %33 : vector<1x4x128xbf16> to vector<4x128xbf16>
    %cst_32 = arith.constant dense<0.000000e+00> : vector<144x128xf32>
    %35 = tpu.matmul %32, %34, %cst_32 {dimension_numbers = #tpu.dot_dimension_numbers<[1], [0], [0], [1], [0, 0, 1, 1], [], []>} : vector<144x4xbf16>, vector<4x128xbf16>, vector<144x128xf32> -> vector<144x128xf32>
    %36 = arith.addf %30, %35 : vector<144x128xf32>
    %c0_33 = arith.constant 0 : index
    %c36 = arith.constant 36 : index
    %c0_34 = arith.constant 0 : index
    %37 = vector.load %arg2[%c0_33, %c36, %c0_34] : memref<1x188x4xbf16, #tpu.memory_space<vmem>>, vector<1x144x4xbf16>
    %38 = vector.shape_cast %37 : vector<1x144x4xbf16> to vector<144x4xbf16>
    %c6 = arith.constant 6 : index
    %c0_35 = arith.constant 0 : index
    %c0_36 = arith.constant 0 : index
    %39 = vector.load %arg3[%c6, %c0_35, %c0_36] : memref<9x4x128xbf16, #tpu.memory_space<vmem>>, vector<1x4x128xbf16>
    %40 = vector.shape_cast %39 : vector<1x4x128xbf16> to vector<4x128xbf16>
    %cst_37 = arith.constant dense<0.000000e+00> : vector<144x128xf32>
    %41 = tpu.matmul %38, %40, %cst_37 {dimension_numbers = #tpu.dot_dimension_numbers<[1], [0], [0], [1], [0, 0, 1, 1], [], []>} : vector<144x4xbf16>, vector<4x128xbf16>, vector<144x128xf32> -> vector<144x128xf32>
    %42 = arith.addf %36, %41 : vector<144x128xf32>
    %c0_38 = arith.constant 0 : index
    %c37 = arith.constant 37 : index
    %c0_39 = arith.constant 0 : index
    %43 = vector.load %arg2[%c0_38, %c37, %c0_39] : memref<1x188x4xbf16, #tpu.memory_space<vmem>>, vector<1x144x4xbf16>
    %44 = vector.shape_cast %43 : vector<1x144x4xbf16> to vector<144x4xbf16>
    %c7 = arith.constant 7 : index
    %c0_40 = arith.constant 0 : index
    %c0_41 = arith.constant 0 : index
    %45 = vector.load %arg3[%c7, %c0_40, %c0_41] : memref<9x4x128xbf16, #tpu.memory_space<vmem>>, vector<1x4x128xbf16>
    %46 = vector.shape_cast %45 : vector<1x4x128xbf16> to vector<4x128xbf16>
    %cst_42 = arith.constant dense<0.000000e+00> : vector<144x128xf32>
    %47 = tpu.matmul %44, %46, %cst_42 {dimension_numbers = #tpu.dot_dimension_numbers<[1], [0], [0], [1], [0, 0, 1, 1], [], []>} : vector<144x4xbf16>, vector<4x128xbf16>, vector<144x128xf32> -> vector<144x128xf32>
    %48 = arith.addf %42, %47 : vector<144x128xf32>
    %c0_43 = arith.constant 0 : index
    %c38 = arith.constant 38 : index
    %c0_44 = arith.constant 0 : index
    %49 = vector.load %arg2[%c0_43, %c38, %c0_44] : memref<1x188x4xbf16, #tpu.memory_space<vmem>>, vector<1x144x4xbf16>
    %50 = vector.shape_cast %49 : vector<1x144x4xbf16> to vector<144x4xbf16>
    %c8 = arith.constant 8 : index
    %c0_45 = arith.constant 0 : index
    %c0_46 = arith.constant 0 : index
    %51 = vector.load %arg3[%c8, %c0_45, %c0_46] : memref<9x4x128xbf16, #tpu.memory_space<vmem>>, vector<1x4x128xbf16>
    %52 = vector.shape_cast %51 : vector<1x4x128xbf16> to vector<4x128xbf16>
    %cst_47 = arith.constant dense<0.000000e+00> : vector<144x128xf32>
    %53 = tpu.matmul %50, %52, %cst_47 {dimension_numbers = #tpu.dot_dimension_numbers<[1], [0], [0], [1], [0, 0, 1, 1], [], []>} : vector<144x4xbf16>, vector<4x128xbf16>, vector<144x128xf32> -> vector<144x128xf32>
    %54 = arith.addf %48, %53 : vector<144x128xf32>
    %c0_48 = arith.constant 0 : index
    %c0_49 = arith.constant 0 : index
    %55 = vector.load %arg4[%c0_48, %c0_49] : memref<1x128xf32, #tpu.memory_space<vmem>>, vector<1x128xf32>
    %56 = vector.broadcast %55 : vector<1x128xf32> to vector<144x128xf32>
    %57 = arith.addf %54, %56 : vector<144x128xf32>
    %cst_50 = arith.constant 0.000000e+00 : f32
    %58 = vector.broadcast %cst_50 : f32 to vector<144x128xf32>
    %59 = arith.maximumf %57, %58 : vector<144x128xf32>
    %60 = arith.truncf %59 : vector<144x128xf32> to vector<144x128xbf16>
    %c0_51 = arith.constant 0 : index
    %c0_52 = arith.constant 0 : index
    %c0_53 = arith.constant 0 : index
    %61 = vector.load %arg5[%c0_51, %c0_52, %c0_53] : memref<1x144x128xbf16, #tpu.memory_space<vmem>>, vector<1x144x128xbf16>
    %62 = vector.shape_cast %61 : vector<1x144x128xbf16> to vector<144x128xbf16>
    %63 = vector.shape_cast %60 : vector<144x128xbf16> to vector<1x144x128xbf16>
    tpu.vector_store %arg5[%c0_51, %c0_52, %c0_53], %63 {strides = array<i32>} : memref<1x144x128xbf16, #tpu.memory_space<vmem>>, vector<1x144x128xbf16>,
    return
  }
  func.func @transform_0(%arg0: i32, %arg1: i32) -> (i32, i32, i32) {
    %c0_i32 = arith.constant 0 : i32
    %c0_i32_0 = arith.constant 0 : i32
    %c0_i32_1 = arith.constant 0 : i32
    return %arg0, %c0_i32, %c0_i32_0 : i32, i32, i32
  }
  func.func @transform_1(%arg0: i32, %arg1: i32) -> (i32, i32, i32) {
    %c0_i32 = arith.constant 0 : i32
    %c0_i32_0 = arith.constant 0 : i32
    %c0_i32_1 = arith.constant 0 : i32
    return %c0_i32, %c0_i32_0, %arg1 : i32, i32, i32
  }
  func.func @transform_2(%arg0: i32, %arg1: i32) -> (i32, i32) {
    %c0_i32 = arith.constant 0 : i32
    %c0_i32_0 = arith.constant 0 : i32
    return %c0_i32, %arg1 : i32, i32
  }
  func.func @transform_3(%arg0: i32, %arg1: i32) -> (i32, i32, i32) {
    %c0_i32 = arith.constant 0 : i32
    %c0_i32_0 = arith.constant 0 : i32
    return %arg0, %c0_i32, %arg1 : i32, i32, i32
  }
}

module attributes {stable_mosaic.version = 11 : i64} {
  func.func @_conv3x3_fused_head_kernel(%arg0: i32, %arg1: i32, %arg2: memref<1x188x128xbf16, #tpu.memory_space<vmem>>, %arg3: memref<9x128x32xbf16, #tpu.memory_space<vmem>>, %arg4: memref<1x32xf32, #tpu.memory_space<vmem>>, %arg5: memref<32x128xbf16, #tpu.memory_space<vmem>>, %arg6: memref<1x128xf32, #tpu.memory_space<vmem>>, %arg7: memref<1x144x128xf32, #tpu.memory_space<vmem>>) attributes {dimension_semantics = [#tpu.dimension_semantics<parallel>, #tpu.dimension_semantics<parallel>], iteration_bounds = array<i64: 2, 1>, scalar_prefetch = 0 : i64, scratch_operands = 0 : i64, tpu.core_type = #tpu.core_type<tc>, window_params = [{transform_indices = @transform_0, window_bounds = array<i64: 1, 188, 128>}, {pipeline_mode = #tpu.pipeline_mode<synchronous>, transform_indices = @transform_1, window_bounds = array<i64: 9, 128, 32>}, {pipeline_mode = #tpu.pipeline_mode<synchronous>, transform_indices = @transform_2, window_bounds = array<i64: 1, 32>}, {transform_indices = @transform_3, window_bounds = array<i64: 32, 128>}, {transform_indices = @transform_4, window_bounds = array<i64: 1, 128>}, {transform_indices = @transform_5, window_bounds = array<i64: 1, 144, 128>}]} {
    %cst = arith.constant 0.000000e+00 : f32
    %0 = vector.broadcast %cst : f32 to vector<144x32xf32>
    %c0 = arith.constant 0 : index
    %c0_0 = arith.constant 0 : index
    %c0_1 = arith.constant 0 : index
    %1 = vector.load %arg2[%c0, %c0_0, %c0_1] : memref<1x188x128xbf16, #tpu.memory_space<vmem>>, vector<1x144x128xbf16>
    %2 = vector.shape_cast %1 : vector<1x144x128xbf16> to vector<144x128xbf16>
    %c0_2 = arith.constant 0 : index
    %c0_3 = arith.constant 0 : index
    %c0_4 = arith.constant 0 : index
    %3 = vector.load %arg3[%c0_2, %c0_3, %c0_4] : memref<9x128x32xbf16, #tpu.memory_space<vmem>>, vector<1x128x32xbf16>
    %4 = vector.shape_cast %3 : vector<1x128x32xbf16> to vector<128x32xbf16>
    %cst_5 = arith.constant dense<0.000000e+00> : vector<144x32xf32>
    %5 = tpu.matmul %2, %4, %cst_5 {dimension_numbers = #tpu.dot_dimension_numbers<[1], [0], [0], [1], [0, 0, 1, 1], [], []>} : vector<144x128xbf16>, vector<128x32xbf16>, vector<144x32xf32> -> vector<144x32xf32>
    %6 = arith.addf %0, %5 : vector<144x32xf32>
    %c0_6 = arith.constant 0 : index
    %c1 = arith.constant 1 : index
    %c0_7 = arith.constant 0 : index
    %7 = vector.load %arg2[%c0_6, %c1, %c0_7] : memref<1x188x128xbf16, #tpu.memory_space<vmem>>, vector<1x144x128xbf16>
    %8 = vector.shape_cast %7 : vector<1x144x128xbf16> to vector<144x128xbf16>
    %c1_8 = arith.constant 1 : index
    %c0_9 = arith.constant 0 : index
    %c0_10 = arith.constant 0 : index
    %9 = vector.load %arg3[%c1_8, %c0_9, %c0_10] : memref<9x128x32xbf16, #tpu.memory_space<vmem>>, vector<1x128x32xbf16>
    %10 = vector.shape_cast %9 : vector<1x128x32xbf16> to vector<128x32xbf16>
    %cst_11 = arith.constant dense<0.000000e+00> : vector<144x32xf32>
    %11 = tpu.matmul %8, %10, %cst_11 {dimension_numbers = #tpu.dot_dimension_numbers<[1], [0], [0], [1], [0, 0, 1, 1], [], []>} : vector<144x128xbf16>, vector<128x32xbf16>, vector<144x32xf32> -> vector<144x32xf32>
    %12 = arith.addf %6, %11 : vector<144x32xf32>
    %c0_12 = arith.constant 0 : index
    %c2 = arith.constant 2 : index
    %c0_13 = arith.constant 0 : index
    %13 = vector.load %arg2[%c0_12, %c2, %c0_13] : memref<1x188x128xbf16, #tpu.memory_space<vmem>>, vector<1x144x128xbf16>
    %14 = vector.shape_cast %13 : vector<1x144x128xbf16> to vector<144x128xbf16>
    %c2_14 = arith.constant 2 : index
    %c0_15 = arith.constant 0 : index
    %c0_16 = arith.constant 0 : index
    %15 = vector.load %arg3[%c2_14, %c0_15, %c0_16] : memref<9x128x32xbf16, #tpu.memory_space<vmem>>, vector<1x128x32xbf16>
    %16 = vector.shape_cast %15 : vector<1x128x32xbf16> to vector<128x32xbf16>
    %cst_17 = arith.constant dense<0.000000e+00> : vector<144x32xf32>
    %17 = tpu.matmul %14, %16, %cst_17 {dimension_numbers = #tpu.dot_dimension_numbers<[1], [0], [0], [1], [0, 0, 1, 1], [], []>} : vector<144x128xbf16>, vector<128x32xbf16>, vector<144x32xf32> -> vector<144x32xf32>
    %18 = arith.addf %12, %17 : vector<144x32xf32>
    %c0_18 = arith.constant 0 : index
    %c18 = arith.constant 18 : index
    %c0_19 = arith.constant 0 : index
    %19 = vector.load %arg2[%c0_18, %c18, %c0_19] : memref<1x188x128xbf16, #tpu.memory_space<vmem>>, vector<1x144x128xbf16>
    %20 = vector.shape_cast %19 : vector<1x144x128xbf16> to vector<144x128xbf16>
    %c3 = arith.constant 3 : index
    %c0_20 = arith.constant 0 : index
    %c0_21 = arith.constant 0 : index
    %21 = vector.load %arg3[%c3, %c0_20, %c0_21] : memref<9x128x32xbf16, #tpu.memory_space<vmem>>, vector<1x128x32xbf16>
    %22 = vector.shape_cast %21 : vector<1x128x32xbf16> to vector<128x32xbf16>
    %cst_22 = arith.constant dense<0.000000e+00> : vector<144x32xf32>
    %23 = tpu.matmul %20, %22, %cst_22 {dimension_numbers = #tpu.dot_dimension_numbers<[1], [0], [0], [1], [0, 0, 1, 1], [], []>} : vector<144x128xbf16>, vector<128x32xbf16>, vector<144x32xf32> -> vector<144x32xf32>
    %24 = arith.addf %18, %23 : vector<144x32xf32>
    %c0_23 = arith.constant 0 : index
    %c19 = arith.constant 19 : index
    %c0_24 = arith.constant 0 : index
    %25 = vector.load %arg2[%c0_23, %c19, %c0_24] : memref<1x188x128xbf16, #tpu.memory_space<vmem>>, vector<1x144x128xbf16>
    %26 = vector.shape_cast %25 : vector<1x144x128xbf16> to vector<144x128xbf16>
    %c4 = arith.constant 4 : index
    %c0_25 = arith.constant 0 : index
    %c0_26 = arith.constant 0 : index
    %27 = vector.load %arg3[%c4, %c0_25, %c0_26] : memref<9x128x32xbf16, #tpu.memory_space<vmem>>, vector<1x128x32xbf16>
    %28 = vector.shape_cast %27 : vector<1x128x32xbf16> to vector<128x32xbf16>
    %cst_27 = arith.constant dense<0.000000e+00> : vector<144x32xf32>
    %29 = tpu.matmul %26, %28, %cst_27 {dimension_numbers = #tpu.dot_dimension_numbers<[1], [0], [0], [1], [0, 0, 1, 1], [], []>} : vector<144x128xbf16>, vector<128x32xbf16>, vector<144x32xf32> -> vector<144x32xf32>
    %30 = arith.addf %24, %29 : vector<144x32xf32>
    %c0_28 = arith.constant 0 : index
    %c20 = arith.constant 20 : index
    %c0_29 = arith.constant 0 : index
    %31 = vector.load %arg2[%c0_28, %c20, %c0_29] : memref<1x188x128xbf16, #tpu.memory_space<vmem>>, vector<1x144x128xbf16>
    %32 = vector.shape_cast %31 : vector<1x144x128xbf16> to vector<144x128xbf16>
    %c5 = arith.constant 5 : index
    %c0_30 = arith.constant 0 : index
    %c0_31 = arith.constant 0 : index
    %33 = vector.load %arg3[%c5, %c0_30, %c0_31] : memref<9x128x32xbf16, #tpu.memory_space<vmem>>, vector<1x128x32xbf16>
    %34 = vector.shape_cast %33 : vector<1x128x32xbf16> to vector<128x32xbf16>
    %cst_32 = arith.constant dense<0.000000e+00> : vector<144x32xf32>
    %35 = tpu.matmul %32, %34, %cst_32 {dimension_numbers = #tpu.dot_dimension_numbers<[1], [0], [0], [1], [0, 0, 1, 1], [], []>} : vector<144x128xbf16>, vector<128x32xbf16>, vector<144x32xf32> -> vector<144x32xf32>
    %36 = arith.addf %30, %35 : vector<144x32xf32>
    %c0_33 = arith.constant 0 : index
    %c36 = arith.constant 36 : index
    %c0_34 = arith.constant 0 : index
    %37 = vector.load %arg2[%c0_33, %c36, %c0_34] : memref<1x188x128xbf16, #tpu.memory_space<vmem>>, vector<1x144x128xbf16>
    %38 = vector.shape_cast %37 : vector<1x144x128xbf16> to vector<144x128xbf16>
    %c6 = arith.constant 6 : index
    %c0_35 = arith.constant 0 : index
    %c0_36 = arith.constant 0 : index
    %39 = vector.load %arg3[%c6, %c0_35, %c0_36] : memref<9x128x32xbf16, #tpu.memory_space<vmem>>, vector<1x128x32xbf16>
    %40 = vector.shape_cast %39 : vector<1x128x32xbf16> to vector<128x32xbf16>
    %cst_37 = arith.constant dense<0.000000e+00> : vector<144x32xf32>
    %41 = tpu.matmul %38, %40, %cst_37 {dimension_numbers = #tpu.dot_dimension_numbers<[1], [0], [0], [1], [0, 0, 1, 1], [], []>} : vector<144x128xbf16>, vector<128x32xbf16>, vector<144x32xf32> -> vector<144x32xf32>
    %42 = arith.addf %36, %41 : vector<144x32xf32>
    %c0_38 = arith.constant 0 : index
    %c37 = arith.constant 37 : index
    %c0_39 = arith.constant 0 : index
    %43 = vector.load %arg2[%c0_38, %c37, %c0_39] : memref<1x188x128xbf16, #tpu.memory_space<vmem>>, vector<1x144x128xbf16>
    %44 = vector.shape_cast %43 : vector<1x144x128xbf16> to vector<144x128xbf16>
    %c7 = arith.constant 7 : index
    %c0_40 = arith.constant 0 : index
    %c0_41 = arith.constant 0 : index
    %45 = vector.load %arg3[%c7, %c0_40, %c0_41] : memref<9x128x32xbf16, #tpu.memory_space<vmem>>, vector<1x128x32xbf16>
    %46 = vector.shape_cast %45 : vector<1x128x32xbf16> to vector<128x32xbf16>
    %cst_42 = arith.constant dense<0.000000e+00> : vector<144x32xf32>
    %47 = tpu.matmul %44, %46, %cst_42 {dimension_numbers = #tpu.dot_dimension_numbers<[1], [0], [0], [1], [0, 0, 1, 1], [], []>} : vector<144x128xbf16>, vector<128x32xbf16>, vector<144x32xf32> -> vector<144x32xf32>
    %48 = arith.addf %42, %47 : vector<144x32xf32>
    %c0_43 = arith.constant 0 : index
    %c38 = arith.constant 38 : index
    %c0_44 = arith.constant 0 : index
    %49 = vector.load %arg2[%c0_43, %c38, %c0_44] : memref<1x188x128xbf16, #tpu.memory_space<vmem>>, vector<1x144x128xbf16>
    %50 = vector.shape_cast %49 : vector<1x144x128xbf16> to vector<144x128xbf16>
    %c8 = arith.constant 8 : index
    %c0_45 = arith.constant 0 : index
    %c0_46 = arith.constant 0 : index
    %51 = vector.load %arg3[%c8, %c0_45, %c0_46] : memref<9x128x32xbf16, #tpu.memory_space<vmem>>, vector<1x128x32xbf16>
    %52 = vector.shape_cast %51 : vector<1x128x32xbf16> to vector<128x32xbf16>
    %cst_47 = arith.constant dense<0.000000e+00> : vector<144x32xf32>
    %53 = tpu.matmul %50, %52, %cst_47 {dimension_numbers = #tpu.dot_dimension_numbers<[1], [0], [0], [1], [0, 0, 1, 1], [], []>} : vector<144x128xbf16>, vector<128x32xbf16>, vector<144x32xf32> -> vector<144x32xf32>
    %54 = arith.addf %48, %53 : vector<144x32xf32>
    %c0_48 = arith.constant 0 : index
    %c0_49 = arith.constant 0 : index
    %55 = vector.load %arg4[%c0_48, %c0_49] : memref<1x32xf32, #tpu.memory_space<vmem>>, vector<1x32xf32>
    %56 = vector.broadcast %55 : vector<1x32xf32> to vector<144x32xf32>
    %57 = arith.addf %54, %56 : vector<144x32xf32>
    %cst_50 = arith.constant 0.000000e+00 : f32
    %58 = vector.broadcast %cst_50 : f32 to vector<144x32xf32>
    %59 = arith.maximumf %57, %58 : vector<144x32xf32>
    %60 = arith.truncf %59 : vector<144x32xf32> to vector<144x32xbf16>
    %c0_51 = arith.constant 0 : index
    %c0_52 = arith.constant 0 : index
    %61 = vector.load %arg5[%c0_51, %c0_52] : memref<32x128xbf16, #tpu.memory_space<vmem>>, vector<32x128xbf16>
    %cst_53 = arith.constant dense<0.000000e+00> : vector<144x128xf32>
    %62 = tpu.matmul %60, %61, %cst_53 {dimension_numbers = #tpu.dot_dimension_numbers<[1], [0], [0], [1], [0, 0, 1, 1], [], []>} : vector<144x32xbf16>, vector<32x128xbf16>, vector<144x128xf32> -> vector<144x128xf32>
    %c0_54 = arith.constant 0 : index
    %c0_55 = arith.constant 0 : index
    %63 = vector.load %arg6[%c0_54, %c0_55] : memref<1x128xf32, #tpu.memory_space<vmem>>, vector<1x128xf32>
    %64 = vector.broadcast %63 : vector<1x128xf32> to vector<144x128xf32>
    %65 = arith.addf %62, %64 : vector<144x128xf32>
    %c0_56 = arith.constant 0 : index
    %c0_57 = arith.constant 0 : index
    %c0_58 = arith.constant 0 : index
    %66 = vector.load %arg7[%c0_56, %c0_57, %c0_58] : memref<1x144x128xf32, #tpu.memory_space<vmem>>, vector<1x144x128xf32>
    %67 = vector.shape_cast %66 : vector<1x144x128xf32> to vector<144x128xf32>
    %68 = vector.shape_cast %65 : vector<144x128xf32> to vector<1x144x128xf32>
    tpu.vector_store %arg7[%c0_56, %c0_57, %c0_58], %68 {strides = array<i32>} : memref<1x144x128xf32, #tpu.memory_space<vmem>>, vector<1x144x128xf32>,
    return
  }
  func.func @transform_0(%arg0: i32, %arg1: i32) -> (i32, i32, i32) {
    %c0_i32 = arith.constant 0 : i32
    %c0_i32_0 = arith.constant 0 : i32
    %c0_i32_1 = arith.constant 0 : i32
    return %arg0, %c0_i32, %c0_i32_0 : i32, i32, i32
  }
  func.func @transform_1(%arg0: i32, %arg1: i32) -> (i32, i32, i32) {
    %c0_i32 = arith.constant 0 : i32
    %c0_i32_0 = arith.constant 0 : i32
    %c0_i32_1 = arith.constant 0 : i32
    %c0_i32_2 = arith.constant 0 : i32
    return %c0_i32, %c0_i32_0, %c0_i32_1 : i32, i32, i32
  }
  func.func @transform_2(%arg0: i32, %arg1: i32) -> (i32, i32) {
    %c0_i32 = arith.constant 0 : i32
    %c0_i32_0 = arith.constant 0 : i32
    %c0_i32_1 = arith.constant 0 : i32
    return %c0_i32, %c0_i32_0 : i32, i32
  }
  func.func @transform_3(%arg0: i32, %arg1: i32) -> (i32, i32) {
    %c0_i32 = arith.constant 0 : i32
    %c0_i32_0 = arith.constant 0 : i32
    return %c0_i32, %arg1 : i32, i32
  }
  func.func @transform_4(%arg0: i32, %arg1: i32) -> (i32, i32) {
    %c0_i32 = arith.constant 0 : i32
    %c0_i32_0 = arith.constant 0 : i32
    return %c0_i32, %arg1 : i32, i32
  }
  func.func @transform_5(%arg0: i32, %arg1: i32) -> (i32, i32, i32) {
    %c0_i32 = arith.constant 0 : i32
    %c0_i32_0 = arith.constant 0 : i32
    return %arg0, %c0_i32, %arg1 : i32, i32, i32
  }
}

module attributes {stable_mosaic.version = 11 : i64} {
  func.func @_decode_clip_kernel(%arg0: i32, %arg1: memref<8x512xf32, #tpu.memory_space<vmem>>, %arg2: memref<4x512xf32, #tpu.memory_space<vmem>>) attributes {dimension_semantics = [#tpu.dimension_semantics<parallel>], iteration_bounds = array<i64: 5>, scalar_prefetch = 0 : i64, scratch_operands = 0 : i64, tpu.core_type = #tpu.core_type<tc>, window_params = [{transform_indices = @transform_0, window_bounds = array<i64: 8, 512>}, {transform_indices = @transform_1, window_bounds = array<i64: 4, 512>}]} {
    %c0 = arith.constant 0 : index
    %c0_0 = arith.constant 0 : index
    %0 = vector.load %arg1[%c0, %c0_0] : memref<8x512xf32, #tpu.memory_space<vmem>>, vector<2x512xf32>
    %c2 = arith.constant 2 : index
    %c0_1 = arith.constant 0 : index
    %1 = vector.load %arg1[%c2, %c0_1] : memref<8x512xf32, #tpu.memory_space<vmem>>, vector<2x512xf32>
    %c4 = arith.constant 4 : index
    %c0_2 = arith.constant 0 : index
    %2 = vector.load %arg1[%c4, %c0_2] : memref<8x512xf32, #tpu.memory_space<vmem>>, vector<2x512xf32>
    %c6 = arith.constant 6 : index
    %c0_3 = arith.constant 0 : index
    %3 = vector.load %arg1[%c6, %c0_3] : memref<8x512xf32, #tpu.memory_space<vmem>>, vector<2x512xf32>
    %4 = arith.subf %1, %0 : vector<2x512xf32>
    %cst = arith.constant 5.000000e-01 : f32
    %5 = vector.broadcast %cst : f32 to vector<2x512xf32>
    %6 = arith.mulf %5, %4 : vector<2x512xf32>
    %7 = arith.addf %0, %6 : vector<2x512xf32>
    %8 = arith.mulf %2, %4 : vector<2x512xf32>
    %9 = arith.addf %8, %7 : vector<2x512xf32>
    %10 = math.exp %3 : vector<2x512xf32>
    %11 = arith.mulf %10, %4 : vector<2x512xf32>
    %cst_4 = arith.constant 5.000000e-01 : f32
    %12 = vector.broadcast %cst_4 : f32 to vector<2x512xf32>
    %13 = arith.mulf %12, %11 : vector<2x512xf32>
    %14 = tpu.iota {dimensions = array<i32: 0>} : vector<2x512xi32>
    %c0_i32 = arith.constant 0 : i32
    %15 = vector.broadcast %c0_i32 : i32 to vector<2x512xi32>
    %16 = arith.cmpi eq, %14, %15 : vector<2x512xi32>
    %cst_5 = arith.constant 1.600000e+01 : f32
    %cst_6 = arith.constant 1.600000e+01 : f32
    %17 = vector.broadcast %cst_5 : f32 to vector<2x512xf32>
    %18 = vector.broadcast %cst_6 : f32 to vector<2x512xf32>
    %19 = arith.select %16, %17, %18 : vector<2x512xi1>, vector<2x512xf32>
    %20 = arith.subf %9, %13 : vector<2x512xf32>
    %cst_7 = arith.constant 0.000000e+00 : f32
    %21 = vector.broadcast %cst_7 : f32 to vector<2x512xf32>
    %22 = arith.maximumf %21, %20 : vector<2x512xf32>
    %23 = arith.minimumf %19, %22 : vector<2x512xf32>
    %c0_8 = arith.constant 0 : index
    %c0_9 = arith.constant 0 : index
    %24 = vector.load %arg2[%c0_8, %c0_9] : memref<4x512xf32, #tpu.memory_space<vmem>>, vector<2x512xf32>
    tpu.vector_store %arg2[%c0_8, %c0_9], %23 {strides = array<i32>} : memref<4x512xf32, #tpu.memory_space<vmem>>, vector<2x512xf32>,
    %25 = arith.addf %9, %13 : vector<2x512xf32>
    %cst_10 = arith.constant 0.000000e+00 : f32
    %26 = vector.broadcast %cst_10 : f32 to vector<2x512xf32>
    %27 = arith.maximumf %26, %25 : vector<2x512xf32>
    %28 = arith.minimumf %19, %27 : vector<2x512xf32>
    %c2_11 = arith.constant 2 : index
    %c0_12 = arith.constant 0 : index
    %29 = vector.load %arg2[%c2_11, %c0_12] : memref<4x512xf32, #tpu.memory_space<vmem>>, vector<2x512xf32>
    tpu.vector_store %arg2[%c2_11, %c0_12], %28 {strides = array<i32>} : memref<4x512xf32, #tpu.memory_space<vmem>>, vector<2x512xf32>,
    return
  }
  func.func @transform_0(%arg0: i32) -> (i32, i32) {
    %c0_i32 = arith.constant 0 : i32
    %c0_i32_0 = arith.constant 0 : i32
    return %c0_i32, %arg0 : i32, i32
  }
  func.func @transform_1(%arg0: i32) -> (i32, i32) {
    %c0_i32 = arith.constant 0 : i32
    %c0_i32_0 = arith.constant 0 : i32
    return %c0_i32, %arg0 : i32, i32
  }
}

module attributes {stable_mosaic.version = 11 : i64} {
  func.func @_mm_bias_kernel(%arg0: i32, %arg1: i32, %arg2: i32, %arg3: memref<32x512xbf16, #tpu.memory_space<vmem>>, %arg4: memref<512x128xbf16, #tpu.memory_space<vmem>>, %arg5: memref<1x128xf32, #tpu.memory_space<vmem>>, %arg6: memref<32x128xbf16, #tpu.memory_space<vmem>>, %arg7: memref<32x128xf32, #tpu.memory_space<vmem>>) attributes {dimension_semantics = [#tpu.dimension_semantics<parallel>, #tpu.dimension_semantics<parallel>, #tpu.dimension_semantics<arbitrary>], iteration_bounds = array<i64: 1, 1, 13>, scalar_prefetch = 0 : i64, scratch_operands = 1 : i64, tpu.core_type = #tpu.core_type<tc>, window_params = [{transform_indices = @transform_0, window_bounds = array<i64: 32, 512>}, {transform_indices = @transform_1, window_bounds = array<i64: 512, 128>}, {transform_indices = @transform_2, window_bounds = array<i64: 1, 128>}, {transform_indices = @transform_3, window_bounds = array<i64: 32, 128>}]} {
    %c0_i32 = arith.constant 0 : i32
    %0 = arith.cmpi eq, %arg2, %c0_i32 : i32
    %1 = arith.extui %0 : i1 to i32
    %c0_i32_0 = arith.constant 0 : i32
    %2 = arith.cmpi ne, %1, %c0_i32_0 : i32
    scf.if %2 {
      %cst_9 = arith.constant 0.000000e+00 : f32
      %12 = vector.broadcast %cst_9 : f32 to vector<32x128xf32>
      %c0_10 = arith.constant 0 : index
      %c0_11 = arith.constant 0 : index
      %13 = vector.load %arg7[%c0_10, %c0_11] : memref<32x128xf32, #tpu.memory_space<vmem>>, vector<32x128xf32>
      tpu.vector_store %arg7[%c0_10, %c0_11], %12 {strides = array<i32>} : memref<32x128xf32, #tpu.memory_space<vmem>>, vector<32x128xf32>,
    } else {
    }
    %c0 = arith.constant 0 : index
    %c0_1 = arith.constant 0 : index
    %3 = vector.load %arg7[%c0, %c0_1] : memref<32x128xf32, #tpu.memory_space<vmem>>, vector<32x128xf32>
    %c0_2 = arith.constant 0 : index
    %c0_3 = arith.constant 0 : index
    %4 = vector.load %arg3[%c0_2, %c0_3] : memref<32x512xbf16, #tpu.memory_space<vmem>>, vector<32x512xbf16>
    %c0_4 = arith.constant 0 : index
    %c0_5 = arith.constant 0 : index
    %5 = vector.load %arg4[%c0_4, %c0_5] : memref<512x128xbf16, #tpu.memory_space<vmem>>, vector<512x128xbf16>
    %cst = arith.constant dense<0.000000e+00> : vector<32x128xf32>
    %6 = tpu.matmul %4, %5, %cst {dimension_numbers = #tpu.dot_dimension_numbers<[1], [0], [0], [1], [0, 0, 1, 1], [], []>} : vector<32x512xbf16>, vector<512x128xbf16>, vector<32x128xf32> -> vector<32x128xf32>
    %7 = arith.addf %3, %6 : vector<32x128xf32>
    %c0_6 = arith.constant 0 : index
    %c0_7 = arith.constant 0 : index
    %8 = vector.load %arg7[%c0_6, %c0_7] : memref<32x128xf32, #tpu.memory_space<vmem>>, vector<32x128xf32>
    tpu.vector_store %arg7[%c0_6, %c0_7], %7 {strides = array<i32>} : memref<32x128xf32, #tpu.memory_space<vmem>>, vector<32x128xf32>,
    %c12_i32 = arith.constant 12 : i32
    %9 = arith.cmpi eq, %arg2, %c12_i32 : i32
    %10 = arith.extui %9 : i1 to i32
    %c0_i32_8 = arith.constant 0 : i32
    %11 = arith.cmpi ne, %10, %c0_i32_8 : i32
    scf.if %11 {
      %c0_9 = arith.constant 0 : index
      %c0_10 = arith.constant 0 : index
      %12 = vector.load %arg7[%c0_9, %c0_10] : memref<32x128xf32, #tpu.memory_space<vmem>>, vector<32x128xf32>
      %c0_11 = arith.constant 0 : index
      %c0_12 = arith.constant 0 : index
      %13 = vector.load %arg5[%c0_11, %c0_12] : memref<1x128xf32, #tpu.memory_space<vmem>>, vector<1x128xf32>
      %14 = vector.broadcast %13 : vector<1x128xf32> to vector<32x128xf32>
      %15 = arith.addf %12, %14 : vector<32x128xf32>
      %cst_13 = arith.constant 0.000000e+00 : f32
      %16 = vector.broadcast %cst_13 : f32 to vector<32x128xf32>
      %17 = arith.maximumf %15, %16 : vector<32x128xf32>
      %18 = arith.truncf %17 : vector<32x128xf32> to vector<32x128xbf16>
      %c0_14 = arith.constant 0 : index
      %c0_15 = arith.constant 0 : index
      %19 = vector.load %arg6[%c0_14, %c0_15] : memref<32x128xbf16, #tpu.memory_space<vmem>>, vector<32x128xbf16>
      tpu.vector_store %arg6[%c0_14, %c0_15], %18 {strides = array<i32>} : memref<32x128xbf16, #tpu.memory_space<vmem>>, vector<32x128xbf16>,
    } else {
    }
    return
  }
  func.func @transform_0(%arg0: i32, %arg1: i32, %arg2: i32) -> (i32, i32) {
    %c0_i32 = arith.constant 0 : i32
    return %arg0, %arg2 : i32, i32
  }
  func.func @transform_1(%arg0: i32, %arg1: i32, %arg2: i32) -> (i32, i32) {
    %c0_i32 = arith.constant 0 : i32
    return %arg2, %arg1 : i32, i32
  }
  func.func @transform_2(%arg0: i32, %arg1: i32, %arg2: i32) -> (i32, i32) {
    %c0_i32 = arith.constant 0 : i32
    %c0_i32_0 = arith.constant 0 : i32
    return %c0_i32, %arg1 : i32, i32
  }
  func.func @transform_3(%arg0: i32, %arg1: i32, %arg2: i32) -> (i32, i32) {
    %c0_i32 = arith.constant 0 : i32
    return %arg0, %arg1 : i32, i32
  }
}

module attributes {stable_mosaic.version = 11 : i64} {
  func.func @_mm_bias_kernel(%arg0: i32, %arg1: i32, %arg2: i32, %arg3: memref<32x128xbf16, #tpu.memory_space<vmem>>, %arg4: memref<128x128xbf16, #tpu.memory_space<vmem>>, %arg5: memref<1x128xf32, #tpu.memory_space<vmem>>, %arg6: memref<32x128xf32, #tpu.memory_space<vmem>>, %arg7: memref<32x128xf32, #tpu.memory_space<vmem>>) attributes {dimension_semantics = [#tpu.dimension_semantics<parallel>, #tpu.dimension_semantics<parallel>, #tpu.dimension_semantics<arbitrary>], iteration_bounds = array<i64: 1, 1, 1>, scalar_prefetch = 0 : i64, scratch_operands = 1 : i64, tpu.core_type = #tpu.core_type<tc>, window_params = [{transform_indices = @transform_0, window_bounds = array<i64: 32, 128>}, {transform_indices = @transform_1, window_bounds = array<i64: 128, 128>}, {transform_indices = @transform_2, window_bounds = array<i64: 1, 128>}, {transform_indices = @transform_3, window_bounds = array<i64: 32, 128>}]} {
    %c0_i32 = arith.constant 0 : i32
    %0 = arith.cmpi eq, %arg2, %c0_i32 : i32
    %1 = arith.extui %0 : i1 to i32
    %c0_i32_0 = arith.constant 0 : i32
    %2 = arith.cmpi ne, %1, %c0_i32_0 : i32
    scf.if %2 {
      %cst_10 = arith.constant 0.000000e+00 : f32
      %12 = vector.broadcast %cst_10 : f32 to vector<32x128xf32>
      %c0_11 = arith.constant 0 : index
      %c0_12 = arith.constant 0 : index
      %13 = vector.load %arg7[%c0_11, %c0_12] : memref<32x128xf32, #tpu.memory_space<vmem>>, vector<32x128xf32>
      tpu.vector_store %arg7[%c0_11, %c0_12], %12 {strides = array<i32>} : memref<32x128xf32, #tpu.memory_space<vmem>>, vector<32x128xf32>,
    } else {
    }
    %c0 = arith.constant 0 : index
    %c0_1 = arith.constant 0 : index
    %3 = vector.load %arg7[%c0, %c0_1] : memref<32x128xf32, #tpu.memory_space<vmem>>, vector<32x128xf32>
    %c0_2 = arith.constant 0 : index
    %c0_3 = arith.constant 0 : index
    %4 = vector.load %arg3[%c0_2, %c0_3] : memref<32x128xbf16, #tpu.memory_space<vmem>>, vector<32x128xbf16>
    %c0_4 = arith.constant 0 : index
    %c0_5 = arith.constant 0 : index
    %5 = vector.load %arg4[%c0_4, %c0_5] : memref<128x128xbf16, #tpu.memory_space<vmem>>, vector<128x128xbf16>
    %cst = arith.constant dense<0.000000e+00> : vector<32x128xf32>
    %6 = tpu.matmul %4, %5, %cst {dimension_numbers = #tpu.dot_dimension_numbers<[1], [0], [0], [1], [0, 0, 1, 1], [], []>} : vector<32x128xbf16>, vector<128x128xbf16>, vector<32x128xf32> -> vector<32x128xf32>
    %7 = arith.addf %3, %6 : vector<32x128xf32>
    %c0_6 = arith.constant 0 : index
    %c0_7 = arith.constant 0 : index
    %8 = vector.load %arg7[%c0_6, %c0_7] : memref<32x128xf32, #tpu.memory_space<vmem>>, vector<32x128xf32>
    tpu.vector_store %arg7[%c0_6, %c0_7], %7 {strides = array<i32>} : memref<32x128xf32, #tpu.memory_space<vmem>>, vector<32x128xf32>,
    %c0_i32_8 = arith.constant 0 : i32
    %9 = arith.cmpi eq, %arg2, %c0_i32_8 : i32
    %10 = arith.extui %9 : i1 to i32
    %c0_i32_9 = arith.constant 0 : i32
    %11 = arith.cmpi ne, %10, %c0_i32_9 : i32
    scf.if %11 {
      %c0_10 = arith.constant 0 : index
      %c0_11 = arith.constant 0 : index
      %12 = vector.load %arg7[%c0_10, %c0_11] : memref<32x128xf32, #tpu.memory_space<vmem>>, vector<32x128xf32>
      %c0_12 = arith.constant 0 : index
      %c0_13 = arith.constant 0 : index
      %13 = vector.load %arg5[%c0_12, %c0_13] : memref<1x128xf32, #tpu.memory_space<vmem>>, vector<1x128xf32>
      %14 = vector.broadcast %13 : vector<1x128xf32> to vector<32x128xf32>
      %15 = arith.addf %12, %14 : vector<32x128xf32>
      %c0_14 = arith.constant 0 : index
      %c0_15 = arith.constant 0 : index
      %16 = vector.load %arg6[%c0_14, %c0_15] : memref<32x128xf32, #tpu.memory_space<vmem>>, vector<32x128xf32>
      tpu.vector_store %arg6[%c0_14, %c0_15], %15 {strides = array<i32>} : memref<32x128xf32, #tpu.memory_space<vmem>>, vector<32x128xf32>,
    } else {
    }
    return
  }
  func.func @transform_0(%arg0: i32, %arg1: i32, %arg2: i32) -> (i32, i32) {
    %c0_i32 = arith.constant 0 : i32
    return %arg0, %arg2 : i32, i32
  }
  func.func @transform_1(%arg0: i32, %arg1: i32, %arg2: i32) -> (i32, i32) {
    %c0_i32 = arith.constant 0 : i32
    return %arg2, %arg1 : i32, i32
  }
  func.func @transform_2(%arg0: i32, %arg1: i32, %arg2: i32) -> (i32, i32) {
    %c0_i32 = arith.constant 0 : i32
    %c0_i32_0 = arith.constant 0 : i32
    return %c0_i32, %arg1 : i32, i32
  }
  func.func @transform_3(%arg0: i32, %arg1: i32, %arg2: i32) -> (i32, i32) {
    %c0_i32 = arith.constant 0 : i32
    return %arg0, %arg1 : i32, i32
  }
}

</mosaic_0001>

<llo_original>
// kernel: faster_rcnn_forward.5
$region0: #{faster_rcnn_forward.5}
  #allocation0 [shape = 'u32[]', space=smem, size = 0x4, offset = 0x4, fixed_abs, tag = 'smem constant byte address 0x4 - core index']
  #allocation1 [shape = 'u32[144,128]{1,0:T(1,128)}', space=vmem, size = 0x12000, scoped, tag = 'internal scratch']
  %s0 = inlined_call_operand.vmem [shape: bf16[2,188,4], index: 0, kind: input, shape index: {}]
  %s1 = inlined_call_operand.vmem [shape: bf16[9,4,128], index: 1, kind: input, shape index: {}]
  %s2 = inlined_call_operand.hbm [shape: f32[1,128], index: 2, kind: input, shape index: {}]
  %s3 = inlined_call_operand.vmem [shape: bf16[2,144,128], index: 3, kind: output, shape index: {}]
  %s4 = sld [smem:[#allocation0]]
  $region49: #{faster_rcnn_forward.5} parent=0
    _
  %s6 = ssub.s32 1, %s4
  %s7 = scalar_select 0, %s6, %s4
  $region1: #{faster_rcnn_forward.5} parent=0
    #allocation2 [shape = 'u8[512]{0}', space=vmem, size = 0x400, scoped, tag = 'input window, operand 2, single buffered']
    #allocation3 [shape = 's32[2]{0}', space=sflag, size = 0x8, scoped, tag = 'scoped memory for faster_rcnn_forward.5']
    %8 = vsyncpa [#allocation3], 0
    loop: start=0, step=1, limit=4
    $region2: #{faster_rcnn_forward.5} parent=1 // loop_pre_header
      _
    $region3: #{faster_rcnn_forward.5} parent=1 // loop_header
      %s10 = sphi 0, %s14
      %p11 = scmp.ge.s32.totalorder %s10, 4
      %s17 = sphi 0, %s29
      %s18 = sphi 0, %s25
      %s19 = sphi 0, %s17
      %s20 = sphi 0, %s18
      %s21 = sphi 0, %s19
      %s22 = sphi 0, %s20
      %s32 = sphi 0, %s34
      %s35 = sphi 0, %s32
      %s36 = sphi 0, %s35
      %s52 = sphi 0, %s36
      %s58 = sphi 0, %s60
      %s61 = sphi 0, %s58
      %s62 = sphi 0, %s61
      %s78 = sphi 0, %s62
      %s84 = sphi 0, %s86
      %s87 = sphi 0, %s84
      %s88 = sphi 0, %s87
      %s104 = sphi 0, %s88
      %s112 = sphi 0, %s114
      %s115 = sphi 0, %s112
      %s116 = sphi 0, %s115
      %s132 = sphi 0, %s116
    $region4: #{faster_rcnn_forward.5} parent=1 // loop_header_branch
      %13 = sbr.rel (%p11) target = $region8
    $region5: #{faster_rcnn_forward.5} parent=1 // loop_body
      %s15 = ssub.s32 %s10, 1
      %s16 = ssub.s32 %s10, 2
      %s23 = sadd.s32 1, %s18
      %p24 = scmp.ge.s32.totalorder %s23, 1
      %s25 = scalar_select %p24, 0, %s23
      %s26 = sadd.s32 1, %s17
      %s27 = scalar_select %p24, %s26, %s17
      %p28 = scmp.ge.s32.totalorder %s27, 2
      %s29 = scalar_select %p28, 0, %s27
      %s30 = ssub.s32 %s17, %s29
      %p31 = scmp.eq.s32.totalorder %s30, 0
      %s33 = sadd.s32 %s32, 1
      %s34 = scalar_select %p31, %s32, %s33
      %p37 = pneg %p31
      %p38 = scmp.eq.s32.totalorder %s10, 1
      %p39 = por %p37, %p38
      %p40 = scmp.ne.s32.totalorder %s32, %s35
      %p41 = scmp.eq.s32.totalorder %s10, 0
      %p42 = por %p40, %p41
      %p43 = scmp.ne.s32.totalorder %s32, %s35
      %p44 = scmp.eq.s32.totalorder %s15, 1
      %p45 = por %p43, %p44
      %p46 = scmp.ne.s32.totalorder %s35, %s36
      %p47 = scmp.eq.s32.totalorder %s15, 0
      %p48 = por %p46, %p47
      %p49 = scmp.ne.s32.totalorder %s35, %s36
      %p50 = scmp.eq.s32.totalorder %s16, 1
      %p51 = por %p49, %p50
      %p53 = scmp.ne.s32.totalorder %s36, %s52
      %p54 = scmp.eq.s32.totalorder %s16, 0
      %p55 = por %p53, %p54
      %s56 = ssub.s32 %s18, %s25
      %p57 = scmp.eq.s32.totalorder %s56, 0
      %s59 = sadd.s32 %s58, 1
      %s60 = scalar_select %p57, %s58, %s59
      %p63 = pneg %p57
      %p64 = scmp.eq.s32.totalorder %s10, 1
      %p65 = por %p63, %p64
      %p66 = scmp.ne.s32.totalorder %s58, %s61
      %p67 = scmp.eq.s32.totalorder %s10, 0
      %p68 = por %p66, %p67
      %p69 = scmp.ne.s32.totalorder %s58, %s61
      %p70 = scmp.eq.s32.totalorder %s15, 1
      %p71 = por %p69, %p70
      %p72 = scmp.ne.s32.totalorder %s61, %s62
      %p73 = scmp.eq.s32.totalorder %s15, 0
      %p74 = por %p72, %p73
      %p75 = scmp.ne.s32.totalorder %s61, %s62
      %p76 = scmp.eq.s32.totalorder %s16, 1
      %p77 = por %p75, %p76
      %p79 = scmp.ne.s32.totalorder %s62, %s78
      %p80 = scmp.eq.s32.totalorder %s16, 0
      %p81 = por %p79, %p80
      %s82 = ssub.s32 %s18, %s25
      %p83 = scmp.eq.s32.totalorder %s82, 0
      %s85 = sadd.s32 %s84, 1
      %s86 = scalar_select %p83, %s84, %s85
      %p89 = pneg %p83
      %p90 = scmp.eq.s32.totalorder %s10, 1
      %p91 = por %p89, %p90
      %p92 = scmp.ne.s32.totalorder %s84, %s87
      %p93 = scmp.eq.s32.totalorder %s10, 0
      %p94 = por %p92, %p93
      %p95 = scmp.ne.s32.totalorder %s84, %s87
      %p96 = scmp.eq.s32.totalorder %s15, 1
      %p97 = por %p95, %p96
      %p98 = scmp.ne.s32.totalorder %s87, %s88
      %p99 = scmp.eq.s32.totalorder %s15, 0
      %p100 = por %p98, %p99
      %p101 = scmp.ne.s32.totalorder %s87, %s88
      %p102 = scmp.eq.s32.totalorder %s16, 1
      %p103 = por %p101, %p102
      %p105 = scmp.ne.s32.totalorder %s88, %s104
      %p106 = scmp.eq.s32.totalorder %s16, 0
      %p107 = por %p105, %p106
      %s108 = ssub.s32 %s17, %s29
      %s109 = ssub.s32 %s18, %s25
      %s110 = sor.u32 %s108, %s109
      %p111 = scmp.eq.s32.totalorder %s110, 0
      %s113 = sadd.s32 %s112, 1
      %s114 = scalar_select %p111, %s112, %s113
      %p117 = pneg %p111
      %p118 = scmp.eq.s32.totalorder %s10, 1
      %p119 = por %p117, %p118
      %p120 = scmp.ne.s32.totalorder %s112, %s115
      %p121 = scmp.eq.s32.totalorder %s10, 0
      %p122 = por %p120, %p121
      %p123 = scmp.ne.s32.totalorder %s112, %s115
      %p124 = scmp.eq.s32.totalorder %s15, 1
      %p125 = por %p123, %p124
      %p126 = scmp.ne.s32.totalorder %s115, %s116
      %p127 = scmp.eq.s32.totalorder %s15, 0
      %p128 = por %p126, %p127
      %p129 = scmp.ne.s32.totalorder %s115, %s116
      %p130 = scmp.eq.s32.totalorder %s16, 1
      %p131 = por %p129, %p130
      %p133 = scmp.ne.s32.totalorder %s116, %s132
      %p134 = scmp.eq.s32.totalorder %s16, 0
      %p135 = por %p133, %p134
      %p136 = scmp.le.s32.totalorder 1, %s10
      %p137 = scmp.lt.s32.totalorder %s10, 3
      %p138 = pnand %p136, %p137
      %p139 = pneg %p138
      // Predicated region
      $region9: #{faster_rcnn_forward.5} parent=5 // pred_check
        _
      $region10: #{faster_rcnn_forward.5} parent=5 // pred_check_branch
        %141 = sbr.rel (%p138) target = $region12
      $region11: #{faster_rcnn_forward.5} parent=5 // pred_region
        %s142 = ssub.s32 %s10, 1
        // Predicated region
        $region13: #{faster_rcnn_forward.5} parent=11 // pred_check
          %p143 = pneg %p74
        $region14: #{faster_rcnn_forward.5} parent=11 // pred_check_branch
          %145 = sbr.rel (%p143) target = $region16
        $region15: #{faster_rcnn_forward.5} parent=11 // pred_region
          %p146 = scmp.lt.s32.totalorder %s20, 0
          %s147 = scalar_select %p146, %s20, 0
          %s148 = smul.addr %s147, 2
          %s149 = scalar_lea.vmem %s1, %s148
        $region16: #{faster_rcnn_forward.5} parent=11 // pred_fallthru
          _
        // Predicated region
        $region17: #{faster_rcnn_forward.5} parent=11 // pred_check
          %p150 = pneg %p100
        $region18: #{faster_rcnn_forward.5} parent=11 // pred_check_branch
          %152 = sbr.rel (%p150) target = $region20
        $region19: #{faster_rcnn_forward.5} parent=11 // pred_region
          %s154 = ssub.s32 16, 16
          %155 = vsyncadd [#allocation3], %s154
          %s156 = smul.addr %s20, 16
          %s157 = scalar_lea.hbm %s2, %s156
          %s159 = sshll.u32 [#allocation2], 4
          %s160 = int_to_ptr.vmem [resolvable:$true] %s159
          %162 = dma.hbm_to_vmem [thread:$0]  %s157, 16, %s160, [#allocation3]
        $region20: #{faster_rcnn_forward.5} parent=11 // pred_fallthru
          _
      $region12: #{faster_rcnn_forward.5} parent=5 // pred_fallthru
        _
      %p163 = scmp.lt.s32.totalorder %s10, 2
      // Predicated region
      $region21: #{faster_rcnn_forward.5} parent=5 // pred_check
        %p164 = pneg %p163
      $region22: #{faster_rcnn_forward.5} parent=5 // pred_check_branch
        %166 = sbr.rel (%p164) target = $region24
      $region23: #{faster_rcnn_forward.5} parent=5 // pred_region
        // Predicated region
        $region25: #{faster_rcnn_forward.5} parent=23 // pred_check
          %p167 = pneg %p42
        $region26: #{faster_rcnn_forward.5} parent=23 // pred_check_branch
          %169 = sbr.rel (%p167) target = $region28
        $region27: #{faster_rcnn_forward.5} parent=23 // pred_region
          %p170 = scmp.lt.s32.totalorder %s17, 1
          %s171 = scalar_select %p170, %s17, 1
          %s172 = smul.addr %s171, 24
          %s173 = smul.addr %s172, 4
          %s174 = scalar_lea.vmem %s0, %s173
        $region28: #{faster_rcnn_forward.5} parent=23 // pred_fallthru
          _
      $region24: #{faster_rcnn_forward.5} parent=5 // pred_fallthru
        _
      %p175 = scmp.le.s32.totalorder 1, %s10
      %p176 = scmp.lt.s32.totalorder %s10, 3
      %p177 = pnand %p175, %p176
      %p178 = pneg %p177
      // Predicated region
      $region29: #{faster_rcnn_forward.5} parent=5 // pred_check
        _
      $region30: #{faster_rcnn_forward.5} parent=5 // pred_check_branch
        %180 = sbr.rel (%p177) target = $region32
      $region31: #{faster_rcnn_forward.5} parent=5 // pred_region
        %s181 = ssub.s32 %s10, 1
        // Predicated region
        $region33: #{faster_rcnn_forward.5} parent=31 // pred_check
          %p182 = pneg %p100
        $region34: #{faster_rcnn_forward.5} parent=31 // pred_check_branch
          %184 = sbr.rel (%p182) target = $region36
        $region35: #{faster_rcnn_forward.5} parent=31 // pred_region
          %185 = dma.done [#allocation3], 16
        $region36: #{faster_rcnn_forward.5} parent=31 // pred_fallthru
          _
        %p186 = scmp.lt.s32.totalorder %s19, 1
        %s187 = scalar_select %p186, %s19, 1
        %s188 = smul.addr %s187, 24
        %s189 = smul.addr %s188, 4
        %s190 = scalar_lea.vmem %s0, %s189
        %p191 = pneg %p48
        %p192 = pneg %p45
        %p193 = scmp.lt.s32.totalorder %s20, 0
        %s194 = scalar_select %p193, %s20, 0
        %s195 = smul.addr %s194, 2
        %s196 = scalar_lea.vmem %s1, %s195
        %p197 = pneg %p74
        %p198 = pneg %p71
        %p199 = pneg %p100
        %p200 = pneg %p97
        %p201 = pneg %p128
        %p202 = pneg %p125
        %p203 = scmp.lt.s32.totalorder %s19, 1
        %s204 = scalar_select %p203, %s19, 1
        %p205 = scmp.lt.s32.totalorder %s20, 0
        %s206 = scalar_select %p205, %s20, 0
        %s207 = smul.addr %s204, 18
        %s208 = sadd.s32 %s206, %s207
        %s209 = smul.addr %s208, 4
        %s210 = scalar_lea.vmem %s3, %s209
        %p211 = scmp.lt.s32.totalorder %s19, 1
        %s212 = scalar_select %p211, %s19, 1
        %s213 = smul.addr %s212, 24
        %s214 = smul.addr %s213, 4
        %s215 = scalar_lea.vmem %s0, %s214
        %p216 = scmp.lt.s32.totalorder %s20, 0
        %s217 = scalar_select %p216, %s20, 0
        %s218 = smul.addr %s217, 2
        %s219 = scalar_lea.vmem %s1, %s218
        %p220 = scmp.lt.s32.totalorder %s19, 1
        %s221 = scalar_select %p220, %s19, 1
        %p222 = scmp.lt.s32.totalorder %s20, 0
        %s223 = scalar_select %p222, %s20, 0
        %s224 = smul.addr %s221, 18
        %s225 = sadd.s32 %s223, %s224
        %s226 = smul.addr %s225, 4
        %s227 = scalar_lea.vmem %s3, %s226
        %v229 = vld [vmem:[%s215] sm:$0xf]
        %v230 = vld [vmem:[%s215 + $0x4] sm:$0xf]
        %v231 = vld [vmem:[%s215 + $0x8] sm:$0xf]
        %v232 = vld [vmem:[%s215 + $0xc] sm:$0xf]
        %v233 = vld [vmem:[%s215 + $0x10] sm:$0xf]
        %v234 = vld [vmem:[%s215 + $0x14] sm:$0xf]
        %v235 = vld [vmem:[%s215 + $0x18] sm:$0xf]
        %v236 = vld [vmem:[%s215 + $0x1c] sm:$0xf]
        %v237 = vld [vmem:[%s215 + $0x20] sm:$0xf]
        %v238 = vld [vmem:[%s215 + $0x24] sm:$0xf]
        %v239 = vld [vmem:[%s215 + $0x28] sm:$0xf]
        %v240 = vld [vmem:[%s215 + $0x2c] sm:$0xf]
        %v241 = vld [vmem:[%s215 + $0x30] sm:$0xf]
        %v242 = vld [vmem:[%s215 + $0x34] sm:$0xf]
        %v243 = vld [vmem:[%s215 + $0x38] sm:$0xf]
        %v244 = vld [vmem:[%s215 + $0x3c] sm:$0xf]
        %v245 = vld [vmem:[%s215 + $0x40] sm:$0xf]
        %v246 = vld [vmem:[%s215 + $0x44] sm:$0xf]
        %v247 = vld [vmem:[%s219] sm:$0x3]
        %v248 = vld [vmem:[%s215 + $0x48] sm:$0x1]
        %s249 = scalar_lea.vmem %s219, 2
        %v250 = vld [vmem:[%s249] sm:$0x3]
        %v270 = vunpack.c.l.b16 %v229
        %v271 = vunpack.c.l.b16 %v230
        %v272 = vunpack.c.l.b16 %v231
        %v273 = vunpack.c.l.b16 %v232
        %v274 = vunpack.c.l.b16 %v233
        %v275 = vunpack.c.l.b16 %v234
        %v276 = vunpack.c.l.b16 %v235
        %v277 = vunpack.c.l.b16 %v236
        %v278 = vunpack.c.l.b16 %v237
        %v279 = vunpack.c.l.b16 %v238
        %v280 = vunpack.c.l.b16 %v239
        %v281 = vunpack.c.l.b16 %v240
        %v282 = vunpack.c.l.b16 %v241
        %v283 = vunpack.c.l.b16 %v242
        %v284 = vunpack.c.l.b16 %v243
        %v285 = vunpack.c.l.b16 %v244
        %v286 = vunpack.c.l.b16 %v245
        %v287 = vunpack.c.l.b16 %v246
        %v288 = vunpack.c.l.b16 %v248
        %v289 = vpack.c.b16 %v271, %v270
        %v290 = vpack.c.b16 %v273, %v272
        %v291 = vpack.c.b16 %v275, %v274
        %v292 = vpack.c.b16 %v277, %v276
        %v293 = vpack.c.b16 %v279, %v278
        %v294 = vpack.c.b16 %v281, %v280
        %v295 = vpack.c.b16 %v283, %v282
        %v296 = vpack.c.b16 %v285, %v284
        %v297 = vpack.c.b16 %v287, %v286
        %v298 = vpack.c.b16 %v288, %v288
        %vm299 = vsmask.f32 7424
        %v301 = vshrl.u32 %v289, 16
        %v303 = vshll.u32 %v289, 16
        %v305 = vrot.slane %v303, 1
        %v306 = vor.u32 %v301, %v305
        %v308 = vshll.u32 %v290, 16
        %v310 = vrot.slane %v308, 1
        %v311 = vsel %vm299, %v306, %v310
        %v312 = vshrl.u32 %v290, 16
        %v314 = vor.u32 %v312, %v310
        %v316 = vshll.u32 %v291, 16
        %v318 = vrot.slane %v316, 1
        %v319 = vsel %vm299, %v314, %v318
        %v320 = vshrl.u32 %v291, 16
        %v322 = vor.u32 %v320, %v318
        %v324 = vshll.u32 %v292, 16
        %v326 = vrot.slane %v324, 1
        %v327 = vsel %vm299, %v322, %v326
        %v328 = vshrl.u32 %v292, 16
        %v330 = vor.u32 %v328, %v326
        %v332 = vshll.u32 %v293, 16
        %v334 = vrot.slane %v332, 1
        %v335 = vsel %vm299, %v330, %v334
        %v336 = vshrl.u32 %v293, 16
        %v338 = vor.u32 %v336, %v334
        %v340 = vshll.u32 %v294, 16
        %v342 = vrot.slane %v340, 1
        %v343 = vsel %vm299, %v338, %v342
        %v344 = vshrl.u32 %v294, 16
        %v346 = vor.u32 %v344, %v342
        %v348 = vshll.u32 %v295, 16
        %v350 = vrot.slane %v348, 1
        %v351 = vsel %vm299, %v346, %v350
        %v352 = vshrl.u32 %v295, 16
        %v354 = vor.u32 %v352, %v350
        %v356 = vshll.u32 %v296, 16
        %v358 = vrot.slane %v356, 1
        %v359 = vsel %vm299, %v354, %v358
        %v360 = vshrl.u32 %v296, 16
        %v362 = vor.u32 %v360, %v358
        %v364 = vshll.u32 %v297, 16
        %v366 = vrot.slane %v364, 1
        %v367 = vsel %vm299, %v362, %v366
        %v368 = vshrl.u32 %v297, 16
        %v370 = vor.u32 %v368, %v366
        %v372 = vshll.u32 %v298, 16
        %v374 = vrot.slane %v372, 1
        %v375 = vsel %vm299, %v370, %v374
        %vm376 = vcmask 31744
        %v378 = vsel %vm376, %v311, 0
        %v381 = vsel %vm376, %v319, 0
        %v384 = vsel %vm376, %v327, 0
        %v387 = vsel %vm376, %v335, 0
        %v390 = vsel %vm376, %v343, 0
        %v393 = vsel %vm376, %v351, 0
        %v396 = vsel %vm376, %v359, 0
        %v399 = vsel %vm376, %v367, 0
        %v402 = vsel %vm376, %v375, 0
        %vm404 = vcmask 1041408
        %v406 = vsel %vm404, %v250, 0
        %408 = vmatprep.subr.bf16.mxu0 0
        %409 = vmatpush1.bf16.msra.mxu0 %v406
        %410 = vmatprep.subr.bf16.mxu0 0
        %411 = vmatpush1.bf16.msra.mxu0 0
        %412 = vmatprep.subr.bf16.mxu0 0
        %413 = vmatpush1.bf16.msra.mxu0 0
        %414 = vmatprep.subr.bf16.mxu0 0
        %415 = vmatpush1.bf16.msra.mxu0 0
        %416 = vmatprep.subr.bf16.mxu0 0
        %417 = vmatpush1.bf16.msra.mxu0 0
        %418 = vmatprep.subr.bf16.mxu0 0
        %419 = vmatpush1.bf16.msra.mxu0 0
        %420 = vmatprep.subr.bf16.mxu0 0
        %421 = vmatpush1.bf16.msra.mxu0 0
        %422 = vmatprep.subr.bf16.mxu0 0
        %423 = vmatpush1.bf16.msra.mxu0 0
        %424 = vmatprep.subr.bf16.mxu0 0
        %425 = vmatpush1.bf16.msra.mxu0 0
        %426 = vmatprep.subr.bf16.mxu0 0
        %427 = vmatpush1.bf16.msra.mxu0 0
        %428 = vmatprep.subr.bf16.mxu0 0
        %429 = vmatpush1.bf16.msra.mxu0 0
        %430 = vmatprep.subr.bf16.mxu0 0
        %431 = vmatpush1.bf16.msra.mxu0 0
        %432 = vmatprep.subr.bf16.mxu0 0
        %433 = vmatpush1.bf16.msra.mxu0 0
        %434 = vmatprep.subr.bf16.mxu0 0
        %435 = vmatpush1.bf16.msra.mxu0 0
        %436 = vmatprep.subr.bf16.mxu0 0
        %437 = vmatpush1.bf16.msra.mxu0 0
        %438 = vmatprep.subr.bf16.mxu0 0
        %439 = vmatpush1.bf16.msra.mxu0 0
        %440 = vmatprep.mubr.bf16.mxu0 0
        %441 = vmatmul.mubr.bf16.gmra.mrb[0].mxu0 %v378
        %v442 = vpop.f32.mrb[0].mxu0
        %v443 = vadd.f32 0.0, %v442
        %v444 = vpop.f32.mrb[0].mxu0
        %v445 = vpop.f32.mrb[0].mxu0
        %v446 = vadd.f32 0.0, %v445
        %v447 = vpop.f32.mrb[0].mxu0
        %448 = vmatprep.mubr.bf16.mxu0 0
        %449 = vmatmul.mubr.bf16.gmra.mrb[0].mxu0 %v381
        %v450 = vpop.f32.mrb[0].mxu0
        %v451 = vadd.f32 0.0, %v450
        %v452 = vpop.f32.mrb[0].mxu0
        %v453 = vpop.f32.mrb[0].mxu0
        %v454 = vadd.f32 0.0, %v453
        %v455 = vpop.f32.mrb[0].mxu0
        %456 = vmatprep.mubr.bf16.mxu0 0
        %457 = vmatmul.mubr.bf16.gmra.mrb[0].mxu0 %v384
        %v458 = vpop.f32.mrb[0].mxu0
        %v459 = vadd.f32 0.0, %v458
        %v460 = vpop.f32.mrb[0].mxu0
        %v461 = vpop.f32.mrb[0].mxu0
        %v462 = vadd.f32 0.0, %v461
        %v463 = vpop.f32.mrb[0].mxu0
        %464 = vmatprep.mubr.bf16.mxu0 0
        %465 = vmatmul.mubr.bf16.gmra.mrb[0].mxu0 %v387
        %v466 = vpop.f32.mrb[0].mxu0
        %v467 = vadd.f32 0.0, %v466
        %v468 = vpop.f32.mrb[0].mxu0
        %v469 = vpop.f32.mrb[0].mxu0
        %v470 = vadd.f32 0.0, %v469
        %v471 = vpop.f32.mrb[0].mxu0
        %472 = vmatprep.mubr.bf16.mxu0 0
        %473 = vmatmul.mubr.bf16.gmra.mrb[0].mxu0 %v390
        %v474 = vpop.f32.mrb[0].mxu0
        %v475 = vadd.f32 0.0, %v474
        %v476 = vpop.f32.mrb[0].mxu0
        %v477 = vpop.f32.mrb[0].mxu0
        %v478 = vadd.f32 0.0, %v477
        %v479 = vpop.f32.mrb[0].mxu0
        %480 = vmatprep.mubr.bf16.mxu0 0
        %481 = vmatmul.mubr.bf16.gmra.mrb[0].mxu0 %v393
        %v482 = vpop.f32.mrb[0].mxu0
        %v483 = vadd.f32 0.0, %v482
        %v484 = vpop.f32.mrb[0].mxu0
        %v485 = vpop.f32.mrb[0].mxu0
        %v486 = vadd.f32 0.0, %v485
        %v487 = vpop.f32.mrb[0].mxu0
        %488 = vmatprep.mubr.bf16.mxu0 0
        %489 = vmatmul.mubr.bf16.gmra.mrb[0].mxu0 %v396
        %v490 = vpop.f32.mrb[0].mxu0
        %v491 = vadd.f32 0.0, %v490
        %v492 = vpop.f32.mrb[0].mxu0
        %v493 = vpop.f32.mrb[0].mxu0
        %v494 = vadd.f32 0.0, %v493
        %v495 = vpop.f32.mrb[0].mxu0
        %496 = vmatprep.mubr.bf16.mxu0 0
        %497 = vmatmul.mubr.bf16.gmra.mrb[0].mxu0 %v399
        %v498 = vpop.f32.mrb[0].mxu0
        %v499 = vadd.f32 0.0, %v498
        %v500 = vpop.f32.mrb[0].mxu0
        %v501 = vpop.f32.mrb[0].mxu0
        %v502 = vadd.f32 0.0, %v501
        %v503 = vpop.f32.mrb[0].mxu0
        %504 = vmatprep.mubr.bf16.mxu0 0
        %505 = vmatmul.mubr.bf16.gmra.mrb[0].mxu0 %v402
        %v506 = vpop.f32.mrb[0].mxu0
        %v507 = vadd.f32 0.0, %v506
        %v508 = vpop.f32.mrb[0].mxu0
        %v509 = vpop.f32.mrb[0].mxu0
        %v510 = vadd.f32 0.0, %v509
        %v511 = vpop.f32.mrb[0].mxu0
        %512 = vdwg.mxu0
        %v513 = vsel %vm376, %v289, 0
        %v515 = vsel %vm376, %v290, 0
        %v517 = vsel %vm376, %v291, 0
        %v519 = vsel %vm376, %v292, 0
        %v521 = vsel %vm376, %v293, 0
        %v523 = vsel %vm376, %v294, 0
        %v525 = vsel %vm376, %v295, 0
        %v527 = vsel %vm376, %v296, 0
        %v529 = vsel %vm376, %v297, 0
        %v532 = vsel %vm404, %v247, 0
        %534 = vmatprep.subr.bf16.mxu0 0
        %535 = vmatpush1.bf16.msra.mxu0 %v532
        %536 = vmatprep.subr.bf16.mxu0 0
        %537 = vmatpush1.bf16.msra.mxu0 0
        %538 = vmatprep.subr.bf16.mxu0 0
        %539 = vmatpush1.bf16.msra.mxu0 0
        %540 = vmatprep.subr.bf16.mxu0 0
        %541 = vmatpush1.bf16.msra.mxu0 0
        %542 = vmatprep.subr.bf16.mxu0 0
        %543 = vmatpush1.bf16.msra.mxu0 0
        %544 = vmatprep.subr.bf16.mxu0 0
        %545 = vmatpush1.bf16.msra.mxu0 0
        %546 = vmatprep.subr.bf16.mxu0 0
        %547 = vmatpush1.bf16.msra.mxu0 0
        %548 = vmatprep.subr.bf16.mxu0 0
        %549 = vmatpush1.bf16.msra.mxu0 0
        %550 = vmatprep.subr.bf16.mxu0 0
        %551 = vmatpush1.bf16.msra.mxu0 0
        %552 = vmatprep.subr.bf16.mxu0 0
        %553 = vmatpush1.bf16.msra.mxu0 0
        %554 = vmatprep.subr.bf16.mxu0 0
        %555 = vmatpush1.bf16.msra.mxu0 0
        %556 = vmatprep.subr.bf16.mxu0 0
        %557 = vmatpush1.bf16.msra.mxu0 0
        %558 = vmatprep.subr.bf16.mxu0 0
        %559 = vmatpush1.bf16.msra.mxu0 0
        %560 = vmatprep.subr.bf16.mxu0 0
        %561 = vmatpush1.bf16.msra.mxu0 0
        %562 = vmatprep.subr.bf16.mxu0 0
        %563 = vmatpush1.bf16.msra.mxu0 0
        %564 = vmatprep.subr.bf16.mxu0 0
        %565 = vmatpush1.bf16.msra.mxu0 0
        %566 = vmatprep.mubr.bf16.mxu0 0
        %567 = vmatmul.mubr.bf16.gmra.mrb[0].mxu0 %v513
        %v568 = vpop.f32.mrb[0].mxu0
        %v569 = vadd.f32 %v443, %v568
        %v570 = vpop.f32.mrb[0].mxu0
        %v571 = vpop.f32.mrb[0].mxu0
        %v572 = vadd.f32 %v446, %v571
        %v573 = vpop.f32.mrb[0].mxu0
        %574 = vmatprep.mubr.bf16.mxu0 0
        %575 = vmatmul.mubr.bf16.gmra.mrb[0].mxu0 %v515
        %v576 = vpop.f32.mrb[0].mxu0
        %v577 = vadd.f32 %v451, %v576
        %v578 = vpop.f32.mrb[0].mxu0
        %v579 = vpop.f32.mrb[0].mxu0
        %v580 = vadd.f32 %v454, %v579
        %v581 = vpop.f32.mrb[0].mxu0
        %582 = vmatprep.mubr.bf16.mxu0 0
        %583 = vmatmul.mubr.bf16.gmra.mrb[0].mxu0 %v517
        %v584 = vpop.f32.mrb[0].mxu0
        %v585 = vadd.f32 %v459, %v584
        %v586 = vpop.f32.mrb[0].mxu0
        %v587 = vpop.f32.mrb[0].mxu0
        %v588 = vadd.f32 %v462, %v587
        %v589 = vpop.f32.mrb[0].mxu0
        %590 = vmatprep.mubr.bf16.mxu0 0
        %591 = vmatmul.mubr.bf16.gmra.mrb[0].mxu0 %v519
        %v592 = vpop.f32.mrb[0].mxu0
        %v593 = vadd.f32 %v467, %v592
        %v594 = vpop.f32.mrb[0].mxu0
        %v595 = vpop.f32.mrb[0].mxu0
        %v596 = vadd.f32 %v470, %v595
        %v597 = vpop.f32.mrb[0].mxu0
        %598 = vmatprep.mubr.bf16.mxu0 0
        %599 = vmatmul.mubr.bf16.gmra.mrb[0].mxu0 %v521
        %v600 = vpop.f32.mrb[0].mxu0
        %v601 = vadd.f32 %v475, %v600
        %v602 = vpop.f32.mrb[0].mxu0
        %v603 = vpop.f32.mrb[0].mxu0
        %v604 = vadd.f32 %v478, %v603
        %v605 = vpop.f32.mrb[0].mxu0
        %606 = vmatprep.mubr.bf16.mxu0 0
        %607 = vmatmul.mubr.bf16.gmra.mrb[0].mxu0 %v523
        %v608 = vpop.f32.mrb[0].mxu0
        %v609 = vadd.f32 %v483, %v608
        %v610 = vpop.f32.mrb[0].mxu0
        %v611 = vpop.f32.mrb[0].mxu0
        %v612 = vadd.f32 %v486, %v611
        %v613 = vpop.f32.mrb[0].mxu0
        %614 = vmatprep.mubr.bf16.mxu0 0
        %615 = vmatmul.mubr.bf16.gmra.mrb[0].mxu0 %v525
        %v616 = vpop.f32.mrb[0].mxu0
        %v617 = vadd.f32 %v491, %v616
        %v618 = vpop.f32.mrb[0].mxu0
        %v619 = vpop.f32.mrb[0].mxu0
        %v620 = vadd.f32 %v494, %v619
        %v621 = vpop.f32.mrb[0].mxu0
        %622 = vmatprep.mubr.bf16.mxu0 0
        %623 = vmatmul.mubr.bf16.gmra.mrb[0].mxu0 %v527
        %v624 = vpop.f32.mrb[0].mxu0
        %v625 = vadd.f32 %v499, %v624
        %v626 = vpop.f32.mrb[0].mxu0
        %v627 = vpop.f32.mrb[0].mxu0
        %v628 = vadd.f32 %v502, %v627
        %v629 = vpop.f32.mrb[0].mxu0
        %630 = vmatprep.mubr.bf16.mxu0 0
        %631 = vmatmul.mubr.bf16.gmra.mrb[0].mxu0 %v529
        %v632 = vpop.f32.mrb[0].mxu0
        %v633 = vadd.f32 %v507, %v632
        %v634 = vpop.f32.mrb[0].mxu0
        %v635 = vpop.f32.mrb[0].mxu0
        %v636 = vadd.f32 %v510, %v635
        %v637 = vpop.f32.mrb[0].mxu0
        %638 = vdwg.mxu0
        %v639 = vld [vmem:[%s215] sm:$0xe]
        %s640 = scalar_lea.vmem %s219, 4
        %v641 = vld [vmem:[%s640] sm:$0x3]
        %v643 = vunpack.c.l.b16 %v639
        %v644 = vpack.c.b16 %v271, %v643
        %vm645 = vcmask 1046528
        %v646 = vrot.slane %v644, 1
        %v647 = vrot.slane %v290, 1
        %v648 = vsel %vm645, %v646, %v647
        %v649 = vrot.slane %v291, 1
        %v650 = vsel %vm645, %v647, %v649
        %v651 = vrot.slane %v292, 1
        %v652 = vsel %vm645, %v649, %v651
        %v653 = vrot.slane %v293, 1
        %v654 = vsel %vm645, %v651, %v653
        %v655 = vrot.slane %v294, 1
        %v656 = vsel %vm645, %v653, %v655
        %v657 = vrot.slane %v295, 1
        %v658 = vsel %vm645, %v655, %v657
        %v659 = vrot.slane %v296, 1
        %v660 = vsel %vm645, %v657, %v659
        %v661 = vrot.slane %v297, 1
        %v662 = vsel %vm645, %v659, %v661
        %v663 = vrot.slane %v298, 1
        %v664 = vsel %vm645, %v661, %v663
        %v666 = vsel %vm376, %v648, 0
        %v669 = vsel %vm376, %v650, 0
        %v672 = vsel %vm376, %v652, 0
        %v675 = vsel %vm376, %v654, 0
        %v678 = vsel %vm376, %v656, 0
        %v681 = vsel %vm376, %v658, 0
        %v684 = vsel %vm376, %v660, 0
        %v687 = vsel %vm376, %v662, 0
        %v690 = vsel %vm376, %v664, 0
        %v693 = vsel %vm404, %v641, 0
        %695 = vmatprep.subr.bf16.mxu0 0
        %696 = vmatpush1.bf16.msra.mxu0 %v693
        %697 = vmatprep.subr.bf16.mxu0 0
        %698 = vmatpush1.bf16.msra.mxu0 0
        %699 = vmatprep.subr.bf16.mxu0 0
        %700 = vmatpush1.bf16.msra.mxu0 0
        %701 = vmatprep.subr.bf16.mxu0 0
        %702 = vmatpush1.bf16.msra.mxu0 0
        %703 = vmatprep.subr.bf16.mxu0 0
        %704 = vmatpush1.bf16.msra.mxu0 0
        %705 = vmatprep.subr.bf16.mxu0 0
        %706 = vmatpush1.bf16.msra.mxu0 0
        %707 = vmatprep.subr.bf16.mxu0 0
        %708 = vmatpush1.bf16.msra.mxu0 0
        %709 = vmatprep.subr.bf16.mxu0 0
        %710 = vmatpush1.bf16.msra.mxu0 0
        %711 = vmatprep.subr.bf16.mxu0 0
        %712 = vmatpush1.bf16.msra.mxu0 0
        %713 = vmatprep.subr.bf16.mxu0 0
        %714 = vmatpush1.bf16.msra.mxu0 0
        %715 = vmatprep.subr.bf16.mxu0 0
        %716 = vmatpush1.bf16.msra.mxu0 0
        %717 = vmatprep.subr.bf16.mxu0 0
        %718 = vmatpush1.bf16.msra.mxu0 0
        %719 = vmatprep.subr.bf16.mxu0 0
        %720 = vmatpush1.bf16.msra.mxu0 0
        %721 = vmatprep.subr.bf16.mxu0 0
        %722 = vmatpush1.bf16.msra.mxu0 0
        %723 = vmatprep.subr.bf16.mxu0 0
        %724 = vmatpush1.bf16.msra.mxu0 0
        %725 = vmatprep.subr.bf16.mxu0 0
        %726 = vmatpush1.bf16.msra.mxu0 0
        %727 = vmatprep.mubr.bf16.mxu0 0
        %728 = vmatmul.mubr.bf16.gmra.mrb[0].mxu0 %v666
        %v729 = vpop.f32.mrb[0].mxu0
        %v730 = vadd.f32 0.0, %v729
        %v731 = vpop.f32.mrb[0].mxu0
        %v732 = vpop.f32.mrb[0].mxu0
        %v733 = vadd.f32 0.0, %v732
        %v734 = vpop.f32.mrb[0].mxu0
        %735 = vmatprep.mubr.bf16.mxu0 0
        %736 = vmatmul.mubr.bf16.gmra.mrb[0].mxu0 %v669
        %v737 = vpop.f32.mrb[0].mxu0
        %v738 = vadd.f32 0.0, %v737
        %v739 = vpop.f32.mrb[0].mxu0
        %v740 = vpop.f32.mrb[0].mxu0
        %v741 = vadd.f32 0.0, %v740
        %v742 = vpop.f32.mrb[0].mxu0
        %743 = vmatprep.mubr.bf16.mxu0 0
        %744 = vmatmul.mubr.bf16.gmra.mrb[0].mxu0 %v672
        %v745 = vpop.f32.mrb[0].mxu0
        %v746 = vadd.f32 0.0, %v745
        %v747 = vpop.f32.mrb[0].mxu0
        %v748 = vpop.f32.mrb[0].mxu0
        %v749 = vadd.f32 0.0, %v748
        %v750 = vpop.f32.mrb[0].mxu0
        %751 = vmatprep.mubr.bf16.mxu0 0
        %752 = vmatmul.mubr.bf16.gmra.mrb[0].mxu0 %v675
        %v753 = vpop.f32.mrb[0].mxu0
        %v754 = vadd.f32 0.0, %v753
        %v755 = vpop.f32.mrb[0].mxu0
        %v756 = vpop.f32.mrb[0].mxu0
        %v757 = vadd.f32 0.0, %v756
        %v758 = vpop.f32.mrb[0].mxu0
        %759 = vmatprep.mubr.bf16.mxu0 0
        %760 = vmatmul.mubr.bf16.gmra.mrb[0].mxu0 %v678
        %v761 = vpop.f32.mrb[0].mxu0
        %v762 = vadd.f32 0.0, %v761
        %v763 = vpop.f32.mrb[0].mxu0
        %v764 = vpop.f32.mrb[0].mxu0
        %v765 = vadd.f32 0.0, %v764
        %v766 = vpop.f32.mrb[0].mxu0
        %767 = vmatprep.mubr.bf16.mxu0 0
        %768 = vmatmul.mubr.bf16.gmra.mrb[0].mxu0 %v681
        %v769 = vpop.f32.mrb[0].mxu0
        %v770 = vadd.f32 0.0, %v769
        %v771 = vpop.f32.mrb[0].mxu0
        %v772 = vpop.f32.mrb[0].mxu0
        %v773 = vadd.f32 0.0, %v772
        %v774 = vpop.f32.mrb[0].mxu0
        %775 = vmatprep.mubr.bf16.mxu0 0
        %776 = vmatmul.mubr.bf16.gmra.mrb[0].mxu0 %v684
        %v777 = vpop.f32.mrb[0].mxu0
        %v778 = vadd.f32 0.0, %v777
        %v779 = vpop.f32.mrb[0].mxu0
        %v780 = vpop.f32.mrb[0].mxu0
        %v781 = vadd.f32 0.0, %v780
        %v782 = vpop.f32.mrb[0].mxu0
        %783 = vmatprep.mubr.bf16.mxu0 0
        %784 = vmatmul.mubr.bf16.gmra.mrb[0].mxu0 %v687
        %v785 = vpop.f32.mrb[0].mxu0
        %v786 = vadd.f32 0.0, %v785
        %v787 = vpop.f32.mrb[0].mxu0
        %v788 = vpop.f32.mrb[0].mxu0
        %v789 = vadd.f32 0.0, %v788
        %v790 = vpop.f32.mrb[0].mxu0
        %791 = vmatprep.mubr.bf16.mxu0 0
        %792 = vmatmul.mubr.bf16.gmra.mrb[0].mxu0 %v690
        %v793 = vpop.f32.mrb[0].mxu0
        %v794 = vadd.f32 0.0, %v793
        %v795 = vpop.f32.mrb[0].mxu0
        %v796 = vpop.f32.mrb[0].mxu0
        %v797 = vadd.f32 0.0, %v796
        %v798 = vpop.f32.mrb[0].mxu0
        %799 = vdwg.mxu0
        %v800 = vadd.f32 %v569, %v730
        %v801 = vadd.f32 %v572, %v733
        %v802 = vadd.f32 %v577, %v738
        %v803 = vadd.f32 %v580, %v741
        %v804 = vadd.f32 %v585, %v746
        %v805 = vadd.f32 %v588, %v749
        %v806 = vadd.f32 %v593, %v754
        %v807 = vadd.f32 %v596, %v757
        %v808 = vadd.f32 %v601, %v762
        %v809 = vadd.f32 %v604, %v765
        %v810 = vadd.f32 %v609, %v770
        %v811 = vadd.f32 %v612, %v773
        %v812 = vadd.f32 %v617, %v778
        %v813 = vadd.f32 %v620, %v781
        %v814 = vadd.f32 %v625, %v786
        %v815 = vadd.f32 %v628, %v789
        %v816 = vadd.f32 %v633, %v794
        %v817 = vadd.f32 %v636, %v797
        %v818 = vld [vmem:[%s215 + $0x8] sm:$0xe]
        %v819 = vld [vmem:[%s215 + $0xc] sm:$0xf]
        %v820 = vld [vmem:[%s215 + $0x10] sm:$0xf]
        %v821 = vld [vmem:[%s215 + $0x14] sm:$0xf]
        %v822 = vld [vmem:[%s215 + $0x18] sm:$0xf]
        %v823 = vld [vmem:[%s215 + $0x1c] sm:$0xf]
        %v824 = vld [vmem:[%s215 + $0x20] sm:$0xf]
        %v825 = vld [vmem:[%s215 + $0x24] sm:$0xf]
        %v826 = vld [vmem:[%s215 + $0x28] sm:$0xf]
        %v827 = vld [vmem:[%s215 + $0x2c] sm:$0xf]
        %v828 = vld [vmem:[%s215 + $0x30] sm:$0xf]
        %v829 = vld [vmem:[%s215 + $0x34] sm:$0xf]
        %v830 = vld [vmem:[%s215 + $0x38] sm:$0xf]
        %v831 = vld [vmem:[%s215 + $0x3c] sm:$0xf]
        %v832 = vld [vmem:[%s215 + $0x40] sm:$0xf]
        %v833 = vld [vmem:[%s215 + $0x44] sm:$0xf]
        %v834 = vld [vmem:[%s215 + $0x48] sm:$0xf]
        %v835 = vld [vmem:[%s215 + $0x4c] sm:$0xf]
        %v836 = vld [vmem:[%s215 + $0x50] sm:$0x1]
        %s837 = scalar_lea.vmem %s219, 6
        %v838 = vld [vmem:[%s837] sm:$0x3]
        %v858 = vunpack.c.l.b16 %v818
        %v859 = vunpack.c.l.b16 %v819
        %v860 = vunpack.c.l.b16 %v820
        %v861 = vunpack.c.l.b16 %v821
        %v862 = vunpack.c.l.b16 %v822
        %v863 = vunpack.c.l.b16 %v823
        %v864 = vunpack.c.l.b16 %v824
        %v865 = vunpack.c.l.b16 %v825
        %v866 = vunpack.c.l.b16 %v826
        %v867 = vunpack.c.l.b16 %v827
        %v868 = vunpack.c.l.b16 %v828
        %v869 = vunpack.c.l.b16 %v829
        %v870 = vunpack.c.l.b16 %v830
        %v871 = vunpack.c.l.b16 %v831
        %v872 = vunpack.c.l.b16 %v832
        %v873 = vunpack.c.l.b16 %v833
        %v874 = vunpack.c.l.b16 %v834
        %v875 = vunpack.c.l.b16 %v835
        %v876 = vunpack.c.l.b16 %v836
        %v877 = vpack.c.b16 %v859, %v858
        %v878 = vpack.c.b16 %v861, %v860
        %v879 = vpack.c.b16 %v863, %v862
        %v880 = vpack.c.b16 %v865, %v864
        %v881 = vpack.c.b16 %v867, %v866
        %v882 = vpack.c.b16 %v869, %v868
        %v883 = vpack.c.b16 %v871, %v870
        %v884 = vpack.c.b16 %v873, %v872
        %v885 = vpack.c.b16 %v875, %v874
        %v886 = vpack.c.b16 %v876, %v876
        %v887 = vrot.slane %v877, 1
        %v888 = vrot.slane %v878, 1
        %v889 = vsel %vm645, %v887, %v888
        %v890 = vrot.slane %v879, 1
        %v891 = vsel %vm645, %v888, %v890
        %v892 = vrot.slane %v880, 1
        %v893 = vsel %vm645, %v890, %v892
        %v894 = vrot.slane %v881, 1
        %v895 = vsel %vm645, %v892, %v894
        %v896 = vrot.slane %v882, 1
        %v897 = vsel %vm645, %v894, %v896
        %v898 = vrot.slane %v883, 1
        %v899 = vsel %vm645, %v896, %v898
        %v900 = vrot.slane %v884, 1
        %v901 = vsel %vm645, %v898, %v900
        %v902 = vrot.slane %v885, 1
        %v903 = vsel %vm645, %v900, %v902
        %v904 = vrot.slane %v886, 1
        %v905 = vsel %vm645, %v902, %v904
        %v907 = vsel %vm376, %v889, 0
        %v910 = vsel %vm376, %v891, 0
        %v913 = vsel %vm376, %v893, 0
        %v916 = vsel %vm376, %v895, 0
        %v919 = vsel %vm376, %v897, 0
        %v922 = vsel %vm376, %v899, 0
        %v925 = vsel %vm376, %v901, 0
        %v928 = vsel %vm376, %v903, 0
        %v931 = vsel %vm376, %v905, 0
        %v934 = vsel %vm404, %v838, 0
        %936 = vmatprep.subr.bf16.mxu0 0
        %937 = vmatpush1.bf16.msra.mxu0 %v934
        %938 = vmatprep.subr.bf16.mxu0 0
        %939 = vmatpush1.bf16.msra.mxu0 0
        %940 = vmatprep.subr.bf16.mxu0 0
        %941 = vmatpush1.bf16.msra.mxu0 0
        %942 = vmatprep.subr.bf16.mxu0 0
        %943 = vmatpush1.bf16.msra.mxu0 0
        %944 = vmatprep.subr.bf16.mxu0 0
        %945 = vmatpush1.bf16.msra.mxu0 0
        %946 = vmatprep.subr.bf16.mxu0 0
        %947 = vmatpush1.bf16.msra.mxu0 0
        %948 = vmatprep.subr.bf16.mxu0 0
        %949 = vmatpush1.bf16.msra.mxu0 0
        %950 = vmatprep.subr.bf16.mxu0 0
        %951 = vmatpush1.bf16.msra.mxu0 0
        %952 = vmatprep.subr.bf16.mxu0 0
        %953 = vmatpush1.bf16.msra.mxu0 0
        %954 = vmatprep.subr.bf16.mxu0 0
        %955 = vmatpush1.bf16.msra.mxu0 0
        %956 = vmatprep.subr.bf16.mxu0 0
        %957 = vmatpush1.bf16.msra.mxu0 0
        %958 = vmatprep.subr.bf16.mxu0 0
        %959 = vmatpush1.bf16.msra.mxu0 0
        %960 = vmatprep.subr.bf16.mxu0 0
        %961 = vmatpush1.bf16.msra.mxu0 0
        %962 = vmatprep.subr.bf16.mxu0 0
        %963 = vmatpush1.bf16.msra.mxu0 0
        %964 = vmatprep.subr.bf16.mxu0 0
        %965 = vmatpush1.bf16.msra.mxu0 0
        %966 = vmatprep.subr.bf16.mxu0 0
        %967 = vmatpush1.bf16.msra.mxu0 0
        %968 = vmatprep.mubr.bf16.mxu0 0
        %969 = vmatmul.mubr.bf16.gmra.mrb[0].mxu0 %v907
        %v970 = vpop.f32.mrb[0].mxu0
        %v971 = vadd.f32 0.0, %v970
        %v972 = vpop.f32.mrb[0].mxu0
        %v973 = vpop.f32.mrb[0].mxu0
        %v974 = vadd.f32 0.0, %v973
        %v975 = vpop.f32.mrb[0].mxu0
        %976 = vmatprep.mubr.bf16.mxu0 0
        %977 = vmatmul.mubr.bf16.gmra.mrb[0].mxu0 %v910
        %v978 = vpop.f32.mrb[0].mxu0
        %v979 = vadd.f32 0.0, %v978
        %v980 = vpop.f32.mrb[0].mxu0
        %v981 = vpop.f32.mrb[0].mxu0
        %v982 = vadd.f32 0.0, %v981
        %v983 = vpop.f32.mrb[0].mxu0
        %984 = vmatprep.mubr.bf16.mxu0 0
        %985 = vmatmul.mubr.bf16.gmra.mrb[0].mxu0 %v913
        %v986 = vpop.f32.mrb[0].mxu0
        %v987 = vadd.f32 0.0, %v986
        %v988 = vpop.f32.mrb[0].mxu0
        %v989 = vpop.f32.mrb[0].mxu0
        %v990 = vadd.f32 0.0, %v989
        %v991 = vpop.f32.mrb[0].mxu0
        %992 = vmatprep.mubr.bf16.mxu0 0
        %993 = vmatmul.mubr.bf16.gmra.mrb[0].mxu0 %v916
        %v994 = vpop.f32.mrb[0].mxu0
        %v995 = vadd.f32 0.0, %v994
        %v996 = vpop.f32.mrb[0].mxu0
        %v997 = vpop.f32.mrb[0].mxu0
        %v998 = vadd.f32 0.0, %v997
        %v999 = vpop.f32.mrb[0].mxu0
        %1000 = vmatprep.mubr.bf16.mxu0 0
        %1001 = vmatmul.mubr.bf16.gmra.mrb[0].mxu0 %v919
        %v1002 = vpop.f32.mrb[0].mxu0
        %v1003 = vadd.f32 0.0, %v1002
        %v1004 = vpop.f32.mrb[0].mxu0
        %v1005 = vpop.f32.mrb[0].mxu0
        %v1006 = vadd.f32 0.0, %v1005
        %v1007 = vpop.f32.mrb[0].mxu0
        %1008 = vmatprep.mubr.bf16.mxu0 0
        %1009 = vmatmul.mubr.bf16.gmra.mrb[0].mxu0 %v922
        %v1010 = vpop.f32.mrb[0].mxu0
        %v1011 = vadd.f32 0.0, %v1010
        %v1012 = vpop.f32.mrb[0].mxu0
        %v1013 = vpop.f32.mrb[0].mxu0
        %v1014 = vadd.f32 0.0, %v1013
        %v1015 = vpop.f32.mrb[0].mxu0
        %1016 = vmatprep.mubr.bf16.mxu0 0
        %1017 = vmatmul.mubr.bf16.gmra.mrb[0].mxu0 %v925
        %v1018 = vpop.f32.mrb[0].mxu0
        %v1019 = vadd.f32 0.0, %v1018
        %v1020 = vpop.f32.mrb[0].mxu0
        %v1021 = vpop.f32.mrb[0].mxu0
        %v1022 = vadd.f32 0.0, %v1021
        %v1023 = vpop.f32.mrb[0].mxu0
        %1024 = vmatprep.mubr.bf16.mxu0 0
        %1025 = vmatmul.mubr.bf16.gmra.mrb[0].mxu0 %v928
        %v1026 = vpop.f32.mrb[0].mxu0
        %v1027 = vadd.f32 0.0, %v1026
        %v1028 = vpop.f32.mrb[0].mxu0
        %v1029 = vpop.f32.mrb[0].mxu0
        %v1030 = vadd.f32 0.0, %v1029
        %v1031 = vpop.f32.mrb[0].mxu0
        %1032 = vmatprep.mubr.bf16.mxu0 0
        %1033 = vmatmul.mubr.bf16.gmra.mrb[0].mxu0 %v931
        %v1034 = vpop.f32.mrb[0].mxu0
        %v1035 = vadd.f32 0.0, %v1034
        %v1036 = vpop.f32.mrb[0].mxu0
        %v1037 = vpop.f32.mrb[0].mxu0
        %v1038 = vadd.f32 0.0, %v1037
        %v1039 = vpop.f32.mrb[0].mxu0
        %1040 = vdwg.mxu0
        %v1041 = vadd.f32 %v800, %v971
        %v1042 = vadd.f32 %v801, %v974
        %v1043 = vadd.f32 %v802, %v979
        %v1044 = vadd.f32 %v803, %v982
        %v1045 = vadd.f32 %v804, %v987
        %v1046 = vadd.f32 %v805, %v990
        %v1047 = vadd.f32 %v806, %v995
        %v1048 = vadd.f32 %v807, %v998
        %v1049 = vadd.f32 %v808, %v1003
        %v1050 = vadd.f32 %v809, %v1006
        %v1051 = vadd.f32 %v810, %v1011
        %v1052 = vadd.f32 %v811, %v1014
        %v1053 = vadd.f32 %v812, %v1019
        %v1054 = vadd.f32 %v813, %v1022
        %v1055 = vadd.f32 %v814, %v1027
        %v1056 = vadd.f32 %v815, %v1030
        %v1057 = vadd.f32 %v816, %v1035
        %v1058 = vadd.f32 %v817, %v1038
        %v1059 = vld [vmem:[%s215 + $0x50] sm:$0x3]
        %s1060 = scalar_lea.vmem %s219, 8
        %v1061 = vld [vmem:[%s1060] sm:$0x3]
        %v1063 = vunpack.c.l.b16 %v1059
        %v1064 = vpack.c.b16 %v1063, %v1063
        %vm1065 = vsmask.f32 6400
        %v1067 = vshrl.u32 %v877, 16
        %v1069 = vrot.slane %v1067, 1
        %v1070 = vshll.u32 %v877, 16
        %v1072 = vrot.slane %v1070, 2
        %v1073 = vor.u32 %v1069, %v1072
        %v1075 = vshrl.u32 %v878, 16
        %v1077 = vrot.slane %v1075, 1
        %v1078 = vshll.u32 %v878, 16
        %v1080 = vrot.slane %v1078, 2
        %v1081 = vor.u32 %v1077, %v1080
        %v1082 = vsel %vm1065, %v1073, %v1081
        %v1084 = vshrl.u32 %v879, 16
        %v1086 = vrot.slane %v1084, 1
        %v1087 = vshll.u32 %v879, 16
        %v1089 = vrot.slane %v1087, 2
        %v1090 = vor.u32 %v1086, %v1089
        %v1091 = vsel %vm1065, %v1081, %v1090
        %v1093 = vshrl.u32 %v880, 16
        %v1095 = vrot.slane %v1093, 1
        %v1096 = vshll.u32 %v880, 16
        %v1098 = vrot.slane %v1096, 2
        %v1099 = vor.u32 %v1095, %v1098
        %v1100 = vsel %vm1065, %v1090, %v1099
        %v1102 = vshrl.u32 %v881, 16
        %v1104 = vrot.slane %v1102, 1
        %v1105 = vshll.u32 %v881, 16
        %v1107 = vrot.slane %v1105, 2
        %v1108 = vor.u32 %v1104, %v1107
        %v1109 = vsel %vm1065, %v1099, %v1108
        %v1111 = vshrl.u32 %v882, 16
        %v1113 = vrot.slane %v1111, 1
        %v1114 = vshll.u32 %v882, 16
        %v1116 = vrot.slane %v1114, 2
        %v1117 = vor.u32 %v1113, %v1116
        %v1118 = vsel %vm1065, %v1108, %v1117
        %v1120 = vshrl.u32 %v883, 16
        %v1122 = vrot.slane %v1120, 1
        %v1123 = vshll.u32 %v883, 16
        %v1125 = vrot.slane %v1123, 2
        %v1126 = vor.u32 %v1122, %v1125
        %v1127 = vsel %vm1065, %v1117, %v1126
        %v1129 = vshrl.u32 %v884, 16
        %v1131 = vrot.slane %v1129, 1
        %v1132 = vshll.u32 %v884, 16
        %v1134 = vrot.slane %v1132, 2
        %v1135 = vor.u32 %v1131, %v1134
        %v1136 = vsel %vm1065, %v1126, %v1135
        %v1138 = vshrl.u32 %v885, 16
        %v1140 = vrot.slane %v1138, 1
        %v1141 = vshll.u32 %v885, 16
        %v1143 = vrot.slane %v1141, 2
        %v1144 = vor.u32 %v1140, %v1143
        %v1145 = vsel %vm1065, %v1135, %v1144
        %v1147 = vshrl.u32 %v1064, 16
        %v1149 = vrot.slane %v1147, 1
        %v1150 = vshll.u32 %v1064, 16
        %v1152 = vrot.slane %v1150, 2
        %v1153 = vor.u32 %v1149, %v1152
        %v1154 = vsel %vm1065, %v1144, %v1153
        %v1156 = vsel %vm376, %v1082, 0
        %v1159 = vsel %vm376, %v1091, 0
        %v1162 = vsel %vm376, %v1100, 0
        %v1165 = vsel %vm376, %v1109, 0
        %v1168 = vsel %vm376, %v1118, 0
        %v1171 = vsel %vm376, %v1127, 0
        %v1174 = vsel %vm376, %v1136, 0
        %v1177 = vsel %vm376, %v1145, 0
        %v1180 = vsel %vm376, %v1154, 0
        %v1183 = vsel %vm404, %v1061, 0
        %1185 = vmatprep.subr.bf16.mxu0 0
        %1186 = vmatpush1.bf16.msra.mxu0 %v1183
        %1187 = vmatprep.subr.bf16.mxu0 0
        %1188 = vmatpush1.bf16.msra.mxu0 0
        %1189 = vmatprep.subr.bf16.mxu0 0
        %1190 = vmatpush1.bf16.msra.mxu0 0
        %1191 = vmatprep.subr.bf16.mxu0 0
        %1192 = vmatpush1.bf16.msra.mxu0 0
        %1193 = vmatprep.subr.bf16.mxu0 0
        %1194 = vmatpush1.bf16.msra.mxu0 0
        %1195 = vmatprep.subr.bf16.mxu0 0
        %1196 = vmatpush1.bf16.msra.mxu0 0
        %1197 = vmatprep.subr.bf16.mxu0 0
        %1198 = vmatpush1.bf16.msra.mxu0 0
        %1199 = vmatprep.subr.bf16.mxu0 0
        %1200 = vmatpush1.bf16.msra.mxu0 0
        %1201 = vmatprep.subr.bf16.mxu0 0
        %1202 = vmatpush1.bf16.msra.mxu0 0
        %1203 = vmatprep.subr.bf16.mxu0 0
        %1204 = vmatpush1.bf16.msra.mxu0 0
        %1205 = vmatprep.subr.bf16.mxu0 0
        %1206 = vmatpush1.bf16.msra.mxu0 0
        %1207 = vmatprep.subr.bf16.mxu0 0
        %1208 = vmatpush1.bf16.msra.mxu0 0
        %1209 = vmatprep.subr.bf16.mxu0 0
        %1210 = vmatpush1.bf16.msra.mxu0 0
        %1211 = vmatprep.subr.bf16.mxu0 0
        %1212 = vmatpush1.bf16.msra.mxu0 0
        %1213 = vmatprep.subr.bf16.mxu0 0
        %1214 = vmatpush1.bf16.msra.mxu0 0
        %1215 = vmatprep.subr.bf16.mxu0 0
        %1216 = vmatpush1.bf16.msra.mxu0 0
        %1217 = vmatprep.mubr.bf16.mxu0 0
        %1218 = vmatmul.mubr.bf16.gmra.mrb[0].mxu0 %v1156
        %v1219 = vpop.f32.mrb[0].mxu0
        %v1220 = vadd.f32 0.0, %v1219
        %v1221 = vpop.f32.mrb[0].mxu0
        %v1222 = vpop.f32.mrb[0].mxu0
        %v1223 = vadd.f32 0.0, %v1222
        %v1224 = vpop.f32.mrb[0].mxu0
        %1225 = vmatprep.mubr.bf16.mxu0 0
        %1226 = vmatmul.mubr.bf16.gmra.mrb[0].mxu0 %v1159
        %v1227 = vpop.f32.mrb[0].mxu0
        %v1228 = vadd.f32 0.0, %v1227
        %v1229 = vpop.f32.mrb[0].mxu0
        %v1230 = vpop.f32.mrb[0].mxu0
        %v1231 = vadd.f32 0.0, %v1230
        %v1232 = vpop.f32.mrb[0].mxu0
        %1233 = vmatprep.mubr.bf16.mxu0 0
        %1234 = vmatmul.mubr.bf16.gmra.mrb[0].mxu0 %v1162
        %v1235 = vpop.f32.mrb[0].mxu0
        %v1236 = vadd.f32 0.0, %v1235
        %v1237 = vpop.f32.mrb[0].mxu0
        %v1238 = vpop.f32.mrb[0].mxu0
        %v1239 = vadd.f32 0.0, %v1238
        %v1240 = vpop.f32.mrb[0].mxu0
        %1241 = vmatprep.mubr.bf16.mxu0 0
        %1242 = vmatmul.mubr.bf16.gmra.mrb[0].mxu0 %v1165
        %v1243 = vpop.f32.mrb[0].mxu0
        %v1244 = vadd.f32 0.0, %v1243
        %v1245 = vpop.f32.mrb[0].mxu0
        %v1246 = vpop.f32.mrb[0].mxu0
        %v1247 = vadd.f32 0.0, %v1246
        %v1248 = vpop.f32.mrb[0].mxu0
        %1249 = vmatprep.mubr.bf16.mxu0 0
        %1250 = vmatmul.mubr.bf16.gmra.mrb[0].mxu0 %v1168
        %v1251 = vpop.f32.mrb[0].mxu0
        %v1252 = vadd.f32 0.0, %v1251
        %v1253 = vpop.f32.mrb[0].mxu0
        %v1254 = vpop.f32.mrb[0].mxu0
        %v1255 = vadd.f32 0.0, %v1254
        %v1256 = vpop.f32.mrb[0].mxu0
        %1257 = vmatprep.mubr.bf16.mxu0 0
        %1258 = vmatmul.mubr.bf16.gmra.mrb[0].mxu0 %v1171
        %v1259 = vpop.f32.mrb[0].mxu0
        %v1260 = vadd.f32 0.0, %v1259
        %v1261 = vpop.f32.mrb[0].mxu0
        %v1262 = vpop.f32.mrb[0].mxu0
        %v1263 = vadd.f32 0.0, %v1262
        %v1264 = vpop.f32.mrb[0].mxu0
        %1265 = vmatprep.mubr.bf16.mxu0 0
        %1266 = vmatmul.mubr.bf16.gmra.mrb[0].mxu0 %v1174
        %v1267 = vpop.f32.mrb[0].mxu0
        %v1268 = vadd.f32 0.0, %v1267
        %v1269 = vpop.f32.mrb[0].mxu0
        %v1270 = vpop.f32.mrb[0].mxu0
        %v1271 = vadd.f32 0.0, %v1270
        %v1272 = vpop.f32.mrb[0].mxu0
        %1273 = vmatprep.mubr.bf16.mxu0 0
        %1274 = vmatmul.mubr.bf16.gmra.mrb[0].mxu0 %v1177
        %v1275 = vpop.f32.mrb[0].mxu0
        %v1276 = vadd.f32 0.0, %v1275
        %v1277 = vpop.f32.mrb[0].mxu0
        %v1278 = vpop.f32.mrb[0].mxu0
        %v1279 = vadd.f32 0.0, %v1278
        %v1280 = vpop.f32.mrb[0].mxu0
        %1281 = vmatprep.mubr.bf16.mxu0 0
        %1282 = vmatmul.mubr.bf16.gmra.mrb[0].mxu0 %v1180
        %v1283 = vpop.f32.mrb[0].mxu0
        %v1284 = vadd.f32 0.0, %v1283
        %v1285 = vpop.f32.mrb[0].mxu0
        %v1286 = vpop.f32.mrb[0].mxu0
        %v1287 = vadd.f32 0.0, %v1286
        %v1288 = vpop.f32.mrb[0].mxu0
        %1289 = vdwg.mxu0
        %v1290 = vadd.f32 %v1041, %v1220
        %v1291 = vadd.f32 %v1042, %v1223
        %v1292 = vadd.f32 %v1043, %v1228
        %v1293 = vadd.f32 %v1044, %v1231
        %v1294 = vadd.f32 %v1045, %v1236
        %v1295 = vadd.f32 %v1046, %v1239
        %v1296 = vadd.f32 %v1047, %v1244
        %v1297 = vadd.f32 %v1048, %v1247
        %v1298 = vadd.f32 %v1049, %v1252
        %v1299 = vadd.f32 %v1050, %v1255
        %v1300 = vadd.f32 %v1051, %v1260
        %v1301 = vadd.f32 %v1052, %v1263
        %v1302 = vadd.f32 %v1053, %v1268
        %v1303 = vadd.f32 %v1054, %v1271
        %v1304 = vadd.f32 %v1055, %v1276
        %v1305 = vadd.f32 %v1056, %v1279
        %v1306 = vadd.f32 %v1057, %v1284
        %v1307 = vadd.f32 %v1058, %v1287
        %v1308 = vld [vmem:[%s215 + $0x8] sm:$0xc]
        %s1309 = scalar_lea.vmem %s219, 10
        %v1310 = vld [vmem:[%s1309] sm:$0x3]
        %v1312 = vunpack.c.l.b16 %v1308
        %v1313 = vpack.c.b16 %v859, %v1312
        %vm1314 = vcmask 1045504
        %v1315 = vrot.slane %v1313, 2
        %v1316 = vrot.slane %v878, 2
        %v1317 = vsel %vm1314, %v1315, %v1316
        %v1318 = vrot.slane %v879, 2
        %v1319 = vsel %vm1314, %v1316, %v1318
        %v1320 = vrot.slane %v880, 2
        %v1321 = vsel %vm1314, %v1318, %v1320
        %v1322 = vrot.slane %v881, 2
        %v1323 = vsel %vm1314, %v1320, %v1322
        %v1324 = vrot.slane %v882, 2
        %v1325 = vsel %vm1314, %v1322, %v1324
        %v1326 = vrot.slane %v883, 2
        %v1327 = vsel %vm1314, %v1324, %v1326
        %v1328 = vrot.slane %v884, 2
        %v1329 = vsel %vm1314, %v1326, %v1328
        %v1330 = vrot.slane %v885, 2
        %v1331 = vsel %vm1314, %v1328, %v1330
        %v1332 = vrot.slane %v1064, 2
        %v1333 = vsel %vm1314, %v1330, %v1332
        %v1335 = vsel %vm376, %v1317, 0
        %v1338 = vsel %vm376, %v1319, 0
        %v1341 = vsel %vm376, %v1321, 0
        %v1344 = vsel %vm376, %v1323, 0
        %v1347 = vsel %vm376, %v1325, 0
        %v1350 = vsel %vm376, %v1327, 0
        %v1353 = vsel %vm376, %v1329, 0
        %v1356 = vsel %vm376, %v1331, 0
        %v1359 = vsel %vm376, %v1333, 0
        %v1362 = vsel %vm404, %v1310, 0
        %1364 = vmatprep.subr.bf16.mxu0 0
        %1365 = vmatpush1.bf16.msra.mxu0 %v1362
        %1366 = vmatprep.subr.bf16.mxu0 0
        %1367 = vmatpush1.bf16.msra.mxu0 0
        %1368 = vmatprep.subr.bf16.mxu0 0
        %1369 = vmatpush1.bf16.msra.mxu0 0
        %1370 = vmatprep.subr.bf16.mxu0 0
        %1371 = vmatpush1.bf16.msra.mxu0 0
        %1372 = vmatprep.subr.bf16.mxu0 0
        %1373 = vmatpush1.bf16.msra.mxu0 0
        %1374 = vmatprep.subr.bf16.mxu0 0
        %1375 = vmatpush1.bf16.msra.mxu0 0
        %1376 = vmatprep.subr.bf16.mxu0 0
        %1377 = vmatpush1.bf16.msra.mxu0 0
        %1378 = vmatprep.subr.bf16.mxu0 0
        %1379 = vmatpush1.bf16.msra.mxu0 0
        %1380 = vmatprep.subr.bf16.mxu0 0
        %1381 = vmatpush1.bf16.msra.mxu0 0
        %1382 = vmatprep.subr.bf16.mxu0 0
        %1383 = vmatpush1.bf16.msra.mxu0 0
        %1384 = vmatprep.subr.bf16.mxu0 0
        %1385 = vmatpush1.bf16.msra.mxu0 0
        %1386 = vmatprep.subr.bf16.mxu0 0
        %1387 = vmatpush1.bf16.msra.mxu0 0
        %1388 = vmatprep.subr.bf16.mxu0 0
        %1389 = vmatpush1.bf16.msra.mxu0 0
        %1390 = vmatprep.subr.bf16.mxu0 0
        %1391 = vmatpush1.bf16.msra.mxu0 0
        %1392 = vmatprep.subr.bf16.mxu0 0
        %1393 = vmatpush1.bf16.msra.mxu0 0
        %1394 = vmatprep.subr.bf16.mxu0 0
        %1395 = vmatpush1.bf16.msra.mxu0 0
        %1396 = vmatprep.mubr.bf16.mxu0 0
        %1397 = vmatmul.mubr.bf16.gmra.mrb[0].mxu0 %v1335
        %v1398 = vpop.f32.mrb[0].mxu0
        %v1399 = vadd.f32 0.0, %v1398
        %v1400 = vpop.f32.mrb[0].mxu0
        %v1401 = vpop.f32.mrb[0].mxu0
        %v1402 = vadd.f32 0.0, %v1401
        %v1403 = vpop.f32.mrb[0].mxu0
        %1404 = vmatprep.mubr.bf16.mxu0 0
        %1405 = vmatmul.mubr.bf16.gmra.mrb[0].mxu0 %v1338
        %v1406 = vpop.f32.mrb[0].mxu0
        %v1407 = vadd.f32 0.0, %v1406
        %v1408 = vpop.f32.mrb[0].mxu0
        %v1409 = vpop.f32.mrb[0].mxu0
        %v1410 = vadd.f32 0.0, %v1409
        %v1411 = vpop.f32.mrb[0].mxu0
        %1412 = vmatprep.mubr.bf16.mxu0 0
        %1413 = vmatmul.mubr.bf16.gmra.mrb[0].mxu0 %v1341
        %v1414 = vpop.f32.mrb[0].mxu0
        %v1415 = vadd.f32 0.0, %v1414
        %v1416 = vpop.f32.mrb[0].mxu0
        %v1417 = vpop.f32.mrb[0].mxu0
        %v1418 = vadd.f32 0.0, %v1417
        %v1419 = vpop.f32.mrb[0].mxu0
        %1420 = vmatprep.mubr.bf16.mxu0 0
        %1421 = vmatmul.mubr.bf16.gmra.mrb[0].mxu0 %v1344
        %v1422 = vpop.f32.mrb[0].mxu0
        %v1423 = vadd.f32 0.0, %v1422
        %v1424 = vpop.f32.mrb[0].mxu0
        %v1425 = vpop.f32.mrb[0].mxu0
        %v1426 = vadd.f32 0.0, %v1425
        %v1427 = vpop.f32.mrb[0].mxu0
        %1428 = vmatprep.mubr.bf16.mxu0 0
        %1429 = vmatmul.mubr.bf16.gmra.mrb[0].mxu0 %v1347
        %v1430 = vpop.f32.mrb[0].mxu0
        %v1431 = vadd.f32 0.0, %v1430
        %v1432 = vpop.f32.mrb[0].mxu0
        %v1433 = vpop.f32.mrb[0].mxu0
        %v1434 = vadd.f32 0.0, %v1433
        %v1435 = vpop.f32.mrb[0].mxu0
        %1436 = vmatprep.mubr.bf16.mxu0 0
        %1437 = vmatmul.mubr.bf16.gmra.mrb[0].mxu0 %v1350
        %v1438 = vpop.f32.mrb[0].mxu0
        %v1439 = vadd.f32 0.0, %v1438
        %v1440 = vpop.f32.mrb[0].mxu0
        %v1441 = vpop.f32.mrb[0].mxu0
        %v1442 = vadd.f32 0.0, %v1441
        %v1443 = vpop.f32.mrb[0].mxu0
        %1444 = vmatprep.mubr.bf16.mxu0 0
        %1445 = vmatmul.mubr.bf16.gmra.mrb[0].mxu0 %v1353
        %v1446 = vpop.f32.mrb[0].mxu0
        %v1447 = vadd.f32 0.0, %v1446
        %v1448 = vpop.f32.mrb[0].mxu0
        %v1449 = vpop.f32.mrb[0].mxu0
        %v1450 = vadd.f32 0.0, %v1449
        %v1451 = vpop.f32.mrb[0].mxu0
        %1452 = vmatprep.mubr.bf16.mxu0 0
        %1453 = vmatmul.mubr.bf16.gmra.mrb[0].mxu0 %v1356
        %v1454 = vpop.f32.mrb[0].mxu0
        %v1455 = vadd.f32 0.0, %v1454
        %v1456 = vpop.f32.mrb[0].mxu0
        %v1457 = vpop.f32.mrb[0].mxu0
        %v1458 = vadd.f32 0.0, %v1457
        %v1459 = vpop.f32.mrb[0].mxu0
        %1460 = vmatprep.mubr.bf16.mxu0 0
        %1461 = vmatmul.mubr.bf16.gmra.mrb[0].mxu0 %v1359
        %v1462 = vpop.f32.mrb[0].mxu0
        %v1463 = vadd.f32 0.0, %v1462
        %v1464 = vpop.f32.mrb[0].mxu0
        %v1465 = vpop.f32.mrb[0].mxu0
        %v1466 = vadd.f32 0.0, %v1465
        %v1467 = vpop.f32.mrb[0].mxu0
        %1468 = vdwg.mxu0
        %v1469 = vadd.f32 %v1290, %v1399
        %v1470 = vadd.f32 %v1291, %v1402
        %v1471 = vadd.f32 %v1292, %v1407
        %v1472 = vadd.f32 %v1293, %v1410
        %v1473 = vadd.f32 %v1294, %v1415
        %v1474 = vadd.f32 %v1295, %v1418
        %v1475 = vadd.f32 %v1296, %v1423
        %v1476 = vadd.f32 %v1297, %v1426
        %v1477 = vadd.f32 %v1298, %v1431
        %v1478 = vadd.f32 %v1299, %v1434
        %v1479 = vadd.f32 %v1300, %v1439
        %v1480 = vadd.f32 %v1301, %v1442
        %v1481 = vadd.f32 %v1302, %v1447
        %v1482 = vadd.f32 %v1303, %v1450
        %v1483 = vadd.f32 %v1304, %v1455
        %v1484 = vadd.f32 %v1305, %v1458
        %v1485 = vadd.f32 %v1306, %v1463
        %v1486 = vadd.f32 %v1307, %v1466
        %v1487 = vld [vmem:[%s215 + $0x10] sm:$0xc]
        %v1488 = vld [vmem:[%s215 + $0x14] sm:$0xf]
        %v1489 = vld [vmem:[%s215 + $0x18] sm:$0xf]
        %v1490 = vld [vmem:[%s215 + $0x1c] sm:$0xf]
        %v1491 = vld [vmem:[%s215 + $0x20] sm:$0xf]
        %v1492 = vld [vmem:[%s215 + $0x24] sm:$0xf]
        %v1493 = vld [vmem:[%s215 + $0x28] sm:$0xf]
        %v1494 = vld [vmem:[%s215 + $0x2c] sm:$0xf]
        %v1495 = vld [vmem:[%s215 + $0x30] sm:$0xf]
        %v1496 = vld [vmem:[%s215 + $0x34] sm:$0xf]
        %v1497 = vld [vmem:[%s215 + $0x38] sm:$0xf]
        %v1498 = vld [vmem:[%s215 + $0x3c] sm:$0xf]
        %v1499 = vld [vmem:[%s215 + $0x40] sm:$0xf]
        %v1500 = vld [vmem:[%s215 + $0x44] sm:$0xf]
        %v1501 = vld [vmem:[%s215 + $0x48] sm:$0xf]
        %v1502 = vld [vmem:[%s215 + $0x4c] sm:$0xf]
        %v1503 = vld [vmem:[%s215 + $0x50] sm:$0xf]
        %v1504 = vld [vmem:[%s215 + $0x54] sm:$0xf]
        %v1505 = vld [vmem:[%s215 + $0x58] sm:$0x3]
        %s1506 = scalar_lea.vmem %s219, 12
        %v1507 = vld [vmem:[%s1506] sm:$0x3]
        %v1527 = vunpack.c.l.b16 %v1487
        %v1528 = vunpack.c.l.b16 %v1488
        %v1529 = vunpack.c.l.b16 %v1489
        %v1530 = vunpack.c.l.b16 %v1490
        %v1531 = vunpack.c.l.b16 %v1491
        %v1532 = vunpack.c.l.b16 %v1492
        %v1533 = vunpack.c.l.b16 %v1493
        %v1534 = vunpack.c.l.b16 %v1494
        %v1535 = vunpack.c.l.b16 %v1495
        %v1536 = vunpack.c.l.b16 %v1496
        %v1537 = vunpack.c.l.b16 %v1497
        %v1538 = vunpack.c.l.b16 %v1498
        %v1539 = vunpack.c.l.b16 %v1499
        %v1540 = vunpack.c.l.b16 %v1500
        %v1541 = vunpack.c.l.b16 %v1501
        %v1542 = vunpack.c.l.b16 %v1502
        %v1543 = vunpack.c.l.b16 %v1503
        %v1544 = vunpack.c.l.b16 %v1504
        %v1545 = vunpack.c.l.b16 %v1505
        %v1546 = vpack.c.b16 %v1528, %v1527
        %v1547 = vpack.c.b16 %v1530, %v1529
        %v1548 = vpack.c.b16 %v1532, %v1531
        %v1549 = vpack.c.b16 %v1534, %v1533
        %v1550 = vpack.c.b16 %v1536, %v1535
        %v1551 = vpack.c.b16 %v1538, %v1537
        %v1552 = vpack.c.b16 %v1540, %v1539
        %v1553 = vpack.c.b16 %v1542, %v1541
        %v1554 = vpack.c.b16 %v1544, %v1543
        %v1555 = vpack.c.b16 %v1545, %v1545
        %v1556 = vrot.slane %v1546, 2
        %v1557 = vrot.slane %v1547, 2
        %v1558 = vsel %vm1314, %v1556, %v1557
        %v1559 = vrot.slane %v1548, 2
        %v1560 = vsel %vm1314, %v1557, %v1559
        %v1561 = vrot.slane %v1549, 2
        %v1562 = vsel %vm1314, %v1559, %v1561
        %v1563 = vrot.slane %v1550, 2
        %v1564 = vsel %vm1314, %v1561, %v1563
        %v1565 = vrot.slane %v1551, 2
        %v1566 = vsel %vm1314, %v1563, %v1565
        %v1567 = vrot.slane %v1552, 2
        %v1568 = vsel %vm1314, %v1565, %v1567
        %v1569 = vrot.slane %v1553, 2
        %v1570 = vsel %vm1314, %v1567, %v1569
        %v1571 = vrot.slane %v1554, 2
        %v1572 = vsel %vm1314, %v1569, %v1571
        %v1573 = vrot.slane %v1555, 2
        %v1574 = vsel %vm1314, %v1571, %v1573
        %v1576 = vsel %vm376, %v1558, 0
        %v1579 = vsel %vm376, %v1560, 0
        %v1582 = vsel %vm376, %v1562, 0
        %v1585 = vsel %vm376, %v1564, 0
        %v1588 = vsel %vm376, %v1566, 0
        %v1591 = vsel %vm376, %v1568, 0
        %v1594 = vsel %vm376, %v1570, 0
        %v1597 = vsel %vm376, %v1572, 0
        %v1600 = vsel %vm376, %v1574, 0
        %v1603 = vsel %vm404, %v1507, 0
        %1605 = vmatprep.subr.bf16.mxu0 0
        %1606 = vmatpush1.bf16.msra.mxu0 %v1603
        %1607 = vmatprep.subr.bf16.mxu0 0
        %1608 = vmatpush1.bf16.msra.mxu0 0
        %1609 = vmatprep.subr.bf16.mxu0 0
        %1610 = vmatpush1.bf16.msra.mxu0 0
        %1611 = vmatprep.subr.bf16.mxu0 0
        %1612 = vmatpush1.bf16.msra.mxu0 0
        %1613 = vmatprep.subr.bf16.mxu0 0
        %1614 = vmatpush1.bf16.msra.mxu0 0
        %1615 = vmatprep.subr.bf16.mxu0 0
        %1616 = vmatpush1.bf16.msra.mxu0 0
        %1617 = vmatprep.subr.bf16.mxu0 0
        %1618 = vmatpush1.bf16.msra.mxu0 0
        %1619 = vmatprep.subr.bf16.mxu0 0
        %1620 = vmatpush1.bf16.msra.mxu0 0
        %1621 = vmatprep.subr.bf16.mxu0 0
        %1622 = vmatpush1.bf16.msra.mxu0 0
        %1623 = vmatprep.subr.bf16.mxu0 0
        %1624 = vmatpush1.bf16.msra.mxu0 0
        %1625 = vmatprep.subr.bf16.mxu0 0
        %1626 = vmatpush1.bf16.msra.mxu0 0
        %1627 = vmatprep.subr.bf16.mxu0 0
        %1628 = vmatpush1.bf16.msra.mxu0 0
        %1629 = vmatprep.subr.bf16.mxu0 0
        %1630 = vmatpush1.bf16.msra.mxu0 0
        %1631 = vmatprep.subr.bf16.mxu0 0
        %1632 = vmatpush1.bf16.msra.mxu0 0
        %1633 = vmatprep.subr.bf16.mxu0 0
        %1634 = vmatpush1.bf16.msra.mxu0 0
        %1635 = vmatprep.subr.bf16.mxu0 0
        %1636 = vmatpush1.bf16.msra.mxu0 0
        %1637 = vmatprep.mubr.bf16.mxu0 0
        %1638 = vmatmul.mubr.bf16.gmra.mrb[0].mxu0 %v1576
        %v1639 = vpop.f32.mrb[0].mxu0
        %v1640 = vadd.f32 0.0, %v1639
        %v1641 = vpop.f32.mrb[0].mxu0
        %v1642 = vpop.f32.mrb[0].mxu0
        %v1643 = vadd.f32 0.0, %v1642
        %v1644 = vpop.f32.mrb[0].mxu0
        %1645 = vmatprep.mubr.bf16.mxu0 0
        %1646 = vmatmul.mubr.bf16.gmra.mrb[0].mxu0 %v1579
        %v1647 = vpop.f32.mrb[0].mxu0
        %v1648 = vadd.f32 0.0, %v1647
        %v1649 = vpop.f32.mrb[0].mxu0
        %v1650 = vpop.f32.mrb[0].mxu0
        %v1651 = vadd.f32 0.0, %v1650
        %v1652 = vpop.f32.mrb[0].mxu0
        %1653 = vmatprep.mubr.bf16.mxu0 0
        %1654 = vmatmul.mubr.bf16.gmra.mrb[0].mxu0 %v1582
        %v1655 = vpop.f32.mrb[0].mxu0
        %v1656 = vadd.f32 0.0, %v1655
        %v1657 = vpop.f32.mrb[0].mxu0
        %v1658 = vpop.f32.mrb[0].mxu0
        %v1659 = vadd.f32 0.0, %v1658
        %v1660 = vpop.f32.mrb[0].mxu0
        %1661 = vmatprep.mubr.bf16.mxu0 0
        %1662 = vmatmul.mubr.bf16.gmra.mrb[0].mxu0 %v1585
        %v1663 = vpop.f32.mrb[0].mxu0
        %v1664 = vadd.f32 0.0, %v1663
        %v1665 = vpop.f32.mrb[0].mxu0
        %v1666 = vpop.f32.mrb[0].mxu0
        %v1667 = vadd.f32 0.0, %v1666
        %v1668 = vpop.f32.mrb[0].mxu0
        %1669 = vmatprep.mubr.bf16.mxu0 0
        %1670 = vmatmul.mubr.bf16.gmra.mrb[0].mxu0 %v1588
        %v1671 = vpop.f32.mrb[0].mxu0
        %v1672 = vadd.f32 0.0, %v1671
        %v1673 = vpop.f32.mrb[0].mxu0
        %v1674 = vpop.f32.mrb[0].mxu0
        %v1675 = vadd.f32 0.0, %v1674
        %v1676 = vpop.f32.mrb[0].mxu0
        %1677 = vmatprep.mubr.bf16.mxu0 0
        %1678 = vmatmul.mubr.bf16.gmra.mrb[0].mxu0 %v1591
        %v1679 = vpop.f32.mrb[0].mxu0
        %v1680 = vadd.f32 0.0, %v1679
        %v1681 = vpop.f32.mrb[0].mxu0
        %v1682 = vpop.f32.mrb[0].mxu0
        %v1683 = vadd.f32 0.0, %v1682
        %v1684 = vpop.f32.mrb[0].mxu0
        %1685 = vmatprep.mubr.bf16.mxu0 0
        %1686 = vmatmul.mubr.bf16.gmra.mrb[0].mxu0 %v1594
        %v1687 = vpop.f32.mrb[0].mxu0
        %v1688 = vadd.f32 0.0, %v1687
        %v1689 = vpop.f32.mrb[0].mxu0
        %v1690 = vpop.f32.mrb[0].mxu0
        %v1691 = vadd.f32 0.0, %v1690
        %v1692 = vpop.f32.mrb[0].mxu0
        %1693 = vmatprep.mubr.bf16.mxu0 0
        %1694 = vmatmul.mubr.bf16.gmra.mrb[0].mxu0 %v1597
        %v1695 = vpop.f32.mrb[0].mxu0
        %v1696 = vadd.f32 0.0, %v1695
        %v1697 = vpop.f32.mrb[0].mxu0
        %v1698 = vpop.f32.mrb[0].mxu0
        %v1699 = vadd.f32 0.0, %v1698
        %v1700 = vpop.f32.mrb[0].mxu0
        %1701 = vmatprep.mubr.bf16.mxu0 0
        %1702 = vmatmul.mubr.bf16.gmra.mrb[0].mxu0 %v1600
        %v1703 = vpop.f32.mrb[0].mxu0
        %v1704 = vadd.f32 0.0, %v1703
        %v1705 = vpop.f32.mrb[0].mxu0
        %v1706 = vpop.f32.mrb[0].mxu0
        %v1707 = vadd.f32 0.0, %v1706
        %v1708 = vpop.f32.mrb[0].mxu0
        %1709 = vdwg.mxu0
        %v1710 = vadd.f32 %v1469, %v1640
        %v1711 = vadd.f32 %v1470, %v1643
        %v1712 = vadd.f32 %v1471, %v1648
        %v1713 = vadd.f32 %v1472, %v1651
        %v1714 = vadd.f32 %v1473, %v1656
        %v1715 = vadd.f32 %v1474, %v1659
        %v1716 = vadd.f32 %v1475, %v1664
        %v1717 = vadd.f32 %v1476, %v1667
        %v1718 = vadd.f32 %v1477, %v1672
        %v1719 = vadd.f32 %v1478, %v1675
        %v1720 = vadd.f32 %v1479, %v1680
        %v1721 = vadd.f32 %v1480, %v1683
        %v1722 = vadd.f32 %v1481, %v1688
        %v1723 = vadd.f32 %v1482, %v1691
        %v1724 = vadd.f32 %v1483, %v1696
        %v1725 = vadd.f32 %v1484, %v1699
        %v1726 = vadd.f32 %v1485, %v1704
        %v1727 = vadd.f32 %v1486, %v1707
        %v1728 = vld [vmem:[%s215 + $0x58] sm:$0x7]
        %s1729 = scalar_lea.vmem %s219, 14
        %v1730 = vld [vmem:[%s1729] sm:$0x3]
        %v1732 = vunpack.c.l.b16 %v1728
        %v1733 = vpack.c.b16 %v1732, %v1732
        %vm1734 = vsmask.f32 5376
        %v1736 = vshrl.u32 %v1546, 16
        %v1738 = vrot.slane %v1736, 2
        %v1739 = vshll.u32 %v1546, 16
        %v1741 = vrot.slane %v1739, 3
        %v1742 = vor.u32 %v1738, %v1741
        %v1744 = vshrl.u32 %v1547, 16
        %v1746 = vrot.slane %v1744, 2
        %v1747 = vshll.u32 %v1547, 16
        %v1749 = vrot.slane %v1747, 3
        %v1750 = vor.u32 %v1746, %v1749
        %v1751 = vsel %vm1734, %v1742, %v1750
        %v1753 = vshrl.u32 %v1548, 16
        %v1755 = vrot.slane %v1753, 2
        %v1756 = vshll.u32 %v1548, 16
        %v1758 = vrot.slane %v1756, 3
        %v1759 = vor.u32 %v1755, %v1758
        %v1760 = vsel %vm1734, %v1750, %v1759
        %v1762 = vshrl.u32 %v1549, 16
        %v1764 = vrot.slane %v1762, 2
        %v1765 = vshll.u32 %v1549, 16
        %v1767 = vrot.slane %v1765, 3
        %v1768 = vor.u32 %v1764, %v1767
        %v1769 = vsel %vm1734, %v1759, %v1768
        %v1771 = vshrl.u32 %v1550, 16
        %v1773 = vrot.slane %v1771, 2
        %v1774 = vshll.u32 %v1550, 16
        %v1776 = vrot.slane %v1774, 3
        %v1777 = vor.u32 %v1773, %v1776
        %v1778 = vsel %vm1734, %v1768, %v1777
        %v1780 = vshrl.u32 %v1551, 16
        %v1782 = vrot.slane %v1780, 2
        %v1783 = vshll.u32 %v1551, 16
        %v1785 = vrot.slane %v1783, 3
        %v1786 = vor.u32 %v1782, %v1785
        %v1787 = vsel %vm1734, %v1777, %v1786
        %v1789 = vshrl.u32 %v1552, 16
        %v1791 = vrot.slane %v1789, 2
        %v1792 = vshll.u32 %v1552, 16
        %v1794 = vrot.slane %v1792, 3
        %v1795 = vor.u32 %v1791, %v1794
        %v1796 = vsel %vm1734, %v1786, %v1795
        %v1798 = vshrl.u32 %v1553, 16
        %v1800 = vrot.slane %v1798, 2
        %v1801 = vshll.u32 %v1553, 16
        %v1803 = vrot.slane %v1801, 3
        %v1804 = vor.u32 %v1800, %v1803
        %v1805 = vsel %vm1734, %v1795, %v1804
        %v1807 = vshrl.u32 %v1554, 16
        %v1809 = vrot.slane %v1807, 2
        %v1810 = vshll.u32 %v1554, 16
        %v1812 = vrot.slane %v1810, 3
        %v1813 = vor.u32 %v1809, %v1812
        %v1814 = vsel %vm1734, %v1804, %v1813
        %v1816 = vshrl.u32 %v1733, 16
        %v1818 = vrot.slane %v1816, 2
        %v1819 = vshll.u32 %v1733, 16
        %v1821 = vrot.slane %v1819, 3
        %v1822 = vor.u32 %v1818, %v1821
        %v1823 = vsel %vm1734, %v1813, %v1822
        %v1825 = vsel %vm376, %v1751, 0
        %v1828 = vsel %vm376, %v1760, 0
        %v1831 = vsel %vm376, %v1769, 0
        %v1834 = vsel %vm376, %v1778, 0
        %v1837 = vsel %vm376, %v1787, 0
        %v1840 = vsel %vm376, %v1796, 0
        %v1843 = vsel %vm376, %v1805, 0
        %v1846 = vsel %vm376, %v1814, 0
        %v1849 = vsel %vm376, %v1823, 0
        %v1852 = vsel %vm404, %v1730, 0
        %1854 = vmatprep.subr.bf16.mxu0 0
        %1855 = vmatpush1.bf16.msra.mxu0 %v1852
        %1856 = vmatprep.subr.bf16.mxu0 0
        %1857 = vmatpush1.bf16.msra.mxu0 0
        %1858 = vmatprep.subr.bf16.mxu0 0
        %1859 = vmatpush1.bf16.msra.mxu0 0
        %1860 = vmatprep.subr.bf16.mxu0 0
        %1861 = vmatpush1.bf16.msra.mxu0 0
        %1862 = vmatprep.subr.bf16.mxu0 0
        %1863 = vmatpush1.bf16.msra.mxu0 0
        %1864 = vmatprep.subr.bf16.mxu0 0
        %1865 = vmatpush1.bf16.msra.mxu0 0
        %1866 = vmatprep.subr.bf16.mxu0 0
        %1867 = vmatpush1.bf16.msra.mxu0 0
        %1868 = vmatprep.subr.bf16.mxu0 0
        %1869 = vmatpush1.bf16.msra.mxu0 0
        %1870 = vmatprep.subr.bf16.mxu0 0
        %1871 = vmatpush1.bf16.msra.mxu0 0
        %1872 = vmatprep.subr.bf16.mxu0 0
        %1873 = vmatpush1.bf16.msra.mxu0 0
        %1874 = vmatprep.subr.bf16.mxu0 0
        %1875 = vmatpush1.bf16.msra.mxu0 0
        %1876 = vmatprep.subr.bf16.mxu0 0
        %1877 = vmatpush1.bf16.msra.mxu0 0
        %1878 = vmatprep.subr.bf16.mxu0 0
        %1879 = vmatpush1.bf16.msra.mxu0 0
        %1880 = vmatprep.subr.bf16.mxu0 0
        %1881 = vmatpush1.bf16.msra.mxu0 0
        %1882 = vmatprep.subr.bf16.mxu0 0
        %1883 = vmatpush1.bf16.msra.mxu0 0
        %1884 = vmatprep.subr.bf16.mxu0 0
        %1885 = vmatpush1.bf16.msra.mxu0 0
        %1886 = vmatprep.mubr.bf16.mxu0 0
        %1887 = vmatmul.mubr.bf16.gmra.mrb[0].mxu0 %v1825
        %v1888 = vpop.f32.mrb[0].mxu0
        %v1889 = vadd.f32 0.0, %v1888
        %v1890 = vpop.f32.mrb[0].mxu0
        %v1891 = vpop.f32.mrb[0].mxu0
        %v1892 = vadd.f32 0.0, %v1891
        %v1893 = vpop.f32.mrb[0].mxu0
        %1894 = vmatprep.mubr.bf16.mxu0 0
        %1895 = vmatmul.mubr.bf16.gmra.mrb[0].mxu0 %v1828
        %v1896 = vpop.f32.mrb[0].mxu0
        %v1897 = vadd.f32 0.0, %v1896
        %v1898 = vpop.f32.mrb[0].mxu0
        %v1899 = vpop.f32.mrb[0].mxu0
        %v1900 = vadd.f32 0.0, %v1899
        %v1901 = vpop.f32.mrb[0].mxu0
        %1902 = vmatprep.mubr.bf16.mxu0 0
        %1903 = vmatmul.mubr.bf16.gmra.mrb[0].mxu0 %v1831
        %v1904 = vpop.f32.mrb[0].mxu0
        %v1905 = vadd.f32 0.0, %v1904
        %v1906 = vpop.f32.mrb[0].mxu0
        %v1907 = vpop.f32.mrb[0].mxu0
        %v1908 = vadd.f32 0.0, %v1907
        %v1909 = vpop.f32.mrb[0].mxu0
        %1910 = vmatprep.mubr.bf16.mxu0 0
        %1911 = vmatmul.mubr.bf16.gmra.mrb[0].mxu0 %v1834
        %v1912 = vpop.f32.mrb[0].mxu0
        %v1913 = vadd.f32 0.0, %v1912
        %v1914 = vpop.f32.mrb[0].mxu0
        %v1915 = vpop.f32.mrb[0].mxu0
        %v1916 = vadd.f32 0.0, %v1915
        %v1917 = vpop.f32.mrb[0].mxu0
        %1918 = vmatprep.mubr.bf16.mxu0 0
        %1919 = vmatmul.mubr.bf16.gmra.mrb[0].mxu0 %v1837
        %v1920 = vpop.f32.mrb[0].mxu0
        %v1921 = vadd.f32 0.0, %v1920
        %v1922 = vpop.f32.mrb[0].mxu0
        %v1923 = vpop.f32.mrb[0].mxu0
        %v1924 = vadd.f32 0.0, %v1923
        %v1925 = vpop.f32.mrb[0].mxu0
        %1926 = vmatprep.mubr.bf16.mxu0 0
        %1927 = vmatmul.mubr.bf16.gmra.mrb[0].mxu0 %v1840
        %v1928 = vpop.f32.mrb[0].mxu0
        %v1929 = vadd.f32 0.0, %v1928
        %v1930 = vpop.f32.mrb[0].mxu0
        %v1931 = vpop.f32.mrb[0].mxu0
        %v1932 = vadd.f32 0.0, %v1931
        %v1933 = vpop.f32.mrb[0].mxu0
        %1934 = vmatprep.mubr.bf16.mxu0 0
        %1935 = vmatmul.mubr.bf16.gmra.mrb[0].mxu0 %v1843
        %v1936 = vpop.f32.mrb[0].mxu0
        %v1937 = vadd.f32 0.0, %v1936
        %v1938 = vpop.f32.mrb[0].mxu0
        %v1939 = vpop.f32.mrb[0].mxu0
        %v1940 = vadd.f32 0.0, %v1939
        %v1941 = vpop.f32.mrb[0].mxu0
        %1942 = vmatprep.mubr.bf16.mxu0 0
        %1943 = vmatmul.mubr.bf16.gmra.mrb[0].mxu0 %v1846
        %v1944 = vpop.f32.mrb[0].mxu0
        %v1945 = vadd.f32 0.0, %v1944
        %v1946 = vpop.f32.mrb[0].mxu0
        %v1947 = vpop.f32.mrb[0].mxu0
        %v1948 = vadd.f32 0.0, %v1947
        %v1949 = vpop.f32.mrb[0].mxu0
        %1950 = vmatprep.mubr.bf16.mxu0 0
        %1951 = vmatmul.mubr.bf16.gmra.mrb[0].mxu0 %v1849
        %v1952 = vpop.f32.mrb[0].mxu0
        %v1953 = vadd.f32 0.0, %v1952
        %v1954 = vpop.f32.mrb[0].mxu0
        %v1955 = vpop.f32.mrb[0].mxu0
        %v1956 = vadd.f32 0.0, %v1955
        %v1957 = vpop.f32.mrb[0].mxu0
        %1958 = vdwg.mxu0
        %v1959 = vadd.f32 %v1710, %v1889
        %v1960 = vadd.f32 %v1711, %v1892
        %v1961 = vadd.f32 %v1712, %v1897
        %v1962 = vadd.f32 %v1713, %v1900
        %v1963 = vadd.f32 %v1714, %v1905
        %v1964 = vadd.f32 %v1715, %v1908
        %v1965 = vadd.f32 %v1716, %v1913
        %v1966 = vadd.f32 %v1717, %v1916
        %v1967 = vadd.f32 %v1718, %v1921
        %v1968 = vadd.f32 %v1719, %v1924
        %v1969 = vadd.f32 %v1720, %v1929
        %v1970 = vadd.f32 %v1721, %v1932
        %v1971 = vadd.f32 %v1722, %v1937
        %v1972 = vadd.f32 %v1723, %v1940
        %v1973 = vadd.f32 %v1724, %v1945
        %v1974 = vadd.f32 %v1725, %v1948
        %v1975 = vadd.f32 %v1726, %v1953
        %v1976 = vadd.f32 %v1727, %v1956
        %v1977 = vld [vmem:[%s215 + $0x10] sm:$0x8]
        %s1978 = scalar_lea.vmem %s219, 16
        %v1979 = vld [vmem:[%s1978] sm:$0x3]
        %v1981 = vunpack.c.l.b16 %v1977
        %v1982 = vpack.c.b16 %v1528, %v1981
        %vm1983 = vcmask 1044480
        %v1984 = vrot.slane %v1982, 3
        %v1985 = vrot.slane %v1547, 3
        %v1986 = vsel %vm1983, %v1984, %v1985
        %v1987 = vrot.slane %v1548, 3
        %v1988 = vsel %vm1983, %v1985, %v1987
        %v1989 = vrot.slane %v1549, 3
        %v1990 = vsel %vm1983, %v1987, %v1989
        %v1991 = vrot.slane %v1550, 3
        %v1992 = vsel %vm1983, %v1989, %v1991
        %v1993 = vrot.slane %v1551, 3
        %v1994 = vsel %vm1983, %v1991, %v1993
        %v1995 = vrot.slane %v1552, 3
        %v1996 = vsel %vm1983, %v1993, %v1995
        %v1997 = vrot.slane %v1553, 3
        %v1998 = vsel %vm1983, %v1995, %v1997
        %v1999 = vrot.slane %v1554, 3
        %v2000 = vsel %vm1983, %v1997, %v1999
        %v2001 = vrot.slane %v1733, 3
        %v2002 = vsel %vm1983, %v1999, %v2001
        %v2004 = vsel %vm376, %v1986, 0
        %v2007 = vsel %vm376, %v1988, 0
        %v2010 = vsel %vm376, %v1990, 0
        %v2013 = vsel %vm376, %v1992, 0
        %v2016 = vsel %vm376, %v1994, 0
        %v2019 = vsel %vm376, %v1996, 0
        %v2022 = vsel %vm376, %v1998, 0
        %v2025 = vsel %vm376, %v2000, 0
        %v2028 = vsel %vm376, %v2002, 0
        %v2031 = vsel %vm404, %v1979, 0
        %2033 = vmatprep.subr.bf16.mxu0 0
        %2034 = vmatpush1.bf16.msra.mxu0 %v2031
        %2035 = vmatprep.subr.bf16.mxu0 0
        %2036 = vmatpush1.bf16.msra.mxu0 0
        %2037 = vmatprep.subr.bf16.mxu0 0
        %2038 = vmatpush1.bf16.msra.mxu0 0
        %2039 = vmatprep.subr.bf16.mxu0 0
        %2040 = vmatpush1.bf16.msra.mxu0 0
        %2041 = vmatprep.subr.bf16.mxu0 0
        %2042 = vmatpush1.bf16.msra.mxu0 0
        %2043 = vmatprep.subr.bf16.mxu0 0
        %2044 = vmatpush1.bf16.msra.mxu0 0
        %2045 = vmatprep.subr.bf16.mxu0 0
        %2046 = vmatpush1.bf16.msra.mxu0 0
        %2047 = vmatprep.subr.bf16.mxu0 0
        %2048 = vmatpush1.bf16.msra.mxu0 0
        %2049 = vmatprep.subr.bf16.mxu0 0
        %2050 = vmatpush1.bf16.msra.mxu0 0
        %2051 = vmatprep.subr.bf16.mxu0 0
        %2052 = vmatpush1.bf16.msra.mxu0 0
        %2053 = vmatprep.subr.bf16.mxu0 0
        %2054 = vmatpush1.bf16.msra.mxu0 0
        %2055 = vmatprep.subr.bf16.mxu0 0
        %2056 = vmatpush1.bf16.msra.mxu0 0
        %2057 = vmatprep.subr.bf16.mxu0 0
        %2058 = vmatpush1.bf16.msra.mxu0 0
        %2059 = vmatprep.subr.bf16.mxu0 0
        %2060 = vmatpush1.bf16.msra.mxu0 0
        %2061 = vmatprep.subr.bf16.mxu0 0
        %2062 = vmatpush1.bf16.msra.mxu0 0
        %2063 = vmatprep.subr.bf16.mxu0 0
        %2064 = vmatpush1.bf16.msra.mxu0 0
        %2065 = vmatprep.mubr.bf16.mxu0 0
        %2066 = vmatmul.mubr.bf16.gmra.mrb[0].mxu0 %v2004
        %v2067 = vpop.f32.mrb[0].mxu0
        %v2068 = vadd.f32 0.0, %v2067
        %v2069 = vpop.f32.mrb[0].mxu0
        %v2070 = vpop.f32.mrb[0].mxu0
        %v2071 = vadd.f32 0.0, %v2070
        %v2072 = vpop.f32.mrb[0].mxu0
        %2073 = vmatprep.mubr.bf16.mxu0 0
        %2074 = vmatmul.mubr.bf16.gmra.mrb[0].mxu0 %v2007
        %v2075 = vpop.f32.mrb[0].mxu0
        %v2076 = vadd.f32 0.0, %v2075
        %v2077 = vpop.f32.mrb[0].mxu0
        %v2078 = vpop.f32.mrb[0].mxu0
        %v2079 = vadd.f32 0.0, %v2078
        %v2080 = vpop.f32.mrb[0].mxu0
        %2081 = vmatprep.mubr.bf16.mxu0 0
        %2082 = vmatmul.mubr.bf16.gmra.mrb[0].mxu0 %v2010
        %v2083 = vpop.f32.mrb[0].mxu0
        %v2084 = vadd.f32 0.0, %v2083
        %v2085 = vpop.f32.mrb[0].mxu0
        %v2086 = vpop.f32.mrb[0].mxu0
        %v2087 = vadd.f32 0.0, %v2086
        %v2088 = vpop.f32.mrb[0].mxu0
        %2089 = vmatprep.mubr.bf16.mxu0 0
        %2090 = vmatmul.mubr.bf16.gmra.mrb[0].mxu0 %v2013
        %v2091 = vpop.f32.mrb[0].mxu0
        %v2092 = vadd.f32 0.0, %v2091
        %v2093 = vpop.f32.mrb[0].mxu0
        %v2094 = vpop.f32.mrb[0].mxu0
        %v2095 = vadd.f32 0.0, %v2094
        %v2096 = vpop.f32.mrb[0].mxu0
        %2097 = vmatprep.mubr.bf16.mxu0 0
        %2098 = vmatmul.mubr.bf16.gmra.mrb[0].mxu0 %v2016
        %v2099 = vpop.f32.mrb[0].mxu0
        %v2100 = vadd.f32 0.0, %v2099
        %v2101 = vpop.f32.mrb[0].mxu0
        %v2102 = vpop.f32.mrb[0].mxu0
        %v2103 = vadd.f32 0.0, %v2102
        %v2104 = vpop.f32.mrb[0].mxu0
        %2105 = vmatprep.mubr.bf16.mxu0 0
        %2106 = vmatmul.mubr.bf16.gmra.mrb[0].mxu0 %v2019
        %v2107 = vpop.f32.mrb[0].mxu0
        %v2108 = vadd.f32 0.0, %v2107
        %v2109 = vpop.f32.mrb[0].mxu0
        %v2110 = vpop.f32.mrb[0].mxu0
        %v2111 = vadd.f32 0.0, %v2110
        %v2112 = vpop.f32.mrb[0].mxu0
        %2113 = vmatprep.mubr.bf16.mxu0 0
        %2114 = vmatmul.mubr.bf16.gmra.mrb[0].mxu0 %v2022
        %v2115 = vpop.f32.mrb[0].mxu0
        %v2116 = vadd.f32 0.0, %v2115
        %v2117 = vpop.f32.mrb[0].mxu0
        %v2118 = vpop.f32.mrb[0].mxu0
        %v2119 = vadd.f32 0.0, %v2118
        %v2120 = vpop.f32.mrb[0].mxu0
        %2121 = vmatprep.mubr.bf16.mxu0 0
        %2122 = vmatmul.mubr.bf16.gmra.mrb[0].mxu0 %v2025
        %v2123 = vpop.f32.mrb[0].mxu0
        %v2124 = vadd.f32 0.0, %v2123
        %v2125 = vpop.f32.mrb[0].mxu0
        %v2126 = vpop.f32.mrb[0].mxu0
        %v2127 = vadd.f32 0.0, %v2126
        %v2128 = vpop.f32.mrb[0].mxu0
        %2129 = vmatprep.mubr.bf16.mxu0 0
        %2130 = vmatmul.mubr.bf16.gmra.mrb[0].mxu0 %v2028
        %v2131 = vpop.f32.mrb[0].mxu0
        %v2132 = vadd.f32 0.0, %v2131
        %v2133 = vpop.f32.mrb[0].mxu0
        %v2134 = vpop.f32.mrb[0].mxu0
        %v2135 = vadd.f32 0.0, %v2134
        %v2136 = vpop.f32.mrb[0].mxu0
        %2137 = vdwg.mxu0
        %v2138 = vadd.f32 %v1959, %v2068
        %v2139 = vadd.f32 %v1960, %v2071
        %v2140 = vadd.f32 %v1961, %v2076
        %v2141 = vadd.f32 %v1962, %v2079
        %v2142 = vadd.f32 %v1963, %v2084
        %v2143 = vadd.f32 %v1964, %v2087
        %v2144 = vadd.f32 %v1965, %v2092
        %v2145 = vadd.f32 %v1966, %v2095
        %v2146 = vadd.f32 %v1967, %v2100
        %v2147 = vadd.f32 %v1968, %v2103
        %v2148 = vadd.f32 %v1969, %v2108
        %v2149 = vadd.f32 %v1970, %v2111
        %v2150 = vadd.f32 %v1971, %v2116
        %v2151 = vadd.f32 %v1972, %v2119
        %v2152 = vadd.f32 %v1973, %v2124
        %v2153 = vadd.f32 %v1974, %v2127
        %v2154 = vadd.f32 %v1975, %v2132
        %v2155 = vadd.f32 %v1976, %v2135
        %v2156 = vld [vmem:[#allocation2] sm:$0x1]
        %v2158 = vlaneseq
        %v2159 = vshrl.u32 %v2158, 7
        %v2160 = vsub.s32 0, %v2159
        %v2161 = vrot.slane %v2156, %v2160
        %v2163 = vadd.f32 %v2138, %v2161
        %v2164 = vadd.f32 %v2139, %v2161
        %v2165 = vadd.f32 %v2140, %v2161
        %v2166 = vadd.f32 %v2141, %v2161
        %v2167 = vadd.f32 %v2142, %v2161
        %v2168 = vadd.f32 %v2143, %v2161
        %v2169 = vadd.f32 %v2144, %v2161
        %v2170 = vadd.f32 %v2145, %v2161
        %v2171 = vadd.f32 %v2146, %v2161
        %v2172 = vadd.f32 %v2147, %v2161
        %v2173 = vadd.f32 %v2148, %v2161
        %v2174 = vadd.f32 %v2149, %v2161
        %v2175 = vadd.f32 %v2150, %v2161
        %v2176 = vadd.f32 %v2151, %v2161
        %v2177 = vadd.f32 %v2152, %v2161
        %v2178 = vadd.f32 %v2153, %v2161
        %v2179 = vadd.f32 %v2154, %v2161
        %v2180 = vadd.f32 %v2155, %v2161
        %v2181 = vmax.f32 %v2163, 0.0
        %v2182 = vmax.f32 %v2164, 0.0
        %v2183 = vmax.f32 %v2165, 0.0
        %v2184 = vmax.f32 %v2166, 0.0
        %v2185 = vmax.f32 %v2167, 0.0
        %v2186 = vmax.f32 %v2168, 0.0
        %v2187 = vmax.f32 %v2169, 0.0
        %v2188 = vmax.f32 %v2170, 0.0
        %v2189 = vmax.f32 %v2171, 0.0
        %v2190 = vmax.f32 %v2172, 0.0
        %v2191 = vmax.f32 %v2173, 0.0
        %v2192 = vmax.f32 %v2174, 0.0
        %v2193 = vmax.f32 %v2175, 0.0
        %v2194 = vmax.f32 %v2176, 0.0
        %v2195 = vmax.f32 %v2177, 0.0
        %v2196 = vmax.f32 %v2178, 0.0
        %v2197 = vmax.f32 %v2179, 0.0
        %v2198 = vmax.f32 %v2180, 0.0
        %v2199 = vpack.c.bf16 %v2182, %v2181
        %v2200 = vpack.c.bf16 %v2184, %v2183
        %v2201 = vpack.c.bf16 %v2186, %v2185
        %v2202 = vpack.c.bf16 %v2188, %v2187
        %v2203 = vpack.c.bf16 %v2190, %v2189
        %v2204 = vpack.c.bf16 %v2192, %v2191
        %v2205 = vpack.c.bf16 %v2194, %v2193
        %v2206 = vpack.c.bf16 %v2196, %v2195
        %v2207 = vpack.c.bf16 %v2198, %v2197
        %v2217 = vunpack.c.l.b16 %v2199
        %v2218 = vunpack.c.h.b16 %v2199
        %v2219 = vunpack.c.l.b16 %v2200
        %v2220 = vunpack.c.h.b16 %v2200
        %v2221 = vunpack.c.l.b16 %v2201
        %v2222 = vunpack.c.h.b16 %v2201
        %v2223 = vunpack.c.l.b16 %v2202
        %v2224 = vunpack.c.h.b16 %v2202
        %v2225 = vunpack.c.l.b16 %v2203
        %v2226 = vunpack.c.h.b16 %v2203
        %v2227 = vunpack.c.l.b16 %v2204
        %v2228 = vunpack.c.h.b16 %v2204
        %v2229 = vunpack.c.l.b16 %v2205
        %v2230 = vunpack.c.h.b16 %v2205
        %v2231 = vunpack.c.l.b16 %v2206
        %v2232 = vunpack.c.h.b16 %v2206
        %v2233 = vunpack.c.l.b16 %v2207
        %v2234 = vunpack.c.h.b16 %v2207
        %v2235 = vpack.c.b16 %v2217, %v2217
        %v2236 = vpack.c.b16 %v2218, %v2218
        %v2237 = vpack.c.b16 %v2219, %v2219
        %v2238 = vpack.c.b16 %v2220, %v2220
        %v2239 = vpack.c.b16 %v2221, %v2221
        %v2240 = vpack.c.b16 %v2222, %v2222
        %v2241 = vpack.c.b16 %v2223, %v2223
        %v2242 = vpack.c.b16 %v2224, %v2224
        %v2243 = vpack.c.b16 %v2225, %v2225
        %v2244 = vpack.c.b16 %v2226, %v2226
        %v2245 = vpack.c.b16 %v2227, %v2227
        %v2246 = vpack.c.b16 %v2228, %v2228
        %v2247 = vpack.c.b16 %v2229, %v2229
        %v2248 = vpack.c.b16 %v2230, %v2230
        %v2249 = vpack.c.b16 %v2231, %v2231
        %v2250 = vpack.c.b16 %v2232, %v2232
        %v2251 = vpack.c.b16 %v2233, %v2233
        %v2252 = vpack.c.b16 %v2234, %v2234
        %2271 = vst [vmem:[%s227] sm:$0xf] %v2235
        %2272 = vst [vmem:[%s227 + $0x4] sm:$0xf] %v2236
        %2273 = vst [vmem:[%s227 + $0x8] sm:$0xf] %v2237
        %2274 = vst [vmem:[%s227 + $0xc] sm:$0xf] %v2238
        %2275 = vst [vmem:[%s227 + $0x10] sm:$0xf] %v2239
        %2276 = vst [vmem:[%s227 + $0x14] sm:$0xf] %v2240
        %2277 = vst [vmem:[%s227 + $0x18] sm:$0xf] %v2241
        %2278 = vst [vmem:[%s227 + $0x1c] sm:$0xf] %v2242
        %2279 = vst [vmem:[%s227 + $0x20] sm:$0xf] %v2243
        %2280 = vst [vmem:[%s227 + $0x24] sm:$0xf] %v2244
        %2281 = vst [vmem:[%s227 + $0x28] sm:$0xf] %v2245
        %2282 = vst [vmem:[%s227 + $0x2c] sm:$0xf] %v2246
        %2283 = vst [vmem:[%s227 + $0x30] sm:$0xf] %v2247
        %2284 = vst [vmem:[%s227 + $0x34] sm:$0xf] %v2248
        %2285 = vst [vmem:[%s227 + $0x38] sm:$0xf] %v2249
        %2286 = vst [vmem:[%s227 + $0x3c] sm:$0xf] %v2250
        %2287 = vst [vmem:[%s227 + $0x40] sm:$0xf] %v2251
        %2288 = vst [vmem:[%s227 + $0x44] sm:$0xf] %v2252
        %p2289 = scmp.lt.s32.totalorder %s19, 1
        %s2290 = scalar_select %p2289, %s19, 1
        %p2291 = scmp.lt.s32.totalorder %s20, 0
        %s2292 = scalar_select %p2291, %s20, 0
        %s2293 = smul.addr %s2290, 18
        %s2294 = sadd.s32 %s2292, %s2293
        %s2295 = smul.addr %s2294, 4
        %s2296 = scalar_lea.vmem %s3, %s2295
        // Predicated region
        $region37: #{faster_rcnn_forward.5} parent=31 // pred_check
          %p2297 = pneg %p125
        $region38: #{faster_rcnn_forward.5} parent=31 // pred_check_branch
          %2299 = sbr.rel (%p2297) target = $region40
        $region39: #{faster_rcnn_forward.5} parent=31 // pred_region
          _
        $region40: #{faster_rcnn_forward.5} parent=31 // pred_fallthru
          _
      $region32: #{faster_rcnn_forward.5} parent=5 // pred_fallthru
        _
      %p2300 = scmp.le.s32.totalorder 2, %s10
      // Predicated region
      $region41: #{faster_rcnn_forward.5} parent=5 // pred_check
        %p2301 = pneg %p2300
      $region42: #{faster_rcnn_forward.5} parent=5 // pred_check_branch
        %2303 = sbr.rel (%p2301) target = $region44
      $region43: #{faster_rcnn_forward.5} parent=5 // pred_region
        %s2304 = ssub.s32 %s10, 2
        // Predicated region
        $region45: #{faster_rcnn_forward.5} parent=43 // pred_check
          %p2305 = pneg %p131
        $region46: #{faster_rcnn_forward.5} parent=43 // pred_check_branch
          %2307 = sbr.rel (%p2305) target = $region48
        $region47: #{faster_rcnn_forward.5} parent=43 // pred_region
          %p2308 = scmp.lt.s32.totalorder %s21, 1
          %s2309 = scalar_select %p2308, %s21, 1
          %p2310 = scmp.lt.s32.totalorder %s22, 0
          %s2311 = scalar_select %p2310, %s22, 0
          %s2312 = smul.addr %s2309, 18
          %s2313 = sadd.s32 %s2311, %s2312
          %s2314 = smul.addr %s2313, 4
          %s2315 = scalar_lea.vmem %s3, %s2314
        $region48: #{faster_rcnn_forward.5} parent=43 // pred_fallthru
          _
      $region44: #{faster_rcnn_forward.5} parent=5 // pred_fallthru
        _
    $region6: #{faster_rcnn_forward.5} parent=1 // loop_footer
      %s14 = sadd.s32 1, %s10
    $region7: #{faster_rcnn_forward.5} parent=1 // loop_footer_branch
      %9 = sbr.rel target = $region3
    $region8: #{faster_rcnn_forward.5} parent=1 // loop_exit
      _
    %2316 = vsyncpa [#allocation3], 1
    %s2317 = scalar_lea.sflag [#allocation3], 1
    %2318 = vsyncpa %s2317, 1

// kernel: faster_rcnn_forward.6
$region0: #{faster_rcnn_forward.6}
  #allocation0 [shape = 'u32[]', space=smem, size = 0x4, offset = 0x4, fixed_abs, tag = 'smem constant byte address 0x4 - core index']
  #allocation1 [shape = 'u32[144,128]{1,0:T(1,128)}', space=vmem, size = 0x12000, scoped, tag = 'internal scratch']
  %s0 = inlined_call_operand.vmem [shape: bf16[2,188,128], index: 0, kind: input, shape index: {}]
  %s1 = inlined_call_operand.vmem [shape: bf16[9,128,32], index: 1, kind: input, shape index: {}]
  %s2 = inlined_call_operand.vmem [shape: f32[1,32], index: 2, kind: input, shape index: {}]
  %s3 = inlined_call_operand.vmem [shape: bf16[32,128], index: 3, kind: input, shape index: {}]
  %s4 = inlined_call_operand.vmem [shape: f32[1,128], index: 4, kind: input, shape index: {}]
  %s5 = inlined_call_operand.vmem [shape: f32[2,144,128], index: 5, kind: output, shape index: {}]
  %s6 = sld [smem:[#allocation0]]
  $region53: #{faster_rcnn_forward.6} parent=0
    _
  %s8 = ssub.s32 1, %s6
  %s9 = scalar_select 0, %s8, %s6
  loop: start=0, step=1, limit=4
  $region2: #{faster_rcnn_forward.6} parent=0 // loop_pre_header
    _
  $region3: #{faster_rcnn_forward.6} parent=0 // loop_header
    %s11 = sphi 0, %s15
    %p12 = scmp.ge.s32.totalorder %s11, 4
    %s18 = sphi 0, %s30
    %s19 = sphi 0, %s26
    %s20 = sphi 0, %s18
    %s21 = sphi 0, %s19
    %s22 = sphi 0, %s20
    %s23 = sphi 0, %s21
    %s33 = sphi 0, %s35
    %s36 = sphi 0, %s33
    %s37 = sphi 0, %s36
    %s53 = sphi 0, %s37
    %s57 = sphi 0, %s57
    %s59 = sphi 0, %s57
    %s60 = sphi 0, %s59
    %s74 = sphi 0, %s60
    %s78 = sphi 0, %s78
    %s80 = sphi 0, %s78
    %s81 = sphi 0, %s80
    %s95 = sphi 0, %s81
    %s101 = sphi 0, %s103
    %s104 = sphi 0, %s101
    %s105 = sphi 0, %s104
    %s121 = sphi 0, %s105
    %s127 = sphi 0, %s129
    %s130 = sphi 0, %s127
    %s131 = sphi 0, %s130
    %s147 = sphi 0, %s131
    %s155 = sphi 0, %s157
    %s158 = sphi 0, %s155
    %s159 = sphi 0, %s158
    %s175 = sphi 0, %s159
  $region4: #{faster_rcnn_forward.6} parent=0 // loop_header_branch
    %14 = sbr.rel (%p12) target = $region8
  $region5: #{faster_rcnn_forward.6} parent=0 // loop_body
    %s16 = ssub.s32 %s11, 1
    %s17 = ssub.s32 %s11, 2
    %s24 = sadd.s32 1, %s19
    %p25 = scmp.ge.s32.totalorder %s24, 1
    %s26 = scalar_select %p25, 0, %s24
    %s27 = sadd.s32 1, %s18
    %s28 = scalar_select %p25, %s27, %s18
    %p29 = scmp.ge.s32.totalorder %s28, 2
    %s30 = scalar_select %p29, 0, %s28
    %s31 = ssub.s32 %s18, %s30
    %p32 = scmp.eq.s32.totalorder %s31, 0
    %s34 = sadd.s32 %s33, 1
    %s35 = scalar_select %p32, %s33, %s34
    %p38 = pneg %p32
    %p39 = scmp.eq.s32.totalorder %s11, 1
    %p40 = por %p38, %p39
    %p41 = scmp.ne.s32.totalorder %s33, %s36
    %p42 = scmp.eq.s32.totalorder %s11, 0
    %p43 = por %p41, %p42
    %p44 = scmp.ne.s32.totalorder %s33, %s36
    %p45 = scmp.eq.s32.totalorder %s16, 1
    %p46 = por %p44, %p45
    %p47 = scmp.ne.s32.totalorder %s36, %s37
    %p48 = scmp.eq.s32.totalorder %s16, 0
    %p49 = por %p47, %p48
    %p50 = scmp.ne.s32.totalorder %s36, %s37
    %p51 = scmp.eq.s32.totalorder %s17, 1
    %p52 = por %p50, %p51
    %p54 = scmp.ne.s32.totalorder %s37, %s53
    %p55 = scmp.eq.s32.totalorder %s17, 0
    %p56 = por %p54, %p55
    %s58 = sadd.s32 %s57, 1
    %p61 = scmp.eq.s32.totalorder %s11, 1
    %p62 = scmp.ne.s32.totalorder %s57, %s59
    %p63 = scmp.eq.s32.totalorder %s11, 0
    %p64 = por %p62, %p63
    %p65 = scmp.ne.s32.totalorder %s57, %s59
    %p66 = scmp.eq.s32.totalorder %s16, 1
    %p67 = por %p65, %p66
    %p68 = scmp.ne.s32.totalorder %s59, %s60
    %p69 = scmp.eq.s32.totalorder %s16, 0
    %p70 = por %p68, %p69
    %p71 = scmp.ne.s32.totalorder %s59, %s60
    %p72 = scmp.eq.s32.totalorder %s17, 1
    %p73 = por %p71, %p72
    %p75 = scmp.ne.s32.totalorder %s60, %s74
    %p76 = scmp.eq.s32.totalorder %s17, 0
    %p77 = por %p75, %p76
    %s79 = sadd.s32 %s78, 1
    %p82 = scmp.eq.s32.totalorder %s11, 1
    %p83 = scmp.ne.s32.totalorder %s78, %s80
    %p84 = scmp.eq.s32.totalorder %s11, 0
    %p85 = por %p83, %p84
    %p86 = scmp.ne.s32.totalorder %s78, %s80
    %p87 = scmp.eq.s32.totalorder %s16, 1
    %p88 = por %p86, %p87
    %p89 = scmp.ne.s32.totalorder %s80, %s81
    %p90 = scmp.eq.s32.totalorder %s16, 0
    %p91 = por %p89, %p90
    %p92 = scmp.ne.s32.totalorder %s80, %s81
    %p93 = scmp.eq.s32.totalorder %s17, 1
    %p94 = por %p92, %p93
    %p96 = scmp.ne.s32.totalorder %s81, %s95
    %p97 = scmp.eq.s32.totalorder %s17, 0
    %p98 = por %p96, %p97
    %s99 = ssub.s32 %s19, %s26
    %p100 = scmp.eq.s32.totalorder %s99, 0
    %s102 = sadd.s32 %s101, 1
    %s103 = scalar_select %p100, %s101, %s102
    %p106 = pneg %p100
    %p107 = scmp.eq.s32.totalorder %s11, 1
    %p108 = por %p106, %p107
    %p109 = scmp.ne.s32.totalorder %s101, %s104
    %p110 = scmp.eq.s32.totalorder %s11, 0
    %p111 = por %p109, %p110
    %p112 = scmp.ne.s32.totalorder %s101, %s104
    %p113 = scmp.eq.s32.totalorder %s16, 1
    %p114 = por %p112, %p113
    %p115 = scmp.ne.s32.totalorder %s104, %s105
    %p116 = scmp.eq.s32.totalorder %s16, 0
    %p117 = por %p115, %p116
    %p118 = scmp.ne.s32.totalorder %s104, %s105
    %p119 = scmp.eq.s32.totalorder %s17, 1
    %p120 = por %p118, %p119
    %p122 = scmp.ne.s32.totalorder %s105, %s121
    %p123 = scmp.eq.s32.totalorder %s17, 0
    %p124 = por %p122, %p123
    %s125 = ssub.s32 %s19, %s26
    %p126 = scmp.eq.s32.totalorder %s125, 0
    %s128 = sadd.s32 %s127, 1
    %s129 = scalar_select %p126, %s127, %s128
    %p132 = pneg %p126
    %p133 = scmp.eq.s32.totalorder %s11, 1
    %p134 = por %p132, %p133
    %p135 = scmp.ne.s32.totalorder %s127, %s130
    %p136 = scmp.eq.s32.totalorder %s11, 0
    %p137 = por %p135, %p136
    %p138 = scmp.ne.s32.totalorder %s127, %s130
    %p139 = scmp.eq.s32.totalorder %s16, 1
    %p140 = por %p138, %p139
    %p141 = scmp.ne.s32.totalorder %s130, %s131
    %p142 = scmp.eq.s32.totalorder %s16, 0
    %p143 = por %p141, %p142
    %p144 = scmp.ne.s32.totalorder %s130, %s131
    %p145 = scmp.eq.s32.totalorder %s17, 1
    %p146 = por %p144, %p145
    %p148 = scmp.ne.s32.totalorder %s131, %s147
    %p149 = scmp.eq.s32.totalorder %s17, 0
    %p150 = por %p148, %p149
    %s151 = ssub.s32 %s18, %s30
    %s152 = ssub.s32 %s19, %s26
    %s153 = sor.u32 %s151, %s152
    %p154 = scmp.eq.s32.totalorder %s153, 0
    %s156 = sadd.s32 %s155, 1
    %s157 = scalar_select %p154, %s155, %s156
    %p160 = pneg %p154
    %p161 = scmp.eq.s32.totalorder %s11, 1
    %p162 = por %p160, %p161
    %p163 = scmp.ne.s32.totalorder %s155, %s158
    %p164 = scmp.eq.s32.totalorder %s11, 0
    %p165 = por %p163, %p164
    %p166 = scmp.ne.s32.totalorder %s155, %s158
    %p167 = scmp.eq.s32.totalorder %s16, 1
    %p168 = por %p166, %p167
    %p169 = scmp.ne.s32.totalorder %s158, %s159
    %p170 = scmp.eq.s32.totalorder %s16, 0
    %p171 = por %p169, %p170
    %p172 = scmp.ne.s32.totalorder %s158, %s159
    %p173 = scmp.eq.s32.totalorder %s17, 1
    %p174 = por %p172, %p173
    %p176 = scmp.ne.s32.totalorder %s159, %s175
    %p177 = scmp.eq.s32.totalorder %s17, 0
    %p178 = por %p176, %p177
    %p179 = scmp.le.s32.totalorder 1, %s11
    %p180 = scmp.lt.s32.totalorder %s11, 3
    %p181 = pnand %p179, %p180
    %p182 = pneg %p181
    // Predicated region
    $region9: #{faster_rcnn_forward.6} parent=5 // pred_check
      _
    $region10: #{faster_rcnn_forward.6} parent=5 // pred_check_branch
      %184 = sbr.rel (%p181) target = $region12
    $region11: #{faster_rcnn_forward.6} parent=5 // pred_region
      %s185 = ssub.s32 %s11, 1
      // Predicated region
      $region13: #{faster_rcnn_forward.6} parent=11 // pred_check
        %p186 = pneg %p70
      $region14: #{faster_rcnn_forward.6} parent=11 // pred_check_branch
        %188 = sbr.rel (%p186) target = $region16
      $region15: #{faster_rcnn_forward.6} parent=11 // pred_region
        _
      $region16: #{faster_rcnn_forward.6} parent=11 // pred_fallthru
        _
      // Predicated region
      $region17: #{faster_rcnn_forward.6} parent=11 // pred_check
        %p189 = pneg %p91
      $region18: #{faster_rcnn_forward.6} parent=11 // pred_check_branch
        %191 = sbr.rel (%p189) target = $region20
      $region19: #{faster_rcnn_forward.6} parent=11 // pred_region
        _
      $region20: #{faster_rcnn_forward.6} parent=11 // pred_fallthru
        _
      // Predicated region
      $region21: #{faster_rcnn_forward.6} parent=11 // pred_check
        %p192 = pneg %p117
      $region22: #{faster_rcnn_forward.6} parent=11 // pred_check_branch
        %194 = sbr.rel (%p192) target = $region24
      $region23: #{faster_rcnn_forward.6} parent=11 // pred_region
        %p195 = scmp.lt.s32.totalorder %s21, 0
        %s196 = scalar_select %p195, %s21, 0
        %s197 = smul.addr %s196, 4
        %s198 = scalar_lea.vmem %s3, %s197
      $region24: #{faster_rcnn_forward.6} parent=11 // pred_fallthru
        _
      // Predicated region
      $region25: #{faster_rcnn_forward.6} parent=11 // pred_check
        %p199 = pneg %p143
      $region26: #{faster_rcnn_forward.6} parent=11 // pred_check_branch
        %201 = sbr.rel (%p199) target = $region28
      $region27: #{faster_rcnn_forward.6} parent=11 // pred_region
        %p202 = scmp.lt.s32.totalorder %s21, 0
        %s203 = scalar_select %p202, %s21, 0
        %s204 = scalar_lea.vmem %s4, %s203
      $region28: #{faster_rcnn_forward.6} parent=11 // pred_fallthru
        _
    $region12: #{faster_rcnn_forward.6} parent=5 // pred_fallthru
      _
    %p205 = scmp.lt.s32.totalorder %s11, 2
    // Predicated region
    $region29: #{faster_rcnn_forward.6} parent=5 // pred_check
      %p206 = pneg %p205
    $region30: #{faster_rcnn_forward.6} parent=5 // pred_check_branch
      %208 = sbr.rel (%p206) target = $region32
    $region31: #{faster_rcnn_forward.6} parent=5 // pred_region
      // Predicated region
      $region33: #{faster_rcnn_forward.6} parent=31 // pred_check
        %p209 = pneg %p43
      $region34: #{faster_rcnn_forward.6} parent=31 // pred_check_branch
        %211 = sbr.rel (%p209) target = $region36
      $region35: #{faster_rcnn_forward.6} parent=31 // pred_region
        %p212 = scmp.lt.s32.totalorder %s18, 1
        %s213 = scalar_select %p212, %s18, 1
        %s214 = smul.addr %s213, 24
        %s215 = smul.addr %s214, 4
        %s216 = scalar_lea.vmem %s0, %s215
      $region36: #{faster_rcnn_forward.6} parent=31 // pred_fallthru
        _
    $region32: #{faster_rcnn_forward.6} parent=5 // pred_fallthru
      _
    %p217 = scmp.le.s32.totalorder 1, %s11
    %p218 = scmp.lt.s32.totalorder %s11, 3
    %p219 = pnand %p217, %p218
    %p220 = pneg %p219
    // Predicated region
    $region37: #{faster_rcnn_forward.6} parent=5 // pred_check
      _
    $region38: #{faster_rcnn_forward.6} parent=5 // pred_check_branch
      %222 = sbr.rel (%p219) target = $region40
    $region39: #{faster_rcnn_forward.6} parent=5 // pred_region
      %s223 = ssub.s32 %s11, 1
      %p224 = scmp.lt.s32.totalorder %s20, 1
      %s225 = scalar_select %p224, %s20, 1
      %s226 = smul.addr %s225, 24
      %s227 = smul.addr %s226, 4
      %s228 = scalar_lea.vmem %s0, %s227
      %p229 = pneg %p49
      %p230 = pneg %p46
      %p231 = pneg %p70
      %p232 = pneg %p67
      %p233 = pneg %p91
      %p234 = pneg %p88
      %p235 = scmp.lt.s32.totalorder %s21, 0
      %s236 = scalar_select %p235, %s21, 0
      %s237 = smul.addr %s236, 4
      %s238 = scalar_lea.vmem %s3, %s237
      %p239 = pneg %p117
      %p240 = pneg %p114
      %p241 = scmp.lt.s32.totalorder %s21, 0
      %s242 = scalar_select %p241, %s21, 0
      %s243 = scalar_lea.vmem %s4, %s242
      %p244 = pneg %p143
      %p245 = pneg %p140
      %p246 = pneg %p171
      %p247 = pneg %p168
      %p248 = scmp.lt.s32.totalorder %s20, 1
      %s249 = scalar_select %p248, %s20, 1
      %p250 = scmp.lt.s32.totalorder %s21, 0
      %s251 = scalar_select %p250, %s21, 0
      %s252 = smul.addr %s249, 18
      %s253 = sadd.s32 %s251, %s252
      %s254 = smul.addr %s253, 8
      %s255 = scalar_lea.vmem %s5, %s254
      %p256 = scmp.lt.s32.totalorder %s20, 1
      %s257 = scalar_select %p256, %s20, 1
      %s258 = smul.addr %s257, 24
      %s259 = smul.addr %s258, 4
      %s260 = scalar_lea.vmem %s0, %s259
      %p261 = scmp.lt.s32.totalorder %s21, 0
      %s262 = scalar_select %p261, %s21, 0
      %s263 = smul.addr %s262, 4
      %s264 = scalar_lea.vmem %s3, %s263
      %p265 = scmp.lt.s32.totalorder %s21, 0
      %s266 = scalar_select %p265, %s21, 0
      %s267 = scalar_lea.vmem %s4, %s266
      %p268 = scmp.lt.s32.totalorder %s20, 1
      %s269 = scalar_select %p268, %s20, 1
      %p270 = scmp.lt.s32.totalorder %s21, 0
      %s271 = scalar_select %p270, %s21, 0
      %s272 = smul.addr %s269, 18
      %s273 = sadd.s32 %s271, %s272
      %s274 = smul.addr %s273, 8
      %s275 = scalar_lea.vmem %s5, %s274
      %v277 = vld [vmem:[%s260] sm:$0xf]
      %v278 = vld [vmem:[%s260 + $0x4] sm:$0xf]
      %v279 = vld [vmem:[%s260 + $0x8] sm:$0xf]
      %v280 = vld [vmem:[%s260 + $0xc] sm:$0xf]
      %v281 = vld [vmem:[%s260 + $0x10] sm:$0xf]
      %v282 = vld [vmem:[%s260 + $0x14] sm:$0xf]
      %v283 = vld [vmem:[%s260 + $0x18] sm:$0xf]
      %v284 = vld [vmem:[%s260 + $0x1c] sm:$0xf]
      %v285 = vld [vmem:[%s260 + $0x20] sm:$0xf]
      %v286 = vld [vmem:[%s260 + $0x24] sm:$0xf]
      %v287 = vld [vmem:[%s260 + $0x28] sm:$0xf]
      %v288 = vld [vmem:[%s260 + $0x2c] sm:$0xf]
      %v289 = vld [vmem:[%s260 + $0x30] sm:$0xf]
      %v290 = vld [vmem:[%s260 + $0x34] sm:$0xf]
      %v291 = vld [vmem:[%s260 + $0x38] sm:$0xf]
      %v292 = vld [vmem:[%s260 + $0x3c] sm:$0xf]
      %v293 = vld [vmem:[%s260 + $0x40] sm:$0xf]
      %v294 = vld [vmem:[%s260 + $0x44] sm:$0xf]
      %v295 = vld [vmem:[%s1] sm:$0xf]
      %v296 = vld [vmem:[%s1 + $0x4] sm:$0xf]
      %v297 = vld [vmem:[%s1 + $0x8] sm:$0xf]
      %v298 = vld [vmem:[%s1 + $0xc] sm:$0xf]
      %v299 = vld [vmem:[%s1 + $0x10] sm:$0xf]
      %v300 = vld [vmem:[%s1 + $0x14] sm:$0xf]
      %v301 = vld [vmem:[%s1 + $0x18] sm:$0xf]
      %v302 = vld [vmem:[%s1 + $0x1c] sm:$0xf]
      %v303 = vld [vmem:[%s1 + $0x20] sm:$0xf]
      %v304 = vld [vmem:[%s1 + $0x24] sm:$0xf]
      %v305 = vld [vmem:[%s1 + $0x28] sm:$0xf]
      %v306 = vld [vmem:[%s1 + $0x2c] sm:$0xf]
      %v307 = vld [vmem:[%s1 + $0x30] sm:$0xf]
      %v308 = vld [vmem:[%s1 + $0x34] sm:$0xf]
      %v309 = vld [vmem:[%s1 + $0x38] sm:$0xf]
      %v310 = vld [vmem:[%s1 + $0x3c] sm:$0xf]
      %v311 = vld [vmem:[%s260 + $0x48] sm:$0x1]
      %s312 = scalar_lea.vmem %s1, 64
      %v313 = vld [vmem:[%s312] sm:$0xf]
      %v314 = vld [vmem:[%s312 + $0x4] sm:$0xf]
      %v315 = vld [vmem:[%s312 + $0x8] sm:$0xf]
      %v316 = vld [vmem:[%s312 + $0xc] sm:$0xf]
      %v317 = vld [vmem:[%s312 + $0x10] sm:$0xf]
      %v318 = vld [vmem:[%s312 + $0x14] sm:$0xf]
      %v319 = vld [vmem:[%s312 + $0x18] sm:$0xf]
      %v320 = vld [vmem:[%s312 + $0x1c] sm:$0xf]
      %v321 = vld [vmem:[%s312 + $0x20] sm:$0xf]
      %v322 = vld [vmem:[%s312 + $0x24] sm:$0xf]
      %v323 = vld [vmem:[%s312 + $0x28] sm:$0xf]
      %v324 = vld [vmem:[%s312 + $0x2c] sm:$0xf]
      %v325 = vld [vmem:[%s312 + $0x30] sm:$0xf]
      %v326 = vld [vmem:[%s312 + $0x34] sm:$0xf]
      %v327 = vld [vmem:[%s312 + $0x38] sm:$0xf]
      %v328 = vld [vmem:[%s312 + $0x3c] sm:$0xf]
      %v348 = vunpack.c.l.b16 %v277
      %v349 = vunpack.c.l.b16 %v278
      %v350 = vunpack.c.l.b16 %v279
      %v351 = vunpack.c.l.b16 %v280
      %v352 = vunpack.c.l.b16 %v281
      %v353 = vunpack.c.l.b16 %v282
      %v354 = vunpack.c.l.b16 %v283
      %v355 = vunpack.c.l.b16 %v284
      %v356 = vunpack.c.l.b16 %v285
      %v357 = vunpack.c.l.b16 %v286
      %v358 = vunpack.c.l.b16 %v287
      %v359 = vunpack.c.l.b16 %v288
      %v360 = vunpack.c.l.b16 %v289
      %v361 = vunpack.c.l.b16 %v290
      %v362 = vunpack.c.l.b16 %v291
      %v363 = vunpack.c.l.b16 %v292
      %v364 = vunpack.c.l.b16 %v293
      %v365 = vunpack.c.l.b16 %v294
      %v366 = vunpack.c.l.b16 %v311
      %v367 = vpack.c.b16 %v349, %v348
      %v368 = vpack.c.b16 %v351, %v350
      %v369 = vpack.c.b16 %v353, %v352
      %v370 = vpack.c.b16 %v355, %v354
      %v371 = vpack.c.b16 %v357, %v356
      %v372 = vpack.c.b16 %v359, %v358
      %v373 = vpack.c.b16 %v361, %v360
      %v374 = vpack.c.b16 %v363, %v362
      %v375 = vpack.c.b16 %v365, %v364
      %v376 = vpack.c.b16 %v366, %v366
      %vm377 = vsmask.f32 7424
      %v379 = vshrl.u32 %v367, 16
      %v381 = vshll.u32 %v367, 16
      %v383 = vrot.slane %v381, 1
      %v384 = vor.u32 %v379, %v383
      %v386 = vshll.u32 %v368, 16
      %v388 = vrot.slane %v386, 1
      %v389 = vsel %vm377, %v384, %v388
      %v390 = vshrl.u32 %v368, 16
      %v392 = vor.u32 %v390, %v388
      %v394 = vshll.u32 %v369, 16
      %v396 = vrot.slane %v394, 1
      %v397 = vsel %vm377, %v392, %v396
      %v398 = vshrl.u32 %v369, 16
      %v400 = vor.u32 %v398, %v396
      %v402 = vshll.u32 %v370, 16
      %v404 = vrot.slane %v402, 1
      %v405 = vsel %vm377, %v400, %v404
      %v406 = vshrl.u32 %v370, 16
      %v408 = vor.u32 %v406, %v404
      %v410 = vshll.u32 %v371, 16
      %v412 = vrot.slane %v410, 1
      %v413 = vsel %vm377, %v408, %v412
      %v414 = vshrl.u32 %v371, 16
      %v416 = vor.u32 %v414, %v412
      %v418 = vshll.u32 %v372, 16
      %v420 = vrot.slane %v418, 1
      %v421 = vsel %vm377, %v416, %v420
      %v422 = vshrl.u32 %v372, 16
      %v424 = vor.u32 %v422, %v420
      %v426 = vshll.u32 %v373, 16
      %v428 = vrot.slane %v426, 1
      %v429 = vsel %vm377, %v424, %v428
      %v430 = vshrl.u32 %v373, 16
      %v432 = vor.u32 %v430, %v428
      %v434 = vshll.u32 %v374, 16
      %v436 = vrot.slane %v434, 1
      %v437 = vsel %vm377, %v432, %v436
      %v438 = vshrl.u32 %v374, 16
      %v440 = vor.u32 %v438, %v436
      %v442 = vshll.u32 %v375, 16
      %v444 = vrot.slane %v442, 1
      %v445 = vsel %vm377, %v440, %v444
      %v446 = vshrl.u32 %v375, 16
      %v448 = vor.u32 %v446, %v444
      %v450 = vshll.u32 %v376, 16
      %v452 = vrot.slane %v450, 1
      %v453 = vsel %vm377, %v448, %v452
      %v479 = vunpack.c.l.b16 %v313
      %v480 = vunpack.c.l.b16 %v314
      %v481 = vunpack.c.l.b16 %v315
      %v482 = vunpack.c.l.b16 %v316
      %v483 = vunpack.c.l.b16 %v317
      %v484 = vunpack.c.l.b16 %v318
      %v485 = vunpack.c.l.b16 %v319
      %v486 = vunpack.c.l.b16 %v320
      %v487 = vunpack.c.l.b16 %v321
      %v488 = vunpack.c.l.b16 %v322
      %v489 = vunpack.c.l.b16 %v323
      %v490 = vunpack.c.l.b16 %v324
      %v491 = vunpack.c.l.b16 %v325
      %v492 = vunpack.c.l.b16 %v326
      %v493 = vunpack.c.l.b16 %v327
      %v494 = vunpack.c.l.b16 %v328
      %v495 = vpack.c.b16 %v480, %v479
      %v496 = vpack.c.b16 %v482, %v481
      %v497 = vpack.c.b16 %v484, %v483
      %v498 = vpack.c.b16 %v486, %v485
      %v499 = vpack.c.b16 %v488, %v487
      %v500 = vpack.c.b16 %v490, %v489
      %v501 = vpack.c.b16 %v492, %v491
      %v502 = vpack.c.b16 %v494, %v493
      %511 = vmatprep.subr.bf16.mxu0 0
      %512 = vmatpush1.bf16.msra.mxu0 %v495
      %513 = vmatprep.subr.bf16.mxu0 0
      %514 = vmatpush1.bf16.msra.mxu0 %v496
      %515 = vmatprep.subr.bf16.mxu0 0
      %516 = vmatpush1.bf16.msra.mxu0 %v497
      %517 = vmatprep.subr.bf16.mxu0 0
      %518 = vmatpush1.bf16.msra.mxu0 %v498
      %519 = vmatprep.subr.bf16.mxu0 0
      %520 = vmatpush1.bf16.msra.mxu0 %v499
      %521 = vmatprep.subr.bf16.mxu0 0
      %522 = vmatpush1.bf16.msra.mxu0 %v500
      %523 = vmatprep.subr.bf16.mxu0 0
      %524 = vmatpush1.bf16.msra.mxu0 %v501
      %525 = vmatprep.subr.bf16.mxu0 0
      %526 = vmatpush1.bf16.msra.mxu0 %v502
      %527 = vmatprep.subr.bf16.mxu0 0
      %528 = vmatpush1.bf16.msra.mxu0 0
      %529 = vmatprep.subr.bf16.mxu0 0
      %530 = vmatpush1.bf16.msra.mxu0 0
      %531 = vmatprep.subr.bf16.mxu0 0
      %532 = vmatpush1.bf16.msra.mxu0 0
      %533 = vmatprep.subr.bf16.mxu0 0
      %534 = vmatpush1.bf16.msra.mxu0 0
      %535 = vmatprep.subr.bf16.mxu0 0
      %536 = vmatpush1.bf16.msra.mxu0 0
      %537 = vmatprep.subr.bf16.mxu0 0
      %538 = vmatpush1.bf16.msra.mxu0 0
      %539 = vmatprep.subr.bf16.mxu0 0
      %540 = vmatpush1.bf16.msra.mxu0 0
      %541 = vmatprep.subr.bf16.mxu0 0
      %542 = vmatpush1.bf16.msra.mxu0 0
      %543 = vmatprep.mubr.bf16.mxu0 0
      %544 = vmatmul.mubr.bf16.gmra.mrb[0].mxu0 %v389
      %v545 = vpop.f32.mrb[0].mxu0
      %v546 = vadd.f32 0.0, %v545
      %v547 = vpop.f32.mrb[0].mxu0
      %v548 = vpop.f32.mrb[0].mxu0
      %v549 = vadd.f32 0.0, %v548
      %v550 = vpop.f32.mrb[0].mxu0
      %551 = vmatprep.mubr.bf16.mxu0 0
      %552 = vmatmul.mubr.bf16.gmra.mrb[0].mxu0 %v397
      %v553 = vpop.f32.mrb[0].mxu0
      %v554 = vadd.f32 0.0, %v553
      %v555 = vpop.f32.mrb[0].mxu0
      %v556 = vpop.f32.mrb[0].mxu0
      %v557 = vadd.f32 0.0, %v556
      %v558 = vpop.f32.mrb[0].mxu0
      %559 = vmatprep.mubr.bf16.mxu0 0
      %560 = vmatmul.mubr.bf16.gmra.mrb[0].mxu0 %v405
      %v561 = vpop.f32.mrb[0].mxu0
      %v562 = vadd.f32 0.0, %v561
      %v563 = vpop.f32.mrb[0].mxu0
      %v564 = vpop.f32.mrb[0].mxu0
      %v565 = vadd.f32 0.0, %v564
      %v566 = vpop.f32.mrb[0].mxu0
      %567 = vmatprep.mubr.bf16.mxu0 0
      %568 = vmatmul.mubr.bf16.gmra.mrb[0].mxu0 %v413
      %v569 = vpop.f32.mrb[0].mxu0
      %v570 = vadd.f32 0.0, %v569
      %v571 = vpop.f32.mrb[0].mxu0
      %v572 = vpop.f32.mrb[0].mxu0
      %v573 = vadd.f32 0.0, %v572
      %v574 = vpop.f32.mrb[0].mxu0
      %575 = vmatprep.mubr.bf16.mxu0 0
      %576 = vmatmul.mubr.bf16.gmra.mrb[0].mxu0 %v421
      %v577 = vpop.f32.mrb[0].mxu0
      %v578 = vadd.f32 0.0, %v577
      %v579 = vpop.f32.mrb[0].mxu0
      %v580 = vpop.f32.mrb[0].mxu0
      %v581 = vadd.f32 0.0, %v580
      %v582 = vpop.f32.mrb[0].mxu0
      %583 = vmatprep.mubr.bf16.mxu0 0
      %584 = vmatmul.mubr.bf16.gmra.mrb[0].mxu0 %v429
      %v585 = vpop.f32.mrb[0].mxu0
      %v586 = vadd.f32 0.0, %v585
      %v587 = vpop.f32.mrb[0].mxu0
      %v588 = vpop.f32.mrb[0].mxu0
      %v589 = vadd.f32 0.0, %v588
      %v590 = vpop.f32.mrb[0].mxu0
      %591 = vmatprep.mubr.bf16.mxu0 0
      %592 = vmatmul.mubr.bf16.gmra.mrb[0].mxu0 %v437
      %v593 = vpop.f32.mrb[0].mxu0
      %v594 = vadd.f32 0.0, %v593
      %v595 = vpop.f32.mrb[0].mxu0
      %v596 = vpop.f32.mrb[0].mxu0
      %v597 = vadd.f32 0.0, %v596
      %v598 = vpop.f32.mrb[0].mxu0
      %599 = vmatprep.mubr.bf16.mxu0 0
      %600 = vmatmul.mubr.bf16.gmra.mrb[0].mxu0 %v445
      %v601 = vpop.f32.mrb[0].mxu0
      %v602 = vadd.f32 0.0, %v601
      %v603 = vpop.f32.mrb[0].mxu0
      %v604 = vpop.f32.mrb[0].mxu0
      %v605 = vadd.f32 0.0, %v604
      %v606 = vpop.f32.mrb[0].mxu0
      %607 = vmatprep.mubr.bf16.mxu0 0
      %608 = vmatmul.mubr.bf16.gmra.mrb[0].mxu0 %v453
      %v609 = vpop.f32.mrb[0].mxu0
      %v610 = vadd.f32 0.0, %v609
      %v611 = vpop.f32.mrb[0].mxu0
      %v612 = vpop.f32.mrb[0].mxu0
      %v613 = vadd.f32 0.0, %v612
      %v614 = vpop.f32.mrb[0].mxu0
      %615 = vdwg.mxu0
      %v641 = vunpack.c.l.b16 %v295
      %v642 = vunpack.c.l.b16 %v296
      %v643 = vunpack.c.l.b16 %v297
      %v644 = vunpack.c.l.b16 %v298
      %v645 = vunpack.c.l.b16 %v299
      %v646 = vunpack.c.l.b16 %v300
      %v647 = vunpack.c.l.b16 %v301
      %v648 = vunpack.c.l.b16 %v302
      %v649 = vunpack.c.l.b16 %v303
      %v650 = vunpack.c.l.b16 %v304
      %v651 = vunpack.c.l.b16 %v305
      %v652 = vunpack.c.l.b16 %v306
      %v653 = vunpack.c.l.b16 %v307
      %v654 = vunpack.c.l.b16 %v308
      %v655 = vunpack.c.l.b16 %v309
      %v656 = vunpack.c.l.b16 %v310
      %v657 = vpack.c.b16 %v642, %v641
      %v658 = vpack.c.b16 %v644, %v643
      %v659 = vpack.c.b16 %v646, %v645
      %v660 = vpack.c.b16 %v648, %v647
      %v661 = vpack.c.b16 %v650, %v649
      %v662 = vpack.c.b16 %v652, %v651
      %v663 = vpack.c.b16 %v654, %v653
      %v664 = vpack.c.b16 %v656, %v655
      %673 = vmatprep.subr.bf16.mxu0 0
      %674 = vmatpush1.bf16.msra.mxu0 %v657
      %675 = vmatprep.subr.bf16.mxu0 0
      %676 = vmatpush1.bf16.msra.mxu0 %v658
      %677 = vmatprep.subr.bf16.mxu0 0
      %678 = vmatpush1.bf16.msra.mxu0 %v659
      %679 = vmatprep.subr.bf16.mxu0 0
      %680 = vmatpush1.bf16.msra.mxu0 %v660
      %681 = vmatprep.subr.bf16.mxu0 0
      %682 = vmatpush1.bf16.msra.mxu0 %v661
      %683 = vmatprep.subr.bf16.mxu0 0
      %684 = vmatpush1.bf16.msra.mxu0 %v662
      %685 = vmatprep.subr.bf16.mxu0 0
      %686 = vmatpush1.bf16.msra.mxu0 %v663
      %687 = vmatprep.subr.bf16.mxu0 0
      %688 = vmatpush1.bf16.msra.mxu0 %v664
      %689 = vmatprep.subr.bf16.mxu0 0
      %690 = vmatpush1.bf16.msra.mxu0 0
      %691 = vmatprep.subr.bf16.mxu0 0
      %692 = vmatpush1.bf16.msra.mxu0 0
      %693 = vmatprep.subr.bf16.mxu0 0
      %694 = vmatpush1.bf16.msra.mxu0 0
      %695 = vmatprep.subr.bf16.mxu0 0
      %696 = vmatpush1.bf16.msra.mxu0 0
      %697 = vmatprep.subr.bf16.mxu0 0
      %698 = vmatpush1.bf16.msra.mxu0 0
      %699 = vmatprep.subr.bf16.mxu0 0
      %700 = vmatpush1.bf16.msra.mxu0 0
      %701 = vmatprep.subr.bf16.mxu0 0
      %702 = vmatpush1.bf16.msra.mxu0 0
      %703 = vmatprep.subr.bf16.mxu0 0
      %704 = vmatpush1.bf16.msra.mxu0 0
      %705 = vmatprep.mubr.bf16.mxu0 0
      %706 = vmatmul.mubr.bf16.gmra.mrb[0].mxu0 %v367
      %v707 = vpop.f32.mrb[0].mxu0
      %v708 = vadd.f32 %v546, %v707
      %v709 = vpop.f32.mrb[0].mxu0
      %v710 = vpop.f32.mrb[0].mxu0
      %v711 = vadd.f32 %v549, %v710
      %v712 = vpop.f32.mrb[0].mxu0
      %713 = vmatprep.mubr.bf16.mxu0 0
      %714 = vmatmul.mubr.bf16.gmra.mrb[0].mxu0 %v368
      %v715 = vpop.f32.mrb[0].mxu0
      %v716 = vadd.f32 %v554, %v715
      %v717 = vpop.f32.mrb[0].mxu0
      %v718 = vpop.f32.mrb[0].mxu0
      %v719 = vadd.f32 %v557, %v718
      %v720 = vpop.f32.mrb[0].mxu0
      %721 = vmatprep.mubr.bf16.mxu0 0
      %722 = vmatmul.mubr.bf16.gmra.mrb[0].mxu0 %v369
      %v723 = vpop.f32.mrb[0].mxu0
      %v724 = vadd.f32 %v562, %v723
      %v725 = vpop.f32.mrb[0].mxu0
      %v726 = vpop.f32.mrb[0].mxu0
      %v727 = vadd.f32 %v565, %v726
      %v728 = vpop.f32.mrb[0].mxu0
      %729 = vmatprep.mubr.bf16.mxu0 0
      %730 = vmatmul.mubr.bf16.gmra.mrb[0].mxu0 %v370
      %v731 = vpop.f32.mrb[0].mxu0
      %v732 = vadd.f32 %v570, %v731
      %v733 = vpop.f32.mrb[0].mxu0
      %v734 = vpop.f32.mrb[0].mxu0
      %v735 = vadd.f32 %v573, %v734
      %v736 = vpop.f32.mrb[0].mxu0
      %737 = vmatprep.mubr.bf16.mxu0 0
      %738 = vmatmul.mubr.bf16.gmra.mrb[0].mxu0 %v371
      %v739 = vpop.f32.mrb[0].mxu0
      %v740 = vadd.f32 %v578, %v739
      %v741 = vpop.f32.mrb[0].mxu0
      %v742 = vpop.f32.mrb[0].mxu0
      %v743 = vadd.f32 %v581, %v742
      %v744 = vpop.f32.mrb[0].mxu0
      %745 = vmatprep.mubr.bf16.mxu0 0
      %746 = vmatmul.mubr.bf16.gmra.mrb[0].mxu0 %v372
      %v747 = vpop.f32.mrb[0].mxu0
      %v748 = vadd.f32 %v586, %v747
      %v749 = vpop.f32.mrb[0].mxu0
      %v750 = vpop.f32.mrb[0].mxu0
      %v751 = vadd.f32 %v589, %v750
      %v752 = vpop.f32.mrb[0].mxu0
      %753 = vmatprep.mubr.bf16.mxu0 0
      %754 = vmatmul.mubr.bf16.gmra.mrb[0].mxu0 %v373
      %v755 = vpop.f32.mrb[0].mxu0
      %v756 = vadd.f32 %v594, %v755
      %v757 = vpop.f32.mrb[0].mxu0
      %v758 = vpop.f32.mrb[0].mxu0
      %v759 = vadd.f32 %v597, %v758
      %v760 = vpop.f32.mrb[0].mxu0
      %761 = vmatprep.mubr.bf16.mxu0 0
      %762 = vmatmul.mubr.bf16.gmra.mrb[0].mxu0 %v374
      %v763 = vpop.f32.mrb[0].mxu0
      %v764 = vadd.f32 %v602, %v763
      %v765 = vpop.f32.mrb[0].mxu0
      %v766 = vpop.f32.mrb[0].mxu0
      %v767 = vadd.f32 %v605, %v766
      %v768 = vpop.f32.mrb[0].mxu0
      %769 = vmatprep.mubr.bf16.mxu0 0
      %770 = vmatmul.mubr.bf16.gmra.mrb[0].mxu0 %v375
      %v771 = vpop.f32.mrb[0].mxu0
      %v772 = vadd.f32 %v610, %v771
      %v773 = vpop.f32.mrb[0].mxu0
      %v774 = vpop.f32.mrb[0].mxu0
      %v775 = vadd.f32 %v613, %v774
      %v776 = vpop.f32.mrb[0].mxu0
      %777 = vdwg.mxu0
      %v778 = vld [vmem:[%s260] sm:$0xe]
      %s779 = scalar_lea.vmem %s1, 128
      %v780 = vld [vmem:[%s779] sm:$0xf]
      %v781 = vld [vmem:[%s779 + $0x4] sm:$0xf]
      %v782 = vld [vmem:[%s779 + $0x8] sm:$0xf]
      %v783 = vld [vmem:[%s779 + $0xc] sm:$0xf]
      %v784 = vld [vmem:[%s779 + $0x10] sm:$0xf]
      %v785 = vld [vmem:[%s779 + $0x14] sm:$0xf]
      %v786 = vld [vmem:[%s779 + $0x18] sm:$0xf]
      %v787 = vld [vmem:[%s779 + $0x1c] sm:$0xf]
      %v788 = vld [vmem:[%s779 + $0x20] sm:$0xf]
      %v789 = vld [vmem:[%s779 + $0x24] sm:$0xf]
      %v790 = vld [vmem:[%s779 + $0x28] sm:$0xf]
      %v791 = vld [vmem:[%s779 + $0x2c] sm:$0xf]
      %v792 = vld [vmem:[%s779 + $0x30] sm:$0xf]
      %v793 = vld [vmem:[%s779 + $0x34] sm:$0xf]
      %v794 = vld [vmem:[%s779 + $0x38] sm:$0xf]
      %v795 = vld [vmem:[%s779 + $0x3c] sm:$0xf]
      %v797 = vunpack.c.l.b16 %v778
      %v798 = vpack.c.b16 %v349, %v797
      %vm799 = vcmask 1046528
      %v800 = vrot.slane %v798, 1
      %v801 = vrot.slane %v368, 1
      %v802 = vsel %vm799, %v800, %v801
      %v803 = vrot.slane %v369, 1
      %v804 = vsel %vm799, %v801, %v803
      %v805 = vrot.slane %v370, 1
      %v806 = vsel %vm799, %v803, %v805
      %v807 = vrot.slane %v371, 1
      %v808 = vsel %vm799, %v805, %v807
      %v809 = vrot.slane %v372, 1
      %v810 = vsel %vm799, %v807, %v809
      %v811 = vrot.slane %v373, 1
      %v812 = vsel %vm799, %v809, %v811
      %v813 = vrot.slane %v374, 1
      %v814 = vsel %vm799, %v811, %v813
      %v815 = vrot.slane %v375, 1
      %v816 = vsel %vm799, %v813, %v815
      %v817 = vrot.slane %v376, 1
      %v818 = vsel %vm799, %v815, %v817
      %v844 = vunpack.c.l.b16 %v780
      %v845 = vunpack.c.l.b16 %v781
      %v846 = vunpack.c.l.b16 %v782
      %v847 = vunpack.c.l.b16 %v783
      %v848 = vunpack.c.l.b16 %v784
      %v849 = vunpack.c.l.b16 %v785
      %v850 = vunpack.c.l.b16 %v786
      %v851 = vunpack.c.l.b16 %v787
      %v852 = vunpack.c.l.b16 %v788
      %v853 = vunpack.c.l.b16 %v789
      %v854 = vunpack.c.l.b16 %v790
      %v855 = vunpack.c.l.b16 %v791
      %v856 = vunpack.c.l.b16 %v792
      %v857 = vunpack.c.l.b16 %v793
      %v858 = vunpack.c.l.b16 %v794
      %v859 = vunpack.c.l.b16 %v795
      %v860 = vpack.c.b16 %v845, %v844
      %v861 = vpack.c.b16 %v847, %v846
      %v862 = vpack.c.b16 %v849, %v848
      %v863 = vpack.c.b16 %v851, %v850
      %v864 = vpack.c.b16 %v853, %v852
      %v865 = vpack.c.b16 %v855, %v854
      %v866 = vpack.c.b16 %v857, %v856
      %v867 = vpack.c.b16 %v859, %v858
      %876 = vmatprep.subr.bf16.mxu0 0
      %877 = vmatpush1.bf16.msra.mxu0 %v860
      %878 = vmatprep.subr.bf16.mxu0 0
      %879 = vmatpush1.bf16.msra.mxu0 %v861
      %880 = vmatprep.subr.bf16.mxu0 0
      %881 = vmatpush1.bf16.msra.mxu0 %v862
      %882 = vmatprep.subr.bf16.mxu0 0
      %883 = vmatpush1.bf16.msra.mxu0 %v863
      %884 = vmatprep.subr.bf16.mxu0 0
      %885 = vmatpush1.bf16.msra.mxu0 %v864
      %886 = vmatprep.subr.bf16.mxu0 0
      %887 = vmatpush1.bf16.msra.mxu0 %v865
      %888 = vmatprep.subr.bf16.mxu0 0
      %889 = vmatpush1.bf16.msra.mxu0 %v866
      %890 = vmatprep.subr.bf16.mxu0 0
      %891 = vmatpush1.bf16.msra.mxu0 %v867
      %892 = vmatprep.subr.bf16.mxu0 0
      %893 = vmatpush1.bf16.msra.mxu0 0
      %894 = vmatprep.subr.bf16.mxu0 0
      %895 = vmatpush1.bf16.msra.mxu0 0
      %896 = vmatprep.subr.bf16.mxu0 0
      %897 = vmatpush1.bf16.msra.mxu0 0
      %898 = vmatprep.subr.bf16.mxu0 0
      %899 = vmatpush1.bf16.msra.mxu0 0
      %900 = vmatprep.subr.bf16.mxu0 0
      %901 = vmatpush1.bf16.msra.mxu0 0
      %902 = vmatprep.subr.bf16.mxu0 0
      %903 = vmatpush1.bf16.msra.mxu0 0
      %904 = vmatprep.subr.bf16.mxu0 0
      %905 = vmatpush1.bf16.msra.mxu0 0
      %906 = vmatprep.subr.bf16.mxu0 0
      %907 = vmatpush1.bf16.msra.mxu0 0
      %908 = vmatprep.mubr.bf16.mxu0 0
      %909 = vmatmul.mubr.bf16.gmra.mrb[0].mxu0 %v802
      %v910 = vpop.f32.mrb[0].mxu0
      %v911 = vadd.f32 0.0, %v910
      %v912 = vpop.f32.mrb[0].mxu0
      %v913 = vpop.f32.mrb[0].mxu0
      %v914 = vadd.f32 0.0, %v913
      %v915 = vpop.f32.mrb[0].mxu0
      %916 = vmatprep.mubr.bf16.mxu0 0
      %917 = vmatmul.mubr.bf16.gmra.mrb[0].mxu0 %v804
      %v918 = vpop.f32.mrb[0].mxu0
      %v919 = vadd.f32 0.0, %v918
      %v920 = vpop.f32.mrb[0].mxu0
      %v921 = vpop.f32.mrb[0].mxu0
      %v922 = vadd.f32 0.0, %v921
      %v923 = vpop.f32.mrb[0].mxu0
      %924 = vmatprep.mubr.bf16.mxu0 0
      %925 = vmatmul.mubr.bf16.gmra.mrb[0].mxu0 %v806
      %v926 = vpop.f32.mrb[0].mxu0
      %v927 = vadd.f32 0.0, %v926
      %v928 = vpop.f32.mrb[0].mxu0
      %v929 = vpop.f32.mrb[0].mxu0
      %v930 = vadd.f32 0.0, %v929
      %v931 = vpop.f32.mrb[0].mxu0
      %932 = vmatprep.mubr.bf16.mxu0 0
      %933 = vmatmul.mubr.bf16.gmra.mrb[0].mxu0 %v808
      %v934 = vpop.f32.mrb[0].mxu0
      %v935 = vadd.f32 0.0, %v934
      %v936 = vpop.f32.mrb[0].mxu0
      %v937 = vpop.f32.mrb[0].mxu0
      %v938 = vadd.f32 0.0, %v937
      %v939 = vpop.f32.mrb[0].mxu0
      %940 = vmatprep.mubr.bf16.mxu0 0
      %941 = vmatmul.mubr.bf16.gmra.mrb[0].mxu0 %v810
      %v942 = vpop.f32.mrb[0].mxu0
      %v943 = vadd.f32 0.0, %v942
      %v944 = vpop.f32.mrb[0].mxu0
      %v945 = vpop.f32.mrb[0].mxu0
      %v946 = vadd.f32 0.0, %v945
      %v947 = vpop.f32.mrb[0].mxu0
      %948 = vmatprep.mubr.bf16.mxu0 0
      %949 = vmatmul.mubr.bf16.gmra.mrb[0].mxu0 %v812
      %v950 = vpop.f32.mrb[0].mxu0
      %v951 = vadd.f32 0.0, %v950
      %v952 = vpop.f32.mrb[0].mxu0
      %v953 = vpop.f32.mrb[0].mxu0
      %v954 = vadd.f32 0.0, %v953
      %v955 = vpop.f32.mrb[0].mxu0
      %956 = vmatprep.mubr.bf16.mxu0 0
      %957 = vmatmul.mubr.bf16.gmra.mrb[0].mxu0 %v814
      %v958 = vpop.f32.mrb[0].mxu0
      %v959 = vadd.f32 0.0, %v958
      %v960 = vpop.f32.mrb[0].mxu0
      %v961 = vpop.f32.mrb[0].mxu0
      %v962 = vadd.f32 0.0, %v961
      %v963 = vpop.f32.mrb[0].mxu0
      %964 = vmatprep.mubr.bf16.mxu0 0
      %965 = vmatmul.mubr.bf16.gmra.mrb[0].mxu0 %v816
      %v966 = vpop.f32.mrb[0].mxu0
      %v967 = vadd.f32 0.0, %v966
      %v968 = vpop.f32.mrb[0].mxu0
      %v969 = vpop.f32.mrb[0].mxu0
      %v970 = vadd.f32 0.0, %v969
      %v971 = vpop.f32.mrb[0].mxu0
      %972 = vmatprep.mubr.bf16.mxu0 0
      %973 = vmatmul.mubr.bf16.gmra.mrb[0].mxu0 %v818
      %v974 = vpop.f32.mrb[0].mxu0
      %v975 = vadd.f32 0.0, %v974
      %v976 = vpop.f32.mrb[0].mxu0
      %v977 = vpop.f32.mrb[0].mxu0
      %v978 = vadd.f32 0.0, %v977
      %v979 = vpop.f32.mrb[0].mxu0
      %980 = vdwg.mxu0
      %v981 = vadd.f32 %v708, %v911
      %v982 = vadd.f32 %v711, %v914
      %v983 = vadd.f32 %v716, %v919
      %v984 = vadd.f32 %v719, %v922
      %v985 = vadd.f32 %v724, %v927
      %v986 = vadd.f32 %v727, %v930
      %v987 = vadd.f32 %v732, %v935
      %v988 = vadd.f32 %v735, %v938
      %v989 = vadd.f32 %v740, %v943
      %v990 = vadd.f32 %v743, %v946
      %v991 = vadd.f32 %v748, %v951
      %v992 = vadd.f32 %v751, %v954
      %v993 = vadd.f32 %v756, %v959
      %v994 = vadd.f32 %v759, %v962
      %v995 = vadd.f32 %v764, %v967
      %v996 = vadd.f32 %v767, %v970
      %v997 = vadd.f32 %v772, %v975
      %v998 = vadd.f32 %v775, %v978
      %v999 = vld [vmem:[%s260 + $0x8] sm:$0xe]
      %v1000 = vld [vmem:[%s260 + $0xc] sm:$0xf]
      %v1001 = vld [vmem:[%s260 + $0x10] sm:$0xf]
      %v1002 = vld [vmem:[%s260 + $0x14] sm:$0xf]
      %v1003 = vld [vmem:[%s260 + $0x18] sm:$0xf]
      %v1004 = vld [vmem:[%s260 + $0x1c] sm:$0xf]
      %v1005 = vld [vmem:[%s260 + $0x20] sm:$0xf]
      %v1006 = vld [vmem:[%s260 + $0x24] sm:$0xf]
      %v1007 = vld [vmem:[%s260 + $0x28] sm:$0xf]
      %v1008 = vld [vmem:[%s260 + $0x2c] sm:$0xf]
      %v1009 = vld [vmem:[%s260 + $0x30] sm:$0xf]
      %v1010 = vld [vmem:[%s260 + $0x34] sm:$0xf]
      %v1011 = vld [vmem:[%s260 + $0x38] sm:$0xf]
      %v1012 = vld [vmem:[%s260 + $0x3c] sm:$0xf]
      %v1013 = vld [vmem:[%s260 + $0x40] sm:$0xf]
      %v1014 = vld [vmem:[%s260 + $0x44] sm:$0xf]
      %v1015 = vld [vmem:[%s260 + $0x48] sm:$0xf]
      %v1016 = vld [vmem:[%s260 + $0x4c] sm:$0xf]
      %v1017 = vld [vmem:[%s260 + $0x50] sm:$0x1]
      %s1018 = scalar_lea.vmem %s1, 192
      %v1019 = vld [vmem:[%s1018] sm:$0xf]
      %v1020 = vld [vmem:[%s1018 + $0x4] sm:$0xf]
      %v1021 = vld [vmem:[%s1018 + $0x8] sm:$0xf]
      %v1022 = vld [vmem:[%s1018 + $0xc] sm:$0xf]
      %v1023 = vld [vmem:[%s1018 + $0x10] sm:$0xf]
      %v1024 = vld [vmem:[%s1018 + $0x14] sm:$0xf]
      %v1025 = vld [vmem:[%s1018 + $0x18] sm:$0xf]
      %v1026 = vld [vmem:[%s1018 + $0x1c] sm:$0xf]
      %v1027 = vld [vmem:[%s1018 + $0x20] sm:$0xf]
      %v1028 = vld [vmem:[%s1018 + $0x24] sm:$0xf]
      %v1029 = vld [vmem:[%s1018 + $0x28] sm:$0xf]
      %v1030 = vld [vmem:[%s1018 + $0x2c] sm:$0xf]
      %v1031 = vld [vmem:[%s1018 + $0x30] sm:$0xf]
      %v1032 = vld [vmem:[%s1018 + $0x34] sm:$0xf]
      %v1033 = vld [vmem:[%s1018 + $0x38] sm:$0xf]
      %v1034 = vld [vmem:[%s1018 + $0x3c] sm:$0xf]
      %v1054 = vunpack.c.l.b16 %v999
      %v1055 = vunpack.c.l.b16 %v1000
      %v1056 = vunpack.c.l.b16 %v1001
      %v1057 = vunpack.c.l.b16 %v1002
      %v1058 = vunpack.c.l.b16 %v1003
      %v1059 = vunpack.c.l.b16 %v1004
      %v1060 = vunpack.c.l.b16 %v1005
      %v1061 = vunpack.c.l.b16 %v1006
      %v1062 = vunpack.c.l.b16 %v1007
      %v1063 = vunpack.c.l.b16 %v1008
      %v1064 = vunpack.c.l.b16 %v1009
      %v1065 = vunpack.c.l.b16 %v1010
      %v1066 = vunpack.c.l.b16 %v1011
      %v1067 = vunpack.c.l.b16 %v1012
      %v1068 = vunpack.c.l.b16 %v1013
      %v1069 = vunpack.c.l.b16 %v1014
      %v1070 = vunpack.c.l.b16 %v1015
      %v1071 = vunpack.c.l.b16 %v1016
      %v1072 = vunpack.c.l.b16 %v1017
      %v1073 = vpack.c.b16 %v1055, %v1054
      %v1074 = vpack.c.b16 %v1057, %v1056
      %v1075 = vpack.c.b16 %v1059, %v1058
      %v1076 = vpack.c.b16 %v1061, %v1060
      %v1077 = vpack.c.b16 %v1063, %v1062
      %v1078 = vpack.c.b16 %v1065, %v1064
      %v1079 = vpack.c.b16 %v1067, %v1066
      %v1080 = vpack.c.b16 %v1069, %v1068
      %v1081 = vpack.c.b16 %v1071, %v1070
      %v1082 = vpack.c.b16 %v1072, %v1072
      %v1083 = vrot.slane %v1073, 1
      %v1084 = vrot.slane %v1074, 1
      %v1085 = vsel %vm799, %v1083, %v1084
      %v1086 = vrot.slane %v1075, 1
      %v1087 = vsel %vm799, %v1084, %v1086
      %v1088 = vrot.slane %v1076, 1
      %v1089 = vsel %vm799, %v1086, %v1088
      %v1090 = vrot.slane %v1077, 1
      %v1091 = vsel %vm799, %v1088, %v1090
      %v1092 = vrot.slane %v1078, 1
      %v1093 = vsel %vm799, %v1090, %v1092
      %v1094 = vrot.slane %v1079, 1
      %v1095 = vsel %vm799, %v1092, %v1094
      %v1096 = vrot.slane %v1080, 1
      %v1097 = vsel %vm799, %v1094, %v1096
      %v1098 = vrot.slane %v1081, 1
      %v1099 = vsel %vm799, %v1096, %v1098
      %v1100 = vrot.slane %v1082, 1
      %v1101 = vsel %vm799, %v1098, %v1100
      %v1127 = vunpack.c.l.b16 %v1019
      %v1128 = vunpack.c.l.b16 %v1020
      %v1129 = vunpack.c.l.b16 %v1021
      %v1130 = vunpack.c.l.b16 %v1022
      %v1131 = vunpack.c.l.b16 %v1023
      %v1132 = vunpack.c.l.b16 %v1024
      %v1133 = vunpack.c.l.b16 %v1025
      %v1134 = vunpack.c.l.b16 %v1026
      %v1135 = vunpack.c.l.b16 %v1027
      %v1136 = vunpack.c.l.b16 %v1028
      %v1137 = vunpack.c.l.b16 %v1029
      %v1138 = vunpack.c.l.b16 %v1030
      %v1139 = vunpack.c.l.b16 %v1031
      %v1140 = vunpack.c.l.b16 %v1032
      %v1141 = vunpack.c.l.b16 %v1033
      %v1142 = vunpack.c.l.b16 %v1034
      %v1143 = vpack.c.b16 %v1128, %v1127
      %v1144 = vpack.c.b16 %v1130, %v1129
      %v1145 = vpack.c.b16 %v1132, %v1131
      %v1146 = vpack.c.b16 %v1134, %v1133
      %v1147 = vpack.c.b16 %v1136, %v1135
      %v1148 = vpack.c.b16 %v1138, %v1137
      %v1149 = vpack.c.b16 %v1140, %v1139
      %v1150 = vpack.c.b16 %v1142, %v1141
      %1159 = vmatprep.subr.bf16.mxu0 0
      %1160 = vmatpush1.bf16.msra.mxu0 %v1143
      %1161 = vmatprep.subr.bf16.mxu0 0
      %1162 = vmatpush1.bf16.msra.mxu0 %v1144
      %1163 = vmatprep.subr.bf16.mxu0 0
      %1164 = vmatpush1.bf16.msra.mxu0 %v1145
      %1165 = vmatprep.subr.bf16.mxu0 0
      %1166 = vmatpush1.bf16.msra.mxu0 %v1146
      %1167 = vmatprep.subr.bf16.mxu0 0
      %1168 = vmatpush1.bf16.msra.mxu0 %v1147
      %1169 = vmatprep.subr.bf16.mxu0 0
      %1170 = vmatpush1.bf16.msra.mxu0 %v1148
      %1171 = vmatprep.subr.bf16.mxu0 0
      %1172 = vmatpush1.bf16.msra.mxu0 %v1149
      %1173 = vmatprep.subr.bf16.mxu0 0
      %1174 = vmatpush1.bf16.msra.mxu0 %v1150
      %1175 = vmatprep.subr.bf16.mxu0 0
      %1176 = vmatpush1.bf16.msra.mxu0 0
      %1177 = vmatprep.subr.bf16.mxu0 0
      %1178 = vmatpush1.bf16.msra.mxu0 0
      %1179 = vmatprep.subr.bf16.mxu0 0
      %1180 = vmatpush1.bf16.msra.mxu0 0
      %1181 = vmatprep.subr.bf16.mxu0 0
      %1182 = vmatpush1.bf16.msra.mxu0 0
      %1183 = vmatprep.subr.bf16.mxu0 0
      %1184 = vmatpush1.bf16.msra.mxu0 0
      %1185 = vmatprep.subr.bf16.mxu0 0
      %1186 = vmatpush1.bf16.msra.mxu0 0
      %1187 = vmatprep.subr.bf16.mxu0 0
      %1188 = vmatpush1.bf16.msra.mxu0 0
      %1189 = vmatprep.subr.bf16.mxu0 0
      %1190 = vmatpush1.bf16.msra.mxu0 0
      %1191 = vmatprep.mubr.bf16.mxu0 0
      %1192 = vmatmul.mubr.bf16.gmra.mrb[0].mxu0 %v1085
      %v1193 = vpop.f32.mrb[0].mxu0
      %v1194 = vadd.f32 0.0, %v1193
      %v1195 = vpop.f32.mrb[0].mxu0
      %v1196 = vpop.f32.mrb[0].mxu0
      %v1197 = vadd.f32 0.0, %v1196
      %v1198 = vpop.f32.mrb[0].mxu0
      %1199 = vmatprep.mubr.bf16.mxu0 0
      %1200 = vmatmul.mubr.bf16.gmra.mrb[0].mxu0 %v1087
      %v1201 = vpop.f32.mrb[0].mxu0
      %v1202 = vadd.f32 0.0, %v1201
      %v1203 = vpop.f32.mrb[0].mxu0
      %v1204 = vpop.f32.mrb[0].mxu0
      %v1205 = vadd.f32 0.0, %v1204
      %v1206 = vpop.f32.mrb[0].mxu0
      %1207 = vmatprep.mubr.bf16.mxu0 0
      %1208 = vmatmul.mubr.bf16.gmra.mrb[0].mxu0 %v1089
      %v1209 = vpop.f32.mrb[0].mxu0
      %v1210 = vadd.f32 0.0, %v1209
      %v1211 = vpop.f32.mrb[0].mxu0
      %v1212 = vpop.f32.mrb[0].mxu0
      %v1213 = vadd.f32 0.0, %v1212
      %v1214 = vpop.f32.mrb[0].mxu0
      %1215 = vmatprep.mubr.bf16.mxu0 0
      %1216 = vmatmul.mubr.bf16.gmra.mrb[0].mxu0 %v1091
      %v1217 = vpop.f32.mrb[0].mxu0
      %v1218 = vadd.f32 0.0, %v1217
      %v1219 = vpop.f32.mrb[0].mxu0
      %v1220 = vpop.f32.mrb[0].mxu0
      %v1221 = vadd.f32 0.0, %v1220
      %v1222 = vpop.f32.mrb[0].mxu0
      %1223 = vmatprep.mubr.bf16.mxu0 0
      %1224 = vmatmul.mubr.bf16.gmra.mrb[0].mxu0 %v1093
      %v1225 = vpop.f32.mrb[0].mxu0
      %v1226 = vadd.f32 0.0, %v1225
      %v1227 = vpop.f32.mrb[0].mxu0
      %v1228 = vpop.f32.mrb[0].mxu0
      %v1229 = vadd.f32 0.0, %v1228
      %v1230 = vpop.f32.mrb[0].mxu0
      %1231 = vmatprep.mubr.bf16.mxu0 0
      %1232 = vmatmul.mubr.bf16.gmra.mrb[0].mxu0 %v1095
      %v1233 = vpop.f32.mrb[0].mxu0
      %v1234 = vadd.f32 0.0, %v1233
      %v1235 = vpop.f32.mrb[0].mxu0
      %v1236 = vpop.f32.mrb[0].mxu0
      %v1237 = vadd.f32 0.0, %v1236
      %v1238 = vpop.f32.mrb[0].mxu0
      %1239 = vmatprep.mubr.bf16.mxu0 0
      %1240 = vmatmul.mubr.bf16.gmra.mrb[0].mxu0 %v1097
      %v1241 = vpop.f32.mrb[0].mxu0
      %v1242 = vadd.f32 0.0, %v1241
      %v1243 = vpop.f32.mrb[0].mxu0
      %v1244 = vpop.f32.mrb[0].mxu0
      %v1245 = vadd.f32 0.0, %v1244
      %v1246 = vpop.f32.mrb[0].mxu0
      %1247 = vmatprep.mubr.bf16.mxu0 0
      %1248 = vmatmul.mubr.bf16.gmra.mrb[0].mxu0 %v1099
      %v1249 = vpop.f32.mrb[0].mxu0
      %v1250 = vadd.f32 0.0, %v1249
      %v1251 = vpop.f32.mrb[0].mxu0
      %v1252 = vpop.f32.mrb[0].mxu0
      %v1253 = vadd.f32 0.0, %v1252
      %v1254 = vpop.f32.mrb[0].mxu0
      %1255 = vmatprep.mubr.bf16.mxu0 0
      %1256 = vmatmul.mubr.bf16.gmra.mrb[0].mxu0 %v1101
      %v1257 = vpop.f32.mrb[0].mxu0
      %v1258 = vadd.f32 0.0, %v1257
      %v1259 = vpop.f32.mrb[0].mxu0
      %v1260 = vpop.f32.mrb[0].mxu0
      %v1261 = vadd.f32 0.0, %v1260
      %v1262 = vpop.f32.mrb[0].mxu0
      %1263 = vdwg.mxu0
      %v1264 = vadd.f32 %v981, %v1194
      %v1265 = vadd.f32 %v982, %v1197
      %v1266 = vadd.f32 %v983, %v1202
      %v1267 = vadd.f32 %v984, %v1205
      %v1268 = vadd.f32 %v985, %v1210
      %v1269 = vadd.f32 %v986, %v1213
      %v1270 = vadd.f32 %v987, %v1218
      %v1271 = vadd.f32 %v988, %v1221
      %v1272 = vadd.f32 %v989, %v1226
      %v1273 = vadd.f32 %v990, %v1229
      %v1274 = vadd.f32 %v991, %v1234
      %v1275 = vadd.f32 %v992, %v1237
      %v1276 = vadd.f32 %v993, %v1242
      %v1277 = vadd.f32 %v994, %v1245
      %v1278 = vadd.f32 %v995, %v1250
      %v1279 = vadd.f32 %v996, %v1253
      %v1280 = vadd.f32 %v997, %v1258
      %v1281 = vadd.f32 %v998, %v1261
      %v1282 = vld [vmem:[%s260 + $0x50] sm:$0x3]
      %s1283 = scalar_lea.vmem %s1, 256
      %v1284 = vld [vmem:[%s1283] sm:$0xf]
      %v1285 = vld [vmem:[%s1283 + $0x4] sm:$0xf]
      %v1286 = vld [vmem:[%s1283 + $0x8] sm:$0xf]
      %v1287 = vld [vmem:[%s1283 + $0xc] sm:$0xf]
      %v1288 = vld [vmem:[%s1283 + $0x10] sm:$0xf]
      %v1289 = vld [vmem:[%s1283 + $0x14] sm:$0xf]
      %v1290 = vld [vmem:[%s1283 + $0x18] sm:$0xf]
      %v1291 = vld [vmem:[%s1283 + $0x1c] sm:$0xf]
      %v1292 = vld [vmem:[%s1283 + $0x20] sm:$0xf]
      %v1293 = vld [vmem:[%s1283 + $0x24] sm:$0xf]
      %v1294 = vld [vmem:[%s1283 + $0x28] sm:$0xf]
      %v1295 = vld [vmem:[%s1283 + $0x2c] sm:$0xf]
      %v1296 = vld [vmem:[%s1283 + $0x30] sm:$0xf]
      %v1297 = vld [vmem:[%s1283 + $0x34] sm:$0xf]
      %v1298 = vld [vmem:[%s1283 + $0x38] sm:$0xf]
      %v1299 = vld [vmem:[%s1283 + $0x3c] sm:$0xf]
      %v1301 = vunpack.c.l.b16 %v1282
      %v1302 = vpack.c.b16 %v1301, %v1301
      %vm1303 = vsmask.f32 6400
      %v1305 = vshrl.u32 %v1073, 16
      %v1307 = vrot.slane %v1305, 1
      %v1308 = vshll.u32 %v1073, 16
      %v1310 = vrot.slane %v1308, 2
      %v1311 = vor.u32 %v1307, %v1310
      %v1313 = vshrl.u32 %v1074, 16
      %v1315 = vrot.slane %v1313, 1
      %v1316 = vshll.u32 %v1074, 16
      %v1318 = vrot.slane %v1316, 2
      %v1319 = vor.u32 %v1315, %v1318
      %v1320 = vsel %vm1303, %v1311, %v1319
      %v1322 = vshrl.u32 %v1075, 16
      %v1324 = vrot.slane %v1322, 1
      %v1325 = vshll.u32 %v1075, 16
      %v1327 = vrot.slane %v1325, 2
      %v1328 = vor.u32 %v1324, %v1327
      %v1329 = vsel %vm1303, %v1319, %v1328
      %v1331 = vshrl.u32 %v1076, 16
      %v1333 = vrot.slane %v1331, 1
      %v1334 = vshll.u32 %v1076, 16
      %v1336 = vrot.slane %v1334, 2
      %v1337 = vor.u32 %v1333, %v1336
      %v1338 = vsel %vm1303, %v1328, %v1337
      %v1340 = vshrl.u32 %v1077, 16
      %v1342 = vrot.slane %v1340, 1
      %v1343 = vshll.u32 %v1077, 16
      %v1345 = vrot.slane %v1343, 2
      %v1346 = vor.u32 %v1342, %v1345
      %v1347 = vsel %vm1303, %v1337, %v1346
      %v1349 = vshrl.u32 %v1078, 16
      %v1351 = vrot.slane %v1349, 1
      %v1352 = vshll.u32 %v1078, 16
      %v1354 = vrot.slane %v1352, 2
      %v1355 = vor.u32 %v1351, %v1354
      %v1356 = vsel %vm1303, %v1346, %v1355
      %v1358 = vshrl.u32 %v1079, 16
      %v1360 = vrot.slane %v1358, 1
      %v1361 = vshll.u32 %v1079, 16
      %v1363 = vrot.slane %v1361, 2
      %v1364 = vor.u32 %v1360, %v1363
      %v1365 = vsel %vm1303, %v1355, %v1364
      %v1367 = vshrl.u32 %v1080, 16
      %v1369 = vrot.slane %v1367, 1
      %v1370 = vshll.u32 %v1080, 16
      %v1372 = vrot.slane %v1370, 2
      %v1373 = vor.u32 %v1369, %v1372
      %v1374 = vsel %vm1303, %v1364, %v1373
      %v1376 = vshrl.u32 %v1081, 16
      %v1378 = vrot.slane %v1376, 1
      %v1379 = vshll.u32 %v1081, 16
      %v1381 = vrot.slane %v1379, 2
      %v1382 = vor.u32 %v1378, %v1381
      %v1383 = vsel %vm1303, %v1373, %v1382
      %v1385 = vshrl.u32 %v1302, 16
      %v1387 = vrot.slane %v1385, 1
      %v1388 = vshll.u32 %v1302, 16
      %v1390 = vrot.slane %v1388, 2
      %v1391 = vor.u32 %v1387, %v1390
      %v1392 = vsel %vm1303, %v1382, %v1391
      %v1418 = vunpack.c.l.b16 %v1284
      %v1419 = vunpack.c.l.b16 %v1285
      %v1420 = vunpack.c.l.b16 %v1286
      %v1421 = vunpack.c.l.b16 %v1287
      %v1422 = vunpack.c.l.b16 %v1288
      %v1423 = vunpack.c.l.b16 %v1289
      %v1424 = vunpack.c.l.b16 %v1290
      %v1425 = vunpack.c.l.b16 %v1291
      %v1426 = vunpack.c.l.b16 %v1292
      %v1427 = vunpack.c.l.b16 %v1293
      %v1428 = vunpack.c.l.b16 %v1294
      %v1429 = vunpack.c.l.b16 %v1295
      %v1430 = vunpack.c.l.b16 %v1296
      %v1431 = vunpack.c.l.b16 %v1297
      %v1432 = vunpack.c.l.b16 %v1298
      %v1433 = vunpack.c.l.b16 %v1299
      %v1434 = vpack.c.b16 %v1419, %v1418
      %v1435 = vpack.c.b16 %v1421, %v1420
      %v1436 = vpack.c.b16 %v1423, %v1422
      %v1437 = vpack.c.b16 %v1425, %v1424
      %v1438 = vpack.c.b16 %v1427, %v1426
      %v1439 = vpack.c.b16 %v1429, %v1428
      %v1440 = vpack.c.b16 %v1431, %v1430
      %v1441 = vpack.c.b16 %v1433, %v1432
      %1450 = vmatprep.subr.bf16.mxu0 0
      %1451 = vmatpush1.bf16.msra.mxu0 %v1434
      %1452 = vmatprep.subr.bf16.mxu0 0
      %1453 = vmatpush1.bf16.msra.mxu0 %v1435
      %1454 = vmatprep.subr.bf16.mxu0 0
      %1455 = vmatpush1.bf16.msra.mxu0 %v1436
      %1456 = vmatprep.subr.bf16.mxu0 0
      %1457 = vmatpush1.bf16.msra.mxu0 %v1437
      %1458 = vmatprep.subr.bf16.mxu0 0
      %1459 = vmatpush1.bf16.msra.mxu0 %v1438
      %1460 = vmatprep.subr.bf16.mxu0 0
      %1461 = vmatpush1.bf16.msra.mxu0 %v1439
      %1462 = vmatprep.subr.bf16.mxu0 0
      %1463 = vmatpush1.bf16.msra.mxu0 %v1440
      %1464 = vmatprep.subr.bf16.mxu0 0
      %1465 = vmatpush1.bf16.msra.mxu0 %v1441
      %1466 = vmatprep.subr.bf16.mxu0 0
      %1467 = vmatpush1.bf16.msra.mxu0 0
      %1468 = vmatprep.subr.bf16.mxu0 0
      %1469 = vmatpush1.bf16.msra.mxu0 0
      %1470 = vmatprep.subr.bf16.mxu0 0
      %1471 = vmatpush1.bf16.msra.mxu0 0
      %1472 = vmatprep.subr.bf16.mxu0 0
      %1473 = vmatpush1.bf16.msra.mxu0 0
      %1474 = vmatprep.subr.bf16.mxu0 0
      %1475 = vmatpush1.bf16.msra.mxu0 0
      %1476 = vmatprep.subr.bf16.mxu0 0
      %1477 = vmatpush1.bf16.msra.mxu0 0
      %1478 = vmatprep.subr.bf16.mxu0 0
      %1479 = vmatpush1.bf16.msra.mxu0 0
      %1480 = vmatprep.subr.bf16.mxu0 0
      %1481 = vmatpush1.bf16.msra.mxu0 0
      %1482 = vmatprep.mubr.bf16.mxu0 0
      %1483 = vmatmul.mubr.bf16.gmra.mrb[0].mxu0 %v1320
      %v1484 = vpop.f32.mrb[0].mxu0
      %v1485 = vadd.f32 0.0, %v1484
      %v1486 = vpop.f32.mrb[0].mxu0
      %v1487 = vpop.f32.mrb[0].mxu0
      %v1488 = vadd.f32 0.0, %v1487
      %v1489 = vpop.f32.mrb[0].mxu0
      %1490 = vmatprep.mubr.bf16.mxu0 0
      %1491 = vmatmul.mubr.bf16.gmra.mrb[0].mxu0 %v1329
      %v1492 = vpop.f32.mrb[0].mxu0
      %v1493 = vadd.f32 0.0, %v1492
      %v1494 = vpop.f32.mrb[0].mxu0
      %v1495 = vpop.f32.mrb[0].mxu0
      %v1496 = vadd.f32 0.0, %v1495
      %v1497 = vpop.f32.mrb[0].mxu0
      %1498 = vmatprep.mubr.bf16.mxu0 0
      %1499 = vmatmul.mubr.bf16.gmra.mrb[0].mxu0 %v1338
      %v1500 = vpop.f32.mrb[0].mxu0
      %v1501 = vadd.f32 0.0, %v1500
      %v1502 = vpop.f32.mrb[0].mxu0
      %v1503 = vpop.f32.mrb[0].mxu0
      %v1504 = vadd.f32 0.0, %v1503
      %v1505 = vpop.f32.mrb[0].mxu0
      %1506 = vmatprep.mubr.bf16.mxu0 0
      %1507 = vmatmul.mubr.bf16.gmra.mrb[0].mxu0 %v1347
      %v1508 = vpop.f32.mrb[0].mxu0
      %v1509 = vadd.f32 0.0, %v1508
      %v1510 = vpop.f32.mrb[0].mxu0
      %v1511 = vpop.f32.mrb[0].mxu0
      %v1512 = vadd.f32 0.0, %v1511
      %v1513 = vpop.f32.mrb[0].mxu0
      %1514 = vmatprep.mubr.bf16.mxu0 0
      %1515 = vmatmul.mubr.bf16.gmra.mrb[0].mxu0 %v1356
      %v1516 = vpop.f32.mrb[0].mxu0
      %v1517 = vadd.f32 0.0, %v1516
      %v1518 = vpop.f32.mrb[0].mxu0
      %v1519 = vpop.f32.mrb[0].mxu0
      %v1520 = vadd.f32 0.0, %v1519
      %v1521 = vpop.f32.mrb[0].mxu0
      %1522 = vmatprep.mubr.bf16.mxu0 0
      %1523 = vmatmul.mubr.bf16.gmra.mrb[0].mxu0 %v1365
      %v1524 = vpop.f32.mrb[0].mxu0
      %v1525 = vadd.f32 0.0, %v1524
      %v1526 = vpop.f32.mrb[0].mxu0
      %v1527 = vpop.f32.mrb[0].mxu0
      %v1528 = vadd.f32 0.0, %v1527
      %v1529 = vpop.f32.mrb[0].mxu0
      %1530 = vmatprep.mubr.bf16.mxu0 0
      %1531 = vmatmul.mubr.bf16.gmra.mrb[0].mxu0 %v1374
      %v1532 = vpop.f32.mrb[0].mxu0
      %v1533 = vadd.f32 0.0, %v1532
      %v1534 = vpop.f32.mrb[0].mxu0
      %v1535 = vpop.f32.mrb[0].mxu0
      %v1536 = vadd.f32 0.0, %v1535
      %v1537 = vpop.f32.mrb[0].mxu0
      %1538 = vmatprep.mubr.bf16.mxu0 0
      %1539 = vmatmul.mubr.bf16.gmra.mrb[0].mxu0 %v1383
      %v1540 = vpop.f32.mrb[0].mxu0
      %v1541 = vadd.f32 0.0, %v1540
      %v1542 = vpop.f32.mrb[0].mxu0
      %v1543 = vpop.f32.mrb[0].mxu0
      %v1544 = vadd.f32 0.0, %v1543
      %v1545 = vpop.f32.mrb[0].mxu0
      %1546 = vmatprep.mubr.bf16.mxu0 0
      %1547 = vmatmul.mubr.bf16.gmra.mrb[0].mxu0 %v1392
      %v1548 = vpop.f32.mrb[0].mxu0
      %v1549 = vadd.f32 0.0, %v1548
      %v1550 = vpop.f32.mrb[0].mxu0
      %v1551 = vpop.f32.mrb[0].mxu0
      %v1552 = vadd.f32 0.0, %v1551
      %v1553 = vpop.f32.mrb[0].mxu0
      %1554 = vdwg.mxu0
      %v1555 = vadd.f32 %v1264, %v1485
      %v1556 = vadd.f32 %v1265, %v1488
      %v1557 = vadd.f32 %v1266, %v1493
      %v1558 = vadd.f32 %v1267, %v1496
      %v1559 = vadd.f32 %v1268, %v1501
      %v1560 = vadd.f32 %v1269, %v1504
      %v1561 = vadd.f32 %v1270, %v1509
      %v1562 = vadd.f32 %v1271, %v1512
      %v1563 = vadd.f32 %v1272, %v1517
      %v1564 = vadd.f32 %v1273, %v1520
      %v1565 = vadd.f32 %v1274, %v1525
      %v1566 = vadd.f32 %v1275, %v1528
      %v1567 = vadd.f32 %v1276, %v1533
      %v1568 = vadd.f32 %v1277, %v1536
      %v1569 = vadd.f32 %v1278, %v1541
      %v1570 = vadd.f32 %v1279, %v1544
      %v1571 = vadd.f32 %v1280, %v1549
      %v1572 = vadd.f32 %v1281, %v1552
      %v1573 = vld [vmem:[%s260 + $0x8] sm:$0xc]
      %s1574 = scalar_lea.vmem %s1, 320
      %v1575 = vld [vmem:[%s1574] sm:$0xf]
      %v1576 = vld [vmem:[%s1574 + $0x4] sm:$0xf]
      %v1577 = vld [vmem:[%s1574 + $0x8] sm:$0xf]
      %v1578 = vld [vmem:[%s1574 + $0xc] sm:$0xf]
      %v1579 = vld [vmem:[%s1574 + $0x10] sm:$0xf]
      %v1580 = vld [vmem:[%s1574 + $0x14] sm:$0xf]
      %v1581 = vld [vmem:[%s1574 + $0x18] sm:$0xf]
      %v1582 = vld [vmem:[%s1574 + $0x1c] sm:$0xf]
      %v1583 = vld [vmem:[%s1574 + $0x20] sm:$0xf]
      %v1584 = vld [vmem:[%s1574 + $0x24] sm:$0xf]
      %v1585 = vld [vmem:[%s1574 + $0x28] sm:$0xf]
      %v1586 = vld [vmem:[%s1574 + $0x2c] sm:$0xf]
      %v1587 = vld [vmem:[%s1574 + $0x30] sm:$0xf]
      %v1588 = vld [vmem:[%s1574 + $0x34] sm:$0xf]
      %v1589 = vld [vmem:[%s1574 + $0x38] sm:$0xf]
      %v1590 = vld [vmem:[%s1574 + $0x3c] sm:$0xf]
      %v1592 = vunpack.c.l.b16 %v1573
      %v1593 = vpack.c.b16 %v1055, %v1592
      %vm1594 = vcmask 1045504
      %v1595 = vrot.slane %v1593, 2
      %v1596 = vrot.slane %v1074, 2
      %v1597 = vsel %vm1594, %v1595, %v1596
      %v1598 = vrot.slane %v1075, 2
      %v1599 = vsel %vm1594, %v1596, %v1598
      %v1600 = vrot.slane %v1076, 2
      %v1601 = vsel %vm1594, %v1598, %v1600
      %v1602 = vrot.slane %v1077, 2
      %v1603 = vsel %vm1594, %v1600, %v1602
      %v1604 = vrot.slane %v1078, 2
      %v1605 = vsel %vm1594, %v1602, %v1604
      %v1606 = vrot.slane %v1079, 2
      %v1607 = vsel %vm1594, %v1604, %v1606
      %v1608 = vrot.slane %v1080, 2
      %v1609 = vsel %vm1594, %v1606, %v1608
      %v1610 = vrot.slane %v1081, 2
      %v1611 = vsel %vm1594, %v1608, %v1610
      %v1612 = vrot.slane %v1302, 2
      %v1613 = vsel %vm1594, %v1610, %v1612
      %v1639 = vunpack.c.l.b16 %v1575
      %v1640 = vunpack.c.l.b16 %v1576
      %v1641 = vunpack.c.l.b16 %v1577
      %v1642 = vunpack.c.l.b16 %v1578
      %v1643 = vunpack.c.l.b16 %v1579
      %v1644 = vunpack.c.l.b16 %v1580
      %v1645 = vunpack.c.l.b16 %v1581
      %v1646 = vunpack.c.l.b16 %v1582
      %v1647 = vunpack.c.l.b16 %v1583
      %v1648 = vunpack.c.l.b16 %v1584
      %v1649 = vunpack.c.l.b16 %v1585
      %v1650 = vunpack.c.l.b16 %v1586
      %v1651 = vunpack.c.l.b16 %v1587
      %v1652 = vunpack.c.l.b16 %v1588
      %v1653 = vunpack.c.l.b16 %v1589
      %v1654 = vunpack.c.l.b16 %v1590
      %v1655 = vpack.c.b16 %v1640, %v1639
      %v1656 = vpack.c.b16 %v1642, %v1641
      %v1657 = vpack.c.b16 %v1644, %v1643
      %v1658 = vpack.c.b16 %v1646, %v1645
      %v1659 = vpack.c.b16 %v1648, %v1647
      %v1660 = vpack.c.b16 %v1650, %v1649
      %v1661 = vpack.c.b16 %v1652, %v1651
      %v1662 = vpack.c.b16 %v1654, %v1653
      %1671 = vmatprep.subr.bf16.mxu0 0
      %1672 = vmatpush1.bf16.msra.mxu0 %v1655
      %1673 = vmatprep.subr.bf16.mxu0 0
      %1674 = vmatpush1.bf16.msra.mxu0 %v1656
      %1675 = vmatprep.subr.bf16.mxu0 0
      %1676 = vmatpush1.bf16.msra.mxu0 %v1657
      %1677 = vmatprep.subr.bf16.mxu0 0
      %1678 = vmatpush1.bf16.msra.mxu0 %v1658
      %1679 = vmatprep.subr.bf16.mxu0 0
      %1680 = vmatpush1.bf16.msra.mxu0 %v1659
      %1681 = vmatprep.subr.bf16.mxu0 0
      %1682 = vmatpush1.bf16.msra.mxu0 %v1660
      %1683 = vmatprep.subr.bf16.mxu0 0
      %1684 = vmatpush1.bf16.msra.mxu0 %v1661
      %1685 = vmatprep.subr.bf16.mxu0 0
      %1686 = vmatpush1.bf16.msra.mxu0 %v1662
      %1687 = vmatprep.subr.bf16.mxu0 0
      %1688 = vmatpush1.bf16.msra.mxu0 0
      %1689 = vmatprep.subr.bf16.mxu0 0
      %1690 = vmatpush1.bf16.msra.mxu0 0
      %1691 = vmatprep.subr.bf16.mxu0 0
      %1692 = vmatpush1.bf16.msra.mxu0 0
      %1693 = vmatprep.subr.bf16.mxu0 0
      %1694 = vmatpush1.bf16.msra.mxu0 0
      %1695 = vmatprep.subr.bf16.mxu0 0
      %1696 = vmatpush1.bf16.msra.mxu0 0
      %1697 = vmatprep.subr.bf16.mxu0 0
      %1698 = vmatpush1.bf16.msra.mxu0 0
      %1699 = vmatprep.subr.bf16.mxu0 0
      %1700 = vmatpush1.bf16.msra.mxu0 0
      %1701 = vmatprep.subr.bf16.mxu0 0
      %1702 = vmatpush1.bf16.msra.mxu0 0
      %1703 = vmatprep.mubr.bf16.mxu0 0
      %1704 = vmatmul.mubr.bf16.gmra.mrb[0].mxu0 %v1597
      %v1705 = vpop.f32.mrb[0].mxu0
      %v1706 = vadd.f32 0.0, %v1705
      %v1707 = vpop.f32.mrb[0].mxu0
      %v1708 = vpop.f32.mrb[0].mxu0
      %v1709 = vadd.f32 0.0, %v1708
      %v1710 = vpop.f32.mrb[0].mxu0
      %1711 = vmatprep.mubr.bf16.mxu0 0
      %1712 = vmatmul.mubr.bf16.gmra.mrb[0].mxu0 %v1599
      %v1713 = vpop.f32.mrb[0].mxu0
      %v1714 = vadd.f32 0.0, %v1713
      %v1715 = vpop.f32.mrb[0].mxu0
      %v1716 = vpop.f32.mrb[0].mxu0
      %v1717 = vadd.f32 0.0, %v1716
      %v1718 = vpop.f32.mrb[0].mxu0
      %1719 = vmatprep.mubr.bf16.mxu0 0
      %1720 = vmatmul.mubr.bf16.gmra.mrb[0].mxu0 %v1601
      %v1721 = vpop.f32.mrb[0].mxu0
      %v1722 = vadd.f32 0.0, %v1721
      %v1723 = vpop.f32.mrb[0].mxu0
      %v1724 = vpop.f32.mrb[0].mxu0
      %v1725 = vadd.f32 0.0, %v1724
      %v1726 = vpop.f32.mrb[0].mxu0
      %1727 = vmatprep.mubr.bf16.mxu0 0
      %1728 = vmatmul.mubr.bf16.gmra.mrb[0].mxu0 %v1603
      %v1729 = vpop.f32.mrb[0].mxu0
      %v1730 = vadd.f32 0.0, %v1729
      %v1731 = vpop.f32.mrb[0].mxu0
      %v1732 = vpop.f32.mrb[0].mxu0
      %v1733 = vadd.f32 0.0, %v1732
      %v1734 = vpop.f32.mrb[0].mxu0
      %1735 = vmatprep.mubr.bf16.mxu0 0
      %1736 = vmatmul.mubr.bf16.gmra.mrb[0].mxu0 %v1605
      %v1737 = vpop.f32.mrb[0].mxu0
      %v1738 = vadd.f32 0.0, %v1737
      %v1739 = vpop.f32.mrb[0].mxu0
      %v1740 = vpop.f32.mrb[0].mxu0
      %v1741 = vadd.f32 0.0, %v1740
      %v1742 = vpop.f32.mrb[0].mxu0
      %1743 = vmatprep.mubr.bf16.mxu0 0
      %1744 = vmatmul.mubr.bf16.gmra.mrb[0].mxu0 %v1607
      %v1745 = vpop.f32.mrb[0].mxu0
      %v1746 = vadd.f32 0.0, %v1745
      %v1747 = vpop.f32.mrb[0].mxu0
      %v1748 = vpop.f32.mrb[0].mxu0
      %v1749 = vadd.f32 0.0, %v1748
      %v1750 = vpop.f32.mrb[0].mxu0
      %1751 = vmatprep.mubr.bf16.mxu0 0
      %1752 = vmatmul.mubr.bf16.gmra.mrb[0].mxu0 %v1609
      %v1753 = vpop.f32.mrb[0].mxu0
      %v1754 = vadd.f32 0.0, %v1753
      %v1755 = vpop.f32.mrb[0].mxu0
      %v1756 = vpop.f32.mrb[0].mxu0
      %v1757 = vadd.f32 0.0, %v1756
      %v1758 = vpop.f32.mrb[0].mxu0
      %1759 = vmatprep.mubr.bf16.mxu0 0
      %1760 = vmatmul.mubr.bf16.gmra.mrb[0].mxu0 %v1611
      %v1761 = vpop.f32.mrb[0].mxu0
      %v1762 = vadd.f32 0.0, %v1761
      %v1763 = vpop.f32.mrb[0].mxu0
      %v1764 = vpop.f32.mrb[0].mxu0
      %v1765 = vadd.f32 0.0, %v1764
      %v1766 = vpop.f32.mrb[0].mxu0
      %1767 = vmatprep.mubr.bf16.mxu0 0
      %1768 = vmatmul.mubr.bf16.gmra.mrb[0].mxu0 %v1613
      %v1769 = vpop.f32.mrb[0].mxu0
      %v1770 = vadd.f32 0.0, %v1769
      %v1771 = vpop.f32.mrb[0].mxu0
      %v1772 = vpop.f32.mrb[0].mxu0
      %v1773 = vadd.f32 0.0, %v1772
      %v1774 = vpop.f32.mrb[0].mxu0
      %1775 = vdwg.mxu0
      %v1776 = vadd.f32 %v1555, %v1706
      %v1777 = vadd.f32 %v1556, %v1709
      %v1778 = vadd.f32 %v1557, %v1714
      %v1779 = vadd.f32 %v1558, %v1717
      %v1780 = vadd.f32 %v1559, %v1722
      %v1781 = vadd.f32 %v1560, %v1725
      %v1782 = vadd.f32 %v1561, %v1730
      %v1783 = vadd.f32 %v1562, %v1733
      %v1784 = vadd.f32 %v1563, %v1738
      %v1785 = vadd.f32 %v1564, %v1741
      %v1786 = vadd.f32 %v1565, %v1746
      %v1787 = vadd.f32 %v1566, %v1749
      %v1788 = vadd.f32 %v1567, %v1754
      %v1789 = vadd.f32 %v1568, %v1757
      %v1790 = vadd.f32 %v1569, %v1762
      %v1791 = vadd.f32 %v1570, %v1765
      %v1792 = vadd.f32 %v1571, %v1770
      %v1793 = vadd.f32 %v1572, %v1773
      %v1794 = vld [vmem:[%s260 + $0x10] sm:$0xc]
      %v1795 = vld [vmem:[%s260 + $0x14] sm:$0xf]
      %v1796 = vld [vmem:[%s260 + $0x18] sm:$0xf]
      %v1797 = vld [vmem:[%s260 + $0x1c] sm:$0xf]
      %v1798 = vld [vmem:[%s260 + $0x20] sm:$0xf]
      %v1799 = vld [vmem:[%s260 + $0x24] sm:$0xf]
      %v1800 = vld [vmem:[%s260 + $0x28] sm:$0xf]
      %v1801 = vld [vmem:[%s260 + $0x2c] sm:$0xf]
      %v1802 = vld [vmem:[%s260 + $0x30] sm:$0xf]
      %v1803 = vld [vmem:[%s260 + $0x34] sm:$0xf]
      %v1804 = vld [vmem:[%s260 + $0x38] sm:$0xf]
      %v1805 = vld [vmem:[%s260 + $0x3c] sm:$0xf]
      %v1806 = vld [vmem:[%s260 + $0x40] sm:$0xf]
      %v1807 = vld [vmem:[%s260 + $0x44] sm:$0xf]
      %v1808 = vld [vmem:[%s260 + $0x48] sm:$0xf]
      %v1809 = vld [vmem:[%s260 + $0x4c] sm:$0xf]
      %v1810 = vld [vmem:[%s260 + $0x50] sm:$0xf]
      %v1811 = vld [vmem:[%s260 + $0x54] sm:$0xf]
      %v1812 = vld [vmem:[%s260 + $0x58] sm:$0x3]
      %s1813 = scalar_lea.vmem %s1, 384
      %v1814 = vld [vmem:[%s1813] sm:$0xf]
      %v1815 = vld [vmem:[%s1813 + $0x4] sm:$0xf]
      %v1816 = vld [vmem:[%s1813 + $0x8] sm:$0xf]
      %v1817 = vld [vmem:[%s1813 + $0xc] sm:$0xf]
      %v1818 = vld [vmem:[%s1813 + $0x10] sm:$0xf]
      %v1819 = vld [vmem:[%s1813 + $0x14] sm:$0xf]
      %v1820 = vld [vmem:[%s1813 + $0x18] sm:$0xf]
      %v1821 = vld [vmem:[%s1813 + $0x1c] sm:$0xf]
      %v1822 = vld [vmem:[%s1813 + $0x20] sm:$0xf]
      %v1823 = vld [vmem:[%s1813 + $0x24] sm:$0xf]
      %v1824 = vld [vmem:[%s1813 + $0x28] sm:$0xf]
      %v1825 = vld [vmem:[%s1813 + $0x2c] sm:$0xf]
      %v1826 = vld [vmem:[%s1813 + $0x30] sm:$0xf]
      %v1827 = vld [vmem:[%s1813 + $0x34] sm:$0xf]
      %v1828 = vld [vmem:[%s1813 + $0x38] sm:$0xf]
      %v1829 = vld [vmem:[%s1813 + $0x3c] sm:$0xf]
      %v1849 = vunpack.c.l.b16 %v1794
      %v1850 = vunpack.c.l.b16 %v1795
      %v1851 = vunpack.c.l.b16 %v1796
      %v1852 = vunpack.c.l.b16 %v1797
      %v1853 = vunpack.c.l.b16 %v1798
      %v1854 = vunpack.c.l.b16 %v1799
      %v1855 = vunpack.c.l.b16 %v1800
      %v1856 = vunpack.c.l.b16 %v1801
      %v1857 = vunpack.c.l.b16 %v1802
      %v1858 = vunpack.c.l.b16 %v1803
      %v1859 = vunpack.c.l.b16 %v1804
      %v1860 = vunpack.c.l.b16 %v1805
      %v1861 = vunpack.c.l.b16 %v1806
      %v1862 = vunpack.c.l.b16 %v1807
      %v1863 = vunpack.c.l.b16 %v1808
      %v1864 = vunpack.c.l.b16 %v1809
      %v1865 = vunpack.c.l.b16 %v1810
      %v1866 = vunpack.c.l.b16 %v1811
      %v1867 = vunpack.c.l.b16 %v1812
      %v1868 = vpack.c.b16 %v1850, %v1849
      %v1869 = vpack.c.b16 %v1852, %v1851
      %v1870 = vpack.c.b16 %v1854, %v1853
      %v1871 = vpack.c.b16 %v1856, %v1855
      %v1872 = vpack.c.b16 %v1858, %v1857
      %v1873 = vpack.c.b16 %v1860, %v1859
      %v1874 = vpack.c.b16 %v1862, %v1861
      %v1875 = vpack.c.b16 %v1864, %v1863
      %v1876 = vpack.c.b16 %v1866, %v1865
      %v1877 = vpack.c.b16 %v1867, %v1867
      %v1878 = vrot.slane %v1868, 2
      %v1879 = vrot.slane %v1869, 2
      %v1880 = vsel %vm1594, %v1878, %v1879
      %v1881 = vrot.slane %v1870, 2
      %v1882 = vsel %vm1594, %v1879, %v1881
      %v1883 = vrot.slane %v1871, 2
      %v1884 = vsel %vm1594, %v1881, %v1883
      %v1885 = vrot.slane %v1872, 2
      %v1886 = vsel %vm1594, %v1883, %v1885
      %v1887 = vrot.slane %v1873, 2
      %v1888 = vsel %vm1594, %v1885, %v1887
      %v1889 = vrot.slane %v1874, 2
      %v1890 = vsel %vm1594, %v1887, %v1889
      %v1891 = vrot.slane %v1875, 2
      %v1892 = vsel %vm1594, %v1889, %v1891
      %v1893 = vrot.slane %v1876, 2
      %v1894 = vsel %vm1594, %v1891, %v1893
      %v1895 = vrot.slane %v1877, 2
      %v1896 = vsel %vm1594, %v1893, %v1895
      %v1922 = vunpack.c.l.b16 %v1814
      %v1923 = vunpack.c.l.b16 %v1815
      %v1924 = vunpack.c.l.b16 %v1816
      %v1925 = vunpack.c.l.b16 %v1817
      %v1926 = vunpack.c.l.b16 %v1818
      %v1927 = vunpack.c.l.b16 %v1819
      %v1928 = vunpack.c.l.b16 %v1820
      %v1929 = vunpack.c.l.b16 %v1821
      %v1930 = vunpack.c.l.b16 %v1822
      %v1931 = vunpack.c.l.b16 %v1823
      %v1932 = vunpack.c.l.b16 %v1824
      %v1933 = vunpack.c.l.b16 %v1825
      %v1934 = vunpack.c.l.b16 %v1826
      %v1935 = vunpack.c.l.b16 %v1827
      %v1936 = vunpack.c.l.b16 %v1828
      %v1937 = vunpack.c.l.b16 %v1829
      %v1938 = vpack.c.b16 %v1923, %v1922
      %v1939 = vpack.c.b16 %v1925, %v1924
      %v1940 = vpack.c.b16 %v1927, %v1926
      %v1941 = vpack.c.b16 %v1929, %v1928
      %v1942 = vpack.c.b16 %v1931, %v1930
      %v1943 = vpack.c.b16 %v1933, %v1932
      %v1944 = vpack.c.b16 %v1935, %v1934
      %v1945 = vpack.c.b16 %v1937, %v1936
      %1954 = vmatprep.subr.bf16.mxu0 0
      %1955 = vmatpush1.bf16.msra.mxu0 %v1938
      %1956 = vmatprep.subr.bf16.mxu0 0
      %1957 = vmatpush1.bf16.msra.mxu0 %v1939
      %1958 = vmatprep.subr.bf16.mxu0 0
      %1959 = vmatpush1.bf16.msra.mxu0 %v1940
      %1960 = vmatprep.subr.bf16.mxu0 0
      %1961 = vmatpush1.bf16.msra.mxu0 %v1941
      %1962 = vmatprep.subr.bf16.mxu0 0
      %1963 = vmatpush1.bf16.msra.mxu0 %v1942
      %1964 = vmatprep.subr.bf16.mxu0 0
      %1965 = vmatpush1.bf16.msra.mxu0 %v1943
      %1966 = vmatprep.subr.bf16.mxu0 0
      %1967 = vmatpush1.bf16.msra.mxu0 %v1944
      %1968 = vmatprep.subr.bf16.mxu0 0
      %1969 = vmatpush1.bf16.msra.mxu0 %v1945
      %1970 = vmatprep.subr.bf16.mxu0 0
      %1971 = vmatpush1.bf16.msra.mxu0 0
      %1972 = vmatprep.subr.bf16.mxu0 0
      %1973 = vmatpush1.bf16.msra.mxu0 0
      %1974 = vmatprep.subr.bf16.mxu0 0
      %1975 = vmatpush1.bf16.msra.mxu0 0
      %1976 = vmatprep.subr.bf16.mxu0 0
      %1977 = vmatpush1.bf16.msra.mxu0 0
      %1978 = vmatprep.subr.bf16.mxu0 0
      %1979 = vmatpush1.bf16.msra.mxu0 0
      %1980 = vmatprep.subr.bf16.mxu0 0
      %1981 = vmatpush1.bf16.msra.mxu0 0
      %1982 = vmatprep.subr.bf16.mxu0 0
      %1983 = vmatpush1.bf16.msra.mxu0 0
      %1984 = vmatprep.subr.bf16.mxu0 0
      %1985 = vmatpush1.bf16.msra.mxu0 0
      %1986 = vmatprep.mubr.bf16.mxu0 0
      %1987 = vmatmul.mubr.bf16.gmra.mrb[0].mxu0 %v1880
      %v1988 = vpop.f32.mrb[0].mxu0
      %v1989 = vadd.f32 0.0, %v1988
      %v1990 = vpop.f32.mrb[0].mxu0
      %v1991 = vpop.f32.mrb[0].mxu0
      %v1992 = vadd.f32 0.0, %v1991
      %v1993 = vpop.f32.mrb[0].mxu0
      %1994 = vmatprep.mubr.bf16.mxu0 0
      %1995 = vmatmul.mubr.bf16.gmra.mrb[0].mxu0 %v1882
      %v1996 = vpop.f32.mrb[0].mxu0
      %v1997 = vadd.f32 0.0, %v1996
      %v1998 = vpop.f32.mrb[0].mxu0
      %v1999 = vpop.f32.mrb[0].mxu0
      %v2000 = vadd.f32 0.0, %v1999
      %v2001 = vpop.f32.mrb[0].mxu0
      %2002 = vmatprep.mubr.bf16.mxu0 0
      %2003 = vmatmul.mubr.bf16.gmra.mrb[0].mxu0 %v1884
      %v2004 = vpop.f32.mrb[0].mxu0
      %v2005 = vadd.f32 0.0, %v2004
      %v2006 = vpop.f32.mrb[0].mxu0
      %v2007 = vpop.f32.mrb[0].mxu0
      %v2008 = vadd.f32 0.0, %v2007
      %v2009 = vpop.f32.mrb[0].mxu0
      %2010 = vmatprep.mubr.bf16.mxu0 0
      %2011 = vmatmul.mubr.bf16.gmra.mrb[0].mxu0 %v1886
      %v2012 = vpop.f32.mrb[0].mxu0
      %v2013 = vadd.f32 0.0, %v2012
      %v2014 = vpop.f32.mrb[0].mxu0
      %v2015 = vpop.f32.mrb[0].mxu0
      %v2016 = vadd.f32 0.0, %v2015
      %v2017 = vpop.f32.mrb[0].mxu0
      %2018 = vmatprep.mubr.bf16.mxu0 0
      %2019 = vmatmul.mubr.bf16.gmra.mrb[0].mxu0 %v1888
      %v2020 = vpop.f32.mrb[0].mxu0
      %v2021 = vadd.f32 0.0, %v2020
      %v2022 = vpop.f32.mrb[0].mxu0
      %v2023 = vpop.f32.mrb[0].mxu0
      %v2024 = vadd.f32 0.0, %v2023
      %v2025 = vpop.f32.mrb[0].mxu0
      %2026 = vmatprep.mubr.bf16.mxu0 0
      %2027 = vmatmul.mubr.bf16.gmra.mrb[0].mxu0 %v1890
      %v2028 = vpop.f32.mrb[0].mxu0
      %v2029 = vadd.f32 0.0, %v2028
      %v2030 = vpop.f32.mrb[0].mxu0
      %v2031 = vpop.f32.mrb[0].mxu0
      %v2032 = vadd.f32 0.0, %v2031
      %v2033 = vpop.f32.mrb[0].mxu0
      %2034 = vmatprep.mubr.bf16.mxu0 0
      %2035 = vmatmul.mubr.bf16.gmra.mrb[0].mxu0 %v1892
      %v2036 = vpop.f32.mrb[0].mxu0
      %v2037 = vadd.f32 0.0, %v2036
      %v2038 = vpop.f32.mrb[0].mxu0
      %v2039 = vpop.f32.mrb[0].mxu0
      %v2040 = vadd.f32 0.0, %v2039
      %v2041 = vpop.f32.mrb[0].mxu0
      %2042 = vmatprep.mubr.bf16.mxu0 0
      %2043 = vmatmul.mubr.bf16.gmra.mrb[0].mxu0 %v1894
      %v2044 = vpop.f32.mrb[0].mxu0
      %v2045 = vadd.f32 0.0, %v2044
      %v2046 = vpop.f32.mrb[0].mxu0
      %v2047 = vpop.f32.mrb[0].mxu0
      %v2048 = vadd.f32 0.0, %v2047
      %v2049 = vpop.f32.mrb[0].mxu0
      %2050 = vmatprep.mubr.bf16.mxu0 0
      %2051 = vmatmul.mubr.bf16.gmra.mrb[0].mxu0 %v1896
      %v2052 = vpop.f32.mrb[0].mxu0
      %v2053 = vadd.f32 0.0, %v2052
      %v2054 = vpop.f32.mrb[0].mxu0
      %v2055 = vpop.f32.mrb[0].mxu0
      %v2056 = vadd.f32 0.0, %v2055
      %v2057 = vpop.f32.mrb[0].mxu0
      %2058 = vdwg.mxu0
      %v2059 = vadd.f32 %v1776, %v1989
      %v2060 = vadd.f32 %v1777, %v1992
      %v2061 = vadd.f32 %v1778, %v1997
      %v2062 = vadd.f32 %v1779, %v2000
      %v2063 = vadd.f32 %v1780, %v2005
      %v2064 = vadd.f32 %v1781, %v2008
      %v2065 = vadd.f32 %v1782, %v2013
      %v2066 = vadd.f32 %v1783, %v2016
      %v2067 = vadd.f32 %v1784, %v2021
      %v2068 = vadd.f32 %v1785, %v2024
      %v2069 = vadd.f32 %v1786, %v2029
      %v2070 = vadd.f32 %v1787, %v2032
      %v2071 = vadd.f32 %v1788, %v2037
      %v2072 = vadd.f32 %v1789, %v2040
      %v2073 = vadd.f32 %v1790, %v2045
      %v2074 = vadd.f32 %v1791, %v2048
      %v2075 = vadd.f32 %v1792, %v2053
      %v2076 = vadd.f32 %v1793, %v2056
      %v2077 = vld [vmem:[%s260 + $0x58] sm:$0x7]
      %s2078 = scalar_lea.vmem %s1, 448
      %v2079 = vld [vmem:[%s2078] sm:$0xf]
      %v2080 = vld [vmem:[%s2078 + $0x4] sm:$0xf]
      %v2081 = vld [vmem:[%s2078 + $0x8] sm:$0xf]
      %v2082 = vld [vmem:[%s2078 + $0xc] sm:$0xf]
      %v2083 = vld [vmem:[%s2078 + $0x10] sm:$0xf]
      %v2084 = vld [vmem:[%s2078 + $0x14] sm:$0xf]
      %v2085 = vld [vmem:[%s2078 + $0x18] sm:$0xf]
      %v2086 = vld [vmem:[%s2078 + $0x1c] sm:$0xf]
      %v2087 = vld [vmem:[%s2078 + $0x20] sm:$0xf]
      %v2088 = vld [vmem:[%s2078 + $0x24] sm:$0xf]
      %v2089 = vld [vmem:[%s2078 + $0x28] sm:$0xf]
      %v2090 = vld [vmem:[%s2078 + $0x2c] sm:$0xf]
      %v2091 = vld [vmem:[%s2078 + $0x30] sm:$0xf]
      %v2092 = vld [vmem:[%s2078 + $0x34] sm:$0xf]
      %v2093 = vld [vmem:[%s2078 + $0x38] sm:$0xf]
      %v2094 = vld [vmem:[%s2078 + $0x3c] sm:$0xf]
      %v2096 = vunpack.c.l.b16 %v2077
      %v2097 = vpack.c.b16 %v2096, %v2096
      %vm2098 = vsmask.f32 5376
      %v2100 = vshrl.u32 %v1868, 16
      %v2102 = vrot.slane %v2100, 2
      %v2103 = vshll.u32 %v1868, 16
      %v2105 = vrot.slane %v2103, 3
      %v2106 = vor.u32 %v2102, %v2105
      %v2108 = vshrl.u32 %v1869, 16
      %v2110 = vrot.slane %v2108, 2
      %v2111 = vshll.u32 %v1869, 16
      %v2113 = vrot.slane %v2111, 3
      %v2114 = vor.u32 %v2110, %v2113
      %v2115 = vsel %vm2098, %v2106, %v2114
      %v2117 = vshrl.u32 %v1870, 16
      %v2119 = vrot.slane %v2117, 2
      %v2120 = vshll.u32 %v1870, 16
      %v2122 = vrot.slane %v2120, 3
      %v2123 = vor.u32 %v2119, %v2122
      %v2124 = vsel %vm2098, %v2114, %v2123
      %v2126 = vshrl.u32 %v1871, 16
      %v2128 = vrot.slane %v2126, 2
      %v2129 = vshll.u32 %v1871, 16
      %v2131 = vrot.slane %v2129, 3
      %v2132 = vor.u32 %v2128, %v2131
      %v2133 = vsel %vm2098, %v2123, %v2132
      %v2135 = vshrl.u32 %v1872, 16
      %v2137 = vrot.slane %v2135, 2
      %v2138 = vshll.u32 %v1872, 16
      %v2140 = vrot.slane %v2138, 3
      %v2141 = vor.u32 %v2137, %v2140
      %v2142 = vsel %vm2098, %v2132, %v2141
      %v2144 = vshrl.u32 %v1873, 16
      %v2146 = vrot.slane %v2144, 2
      %v2147 = vshll.u32 %v1873, 16
      %v2149 = vrot.slane %v2147, 3
      %v2150 = vor.u32 %v2146, %v2149
      %v2151 = vsel %vm2098, %v2141, %v2150
      %v2153 = vshrl.u32 %v1874, 16
      %v2155 = vrot.slane %v2153, 2
      %v2156 = vshll.u32 %v1874, 16
      %v2158 = vrot.slane %v2156, 3
      %v2159 = vor.u32 %v2155, %v2158
      %v2160 = vsel %vm2098, %v2150, %v2159
      %v2162 = vshrl.u32 %v1875, 16
      %v2164 = vrot.slane %v2162, 2
      %v2165 = vshll.u32 %v1875, 16
      %v2167 = vrot.slane %v2165, 3
      %v2168 = vor.u32 %v2164, %v2167
      %v2169 = vsel %vm2098, %v2159, %v2168
      %v2171 = vshrl.u32 %v1876, 16
      %v2173 = vrot.slane %v2171, 2
      %v2174 = vshll.u32 %v1876, 16
      %v2176 = vrot.slane %v2174, 3
      %v2177 = vor.u32 %v2173, %v2176
      %v2178 = vsel %vm2098, %v2168, %v2177
      %v2180 = vshrl.u32 %v2097, 16
      %v2182 = vrot.slane %v2180, 2
      %v2183 = vshll.u32 %v2097, 16
      %v2185 = vrot.slane %v2183, 3
      %v2186 = vor.u32 %v2182, %v2185
      %v2187 = vsel %vm2098, %v2177, %v2186
      %v2213 = vunpack.c.l.b16 %v2079
      %v2214 = vunpack.c.l.b16 %v2080
      %v2215 = vunpack.c.l.b16 %v2081
      %v2216 = vunpack.c.l.b16 %v2082
      %v2217 = vunpack.c.l.b16 %v2083
      %v2218 = vunpack.c.l.b16 %v2084
      %v2219 = vunpack.c.l.b16 %v2085
      %v2220 = vunpack.c.l.b16 %v2086
      %v2221 = vunpack.c.l.b16 %v2087
      %v2222 = vunpack.c.l.b16 %v2088
      %v2223 = vunpack.c.l.b16 %v2089
      %v2224 = vunpack.c.l.b16 %v2090
      %v2225 = vunpack.c.l.b16 %v2091
      %v2226 = vunpack.c.l.b16 %v2092
      %v2227 = vunpack.c.l.b16 %v2093
      %v2228 = vunpack.c.l.b16 %v2094
      %v2229 = vpack.c.b16 %v2214, %v2213
      %v2230 = vpack.c.b16 %v2216, %v2215
      %v2231 = vpack.c.b16 %v2218, %v2217
      %v2232 = vpack.c.b16 %v2220, %v2219
      %v2233 = vpack.c.b16 %v2222, %v2221
      %v2234 = vpack.c.b16 %v2224, %v2223
      %v2235 = vpack.c.b16 %v2226, %v2225
      %v2236 = vpack.c.b16 %v2228, %v2227
      %2245 = vmatprep.subr.bf16.mxu0 0
      %2246 = vmatpush1.bf16.msra.mxu0 %v2229
      %2247 = vmatprep.subr.bf16.mxu0 0
      %2248 = vmatpush1.bf16.msra.mxu0 %v2230
      %2249 = vmatprep.subr.bf16.mxu0 0
      %2250 = vmatpush1.bf16.msra.mxu0 %v2231
      %2251 = vmatprep.subr.bf16.mxu0 0
      %2252 = vmatpush1.bf16.msra.mxu0 %v2232
      %2253 = vmatprep.subr.bf16.mxu0 0
      %2254 = vmatpush1.bf16.msra.mxu0 %v2233
      %2255 = vmatprep.subr.bf16.mxu0 0
      %2256 = vmatpush1.bf16.msra.mxu0 %v2234
      %2257 = vmatprep.subr.bf16.mxu0 0
      %2258 = vmatpush1.bf16.msra.mxu0 %v2235
      %2259 = vmatprep.subr.bf16.mxu0 0
      %2260 = vmatpush1.bf16.msra.mxu0 %v2236
      %2261 = vmatprep.subr.bf16.mxu0 0
      %2262 = vmatpush1.bf16.msra.mxu0 0
      %2263 = vmatprep.subr.bf16.mxu0 0
      %2264 = vmatpush1.bf16.msra.mxu0 0
      %2265 = vmatprep.subr.bf16.mxu0 0
      %2266 = vmatpush1.bf16.msra.mxu0 0
      %2267 = vmatprep.subr.bf16.mxu0 0
      %2268 = vmatpush1.bf16.msra.mxu0 0
      %2269 = vmatprep.subr.bf16.mxu0 0
      %2270 = vmatpush1.bf16.msra.mxu0 0
      %2271 = vmatprep.subr.bf16.mxu0 0
      %2272 = vmatpush1.bf16.msra.mxu0 0
      %2273 = vmatprep.subr.bf16.mxu0 0
      %2274 = vmatpush1.bf16.msra.mxu0 0
      %2275 = vmatprep.subr.bf16.mxu0 0
      %2276 = vmatpush1.bf16.msra.mxu0 0
      %2277 = vmatprep.mubr.bf16.mxu0 0
      %2278 = vmatmul.mubr.bf16.gmra.mrb[0].mxu0 %v2115
      %v2279 = vpop.f32.mrb[0].mxu0
      %v2280 = vadd.f32 0.0, %v2279
      %v2281 = vpop.f32.mrb[0].mxu0
      %v2282 = vpop.f32.mrb[0].mxu0
      %v2283 = vadd.f32 0.0, %v2282
      %v2284 = vpop.f32.mrb[0].mxu0
      %2285 = vmatprep.mubr.bf16.mxu0 0
      %2286 = vmatmul.mubr.bf16.gmra.mrb[0].mxu0 %v2124
      %v2287 = vpop.f32.mrb[0].mxu0
      %v2288 = vadd.f32 0.0, %v2287
      %v2289 = vpop.f32.mrb[0].mxu0
      %v2290 = vpop.f32.mrb[0].mxu0
      %v2291 = vadd.f32 0.0, %v2290
      %v2292 = vpop.f32.mrb[0].mxu0
      %2293 = vmatprep.mubr.bf16.mxu0 0
      %2294 = vmatmul.mubr.bf16.gmra.mrb[0].mxu0 %v2133
      %v2295 = vpop.f32.mrb[0].mxu0
      %v2296 = vadd.f32 0.0, %v2295
      %v2297 = vpop.f32.mrb[0].mxu0
      %v2298 = vpop.f32.mrb[0].mxu0
      %v2299 = vadd.f32 0.0, %v2298
      %v2300 = vpop.f32.mrb[0].mxu0
      %2301 = vmatprep.mubr.bf16.mxu0 0
      %2302 = vmatmul.mubr.bf16.gmra.mrb[0].mxu0 %v2142
      %v2303 = vpop.f32.mrb[0].mxu0
      %v2304 = vadd.f32 0.0, %v2303
      %v2305 = vpop.f32.mrb[0].mxu0
      %v2306 = vpop.f32.mrb[0].mxu0
      %v2307 = vadd.f32 0.0, %v2306
      %v2308 = vpop.f32.mrb[0].mxu0
      %2309 = vmatprep.mubr.bf16.mxu0 0
      %2310 = vmatmul.mubr.bf16.gmra.mrb[0].mxu0 %v2151
      %v2311 = vpop.f32.mrb[0].mxu0
      %v2312 = vadd.f32 0.0, %v2311
      %v2313 = vpop.f32.mrb[0].mxu0
      %v2314 = vpop.f32.mrb[0].mxu0
      %v2315 = vadd.f32 0.0, %v2314
      %v2316 = vpop.f32.mrb[0].mxu0
      %2317 = vmatprep.mubr.bf16.mxu0 0
      %2318 = vmatmul.mubr.bf16.gmra.mrb[0].mxu0 %v2160
      %v2319 = vpop.f32.mrb[0].mxu0
      %v2320 = vadd.f32 0.0, %v2319
      %v2321 = vpop.f32.mrb[0].mxu0
      %v2322 = vpop.f32.mrb[0].mxu0
      %v2323 = vadd.f32 0.0, %v2322
      %v2324 = vpop.f32.mrb[0].mxu0
      %2325 = vmatprep.mubr.bf16.mxu0 0
      %2326 = vmatmul.mubr.bf16.gmra.mrb[0].mxu0 %v2169
      %v2327 = vpop.f32.mrb[0].mxu0
      %v2328 = vadd.f32 0.0, %v2327
      %v2329 = vpop.f32.mrb[0].mxu0
      %v2330 = vpop.f32.mrb[0].mxu0
      %v2331 = vadd.f32 0.0, %v2330
      %v2332 = vpop.f32.mrb[0].mxu0
      %2333 = vmatprep.mubr.bf16.mxu0 0
      %2334 = vmatmul.mubr.bf16.gmra.mrb[0].mxu0 %v2178
      %v2335 = vpop.f32.mrb[0].mxu0
      %v2336 = vadd.f32 0.0, %v2335
      %v2337 = vpop.f32.mrb[0].mxu0
      %v2338 = vpop.f32.mrb[0].mxu0
      %v2339 = vadd.f32 0.0, %v2338
      %v2340 = vpop.f32.mrb[0].mxu0
      %2341 = vmatprep.mubr.bf16.mxu0 0
      %2342 = vmatmul.mubr.bf16.gmra.mrb[0].mxu0 %v2187
      %v2343 = vpop.f32.mrb[0].mxu0
      %v2344 = vadd.f32 0.0, %v2343
      %v2345 = vpop.f32.mrb[0].mxu0
      %v2346 = vpop.f32.mrb[0].mxu0
      %v2347 = vadd.f32 0.0, %v2346
      %v2348 = vpop.f32.mrb[0].mxu0
      %2349 = vdwg.mxu0
      %v2350 = vadd.f32 %v2059, %v2280
      %v2351 = vadd.f32 %v2060, %v2283
      %v2352 = vadd.f32 %v2061, %v2288
      %v2353 = vadd.f32 %v2062, %v2291
      %v2354 = vadd.f32 %v2063, %v2296
      %v2355 = vadd.f32 %v2064, %v2299
      %v2356 = vadd.f32 %v2065, %v2304
      %v2357 = vadd.f32 %v2066, %v2307
      %v2358 = vadd.f32 %v2067, %v2312
      %v2359 = vadd.f32 %v2068, %v2315
      %v2360 = vadd.f32 %v2069, %v2320
      %v2361 = vadd.f32 %v2070, %v2323
      %v2362 = vadd.f32 %v2071, %v2328
      %v2363 = vadd.f32 %v2072, %v2331
      %v2364 = vadd.f32 %v2073, %v2336
      %v2365 = vadd.f32 %v2074, %v2339
      %v2366 = vadd.f32 %v2075, %v2344
      %v2367 = vadd.f32 %v2076, %v2347
      %v2368 = vld [vmem:[%s260 + $0x10] sm:$0x8]
      %s2369 = scalar_lea.vmem %s1, 512
      %v2370 = vld [vmem:[%s2369] sm:$0xf]
      %v2371 = vld [vmem:[%s2369 + $0x4] sm:$0xf]
      %v2372 = vld [vmem:[%s2369 + $0x8] sm:$0xf]
      %v2373 = vld [vmem:[%s2369 + $0xc] sm:$0xf]
      %v2374 = vld [vmem:[%s2369 + $0x10] sm:$0xf]
      %v2375 = vld [vmem:[%s2369 + $0x14] sm:$0xf]
      %v2376 = vld [vmem:[%s2369 + $0x18] sm:$0xf]
      %v2377 = vld [vmem:[%s2369 + $0x1c] sm:$0xf]
      %v2378 = vld [vmem:[%s2369 + $0x20] sm:$0xf]
      %v2379 = vld [vmem:[%s2369 + $0x24] sm:$0xf]
      %v2380 = vld [vmem:[%s2369 + $0x28] sm:$0xf]
      %v2381 = vld [vmem:[%s2369 + $0x2c] sm:$0xf]
      %v2382 = vld [vmem:[%s2369 + $0x30] sm:$0xf]
      %v2383 = vld [vmem:[%s2369 + $0x34] sm:$0xf]
      %v2384 = vld [vmem:[%s2369 + $0x38] sm:$0xf]
      %v2385 = vld [vmem:[%s2369 + $0x3c] sm:$0xf]
      %v2387 = vunpack.c.l.b16 %v2368
      %v2388 = vpack.c.b16 %v1850, %v2387
      %vm2389 = vcmask 1044480
      %v2390 = vrot.slane %v2388, 3
      %v2391 = vrot.slane %v1869, 3
      %v2392 = vsel %vm2389, %v2390, %v2391
      %v2393 = vrot.slane %v1870, 3
      %v2394 = vsel %vm2389, %v2391, %v2393
      %v2395 = vrot.slane %v1871, 3
      %v2396 = vsel %vm2389, %v2393, %v2395
      %v2397 = vrot.slane %v1872, 3
      %v2398 = vsel %vm2389, %v2395, %v2397
      %v2399 = vrot.slane %v1873, 3
      %v2400 = vsel %vm2389, %v2397, %v2399
      %v2401 = vrot.slane %v1874, 3
      %v2402 = vsel %vm2389, %v2399, %v2401
      %v2403 = vrot.slane %v1875, 3
      %v2404 = vsel %vm2389, %v2401, %v2403
      %v2405 = vrot.slane %v1876, 3
      %v2406 = vsel %vm2389, %v2403, %v2405
      %v2407 = vrot.slane %v2097, 3
      %v2408 = vsel %vm2389, %v2405, %v2407
      %v2434 = vunpack.c.l.b16 %v2370
      %v2435 = vunpack.c.l.b16 %v2371
      %v2436 = vunpack.c.l.b16 %v2372
      %v2437 = vunpack.c.l.b16 %v2373
      %v2438 = vunpack.c.l.b16 %v2374
      %v2439 = vunpack.c.l.b16 %v2375
      %v2440 = vunpack.c.l.b16 %v2376
      %v2441 = vunpack.c.l.b16 %v2377
      %v2442 = vunpack.c.l.b16 %v2378
      %v2443 = vunpack.c.l.b16 %v2379
      %v2444 = vunpack.c.l.b16 %v2380
      %v2445 = vunpack.c.l.b16 %v2381
      %v2446 = vunpack.c.l.b16 %v2382
      %v2447 = vunpack.c.l.b16 %v2383
      %v2448 = vunpack.c.l.b16 %v2384
      %v2449 = vunpack.c.l.b16 %v2385
      %v2450 = vpack.c.b16 %v2435, %v2434
      %v2451 = vpack.c.b16 %v2437, %v2436
      %v2452 = vpack.c.b16 %v2439, %v2438
      %v2453 = vpack.c.b16 %v2441, %v2440
      %v2454 = vpack.c.b16 %v2443, %v2442
      %v2455 = vpack.c.b16 %v2445, %v2444
      %v2456 = vpack.c.b16 %v2447, %v2446
      %v2457 = vpack.c.b16 %v2449, %v2448
      %2466 = vmatprep.subr.bf16.mxu0 0
      %2467 = vmatpush1.bf16.msra.mxu0 %v2450
      %2468 = vmatprep.subr.bf16.mxu0 0
      %2469 = vmatpush1.bf16.msra.mxu0 %v2451
      %2470 = vmatprep.subr.bf16.mxu0 0
      %2471 = vmatpush1.bf16.msra.mxu0 %v2452
      %2472 = vmatprep.subr.bf16.mxu0 0
      %2473 = vmatpush1.bf16.msra.mxu0 %v2453
      %2474 = vmatprep.subr.bf16.mxu0 0
      %2475 = vmatpush1.bf16.msra.mxu0 %v2454
      %2476 = vmatprep.subr.bf16.mxu0 0
      %2477 = vmatpush1.bf16.msra.mxu0 %v2455
      %2478 = vmatprep.subr.bf16.mxu0 0
      %2479 = vmatpush1.bf16.msra.mxu0 %v2456
      %2480 = vmatprep.subr.bf16.mxu0 0
      %2481 = vmatpush1.bf16.msra.mxu0 %v2457
      %2482 = vmatprep.subr.bf16.mxu0 0
      %2483 = vmatpush1.bf16.msra.mxu0 0
      %2484 = vmatprep.subr.bf16.mxu0 0
      %2485 = vmatpush1.bf16.msra.mxu0 0
      %2486 = vmatprep.subr.bf16.mxu0 0
      %2487 = vmatpush1.bf16.msra.mxu0 0
      %2488 = vmatprep.subr.bf16.mxu0 0
      %2489 = vmatpush1.bf16.msra.mxu0 0
      %2490 = vmatprep.subr.bf16.mxu0 0
      %2491 = vmatpush1.bf16.msra.mxu0 0
      %2492 = vmatprep.subr.bf16.mxu0 0
      %2493 = vmatpush1.bf16.msra.mxu0 0
      %2494 = vmatprep.subr.bf16.mxu0 0
      %2495 = vmatpush1.bf16.msra.mxu0 0
      %2496 = vmatprep.subr.bf16.mxu0 0
      %2497 = vmatpush1.bf16.msra.mxu0 0
      %2498 = vmatprep.mubr.bf16.mxu0 0
      %2499 = vmatmul.mubr.bf16.gmra.mrb[0].mxu0 %v2392
      %v2500 = vpop.f32.mrb[0].mxu0
      %v2501 = vadd.f32 0.0, %v2500
      %v2502 = vpop.f32.mrb[0].mxu0
      %v2503 = vpop.f32.mrb[0].mxu0
      %v2504 = vadd.f32 0.0, %v2503
      %v2505 = vpop.f32.mrb[0].mxu0
      %2506 = vmatprep.mubr.bf16.mxu0 0
      %2507 = vmatmul.mubr.bf16.gmra.mrb[0].mxu0 %v2394
      %v2508 = vpop.f32.mrb[0].mxu0
      %v2509 = vadd.f32 0.0, %v2508
      %v2510 = vpop.f32.mrb[0].mxu0
      %v2511 = vpop.f32.mrb[0].mxu0
      %v2512 = vadd.f32 0.0, %v2511
      %v2513 = vpop.f32.mrb[0].mxu0
      %2514 = vmatprep.mubr.bf16.mxu0 0
      %2515 = vmatmul.mubr.bf16.gmra.mrb[0].mxu0 %v2396
      %v2516 = vpop.f32.mrb[0].mxu0
      %v2517 = vadd.f32 0.0, %v2516
      %v2518 = vpop.f32.mrb[0].mxu0
      %v2519 = vpop.f32.mrb[0].mxu0
      %v2520 = vadd.f32 0.0, %v2519
      %v2521 = vpop.f32.mrb[0].mxu0
      %2522 = vmatprep.mubr.bf16.mxu0 0
      %2523 = vmatmul.mubr.bf16.gmra.mrb[0].mxu0 %v2398
      %v2524 = vpop.f32.mrb[0].mxu0
      %v2525 = vadd.f32 0.0, %v2524
      %v2526 = vpop.f32.mrb[0].mxu0
      %v2527 = vpop.f32.mrb[0].mxu0
      %v2528 = vadd.f32 0.0, %v2527
      %v2529 = vpop.f32.mrb[0].mxu0
      %2530 = vmatprep.mubr.bf16.mxu0 0
      %2531 = vmatmul.mubr.bf16.gmra.mrb[0].mxu0 %v2400
      %v2532 = vpop.f32.mrb[0].mxu0
      %v2533 = vadd.f32 0.0, %v2532
      %v2534 = vpop.f32.mrb[0].mxu0
      %v2535 = vpop.f32.mrb[0].mxu0
      %v2536 = vadd.f32 0.0, %v2535
      %v2537 = vpop.f32.mrb[0].mxu0
      %2538 = vmatprep.mubr.bf16.mxu0 0
      %2539 = vmatmul.mubr.bf16.gmra.mrb[0].mxu0 %v2402
      %v2540 = vpop.f32.mrb[0].mxu0
      %v2541 = vadd.f32 0.0, %v2540
      %v2542 = vpop.f32.mrb[0].mxu0
      %v2543 = vpop.f32.mrb[0].mxu0
      %v2544 = vadd.f32 0.0, %v2543
      %v2545 = vpop.f32.mrb[0].mxu0
      %2546 = vmatprep.mubr.bf16.mxu0 0
      %2547 = vmatmul.mubr.bf16.gmra.mrb[0].mxu0 %v2404
      %v2548 = vpop.f32.mrb[0].mxu0
      %v2549 = vadd.f32 0.0, %v2548
      %v2550 = vpop.f32.mrb[0].mxu0
      %v2551 = vpop.f32.mrb[0].mxu0
      %v2552 = vadd.f32 0.0, %v2551
      %v2553 = vpop.f32.mrb[0].mxu0
      %2554 = vmatprep.mubr.bf16.mxu0 0
      %2555 = vmatmul.mubr.bf16.gmra.mrb[0].mxu0 %v2406
      %v2556 = vpop.f32.mrb[0].mxu0
      %v2557 = vadd.f32 0.0, %v2556
      %v2558 = vpop.f32.mrb[0].mxu0
      %v2559 = vpop.f32.mrb[0].mxu0
      %v2560 = vadd.f32 0.0, %v2559
      %v2561 = vpop.f32.mrb[0].mxu0
      %2562 = vmatprep.mubr.bf16.mxu0 0
      %2563 = vmatmul.mubr.bf16.gmra.mrb[0].mxu0 %v2408
      %v2564 = vpop.f32.mrb[0].mxu0
      %v2565 = vadd.f32 0.0, %v2564
      %v2566 = vpop.f32.mrb[0].mxu0
      %v2567 = vpop.f32.mrb[0].mxu0
      %v2568 = vadd.f32 0.0, %v2567
      %v2569 = vpop.f32.mrb[0].mxu0
      %2570 = vdwg.mxu0
      %v2571 = vadd.f32 %v2350, %v2501
      %v2572 = vadd.f32 %v2351, %v2504
      %v2573 = vadd.f32 %v2352, %v2509
      %v2574 = vadd.f32 %v2353, %v2512
      %v2575 = vadd.f32 %v2354, %v2517
      %v2576 = vadd.f32 %v2355, %v2520
      %v2577 = vadd.f32 %v2356, %v2525
      %v2578 = vadd.f32 %v2357, %v2528
      %v2579 = vadd.f32 %v2358, %v2533
      %v2580 = vadd.f32 %v2359, %v2536
      %v2581 = vadd.f32 %v2360, %v2541
      %v2582 = vadd.f32 %v2361, %v2544
      %v2583 = vadd.f32 %v2362, %v2549
      %v2584 = vadd.f32 %v2363, %v2552
      %v2585 = vadd.f32 %v2364, %v2557
      %v2586 = vadd.f32 %v2365, %v2560
      %v2587 = vadd.f32 %v2366, %v2565
      %v2588 = vadd.f32 %v2367, %v2568
      %v2589 = vld [vmem:[%s2] sm:$0x1]
      %v2591 = vlaneseq
      %v2592 = vshrl.u32 %v2591, 7
      %v2593 = vsub.s32 0, %v2592
      %v2594 = vrot.slane %v2589, %v2593
      %v2596 = vadd.f32 %v2571, %v2594
      %v2597 = vadd.f32 %v2572, %v2594
      %v2598 = vadd.f32 %v2573, %v2594
      %v2599 = vadd.f32 %v2574, %v2594
      %v2600 = vadd.f32 %v2575, %v2594
      %v2601 = vadd.f32 %v2576, %v2594
      %v2602 = vadd.f32 %v2577, %v2594
      %v2603 = vadd.f32 %v2578, %v2594
      %v2604 = vadd.f32 %v2579, %v2594
      %v2605 = vadd.f32 %v2580, %v2594
      %v2606 = vadd.f32 %v2581, %v2594
      %v2607 = vadd.f32 %v2582, %v2594
      %v2608 = vadd.f32 %v2583, %v2594
      %v2609 = vadd.f32 %v2584, %v2594
      %v2610 = vadd.f32 %v2585, %v2594
      %v2611 = vadd.f32 %v2586, %v2594
      %v2612 = vadd.f32 %v2587, %v2594
      %v2613 = vadd.f32 %v2588, %v2594
      %v2614 = vmax.f32 %v2596, 0.0
      %v2615 = vmax.f32 %v2597, 0.0
      %v2616 = vmax.f32 %v2598, 0.0
      %v2617 = vmax.f32 %v2599, 0.0
      %v2618 = vmax.f32 %v2600, 0.0
      %v2619 = vmax.f32 %v2601, 0.0
      %v2620 = vmax.f32 %v2602, 0.0
      %v2621 = vmax.f32 %v2603, 0.0
      %v2622 = vmax.f32 %v2604, 0.0
      %v2623 = vmax.f32 %v2605, 0.0
      %v2624 = vmax.f32 %v2606, 0.0
      %v2625 = vmax.f32 %v2607, 0.0
      %v2626 = vmax.f32 %v2608, 0.0
      %v2627 = vmax.f32 %v2609, 0.0
      %v2628 = vmax.f32 %v2610, 0.0
      %v2629 = vmax.f32 %v2611, 0.0
      %v2630 = vmax.f32 %v2612, 0.0
      %v2631 = vmax.f32 %v2613, 0.0
      %v2632 = vpack.c.bf16 %v2615, %v2614
      %v2633 = vpack.c.bf16 %v2617, %v2616
      %v2634 = vpack.c.bf16 %v2619, %v2618
      %v2635 = vpack.c.bf16 %v2621, %v2620
      %v2636 = vpack.c.bf16 %v2623, %v2622
      %v2637 = vpack.c.bf16 %v2625, %v2624
      %v2638 = vpack.c.bf16 %v2627, %v2626
      %v2639 = vpack.c.bf16 %v2629, %v2628
      %v2640 = vpack.c.bf16 %v2631, %v2630
      %v2641 = vld [vmem:[%s264] sm:$0xf]
      %v2642 = vld [vmem:[%s264 + $0x4] sm:$0xf]
      %v2643 = vld [vmem:[%s264 + $0x8] sm:$0xf]
      %v2644 = vld [vmem:[%s264 + $0xc] sm:$0xf]
      %v2645 = vld [vmem:[%s267] sm:$0x1]
      %v2647 = vlaneseq
      %v2648 = vshrl.u32 %v2647, 7
      %v2649 = vsub.s32 0, %v2648
      %v2650 = vrot.slane %v2645, %v2649
      %v2656 = vunpack.c.l.b16 %v2641
      %v2657 = vunpack.c.l.b16 %v2642
      %v2658 = vunpack.c.l.b16 %v2643
      %v2659 = vunpack.c.l.b16 %v2644
      %v2660 = vpack.c.b16 %v2657, %v2656
      %v2661 = vpack.c.b16 %v2659, %v2658
      %vm2664 = vcmask 261120
      %v2666 = vsel %vm2664, %v2632, 0
      %v2669 = vsel %vm2664, %v2633, 0
      %v2672 = vsel %vm2664, %v2634, 0
      %v2675 = vsel %vm2664, %v2635, 0
      %v2678 = vsel %vm2664, %v2636, 0
      %v2681 = vsel %vm2664, %v2637, 0
      %v2684 = vsel %vm2664, %v2638, 0
      %v2687 = vsel %vm2664, %v2639, 0
      %v2690 = vsel %vm2664, %v2640, 0
      %2692 = vmatprep.subr.bf16.mxu0 0
      %2693 = vmatpush1.bf16.msra.mxu0 %v2660
      %2694 = vmatprep.subr.bf16.mxu0 0
      %2695 = vmatpush1.bf16.msra.mxu0 %v2661
      %2696 = vmatprep.subr.bf16.mxu0 0
      %2697 = vmatpush1.bf16.msra.mxu0 0
      %2698 = vmatprep.subr.bf16.mxu0 0
      %2699 = vmatpush1.bf16.msra.mxu0 0
      %2700 = vmatprep.subr.bf16.mxu0 0
      %2701 = vmatpush1.bf16.msra.mxu0 0
      %2702 = vmatprep.subr.bf16.mxu0 0
      %2703 = vmatpush1.bf16.msra.mxu0 0
      %2704 = vmatprep.subr.bf16.mxu0 0
      %2705 = vmatpush1.bf16.msra.mxu0 0
      %2706 = vmatprep.subr.bf16.mxu0 0
      %2707 = vmatpush1.bf16.msra.mxu0 0
      %2708 = vmatprep.subr.bf16.mxu0 0
      %2709 = vmatpush1.bf16.msra.mxu0 0
      %2710 = vmatprep.subr.bf16.mxu0 0
      %2711 = vmatpush1.bf16.msra.mxu0 0
      %2712 = vmatprep.subr.bf16.mxu0 0
      %2713 = vmatpush1.bf16.msra.mxu0 0
      %2714 = vmatprep.subr.bf16.mxu0 0
      %2715 = vmatpush1.bf16.msra.mxu0 0
      %2716 = vmatprep.subr.bf16.mxu0 0
      %2717 = vmatpush1.bf16.msra.mxu0 0
      %2718 = vmatprep.subr.bf16.mxu0 0
      %2719 = vmatpush1.bf16.msra.mxu0 0
      %2720 = vmatprep.subr.bf16.mxu0 0
      %2721 = vmatpush1.bf16.msra.mxu0 0
      %2722 = vmatprep.subr.bf16.mxu0 0
      %2723 = vmatpush1.bf16.msra.mxu0 0
      %2724 = vmatprep.mubr.bf16.mxu0 0
      %2725 = vmatmul.mubr.bf16.gmra.mrb[0].mxu0 %v2666
      %v2726 = vpop.f32.mrb[0].mxu0
      %v2727 = vadd.f32 %v2650, %v2726
      %v2728 = vpop.f32.mrb[0].mxu0
      %v2729 = vpop.f32.mrb[0].mxu0
      %v2730 = vadd.f32 %v2650, %v2729
      %v2731 = vpop.f32.mrb[0].mxu0
      %2732 = vmatprep.mubr.bf16.mxu0 0
      %2733 = vmatmul.mubr.bf16.gmra.mrb[0].mxu0 %v2669
      %v2734 = vpop.f32.mrb[0].mxu0
      %v2735 = vadd.f32 %v2650, %v2734
      %v2736 = vpop.f32.mrb[0].mxu0
      %v2737 = vpop.f32.mrb[0].mxu0
      %v2738 = vadd.f32 %v2650, %v2737
      %v2739 = vpop.f32.mrb[0].mxu0
      %2740 = vmatprep.mubr.bf16.mxu0 0
      %2741 = vmatmul.mubr.bf16.gmra.mrb[0].mxu0 %v2672
      %v2742 = vpop.f32.mrb[0].mxu0
      %v2743 = vadd.f32 %v2650, %v2742
      %v2744 = vpop.f32.mrb[0].mxu0
      %v2745 = vpop.f32.mrb[0].mxu0
      %v2746 = vadd.f32 %v2650, %v2745
      %v2747 = vpop.f32.mrb[0].mxu0
      %2748 = vmatprep.mubr.bf16.mxu0 0
      %2749 = vmatmul.mubr.bf16.gmra.mrb[0].mxu0 %v2675
      %v2750 = vpop.f32.mrb[0].mxu0
      %v2751 = vadd.f32 %v2650, %v2750
      %v2752 = vpop.f32.mrb[0].mxu0
      %v2753 = vpop.f32.mrb[0].mxu0
      %v2754 = vadd.f32 %v2650, %v2753
      %v2755 = vpop.f32.mrb[0].mxu0
      %2756 = vmatprep.mubr.bf16.mxu0 0
      %2757 = vmatmul.mubr.bf16.gmra.mrb[0].mxu0 %v2678
      %v2758 = vpop.f32.mrb[0].mxu0
      %v2759 = vadd.f32 %v2650, %v2758
      %v2760 = vpop.f32.mrb[0].mxu0
      %v2761 = vpop.f32.mrb[0].mxu0
      %v2762 = vadd.f32 %v2650, %v2761
      %v2763 = vpop.f32.mrb[0].mxu0
      %2764 = vmatprep.mubr.bf16.mxu0 0
      %2765 = vmatmul.mubr.bf16.gmra.mrb[0].mxu0 %v2681
      %v2766 = vpop.f32.mrb[0].mxu0
      %v2767 = vadd.f32 %v2650, %v2766
      %v2768 = vpop.f32.mrb[0].mxu0
      %v2769 = vpop.f32.mrb[0].mxu0
      %v2770 = vadd.f32 %v2650, %v2769
      %v2771 = vpop.f32.mrb[0].mxu0
      %2772 = vmatprep.mubr.bf16.mxu0 0
      %2773 = vmatmul.mubr.bf16.gmra.mrb[0].mxu0 %v2684
      %v2774 = vpop.f32.mrb[0].mxu0
      %v2775 = vadd.f32 %v2650, %v2774
      %v2776 = vpop.f32.mrb[0].mxu0
      %v2777 = vpop.f32.mrb[0].mxu0
      %v2778 = vadd.f32 %v2650, %v2777
      %v2779 = vpop.f32.mrb[0].mxu0
      %2780 = vmatprep.mubr.bf16.mxu0 0
      %2781 = vmatmul.mubr.bf16.gmra.mrb[0].mxu0 %v2687
      %v2782 = vpop.f32.mrb[0].mxu0
      %v2783 = vadd.f32 %v2650, %v2782
      %v2784 = vpop.f32.mrb[0].mxu0
      %v2785 = vpop.f32.mrb[0].mxu0
      %v2786 = vadd.f32 %v2650, %v2785
      %v2787 = vpop.f32.mrb[0].mxu0
      %2788 = vmatprep.mubr.bf16.mxu0 0
      %2789 = vmatmul.mubr.bf16.gmra.mrb[0].mxu0 %v2690
      %v2790 = vpop.f32.mrb[0].mxu0
      %v2791 = vadd.f32 %v2650, %v2790
      %v2792 = vpop.f32.mrb[0].mxu0
      %v2793 = vpop.f32.mrb[0].mxu0
      %v2794 = vadd.f32 %v2650, %v2793
      %v2795 = vpop.f32.mrb[0].mxu0
      %2796 = vdwg.mxu0
      %2797 = vst [vmem:[%s275] sm:$0xff] %v2727
      %2798 = vst [vmem:[%s275 + $0x8] sm:$0xff] %v2730
      %2799 = vst [vmem:[%s275 + $0x10] sm:$0xff] %v2735
      %2800 = vst [vmem:[%s275 + $0x18] sm:$0xff] %v2738
      %2801 = vst [vmem:[%s275 + $0x20] sm:$0xff] %v2743
      %2802 = vst [vmem:[%s275 + $0x28] sm:$0xff] %v2746
      %2803 = vst [vmem:[%s275 + $0x30] sm:$0xff] %v2751
      %2804 = vst [vmem:[%s275 + $0x38] sm:$0xff] %v2754
      %2805 = vst [vmem:[%s275 + $0x40] sm:$0xff] %v2759
      %2806 = vst [vmem:[%s275 + $0x48] sm:$0xff] %v2762
      %2807 = vst [vmem:[%s275 + $0x50] sm:$0xff] %v2767
      %2808 = vst [vmem:[%s275 + $0x58] sm:$0xff] %v2770
      %2809 = vst [vmem:[%s275 + $0x60] sm:$0xff] %v2775
      %2810 = vst [vmem:[%s275 + $0x68] sm:$0xff] %v2778
      %2811 = vst [vmem:[%s275 + $0x70] sm:$0xff] %v2783
      %2812 = vst [vmem:[%s275 + $0x78] sm:$0xff] %v2786
      %2813 = vst [vmem:[%s275 + $0x80] sm:$0xff] %v2791
      %2814 = vst [vmem:[%s275 + $0x88] sm:$0xff] %v2794
      %p2815 = scmp.lt.s32.totalorder %s20, 1
      %s2816 = scalar_select %p2815, %s20, 1
      %p2817 = scmp.lt.s32.totalorder %s21, 0
      %s2818 = scalar_select %p2817, %s21, 0
      %s2819 = smul.addr %s2816, 18
      %s2820 = sadd.s32 %s2818, %s2819
      %s2821 = smul.addr %s2820, 8
      %s2822 = scalar_lea.vmem %s5, %s2821
      // Predicated region
      $region41: #{faster_rcnn_forward.6} parent=39 // pred_check
        %p2823 = pneg %p168
      $region42: #{faster_rcnn_forward.6} parent=39 // pred_check_branch
        %2825 = sbr.rel (%p2823) target = $region44
      $region43: #{faster_rcnn_forward.6} parent=39 // pred_region
        _
      $region44: #{faster_rcnn_forward.6} parent=39 // pred_fallthru
        _
    $region40: #{faster_rcnn_forward.6} parent=5 // pred_fallthru
      _
    %p2826 = scmp.le.s32.totalorder 2, %s11
    // Predicated region
    $region45: #{faster_rcnn_forward.6} parent=5 // pred_check
      %p2827 = pneg %p2826
    $region46: #{faster_rcnn_forward.6} parent=5 // pred_check_branch
      %2829 = sbr.rel (%p2827) target = $region48
    $region47: #{faster_rcnn_forward.6} parent=5 // pred_region
      %s2830 = ssub.s32 %s11, 2
      // Predicated region
      $region49: #{faster_rcnn_forward.6} parent=47 // pred_check
        %p2831 = pneg %p174
      $region50: #{faster_rcnn_forward.6} parent=47 // pred_check_branch
        %2833 = sbr.rel (%p2831) target = $region52
      $region51: #{faster_rcnn_forward.6} parent=47 // pred_region
        %p2834 = scmp.lt.s32.totalorder %s22, 1
        %s2835 = scalar_select %p2834, %s22, 1
        %p2836 = scmp.lt.s32.totalorder %s23, 0
        %s2837 = scalar_select %p2836, %s23, 0
        %s2838 = smul.addr %s2835, 18
        %s2839 = sadd.s32 %s2837, %s2838
        %s2840 = smul.addr %s2839, 8
        %s2841 = scalar_lea.vmem %s5, %s2840
      $region52: #{faster_rcnn_forward.6} parent=47 // pred_fallthru
        _
    $region48: #{faster_rcnn_forward.6} parent=5 // pred_fallthru
      _
  $region6: #{faster_rcnn_forward.6} parent=0 // loop_footer
    %s15 = sadd.s32 1, %s11
  $region7: #{faster_rcnn_forward.6} parent=0 // loop_footer_branch
    %10 = sbr.rel target = $region3
  $region8: #{faster_rcnn_forward.6} parent=0 // loop_exit
    _

// kernel: faster_rcnn_forward.7
$region0: #{faster_rcnn_forward.7}
  #allocation0 [shape = 'u32[]', space=smem, size = 0x4, offset = 0x4, fixed_abs, tag = 'smem constant byte address 0x4 - core index']
  #allocation1 [shape = 'u32[144,128]{1,0:T(1,128)}', space=vmem, size = 0x12000, scoped, tag = 'internal scratch']
  %s0 = inlined_call_operand.vmem [shape: f32[8,2560], index: 0, kind: input, shape index: {}]
  %s1 = inlined_call_operand.vmem [shape: f32[4,2560], index: 1, kind: output, shape index: {}]
  %s2 = sld [smem:[#allocation0]]
  $region37: #{faster_rcnn_forward.7} parent=0
    _
  %s4 = ssub.s32 1, %s2
  %s5 = scalar_select 0, %s4, %s2
  loop: start=0, step=1, limit=7
  $region2: #{faster_rcnn_forward.7} parent=0 // loop_pre_header
    _
  $region3: #{faster_rcnn_forward.7} parent=0 // loop_header
    %s7 = sphi 0, %s11
    %p8 = scmp.ge.s32.totalorder %s7, 7
    %s17 = sphi 0, %s19
    %s20 = sphi 0, %s17
    %s21 = sphi 0, %s20
    %s37 = sphi 0, %s21
    %s43 = sphi 0, %s45
    %s46 = sphi 0, %s43
    %s47 = sphi 0, %s46
    %s63 = sphi 0, %s47
  $region4: #{faster_rcnn_forward.7} parent=0 // loop_header_branch
    %10 = sbr.rel (%p8) target = $region8
  $region5: #{faster_rcnn_forward.7} parent=0 // loop_body
    %s12 = ssub.s32 %s7, 1
    %s13 = ssub.s32 %s7, 2
    %s14 = sadd.s32 %s7, 1
    %s15 = ssub.s32 %s7, %s14
    %p16 = scmp.eq.s32.totalorder %s15, 0
    %s18 = sadd.s32 %s17, 1
    %s19 = scalar_select %p16, %s17, %s18
    %p22 = pneg %p16
    %p23 = scmp.eq.s32.totalorder %s7, 4
    %p24 = por %p22, %p23
    %p25 = scmp.ne.s32.totalorder %s17, %s20
    %p26 = scmp.eq.s32.totalorder %s7, 0
    %p27 = por %p25, %p26
    %p28 = scmp.ne.s32.totalorder %s17, %s20
    %p29 = scmp.eq.s32.totalorder %s12, 4
    %p30 = por %p28, %p29
    %p31 = scmp.ne.s32.totalorder %s20, %s21
    %p32 = scmp.eq.s32.totalorder %s12, 0
    %p33 = por %p31, %p32
    %p34 = scmp.ne.s32.totalorder %s20, %s21
    %p35 = scmp.eq.s32.totalorder %s13, 4
    %p36 = por %p34, %p35
    %p38 = scmp.ne.s32.totalorder %s21, %s37
    %p39 = scmp.eq.s32.totalorder %s13, 0
    %p40 = por %p38, %p39
    %s41 = ssub.s32 %s7, %s14
    %p42 = scmp.eq.s32.totalorder %s41, 0
    %s44 = sadd.s32 %s43, 1
    %s45 = scalar_select %p42, %s43, %s44
    %p48 = pneg %p42
    %p49 = scmp.eq.s32.totalorder %s7, 4
    %p50 = por %p48, %p49
    %p51 = scmp.ne.s32.totalorder %s43, %s46
    %p52 = scmp.eq.s32.totalorder %s7, 0
    %p53 = por %p51, %p52
    %p54 = scmp.ne.s32.totalorder %s43, %s46
    %p55 = scmp.eq.s32.totalorder %s12, 4
    %p56 = por %p54, %p55
    %p57 = scmp.ne.s32.totalorder %s46, %s47
    %p58 = scmp.eq.s32.totalorder %s12, 0
    %p59 = por %p57, %p58
    %p60 = scmp.ne.s32.totalorder %s46, %s47
    %p61 = scmp.eq.s32.totalorder %s13, 4
    %p62 = por %p60, %p61
    %p64 = scmp.ne.s32.totalorder %s47, %s63
    %p65 = scmp.eq.s32.totalorder %s13, 0
    %p66 = por %p64, %p65
    %p67 = scmp.le.s32.totalorder 1, %s7
    %p68 = scmp.lt.s32.totalorder %s7, 6
    %p69 = pnand %p67, %p68
    %p70 = pneg %p69
    // Predicated region
    $region9: #{faster_rcnn_forward.7} parent=5 // pred_check
      _
    $region10: #{faster_rcnn_forward.7} parent=5 // pred_check_branch
      %72 = sbr.rel (%p69) target = $region12
    $region11: #{faster_rcnn_forward.7} parent=5 // pred_region
      %s73 = ssub.s32 %s7, 1
    $region12: #{faster_rcnn_forward.7} parent=5 // pred_fallthru
      _
    %p74 = scmp.lt.s32.totalorder %s7, 5
    // Predicated region
    $region13: #{faster_rcnn_forward.7} parent=5 // pred_check
      %p75 = pneg %p74
    $region14: #{faster_rcnn_forward.7} parent=5 // pred_check_branch
      %77 = sbr.rel (%p75) target = $region16
    $region15: #{faster_rcnn_forward.7} parent=5 // pred_region
      // Predicated region
      $region17: #{faster_rcnn_forward.7} parent=15 // pred_check
        %p78 = pneg %p27
      $region18: #{faster_rcnn_forward.7} parent=15 // pred_check_branch
        %80 = sbr.rel (%p78) target = $region20
      $region19: #{faster_rcnn_forward.7} parent=15 // pred_region
        %s81 = smul.u32 4, %s7
        %p82 = scmp.lt.s32.totalorder %s81, 19
        %s83 = scalar_select %p82, %s81, 19
        %s84 = smul.addr %s83, 8
        %s85 = scalar_lea.vmem %s0, %s84
        %s86 = smul.u32 4, %s7
      $region20: #{faster_rcnn_forward.7} parent=15 // pred_fallthru
        _
    $region16: #{faster_rcnn_forward.7} parent=5 // pred_fallthru
      _
    %p87 = scmp.le.s32.totalorder 1, %s7
    %p88 = scmp.lt.s32.totalorder %s7, 6
    %p89 = pnand %p87, %p88
    %p90 = pneg %p89
    // Predicated region
    $region21: #{faster_rcnn_forward.7} parent=5 // pred_check
      _
    $region22: #{faster_rcnn_forward.7} parent=5 // pred_check_branch
      %92 = sbr.rel (%p89) target = $region24
    $region23: #{faster_rcnn_forward.7} parent=5 // pred_region
      %s93 = ssub.s32 %s7, 1
      %s94 = smul.u32 4, %s12
      %p95 = scmp.lt.s32.totalorder %s94, 19
      %s96 = scalar_select %p95, %s94, 19
      %s97 = smul.addr %s96, 8
      %s98 = scalar_lea.vmem %s0, %s97
      %p99 = pneg %p33
      %p100 = pneg %p30
      %p101 = pneg %p59
      %p102 = pneg %p56
      %s103 = smul.u32 4, %s12
      %p104 = scmp.lt.s32.totalorder %s103, 19
      %s105 = scalar_select %p104, %s103, 19
      %s106 = smul.addr %s105, 4
      %s107 = scalar_lea.vmem %s1, %s106
      %s108 = smul.u32 4, %s12
      %p109 = scmp.lt.s32.totalorder %s108, 19
      %s110 = scalar_select %p109, %s108, 19
      %s111 = smul.addr %s110, 8
      %s112 = scalar_lea.vmem %s0, %s111
      %s113 = smul.u32 4, %s12
      %s114 = smul.u32 4, %s12
      %p115 = scmp.lt.s32.totalorder %s114, 19
      %s116 = scalar_select %p115, %s114, 19
      %s117 = smul.addr %s116, 4
      %s118 = scalar_lea.vmem %s1, %s117
      %s119 = smul.u32 4, %s12
      %v120 = vld [vmem:[%s112] sm:$0x3]
      %v121 = vld [vmem:[%s112 + $0x8] sm:$0x3]
      %v122 = vld [vmem:[%s112 + $0x10] sm:$0x3]
      %v123 = vld [vmem:[%s112 + $0x18] sm:$0x3]
      %v124 = vld [vmem:[%s112] sm:$0xc]
      %v125 = vld [vmem:[%s112 + $0x8] sm:$0xc]
      %v126 = vld [vmem:[%s112 + $0x10] sm:$0xc]
      %v127 = vld [vmem:[%s112 + $0x18] sm:$0xc]
      %v128 = vld [vmem:[%s112] sm:$0x30]
      %v129 = vld [vmem:[%s112 + $0x8] sm:$0x30]
      %v130 = vld [vmem:[%s112 + $0x10] sm:$0x30]
      %v131 = vld [vmem:[%s112 + $0x18] sm:$0x30]
      %v132 = vld [vmem:[%s112] sm:$0xc0]
      %v133 = vld [vmem:[%s112 + $0x8] sm:$0xc0]
      %v134 = vld [vmem:[%s112 + $0x10] sm:$0xc0]
      %v135 = vld [vmem:[%s112 + $0x18] sm:$0xc0]
      %v140 = vrot.slane %v120, 6
      %v141 = vrot.slane %v121, 6
      %v142 = vrot.slane %v122, 6
      %v143 = vrot.slane %v123, 6
      %v148 = vsub.f32 %v124, %v140
      %v149 = vsub.f32 %v125, %v141
      %v150 = vsub.f32 %v126, %v142
      %v151 = vsub.f32 %v127, %v143
      %v152 = vmul.f32 %v148, 0.5
      %v153 = vmul.f32 %v149, 0.5
      %v154 = vmul.f32 %v150, 0.5
      %v155 = vmul.f32 %v151, 0.5
      %v160 = vrot.slane %v152, 2
      %v161 = vrot.slane %v153, 2
      %v162 = vrot.slane %v154, 2
      %v163 = vrot.slane %v155, 2
      %v168 = vadd.f32 %v120, %v160
      %v169 = vadd.f32 %v121, %v161
      %v170 = vadd.f32 %v122, %v162
      %v171 = vadd.f32 %v123, %v163
      %v176 = vrot.slane %v148, 6
      %v177 = vrot.slane %v149, 6
      %v178 = vrot.slane %v150, 6
      %v179 = vrot.slane %v151, 6
      %v184 = vmul.f32 %v128, %v176
      %v185 = vmul.f32 %v129, %v177
      %v186 = vmul.f32 %v130, %v178
      %v187 = vmul.f32 %v131, %v179
      %v192 = vrot.slane %v168, 4
      %v193 = vrot.slane %v169, 4
      %v194 = vrot.slane %v170, 4
      %v195 = vrot.slane %v171, 4
      %v200 = vadd.f32 %v184, %v192
      %v201 = vadd.f32 %v185, %v193
      %v202 = vadd.f32 %v186, %v194
      %v203 = vadd.f32 %v187, %v195
      %v204 = vmul.f32 %v132, 1.442695
      %v205 = vpow.pop %v204
      %v206 = vmul.f32 %v133, 1.442695
      %v207 = vpow.pop %v206
      %v208 = vmul.f32 %v134, 1.442695
      %v209 = vpow.pop %v208
      %v210 = vmul.f32 %v135, 1.442695
      %v211 = vpow.pop %v210
      %v212 = vrot.slane %v148, 4
      %v213 = vrot.slane %v149, 4
      %v214 = vrot.slane %v150, 4
      %v215 = vrot.slane %v151, 4
      %v220 = vmul.f32 %v205, %v212
      %v221 = vmul.f32 %v207, %v213
      %v222 = vmul.f32 %v209, %v214
      %v223 = vmul.f32 %v211, %v215
      %v224 = vmul.f32 %v220, 0.5
      %v225 = vmul.f32 %v221, 0.5
      %v226 = vmul.f32 %v222, 0.5
      %v227 = vmul.f32 %v223, 0.5
      %v232 = vrot.slane %v224, 2
      %v233 = vrot.slane %v225, 2
      %v234 = vrot.slane %v226, 2
      %v235 = vrot.slane %v227, 2
      %v240 = vsub.f32 %v200, %v232
      %v241 = vsub.f32 %v201, %v233
      %v242 = vsub.f32 %v202, %v234
      %v243 = vsub.f32 %v203, %v235
      %v244 = vmax.f32 %v240, 0.0
      %v245 = vmax.f32 %v241, 0.0
      %v246 = vmax.f32 %v242, 0.0
      %v247 = vmax.f32 %v243, 0.0
      %v248 = vmin.f32 %v244, 16.0
      %v249 = vmin.f32 %v245, 16.0
      %v250 = vmin.f32 %v246, 16.0
      %v251 = vmin.f32 %v247, 16.0
      %v256 = vcombine.high %v248, %v249
      %v257 = vcombine.high %v250, %v251
      %260 = vst [vmem:[%s118] sm:$0x33] %v256
      %261 = vst [vmem:[%s118 + $0x8] sm:$0x33] %v257
      %v262 = vadd.f32 %v200, %v232
      %v263 = vadd.f32 %v201, %v233
      %v264 = vadd.f32 %v202, %v234
      %v265 = vadd.f32 %v203, %v235
      %v266 = vmax.f32 %v262, 0.0
      %v267 = vmax.f32 %v263, 0.0
      %v268 = vmax.f32 %v264, 0.0
      %v269 = vmax.f32 %v265, 0.0
      %v270 = vmin.f32 %v266, 16.0
      %v271 = vmin.f32 %v267, 16.0
      %v272 = vmin.f32 %v268, 16.0
      %v273 = vmin.f32 %v269, 16.0
      %v278 = vcombine.high %v270, %v271
      %v279 = vcombine.high %v272, %v273
      %v280 = vrot.slane %v278, 6
      %v281 = vrot.slane %v279, 6
      %284 = vst [vmem:[%s118] sm:$0xcc] %v280
      %285 = vst [vmem:[%s118 + $0x8] sm:$0xcc] %v281
      %s286 = smul.u32 4, %s12
      %p287 = scmp.lt.s32.totalorder %s286, 19
      %s288 = scalar_select %p287, %s286, 19
      %s289 = smul.addr %s288, 4
      %s290 = scalar_lea.vmem %s1, %s289
      // Predicated region
      $region25: #{faster_rcnn_forward.7} parent=23 // pred_check
        %p291 = pneg %p56
      $region26: #{faster_rcnn_forward.7} parent=23 // pred_check_branch
        %293 = sbr.rel (%p291) target = $region28
      $region27: #{faster_rcnn_forward.7} parent=23 // pred_region
        %s294 = smul.u32 4, %s12
      $region28: #{faster_rcnn_forward.7} parent=23 // pred_fallthru
        _
    $region24: #{faster_rcnn_forward.7} parent=5 // pred_fallthru
      _
    %p295 = scmp.le.s32.totalorder 2, %s7
    // Predicated region
    $region29: #{faster_rcnn_forward.7} parent=5 // pred_check
      %p296 = pneg %p295
    $region30: #{faster_rcnn_forward.7} parent=5 // pred_check_branch
      %298 = sbr.rel (%p296) target = $region32
    $region31: #{faster_rcnn_forward.7} parent=5 // pred_region
      %s299 = ssub.s32 %s7, 2
      // Predicated region
      $region33: #{faster_rcnn_forward.7} parent=31 // pred_check
        %p300 = pneg %p62
      $region34: #{faster_rcnn_forward.7} parent=31 // pred_check_branch
        %302 = sbr.rel (%p300) target = $region36
      $region35: #{faster_rcnn_forward.7} parent=31 // pred_region
        %s303 = smul.u32 4, %s13
        %p304 = scmp.lt.s32.totalorder %s303, 19
        %s305 = scalar_select %p304, %s303, 19
        %s306 = smul.addr %s305, 4
        %s307 = scalar_lea.vmem %s1, %s306
      $region36: #{faster_rcnn_forward.7} parent=31 // pred_fallthru
        _
    $region32: #{faster_rcnn_forward.7} parent=5 // pred_fallthru
      _
  $region6: #{faster_rcnn_forward.7} parent=0 // loop_footer
    %s11 = sadd.s32 1, %s7
  $region7: #{faster_rcnn_forward.7} parent=0 // loop_footer_branch
    %6 = sbr.rel target = $region3
  $region8: #{faster_rcnn_forward.7} parent=0 // loop_exit
    _

// kernel: faster_rcnn_forward.8
$region0: #{faster_rcnn_forward.8}
  #allocation0 [shape = 'u32[]', space=smem, size = 0x4, offset = 0x4, fixed_abs, tag = 'smem constant byte address 0x4 - core index']
  #allocation1 [shape = 'u32[144,128]{1,0:T(1,128)}', space=vmem, size = 0x12000, scoped, tag = 'internal scratch']
  #allocation2 [shape = 'f32[32,128]{1,0:T(8,128)}', space=vmem, size = 0x4000, scoped, tag = 'scratch operand']
  %s0 = inlined_call_operand.vmem [shape: bf16[32,6656], index: 0, kind: input, shape index: {}]
  %s1 = inlined_call_operand.vmem [shape: bf16[6656,128], index: 1, kind: input, shape index: {}]
  %s2 = inlined_call_operand.vmem [shape: f32[1,128], index: 2, kind: input, shape index: {}]
  %s3 = inlined_call_operand.vmem [shape: bf16[32,128], index: 3, kind: output, shape index: {}]
  %s4 = sld [smem:[#allocation0]]
  $region76: #{faster_rcnn_forward.8} parent=0
    _
  %s6 = ssub.s32 1, %s4
  %s7 = scalar_select 0, %s6, %s4
  $region1: #{faster_rcnn_forward.8} parent=0
    #allocation3 [shape = 'u8[65536]{0}', space=vmem, size = 0x10000, scoped, tag = 'input window, operand 0']
    loop: start=0, step=1, limit=15
    $region2: #{faster_rcnn_forward.8} parent=1 // loop_pre_header
      _
    $region3: #{faster_rcnn_forward.8} parent=1 // loop_header
      %s9 = sphi 0, %s13
      %p10 = scmp.ge.s32.totalorder %s9, 15
      %s16 = sphi 0, %s35
      %s17 = sphi 0, %s31
      %s18 = sphi 0, %s27
      %s19 = sphi 0, %s16
      %s20 = sphi 0, %s17
      %s21 = sphi 0, %s18
      %s22 = sphi 0, %s19
      %s23 = sphi 0, %s20
      %s24 = sphi 0, %s21
      %s40 = sphi 0, %s42
      %s43 = sphi 0, %s40
      %s44 = sphi 0, %s43
      %s60 = sphi 0, %s44
      %s68 = sphi 0, %s70
      %s71 = sphi 0, %s68
      %s72 = sphi 0, %s71
      %s88 = sphi 0, %s72
      %s94 = sphi 0, %s96
      %s97 = sphi 0, %s94
      %s98 = sphi 0, %s97
      %s114 = sphi 0, %s98
      %s122 = sphi 0, %s124
      %s125 = sphi 0, %s122
      %s126 = sphi 0, %s125
      %s142 = sphi 0, %s126
    $region4: #{faster_rcnn_forward.8} parent=1 // loop_header_branch
      %12 = sbr.rel (%p10) target = $region8
    $region5: #{faster_rcnn_forward.8} parent=1 // loop_body
      %s14 = ssub.s32 %s9, 1
      %s15 = ssub.s32 %s9, 2
      %s25 = sadd.s32 1, %s18
      %p26 = scmp.ge.s32.totalorder %s25, 13
      %s27 = scalar_select %p26, 0, %s25
      %s28 = sadd.s32 1, %s17
      %s29 = scalar_select %p26, %s28, %s17
      %p30 = scmp.ge.s32.totalorder %s29, 1
      %s31 = scalar_select %p30, 0, %s29
      %s32 = sadd.s32 1, %s16
      %s33 = scalar_select %p30, %s32, %s16
      %p34 = scmp.ge.s32.totalorder %s33, 1
      %s35 = scalar_select %p34, 0, %s33
      %s36 = ssub.s32 %s16, %s35
      %s37 = ssub.s32 %s18, %s27
      %s38 = sor.u32 %s36, %s37
      %p39 = scmp.eq.s32.totalorder %s38, 0
      %s41 = sadd.s32 %s40, 1
      %s42 = scalar_select %p39, %s40, %s41
      %p45 = pneg %p39
      %p46 = scmp.eq.s32.totalorder %s9, 12
      %p47 = por %p45, %p46
      %p48 = scmp.ne.s32.totalorder %s40, %s43
      %p49 = scmp.eq.s32.totalorder %s9, 0
      %p50 = por %p48, %p49
      %p51 = scmp.ne.s32.totalorder %s40, %s43
      %p52 = scmp.eq.s32.totalorder %s14, 12
      %p53 = por %p51, %p52
      %p54 = scmp.ne.s32.totalorder %s43, %s44
      %p55 = scmp.eq.s32.totalorder %s14, 0
      %p56 = por %p54, %p55
      %p57 = scmp.ne.s32.totalorder %s43, %s44
      %p58 = scmp.eq.s32.totalorder %s15, 12
      %p59 = por %p57, %p58
      %p61 = scmp.ne.s32.totalorder %s44, %s60
      %p62 = scmp.eq.s32.totalorder %s15, 0
      %p63 = por %p61, %p62
      %s64 = ssub.s32 %s18, %s27
      %s65 = ssub.s32 %s17, %s31
      %s66 = sor.u32 %s64, %s65
      %p67 = scmp.eq.s32.totalorder %s66, 0
      %s69 = sadd.s32 %s68, 1
      %s70 = scalar_select %p67, %s68, %s69
      %p73 = pneg %p67
      %p74 = scmp.eq.s32.totalorder %s9, 12
      %p75 = por %p73, %p74
      %p76 = scmp.ne.s32.totalorder %s68, %s71
      %p77 = scmp.eq.s32.totalorder %s9, 0
      %p78 = por %p76, %p77
      %p79 = scmp.ne.s32.totalorder %s68, %s71
      %p80 = scmp.eq.s32.totalorder %s14, 12
      %p81 = por %p79, %p80
      %p82 = scmp.ne.s32.totalorder %s71, %s72
      %p83 = scmp.eq.s32.totalorder %s14, 0
      %p84 = por %p82, %p83
      %p85 = scmp.ne.s32.totalorder %s71, %s72
      %p86 = scmp.eq.s32.totalorder %s15, 12
      %p87 = por %p85, %p86
      %p89 = scmp.ne.s32.totalorder %s72, %s88
      %p90 = scmp.eq.s32.totalorder %s15, 0
      %p91 = por %p89, %p90
      %s92 = ssub.s32 %s17, %s31
      %p93 = scmp.eq.s32.totalorder %s92, 0
      %s95 = sadd.s32 %s94, 1
      %s96 = scalar_select %p93, %s94, %s95
      %p99 = pneg %p93
      %p100 = scmp.eq.s32.totalorder %s9, 12
      %p101 = por %p99, %p100
      %p102 = scmp.ne.s32.totalorder %s94, %s97
      %p103 = scmp.eq.s32.totalorder %s9, 0
      %p104 = por %p102, %p103
      %p105 = scmp.ne.s32.totalorder %s94, %s97
      %p106 = scmp.eq.s32.totalorder %s14, 12
      %p107 = por %p105, %p106
      %p108 = scmp.ne.s32.totalorder %s97, %s98
      %p109 = scmp.eq.s32.totalorder %s14, 0
      %p110 = por %p108, %p109
      %p111 = scmp.ne.s32.totalorder %s97, %s98
      %p112 = scmp.eq.s32.totalorder %s15, 12
      %p113 = por %p111, %p112
      %p115 = scmp.ne.s32.totalorder %s98, %s114
      %p116 = scmp.eq.s32.totalorder %s15, 0
      %p117 = por %p115, %p116
      %s118 = ssub.s32 %s16, %s35
      %s119 = ssub.s32 %s17, %s31
      %s120 = sor.u32 %s118, %s119
      %p121 = scmp.eq.s32.totalorder %s120, 0
      %s123 = sadd.s32 %s122, 1
      %s124 = scalar_select %p121, %s122, %s123
      %p127 = pneg %p121
      %p128 = scmp.eq.s32.totalorder %s9, 12
      %p129 = por %p127, %p128
      %p130 = scmp.ne.s32.totalorder %s122, %s125
      %p131 = scmp.eq.s32.totalorder %s9, 0
      %p132 = por %p130, %p131
      %p133 = scmp.ne.s32.totalorder %s122, %s125
      %p134 = scmp.eq.s32.totalorder %s14, 12
      %p135 = por %p133, %p134
      %p136 = scmp.ne.s32.totalorder %s125, %s126
      %p137 = scmp.eq.s32.totalorder %s14, 0
      %p138 = por %p136, %p137
      %p139 = scmp.ne.s32.totalorder %s125, %s126
      %p140 = scmp.eq.s32.totalorder %s15, 12
      %p141 = por %p139, %p140
      %p143 = scmp.ne.s32.totalorder %s126, %s142
      %p144 = scmp.eq.s32.totalorder %s15, 0
      %p145 = por %p143, %p144
      %p146 = scmp.le.s32.totalorder 1, %s9
      %p147 = scmp.lt.s32.totalorder %s9, 14
      %p148 = pnand %p146, %p147
      %p149 = pneg %p148
      // Predicated region
      $region9: #{faster_rcnn_forward.8} parent=5 // pred_check
        _
      $region10: #{faster_rcnn_forward.8} parent=5 // pred_check_branch
        %151 = sbr.rel (%p148) target = $region12
      $region11: #{faster_rcnn_forward.8} parent=5 // pred_region
        %s152 = ssub.s32 %s9, 1
        // Predicated region
        $region13: #{faster_rcnn_forward.8} parent=11 // pred_check
          %p153 = pneg %p110
        $region14: #{faster_rcnn_forward.8} parent=11 // pred_check_branch
          %155 = sbr.rel (%p153) target = $region16
        $region15: #{faster_rcnn_forward.8} parent=11 // pred_region
          %p156 = scmp.lt.s32.totalorder %s20, 0
          %s157 = scalar_select %p156, %s20, 0
          %s158 = scalar_lea.vmem %s2, %s157
        $region16: #{faster_rcnn_forward.8} parent=11 // pred_fallthru
          _
      $region12: #{faster_rcnn_forward.8} parent=5 // pred_fallthru
        _
      %p159 = scmp.lt.s32.totalorder %s9, 13
      // Predicated region
      $region17: #{faster_rcnn_forward.8} parent=5 // pred_check
        %p160 = pneg %p159
      $region18: #{faster_rcnn_forward.8} parent=5 // pred_check_branch
        %162 = sbr.rel (%p160) target = $region20
      $region19: #{faster_rcnn_forward.8} parent=5 // pred_region
        // Predicated region
        $region21: #{faster_rcnn_forward.8} parent=19 // pred_check
          %p163 = pneg %p50
        $region22: #{faster_rcnn_forward.8} parent=19 // pred_check_branch
          %165 = sbr.rel (%p163) target = $region24
        $region23: #{faster_rcnn_forward.8} parent=19 // pred_region
          %s166 = sand.u32 %s40, 1
          %s167 = sand.u32 %s40, 1
          %s168 = smul.addr %s167, 64
          %s169 = scalar_lea.vmem [#allocation3], %s168
          %s170 = smul.u32 4, %s16
          %s171 = smul.u32 4, %s18
          %s172 = smul.addr %s170, 52
          %s173 = sadd.s32 %s171, %s172
          %s174 = smul.addr %s173, 4
          %s175 = scalar_lea.vmem %s0, %s174
          // Predicated region
          $region25: #{faster_rcnn_forward.8} parent=23 // pred_check
            _
          $region26: #{faster_rcnn_forward.8} parent=23 // pred_check_branch
            %177 = sbr.rel (0) target = $region28
          $region27: #{faster_rcnn_forward.8} parent=23 // pred_region
            // Predicated region
            $region29: #{faster_rcnn_forward.8} parent=27 // pred_check
              _
            $region30: #{faster_rcnn_forward.8} parent=27 // pred_check_branch
              %179 = sbr.rel (0) target = $region32
            $region31: #{faster_rcnn_forward.8} parent=27 // pred_region
              loop: start=0, step=1, limit=1
              $region33: #{faster_rcnn_forward.8} parent=31 // loop_pre_header
                _
              $region34: #{faster_rcnn_forward.8} parent=31 // loop_header
                %s181 = sphi 0, %s185
                %p182 = scmp.ge.s32.totalorder %s181, 1
                %s186 = sphi %s175, %s175
                %s187 = sphi %s169, %s169
              $region35: #{faster_rcnn_forward.8} parent=31 // loop_header_branch
                %184 = sbr.rel (%p182) target = $region39
              $region36: #{faster_rcnn_forward.8} parent=31 // loop_body
                %v188 = vld [vmem:[%s186] sm:$0xff]
                %189 = vst [vmem:[%s187] sm:$0xff] %v188
                %v190 = vld [vmem:[%s186 + $0x8] sm:$0xff]
                %191 = vst [vmem:[%s187 + $0x8] sm:$0xff] %v190
                %v192 = vld [vmem:[%s186 + $0xd0] sm:$0xff]
                %193 = vst [vmem:[%s187 + $0x10] sm:$0xff] %v192
                %v194 = vld [vmem:[%s186 + $0xd8] sm:$0xff]
                %195 = vst [vmem:[%s187 + $0x18] sm:$0xff] %v194
                %v196 = vld [vmem:[%s186 + $0x1a0] sm:$0xff]
                %197 = vst [vmem:[%s187 + $0x20] sm:$0xff] %v196
                %v198 = vld [vmem:[%s186 + $0x1a8] sm:$0xff]
                %199 = vst [vmem:[%s187 + $0x28] sm:$0xff] %v198
                %v200 = vld [vmem:[%s186 + $0x270] sm:$0xff]
                %201 = vst [vmem:[%s187 + $0x30] sm:$0xff] %v200
                %v202 = vld [vmem:[%s186 + $0x278] sm:$0xff]
                %203 = vst [vmem:[%s187 + $0x38] sm:$0xff] %v202
              $region37: #{faster_rcnn_forward.8} parent=31 // loop_footer
                %s185 = sadd.s32 1, %s181
              $region38: #{faster_rcnn_forward.8} parent=31 // loop_footer_branch
                %180 = sbr.rel target = $region34
              $region39: #{faster_rcnn_forward.8} parent=31 // loop_exit
                _
            $region32: #{faster_rcnn_forward.8} parent=27 // pred_fallthru
              _
            // Predicated region
            $region40: #{faster_rcnn_forward.8} parent=27 // pred_check
              _
            $region41: #{faster_rcnn_forward.8} parent=27 // pred_check_branch
              %205 = sbr.rel target = $region43
            $region42: #{faster_rcnn_forward.8} parent=27 // pred_region
              _
            $region43: #{faster_rcnn_forward.8} parent=27 // pred_fallthru
              _
          $region28: #{faster_rcnn_forward.8} parent=23 // pred_fallthru
            _
          %206 = vnop
        $region24: #{faster_rcnn_forward.8} parent=19 // pred_fallthru
          _
        // Predicated region
        $region44: #{faster_rcnn_forward.8} parent=19 // pred_check
          %p207 = pneg %p78
        $region45: #{faster_rcnn_forward.8} parent=19 // pred_check_branch
          %209 = sbr.rel (%p207) target = $region47
        $region46: #{faster_rcnn_forward.8} parent=19 // pred_region
          %s210 = smul.u32 64, %s18
          %p211 = scmp.lt.s32.totalorder %s210, 831
          %s212 = scalar_select %p211, %s210, 831
          %p213 = scmp.lt.s32.totalorder %s17, 0
          %s214 = scalar_select %p213, %s17, 0
          %s215 = sadd.s32 %s214, %s212
          %s216 = smul.addr %s215, 4
          %s217 = scalar_lea.vmem %s1, %s216
          %s218 = smul.u32 64, %s18
        $region47: #{faster_rcnn_forward.8} parent=19 // pred_fallthru
          _
      $region20: #{faster_rcnn_forward.8} parent=5 // pred_fallthru
        _
      %p219 = scmp.le.s32.totalorder 1, %s9
      %p220 = scmp.lt.s32.totalorder %s9, 14
      %p221 = pnand %p219, %p220
      %p222 = pneg %p221
      // Predicated region
      $region48: #{faster_rcnn_forward.8} parent=5 // pred_check
        _
      $region49: #{faster_rcnn_forward.8} parent=5 // pred_check_branch
        %224 = sbr.rel (%p221) target = $region51
      $region50: #{faster_rcnn_forward.8} parent=5 // pred_region
        %s225 = ssub.s32 %s9, 1
        %s226 = sand.u32 %s43, 1
        %s227 = sand.u32 %s43, 1
        %s228 = smul.addr %s227, 64
        %s229 = scalar_lea.vmem [#allocation3], %s228
        // Predicated region
        $region52: #{faster_rcnn_forward.8} parent=50 // pred_check
          %p230 = pneg %p56
        $region53: #{faster_rcnn_forward.8} parent=50 // pred_check_branch
          %232 = sbr.rel (%p230) target = $region55
        $region54: #{faster_rcnn_forward.8} parent=50 // pred_region
          _
        $region55: #{faster_rcnn_forward.8} parent=50 // pred_fallthru
          _
        %s233 = sand.u32 %s43, 1
        %s234 = sand.u32 %s43, 1
        %s235 = smul.addr %s234, 64
        %s236 = scalar_lea.vmem [#allocation3], %s235
        %p237 = pneg %p56
        %p238 = pneg %p53
        %s239 = smul.u32 64, %s21
        %p240 = scmp.lt.s32.totalorder %s239, 831
        %s241 = scalar_select %p240, %s239, 831
        %p242 = scmp.lt.s32.totalorder %s20, 0
        %s243 = scalar_select %p242, %s20, 0
        %s244 = sadd.s32 %s243, %s241
        %s245 = smul.addr %s244, 4
        %s246 = scalar_lea.vmem %s1, %s245
        %p247 = pneg %p84
        %p248 = pneg %p81
        %p249 = scmp.lt.s32.totalorder %s20, 0
        %s250 = scalar_select %p249, %s20, 0
        %s251 = scalar_lea.vmem %s2, %s250
        %p252 = pneg %p110
        %p253 = pneg %p107
        %p254 = pneg %p138
        %p255 = pneg %p135
        %s256 = smul.u32 4, %s19
        %p257 = scmp.lt.s32.totalorder %s256, 3
        %s258 = scalar_select %p257, %s256, 3
        %p259 = scmp.lt.s32.totalorder %s20, 0
        %s260 = scalar_select %p259, %s20, 0
        %s261 = sadd.s32 %s260, %s258
        %s262 = smul.addr %s261, 4
        %s263 = scalar_lea.vmem %s3, %s262
        %s264 = smul.u32 4, %s19
        %s265 = smul.u32 4, %s21
        %s266 = smul.u32 64, %s21
        %p267 = scmp.lt.s32.totalorder %s266, 831
        %s268 = scalar_select %p267, %s266, 831
        %p269 = scmp.lt.s32.totalorder %s20, 0
        %s270 = scalar_select %p269, %s20, 0
        %s271 = sadd.s32 %s270, %s268
        %s272 = smul.addr %s271, 4
        %s273 = scalar_lea.vmem %s1, %s272
        %s274 = smul.u32 64, %s21
        %p275 = scmp.lt.s32.totalorder %s20, 0
        %s276 = scalar_select %p275, %s20, 0
        %s277 = scalar_lea.vmem %s2, %s276
        %s278 = smul.u32 4, %s19
        %p279 = scmp.lt.s32.totalorder %s278, 3
        %s280 = scalar_select %p279, %s278, 3
        %p281 = scmp.lt.s32.totalorder %s20, 0
        %s282 = scalar_select %p281, %s20, 0
        %s283 = sadd.s32 %s282, %s280
        %s284 = smul.addr %s283, 4
        %s285 = scalar_lea.vmem %s3, %s284
        %s286 = smul.u32 4, %s19
        %p288 = scmp.eq.s32.totalorder %s21, 0
        // Predicated region
        $region56: #{faster_rcnn_forward.8} parent=50 // pred_check
          %p289 = pneg %p288
        $region57: #{faster_rcnn_forward.8} parent=50 // pred_check_branch
          %291 = sbr.rel (%p289) target = $region59
        $region58: #{faster_rcnn_forward.8} parent=50 // pred_region
          %292 = vst [vmem:[#allocation2] sm:$0xff] 0.0
          %293 = vst [vmem:[#allocation2 + $0x8] sm:$0xff] 0.0
          %294 = vst [vmem:[#allocation2 + $0x10] sm:$0xff] 0.0
          %295 = vst [vmem:[#allocation2 + $0x18] sm:$0xff] 0.0
        $region59: #{faster_rcnn_forward.8} parent=50 // pred_fallthru
          _
        %v296 = vld [vmem:[#allocation2] sm:$0xff]
        %v297 = vld [vmem:[#allocation2 + $0x8] sm:$0xff]
        %v298 = vld [vmem:[#allocation2 + $0x10] sm:$0xff]
        %v299 = vld [vmem:[#allocation2 + $0x18] sm:$0xff]
        %v300 = vld [vmem:[%s229] sm:$0xff]
        %v301 = vld [vmem:[%s229 + $0x8] sm:$0xff]
        %v302 = vld [vmem:[%s229 + $0x10] sm:$0xff]
        %v303 = vld [vmem:[%s229 + $0x18] sm:$0xff]
        %v304 = vld [vmem:[%s229 + $0x20] sm:$0xff]
        %v305 = vld [vmem:[%s229 + $0x28] sm:$0xff]
        %v306 = vld [vmem:[%s229 + $0x30] sm:$0xff]
        %v307 = vld [vmem:[%s229 + $0x38] sm:$0xff]
        %v308 = vld [vmem:[%s273] sm:$0xf]
        %v309 = vld [vmem:[%s273 + $0x4] sm:$0xf]
        %v310 = vld [vmem:[%s273 + $0x8] sm:$0xf]
        %v311 = vld [vmem:[%s273 + $0xc] sm:$0xf]
        %v312 = vld [vmem:[%s273 + $0x10] sm:$0xf]
        %v313 = vld [vmem:[%s273 + $0x14] sm:$0xf]
        %v314 = vld [vmem:[%s273 + $0x18] sm:$0xf]
        %v315 = vld [vmem:[%s273 + $0x1c] sm:$0xf]
        %v316 = vld [vmem:[%s273 + $0x20] sm:$0xf]
        %v317 = vld [vmem:[%s273 + $0x24] sm:$0xf]
        %v318 = vld [vmem:[%s273 + $0x28] sm:$0xf]
        %v319 = vld [vmem:[%s273 + $0x2c] sm:$0xf]
        %v320 = vld [vmem:[%s273 + $0x30] sm:$0xf]
        %v321 = vld [vmem:[%s273 + $0x34] sm:$0xf]
        %v322 = vld [vmem:[%s273 + $0x38] sm:$0xf]
        %v323 = vld [vmem:[%s273 + $0x3c] sm:$0xf]
        %v324 = vld [vmem:[%s273 + $0x40] sm:$0xf]
        %v325 = vld [vmem:[%s273 + $0x44] sm:$0xf]
        %v326 = vld [vmem:[%s273 + $0x48] sm:$0xf]
        %v327 = vld [vmem:[%s273 + $0x4c] sm:$0xf]
        %v328 = vld [vmem:[%s273 + $0x50] sm:$0xf]
        %v329 = vld [vmem:[%s273 + $0x54] sm:$0xf]
        %v330 = vld [vmem:[%s273 + $0x58] sm:$0xf]
        %v331 = vld [vmem:[%s273 + $0x5c] sm:$0xf]
        %v332 = vld [vmem:[%s273 + $0x60] sm:$0xf]
        %v333 = vld [vmem:[%s273 + $0x64] sm:$0xf]
        %v334 = vld [vmem:[%s273 + $0x68] sm:$0xf]
        %v335 = vld [vmem:[%s273 + $0x6c] sm:$0xf]
        %v336 = vld [vmem:[%s273 + $0x70] sm:$0xf]
        %v337 = vld [vmem:[%s273 + $0x74] sm:$0xf]
        %v338 = vld [vmem:[%s273 + $0x78] sm:$0xf]
        %v339 = vld [vmem:[%s273 + $0x7c] sm:$0xf]
        %v340 = vld [vmem:[%s273 + $0x80] sm:$0xf]
        %v341 = vld [vmem:[%s273 + $0x84] sm:$0xf]
        %v342 = vld [vmem:[%s273 + $0x88] sm:$0xf]
        %v343 = vld [vmem:[%s273 + $0x8c] sm:$0xf]
        %v344 = vld [vmem:[%s273 + $0x90] sm:$0xf]
        %v345 = vld [vmem:[%s273 + $0x94] sm:$0xf]
        %v346 = vld [vmem:[%s273 + $0x98] sm:$0xf]
        %v347 = vld [vmem:[%s273 + $0x9c] sm:$0xf]
        %v348 = vld [vmem:[%s273 + $0xa0] sm:$0xf]
        %v349 = vld [vmem:[%s273 + $0xa4] sm:$0xf]
        %v350 = vld [vmem:[%s273 + $0xa8] sm:$0xf]
        %v351 = vld [vmem:[%s273 + $0xac] sm:$0xf]
        %v352 = vld [vmem:[%s273 + $0xb0] sm:$0xf]
        %v353 = vld [vmem:[%s273 + $0xb4] sm:$0xf]
        %v354 = vld [vmem:[%s273 + $0xb8] sm:$0xf]
        %v355 = vld [vmem:[%s273 + $0xbc] sm:$0xf]
        %v356 = vld [vmem:[%s273 + $0xc0] sm:$0xf]
        %v357 = vld [vmem:[%s273 + $0xc4] sm:$0xf]
        %v358 = vld [vmem:[%s273 + $0xc8] sm:$0xf]
        %v359 = vld [vmem:[%s273 + $0xcc] sm:$0xf]
        %v360 = vld [vmem:[%s273 + $0xd0] sm:$0xf]
        %v361 = vld [vmem:[%s273 + $0xd4] sm:$0xf]
        %v362 = vld [vmem:[%s273 + $0xd8] sm:$0xf]
        %v363 = vld [vmem:[%s273 + $0xdc] sm:$0xf]
        %v364 = vld [vmem:[%s273 + $0xe0] sm:$0xf]
        %v365 = vld [vmem:[%s273 + $0xe4] sm:$0xf]
        %v366 = vld [vmem:[%s273 + $0xe8] sm:$0xf]
        %v367 = vld [vmem:[%s273 + $0xec] sm:$0xf]
        %v368 = vld [vmem:[%s273 + $0xf0] sm:$0xf]
        %v369 = vld [vmem:[%s273 + $0xf4] sm:$0xf]
        %v370 = vld [vmem:[%s273 + $0xf8] sm:$0xf]
        %v371 = vld [vmem:[%s273 + $0xfc] sm:$0xf]
        %v380 = vunpack.c.l.b16 %v300
        %v381 = vunpack.c.h.b16 %v300
        %v382 = vunpack.c.l.b16 %v301
        %v383 = vunpack.c.h.b16 %v301
        %v384 = vunpack.c.l.b16 %v302
        %v385 = vunpack.c.h.b16 %v302
        %v386 = vunpack.c.l.b16 %v303
        %v387 = vunpack.c.h.b16 %v303
        %v388 = vunpack.c.l.b16 %v304
        %v389 = vunpack.c.h.b16 %v304
        %v390 = vunpack.c.l.b16 %v305
        %v391 = vunpack.c.h.b16 %v305
        %v392 = vunpack.c.l.b16 %v306
        %v393 = vunpack.c.h.b16 %v306
        %v394 = vunpack.c.l.b16 %v307
        %v395 = vunpack.c.h.b16 %v307
        %v396 = vpack.c.b16 %v384, %v380
        %v397 = vpack.c.b16 %v385, %v381
        %v398 = vpack.c.b16 %v386, %v382
        %v399 = vpack.c.b16 %v387, %v383
        %v400 = vpack.c.b16 %v392, %v388
        %v401 = vpack.c.b16 %v393, %v389
        %v402 = vpack.c.b16 %v394, %v390
        %v403 = vpack.c.b16 %v395, %v391
        %v476 = vunpack.c.l.b16 %v308
        %v477 = vunpack.c.l.b16 %v309
        %v478 = vunpack.c.l.b16 %v310
        %v479 = vunpack.c.l.b16 %v311
        %v480 = vunpack.c.l.b16 %v312
        %v481 = vunpack.c.l.b16 %v313
        %v482 = vunpack.c.l.b16 %v314
        %v483 = vunpack.c.l.b16 %v315
        %v484 = vunpack.c.l.b16 %v316
        %v485 = vunpack.c.l.b16 %v317
        %v486 = vunpack.c.l.b16 %v318
        %v487 = vunpack.c.l.b16 %v319
        %v488 = vunpack.c.l.b16 %v320
        %v489 = vunpack.c.l.b16 %v321
        %v490 = vunpack.c.l.b16 %v322
        %v491 = vunpack.c.l.b16 %v323
        %v492 = vunpack.c.l.b16 %v324
        %v493 = vunpack.c.l.b16 %v325
        %v494 = vunpack.c.l.b16 %v326
        %v495 = vunpack.c.l.b16 %v327
        %v496 = vunpack.c.l.b16 %v328
        %v497 = vunpack.c.l.b16 %v329
        %v498 = vunpack.c.l.b16 %v330
        %v499 = vunpack.c.l.b16 %v331
        %v500 = vunpack.c.l.b16 %v332
        %v501 = vunpack.c.l.b16 %v333
        %v502 = vunpack.c.l.b16 %v334
        %v503 = vunpack.c.l.b16 %v335
        %v504 = vunpack.c.l.b16 %v336
        %v505 = vunpack.c.l.b16 %v337
        %v506 = vunpack.c.l.b16 %v338
        %v507 = vunpack.c.l.b16 %v339
        %v508 = vunpack.c.l.b16 %v340
        %v509 = vunpack.c.l.b16 %v341
        %v510 = vunpack.c.l.b16 %v342
        %v511 = vunpack.c.l.b16 %v343
        %v512 = vunpack.c.l.b16 %v344
        %v513 = vunpack.c.l.b16 %v345
        %v514 = vunpack.c.l.b16 %v346
        %v515 = vunpack.c.l.b16 %v347
        %v516 = vunpack.c.l.b16 %v348
        %v517 = vunpack.c.l.b16 %v349
        %v518 = vunpack.c.l.b16 %v350
        %v519 = vunpack.c.l.b16 %v351
        %v520 = vunpack.c.l.b16 %v352
        %v521 = vunpack.c.l.b16 %v353
        %v522 = vunpack.c.l.b16 %v354
        %v523 = vunpack.c.l.b16 %v355
        %v524 = vunpack.c.l.b16 %v356
        %v525 = vunpack.c.l.b16 %v357
        %v526 = vunpack.c.l.b16 %v358
        %v527 = vunpack.c.l.b16 %v359
        %v528 = vunpack.c.l.b16 %v360
        %v529 = vunpack.c.l.b16 %v361
        %v530 = vunpack.c.l.b16 %v362
        %v531 = vunpack.c.l.b16 %v363
        %v532 = vunpack.c.l.b16 %v364
        %v533 = vunpack.c.l.b16 %v365
        %v534 = vunpack.c.l.b16 %v366
        %v535 = vunpack.c.l.b16 %v367
        %v536 = vunpack.c.l.b16 %v368
        %v537 = vunpack.c.l.b16 %v369
        %v538 = vunpack.c.l.b16 %v370
        %v539 = vunpack.c.l.b16 %v371
        %v540 = vpack.c.b16 %v477, %v476
        %v541 = vpack.c.b16 %v479, %v478
        %v542 = vpack.c.b16 %v481, %v480
        %v543 = vpack.c.b16 %v483, %v482
        %v544 = vpack.c.b16 %v485, %v484
        %v545 = vpack.c.b16 %v487, %v486
        %v546 = vpack.c.b16 %v489, %v488
        %v547 = vpack.c.b16 %v491, %v490
        %v548 = vpack.c.b16 %v493, %v492
        %v549 = vpack.c.b16 %v495, %v494
        %v550 = vpack.c.b16 %v497, %v496
        %v551 = vpack.c.b16 %v499, %v498
        %v552 = vpack.c.b16 %v501, %v500
        %v553 = vpack.c.b16 %v503, %v502
        %v554 = vpack.c.b16 %v505, %v504
        %v555 = vpack.c.b16 %v507, %v506
        %v556 = vpack.c.b16 %v509, %v508
        %v557 = vpack.c.b16 %v511, %v510
        %v558 = vpack.c.b16 %v513, %v512
        %v559 = vpack.c.b16 %v515, %v514
        %v560 = vpack.c.b16 %v517, %v516
        %v561 = vpack.c.b16 %v519, %v518
        %v562 = vpack.c.b16 %v521, %v520
        %v563 = vpack.c.b16 %v523, %v522
        %v564 = vpack.c.b16 %v525, %v524
        %v565 = vpack.c.b16 %v527, %v526
        %v566 = vpack.c.b16 %v529, %v528
        %v567 = vpack.c.b16 %v531, %v530
        %v568 = vpack.c.b16 %v533, %v532
        %v569 = vpack.c.b16 %v535, %v534
        %v570 = vpack.c.b16 %v537, %v536
        %v571 = vpack.c.b16 %v539, %v538
        %604 = vmatprep.subr.bf16.mxu0 0
        %605 = vmatpush1.bf16.msra.mxu0 %v540
        %606 = vmatprep.subr.bf16.mxu0 0
        %607 = vmatpush1.bf16.msra.mxu0 %v541
        %608 = vmatprep.subr.bf16.mxu0 0
        %609 = vmatpush1.bf16.msra.mxu0 %v542
        %610 = vmatprep.subr.bf16.mxu0 0
        %611 = vmatpush1.bf16.msra.mxu0 %v543
        %612 = vmatprep.subr.bf16.mxu0 0
        %613 = vmatpush1.bf16.msra.mxu0 %v544
        %614 = vmatprep.subr.bf16.mxu0 0
        %615 = vmatpush1.bf16.msra.mxu0 %v545
        %616 = vmatprep.subr.bf16.mxu0 0
        %617 = vmatpush1.bf16.msra.mxu0 %v546
        %618 = vmatprep.subr.bf16.mxu0 0
        %619 = vmatpush1.bf16.msra.mxu0 %v547
        %620 = vmatprep.subr.bf16.mxu0 0
        %621 = vmatpush1.bf16.msra.mxu0 %v548
        %622 = vmatprep.subr.bf16.mxu0 0
        %623 = vmatpush1.bf16.msra.mxu0 %v549
        %624 = vmatprep.subr.bf16.mxu0 0
        %625 = vmatpush1.bf16.msra.mxu0 %v550
        %626 = vmatprep.subr.bf16.mxu0 0
        %627 = vmatpush1.bf16.msra.mxu0 %v551
        %628 = vmatprep.subr.bf16.mxu0 0
        %629 = vmatpush1.bf16.msra.mxu0 %v552
        %630 = vmatprep.subr.bf16.mxu0 0
        %631 = vmatpush1.bf16.msra.mxu0 %v553
        %632 = vmatprep.subr.bf16.mxu0 0
        %633 = vmatpush1.bf16.msra.mxu0 %v554
        %634 = vmatprep.subr.bf16.mxu0 0
        %635 = vmatpush1.bf16.msra.mxu0 %v555
        %636 = vmatprep.mubr.bf16.mxu0 %v397
        %637 = vmatmul.mubr.bf16.gmra.mrb[0].mxu0 %v396
        %v638 = vpop.f32.mrb[0].mxu0
        %v639 = vadd.f32 0.0, %v638
        %v640 = vpop.f32.mrb[0].mxu0
        %v641 = vpop.f32.mrb[0].mxu0
        %v642 = vadd.f32 0.0, %v641
        %v643 = vpop.f32.mrb[0].mxu0
        %644 = vmatprep.mubr.bf16.mxu0 %v401
        %645 = vmatmul.mubr.bf16.gmra.mrb[0].mxu0 %v400
        %v646 = vpop.f32.mrb[0].mxu0
        %v647 = vadd.f32 0.0, %v646
        %v648 = vpop.f32.mrb[0].mxu0
        %v649 = vpop.f32.mrb[0].mxu0
        %v650 = vadd.f32 0.0, %v649
        %v651 = vpop.f32.mrb[0].mxu0
        %652 = vdwg.mxu0
        %653 = vmatprep.subr.bf16.mxu0 0
        %654 = vmatpush1.bf16.msra.mxu0 %v556
        %655 = vmatprep.subr.bf16.mxu0 0
        %656 = vmatpush1.bf16.msra.mxu0 %v557
        %657 = vmatprep.subr.bf16.mxu0 0
        %658 = vmatpush1.bf16.msra.mxu0 %v558
        %659 = vmatprep.subr.bf16.mxu0 0
        %660 = vmatpush1.bf16.msra.mxu0 %v559
        %661 = vmatprep.subr.bf16.mxu0 0
        %662 = vmatpush1.bf16.msra.mxu0 %v560
        %663 = vmatprep.subr.bf16.mxu0 0
        %664 = vmatpush1.bf16.msra.mxu0 %v561
        %665 = vmatprep.subr.bf16.mxu0 0
        %666 = vmatpush1.bf16.msra.mxu0 %v562
        %667 = vmatprep.subr.bf16.mxu0 0
        %668 = vmatpush1.bf16.msra.mxu0 %v563
        %669 = vmatprep.subr.bf16.mxu0 0
        %670 = vmatpush1.bf16.msra.mxu0 %v564
        %671 = vmatprep.subr.bf16.mxu0 0
        %672 = vmatpush1.bf16.msra.mxu0 %v565
        %673 = vmatprep.subr.bf16.mxu0 0
        %674 = vmatpush1.bf16.msra.mxu0 %v566
        %675 = vmatprep.subr.bf16.mxu0 0
        %676 = vmatpush1.bf16.msra.mxu0 %v567
        %677 = vmatprep.subr.bf16.mxu0 0
        %678 = vmatpush1.bf16.msra.mxu0 %v568
        %679 = vmatprep.subr.bf16.mxu0 0
        %680 = vmatpush1.bf16.msra.mxu0 %v569
        %681 = vmatprep.subr.bf16.mxu0 0
        %682 = vmatpush1.bf16.msra.mxu0 %v570
        %683 = vmatprep.subr.bf16.mxu0 0
        %684 = vmatpush1.bf16.msra.mxu0 %v571
        %685 = vmatprep.mubr.bf16.mxu0 %v399
        %686 = vmatmul.mubr.bf16.gmra.mrb[0].mxu0 %v398
        %v687 = vpop.f32.mrb[0].mxu0
        %v688 = vadd.f32 %v639, %v687
        %v689 = vpop.f32.mrb[0].mxu0
        %v690 = vpop.f32.mrb[0].mxu0
        %v691 = vadd.f32 %v642, %v690
        %v692 = vpop.f32.mrb[0].mxu0
        %693 = vmatprep.mubr.bf16.mxu0 %v403
        %694 = vmatmul.mubr.bf16.gmra.mrb[0].mxu0 %v402
        %v695 = vpop.f32.mrb[0].mxu0
        %v696 = vadd.f32 %v647, %v695
        %v697 = vpop.f32.mrb[0].mxu0
        %v698 = vpop.f32.mrb[0].mxu0
        %v699 = vadd.f32 %v650, %v698
        %v700 = vpop.f32.mrb[0].mxu0
        %701 = vdwg.mxu0
        %v702 = vadd.f32 %v296, %v688
        %v703 = vadd.f32 %v297, %v691
        %v704 = vadd.f32 %v298, %v696
        %v705 = vadd.f32 %v299, %v699
        %706 = vst [vmem:[#allocation2] sm:$0xff] %v702
        %707 = vst [vmem:[#allocation2 + $0x8] sm:$0xff] %v703
        %708 = vst [vmem:[#allocation2 + $0x10] sm:$0xff] %v704
        %709 = vst [vmem:[#allocation2 + $0x18] sm:$0xff] %v705
        %p710 = scmp.eq.s32.totalorder %s21, 12
        // Predicated region
        $region60: #{faster_rcnn_forward.8} parent=50 // pred_check
          %p711 = pneg %p710
        $region61: #{faster_rcnn_forward.8} parent=50 // pred_check_branch
          %713 = sbr.rel (%p711) target = $region63
        $region62: #{faster_rcnn_forward.8} parent=50 // pred_region
          %v714 = vld [vmem:[#allocation2] sm:$0xff]
          %v715 = vld [vmem:[#allocation2 + $0x8] sm:$0xff]
          %v716 = vld [vmem:[#allocation2 + $0x10] sm:$0xff]
          %v717 = vld [vmem:[#allocation2 + $0x18] sm:$0xff]
          %v718 = vld [vmem:[%s277] sm:$0x1]
          %v720 = vlaneseq
          %v721 = vshrl.u32 %v720, 7
          %v722 = vsub.s32 0, %v721
          %v723 = vrot.slane %v718, %v722
          %v725 = vadd.f32 %v714, %v723
          %v726 = vadd.f32 %v715, %v723
          %v727 = vadd.f32 %v716, %v723
          %v728 = vadd.f32 %v717, %v723
          %v729 = vmax.f32 %v725, 0.0
          %v730 = vmax.f32 %v726, 0.0
          %v731 = vmax.f32 %v727, 0.0
          %v732 = vmax.f32 %v728, 0.0
          %v733 = vpack.c.bf16 %v730, %v729
          %v734 = vpack.c.bf16 %v732, %v731
          %v737 = vunpack.c.l.b16 %v733
          %v738 = vunpack.c.h.b16 %v733
          %v739 = vunpack.c.l.b16 %v734
          %v740 = vunpack.c.h.b16 %v734
          %v741 = vpack.c.b16 %v737, %v737
          %v742 = vpack.c.b16 %v738, %v738
          %v743 = vpack.c.b16 %v739, %v739
          %v744 = vpack.c.b16 %v740, %v740
          %749 = vst [vmem:[%s285] sm:$0xf] %v741
          %750 = vst [vmem:[%s285 + $0x4] sm:$0xf] %v742
          %751 = vst [vmem:[%s285 + $0x8] sm:$0xf] %v743
          %752 = vst [vmem:[%s285 + $0xc] sm:$0xf] %v744
        $region63: #{faster_rcnn_forward.8} parent=50 // pred_fallthru
          _
        %s753 = smul.u32 4, %s19
        %p754 = scmp.lt.s32.totalorder %s753, 3
        %s755 = scalar_select %p754, %s753, 3
        %p756 = scmp.lt.s32.totalorder %s20, 0
        %s757 = scalar_select %p756, %s20, 0
        %s758 = sadd.s32 %s757, %s755
        %s759 = smul.addr %s758, 4
        %s760 = scalar_lea.vmem %s3, %s759
        // Predicated region
        $region64: #{faster_rcnn_forward.8} parent=50 // pred_check
          %p761 = pneg %p135
        $region65: #{faster_rcnn_forward.8} parent=50 // pred_check_branch
          %763 = sbr.rel (%p761) target = $region67
        $region66: #{faster_rcnn_forward.8} parent=50 // pred_region
          %s764 = smul.u32 4, %s19
        $region67: #{faster_rcnn_forward.8} parent=50 // pred_fallthru
          _
        // Predicated region
        $region68: #{faster_rcnn_forward.8} parent=50 // pred_check
          %p765 = pneg %p135
        $region69: #{faster_rcnn_forward.8} parent=50 // pred_check_branch
          %767 = sbr.rel (%p765) target = $region71
        $region70: #{faster_rcnn_forward.8} parent=50 // pred_region
          %s768 = smul.u32 4, %s19
          %p769 = scmp.lt.s32.totalorder %s768, 3
          %s770 = scalar_select %p769, %s768, 3
          %p771 = scmp.lt.s32.totalorder %s20, 0
          %s772 = scalar_select %p771, %s20, 0
          %s773 = sadd.s32 %s772, %s770
          %s774 = smul.addr %s773, 4
          %s775 = scalar_lea.vmem %s3, %s774
        $region71: #{faster_rcnn_forward.8} parent=50 // pred_fallthru
          _
      $region51: #{faster_rcnn_forward.8} parent=5 // pred_fallthru
        _
      %p776 = scmp.le.s32.totalorder 2, %s9
      // Predicated region
      $region72: #{faster_rcnn_forward.8} parent=5 // pred_check
        %p777 = pneg %p776
      $region73: #{faster_rcnn_forward.8} parent=5 // pred_check_branch
        %779 = sbr.rel (%p777) target = $region75
      $region74: #{faster_rcnn_forward.8} parent=5 // pred_region
        %s780 = ssub.s32 %s9, 2
      $region75: #{faster_rcnn_forward.8} parent=5 // pred_fallthru
        _
    $region6: #{faster_rcnn_forward.8} parent=1 // loop_footer
      %s13 = sadd.s32 1, %s9
    $region7: #{faster_rcnn_forward.8} parent=1 // loop_footer_branch
      %8 = sbr.rel target = $region3
    $region8: #{faster_rcnn_forward.8} parent=1 // loop_exit
      _

// kernel: faster_rcnn_forward.9
$region0: #{faster_rcnn_forward.9}
  #allocation0 [shape = 'u32[]', space=smem, size = 0x4, offset = 0x4, fixed_abs, tag = 'smem constant byte address 0x4 - core index']
  #allocation1 [shape = 'u32[144,128]{1,0:T(1,128)}', space=vmem, size = 0x12000, scoped, tag = 'internal scratch']
  #allocation2 [shape = 'f32[32,128]{1,0:T(8,128)}', space=vmem, size = 0x4000, scoped, tag = 'scratch operand']
  %s0 = inlined_call_operand.vmem [shape: bf16[32,128], index: 0, kind: input, shape index: {}]
  %s1 = inlined_call_operand.vmem [shape: bf16[128,128], index: 1, kind: input, shape index: {}]
  %s2 = inlined_call_operand.vmem [shape: f32[1,128], index: 2, kind: input, shape index: {}]
  %s3 = inlined_call_operand.vmem [shape: f32[32,128], index: 3, kind: output, shape index: {}]
  %s4 = sld [smem:[#allocation0]]
  $region30: #{faster_rcnn_forward.9} parent=0
    _
  %s6 = ssub.s32 1, %s4
  %s7 = scalar_select 0, %s6, %s4
  // Predicated region
  $region2: #{faster_rcnn_forward.9} parent=0 // pred_check
    _
  $region3: #{faster_rcnn_forward.9} parent=0 // pred_check_branch
    %9 = sbr.rel (0) target = $region5
  $region4: #{faster_rcnn_forward.9} parent=0 // pred_region
    _
  $region5: #{faster_rcnn_forward.9} parent=0 // pred_fallthru
    _
  // Predicated region
  $region6: #{faster_rcnn_forward.9} parent=0 // pred_check
    _
  $region7: #{faster_rcnn_forward.9} parent=0 // pred_check_branch
    %11 = sbr.rel (0) target = $region9
  $region8: #{faster_rcnn_forward.9} parent=0 // pred_region
    _
  $region9: #{faster_rcnn_forward.9} parent=0 // pred_fallthru
    _
  // Predicated region
  $region10: #{faster_rcnn_forward.9} parent=0 // pred_check
    _
  $region11: #{faster_rcnn_forward.9} parent=0 // pred_check_branch
    %13 = sbr.rel (0) target = $region13
  $region12: #{faster_rcnn_forward.9} parent=0 // pred_region
    _
  $region13: #{faster_rcnn_forward.9} parent=0 // pred_fallthru
    _
  %p15 = scmp.eq.s32.totalorder 0, 0
  // Predicated region
  $region14: #{faster_rcnn_forward.9} parent=0 // pred_check
    %p16 = pneg %p15
  $region15: #{faster_rcnn_forward.9} parent=0 // pred_check_branch
    %18 = sbr.rel (%p16) target = $region17
  $region16: #{faster_rcnn_forward.9} parent=0 // pred_region
    %19 = vst [vmem:[#allocation2] sm:$0xff] 0.0
    %20 = vst [vmem:[#allocation2 + $0x8] sm:$0xff] 0.0
    %21 = vst [vmem:[#allocation2 + $0x10] sm:$0xff] 0.0
    %22 = vst [vmem:[#allocation2 + $0x18] sm:$0xff] 0.0
  $region17: #{faster_rcnn_forward.9} parent=0 // pred_fallthru
    _
  %v23 = vld [vmem:[#allocation2] sm:$0xff]
  %v24 = vld [vmem:[#allocation2 + $0x8] sm:$0xff]
  %v25 = vld [vmem:[#allocation2 + $0x10] sm:$0xff]
  %v26 = vld [vmem:[#allocation2 + $0x18] sm:$0xff]
  %v27 = vld [vmem:[%s0] sm:$0xf]
  %v28 = vld [vmem:[%s0 + $0x4] sm:$0xf]
  %v29 = vld [vmem:[%s0 + $0x8] sm:$0xf]
  %v30 = vld [vmem:[%s0 + $0xc] sm:$0xf]
  %v31 = vld [vmem:[%s1] sm:$0xf]
  %v32 = vld [vmem:[%s1 + $0x4] sm:$0xf]
  %v33 = vld [vmem:[%s1 + $0x8] sm:$0xf]
  %v34 = vld [vmem:[%s1 + $0xc] sm:$0xf]
  %v35 = vld [vmem:[%s1 + $0x10] sm:$0xf]
  %v36 = vld [vmem:[%s1 + $0x14] sm:$0xf]
  %v37 = vld [vmem:[%s1 + $0x18] sm:$0xf]
  %v38 = vld [vmem:[%s1 + $0x1c] sm:$0xf]
  %v39 = vld [vmem:[%s1 + $0x20] sm:$0xf]
  %v40 = vld [vmem:[%s1 + $0x24] sm:$0xf]
  %v41 = vld [vmem:[%s1 + $0x28] sm:$0xf]
  %v42 = vld [vmem:[%s1 + $0x2c] sm:$0xf]
  %v43 = vld [vmem:[%s1 + $0x30] sm:$0xf]
  %v44 = vld [vmem:[%s1 + $0x34] sm:$0xf]
  %v45 = vld [vmem:[%s1 + $0x38] sm:$0xf]
  %v46 = vld [vmem:[%s1 + $0x3c] sm:$0xf]
  %v51 = vunpack.c.l.b16 %v27
  %v52 = vunpack.c.l.b16 %v28
  %v53 = vunpack.c.l.b16 %v29
  %v54 = vunpack.c.l.b16 %v30
  %v55 = vpack.c.b16 %v52, %v51
  %v56 = vpack.c.b16 %v54, %v53
  %v75 = vunpack.c.l.b16 %v31
  %v76 = vunpack.c.l.b16 %v32
  %v77 = vunpack.c.l.b16 %v33
  %v78 = vunpack.c.l.b16 %v34
  %v79 = vunpack.c.l.b16 %v35
  %v80 = vunpack.c.l.b16 %v36
  %v81 = vunpack.c.l.b16 %v37
  %v82 = vunpack.c.l.b16 %v38
  %v83 = vunpack.c.l.b16 %v39
  %v84 = vunpack.c.l.b16 %v40
  %v85 = vunpack.c.l.b16 %v41
  %v86 = vunpack.c.l.b16 %v42
  %v87 = vunpack.c.l.b16 %v43
  %v88 = vunpack.c.l.b16 %v44
  %v89 = vunpack.c.l.b16 %v45
  %v90 = vunpack.c.l.b16 %v46
  %v91 = vpack.c.b16 %v76, %v75
  %v92 = vpack.c.b16 %v78, %v77
  %v93 = vpack.c.b16 %v80, %v79
  %v94 = vpack.c.b16 %v82, %v81
  %v95 = vpack.c.b16 %v84, %v83
  %v96 = vpack.c.b16 %v86, %v85
  %v97 = vpack.c.b16 %v88, %v87
  %v98 = vpack.c.b16 %v90, %v89
  %107 = vmatprep.subr.bf16.mxu0 0
  %108 = vmatpush1.bf16.msra.mxu0 %v91
  %109 = vmatprep.subr.bf16.mxu0 0
  %110 = vmatpush1.bf16.msra.mxu0 %v92
  %111 = vmatprep.subr.bf16.mxu0 0
  %112 = vmatpush1.bf16.msra.mxu0 %v93
  %113 = vmatprep.subr.bf16.mxu0 0
  %114 = vmatpush1.bf16.msra.mxu0 %v94
  %115 = vmatprep.subr.bf16.mxu0 0
  %116 = vmatpush1.bf16.msra.mxu0 %v95
  %117 = vmatprep.subr.bf16.mxu0 0
  %118 = vmatpush1.bf16.msra.mxu0 %v96
  %119 = vmatprep.subr.bf16.mxu0 0
  %120 = vmatpush1.bf16.msra.mxu0 %v97
  %121 = vmatprep.subr.bf16.mxu0 0
  %122 = vmatpush1.bf16.msra.mxu0 %v98
  %123 = vmatprep.subr.bf16.mxu0 0
  %124 = vmatpush1.bf16.msra.mxu0 0
  %125 = vmatprep.subr.bf16.mxu0 0
  %126 = vmatpush1.bf16.msra.mxu0 0
  %127 = vmatprep.subr.bf16.mxu0 0
  %128 = vmatpush1.bf16.msra.mxu0 0
  %129 = vmatprep.subr.bf16.mxu0 0
  %130 = vmatpush1.bf16.msra.mxu0 0
  %131 = vmatprep.subr.bf16.mxu0 0
  %132 = vmatpush1.bf16.msra.mxu0 0
  %133 = vmatprep.subr.bf16.mxu0 0
  %134 = vmatpush1.bf16.msra.mxu0 0
  %135 = vmatprep.subr.bf16.mxu0 0
  %136 = vmatpush1.bf16.msra.mxu0 0
  %137 = vmatprep.subr.bf16.mxu0 0
  %138 = vmatpush1.bf16.msra.mxu0 0
  %139 = vmatprep.mubr.bf16.mxu0 0
  %140 = vmatmul.mubr.bf16.gmra.mrb[0].mxu0 %v55
  %v141 = vpop.f32.mrb[0].mxu0
  %v142 = vadd.f32 0.0, %v141
  %v143 = vpop.f32.mrb[0].mxu0
  %v144 = vpop.f32.mrb[0].mxu0
  %v145 = vadd.f32 0.0, %v144
  %v146 = vpop.f32.mrb[0].mxu0
  %147 = vmatprep.mubr.bf16.mxu0 0
  %148 = vmatmul.mubr.bf16.gmra.mrb[0].mxu0 %v56
  %v149 = vpop.f32.mrb[0].mxu0
  %v150 = vadd.f32 0.0, %v149
  %v151 = vpop.f32.mrb[0].mxu0
  %v152 = vpop.f32.mrb[0].mxu0
  %v153 = vadd.f32 0.0, %v152
  %v154 = vpop.f32.mrb[0].mxu0
  %155 = vdwg.mxu0
  %v156 = vadd.f32 %v23, %v142
  %v157 = vadd.f32 %v24, %v145
  %v158 = vadd.f32 %v25, %v150
  %v159 = vadd.f32 %v26, %v153
  %160 = vst [vmem:[#allocation2] sm:$0xff] %v156
  %161 = vst [vmem:[#allocation2 + $0x8] sm:$0xff] %v157
  %162 = vst [vmem:[#allocation2 + $0x10] sm:$0xff] %v158
  %163 = vst [vmem:[#allocation2 + $0x18] sm:$0xff] %v159
  // Predicated region
  $region18: #{faster_rcnn_forward.9} parent=0 // pred_check
    %p164 = pneg %p15
  $region19: #{faster_rcnn_forward.9} parent=0 // pred_check_branch
    %166 = sbr.rel (%p164) target = $region21
  $region20: #{faster_rcnn_forward.9} parent=0 // pred_region
    %v167 = vld [vmem:[#allocation2] sm:$0xff]
    %v168 = vld [vmem:[#allocation2 + $0x8] sm:$0xff]
    %v169 = vld [vmem:[#allocation2 + $0x10] sm:$0xff]
    %v170 = vld [vmem:[#allocation2 + $0x18] sm:$0xff]
    %v171 = vld [vmem:[%s2] sm:$0x1]
    %v173 = vlaneseq
    %v174 = vshrl.u32 %v173, 7
    %v175 = vsub.s32 0, %v174
    %v176 = vrot.slane %v171, %v175
    %v178 = vadd.f32 %v167, %v176
    %v179 = vadd.f32 %v168, %v176
    %v180 = vadd.f32 %v169, %v176
    %v181 = vadd.f32 %v170, %v176
    %182 = vst [vmem:[%s3] sm:$0xff] %v178
    %183 = vst [vmem:[%s3 + $0x8] sm:$0xff] %v179
    %184 = vst [vmem:[%s3 + $0x10] sm:$0xff] %v180
    %185 = vst [vmem:[%s3 + $0x18] sm:$0xff] %v181
  $region21: #{faster_rcnn_forward.9} parent=0 // pred_fallthru
    _
  // Predicated region
  $region22: #{faster_rcnn_forward.9} parent=0 // pred_check
    _
  $region23: #{faster_rcnn_forward.9} parent=0 // pred_check_branch
    %187 = sbr.rel (0) target = $region25
  $region24: #{faster_rcnn_forward.9} parent=0 // pred_region
    _
  $region25: #{faster_rcnn_forward.9} parent=0 // pred_fallthru
    _
  // Predicated region
  $region26: #{faster_rcnn_forward.9} parent=0 // pred_check
    _
  $region27: #{faster_rcnn_forward.9} parent=0 // pred_check_branch
    %189 = sbr.rel (0) target = $region29
  $region28: #{faster_rcnn_forward.9} parent=0 // pred_region
    _
  $region29: #{faster_rcnn_forward.9} parent=0 // pred_fallthru
    _

</llo_original>
